<compile_context>
chip_gen: v6e
topology: v6e:2x2x1
jax: 0.10.0
libtpu: 0.0.40
codegen_flags: <defaults>
</compile_context>

<pallas_src>
import functools

import numpy as np

import jax
import jax.numpy as jnp
from jax import lax
from jax.experimental import pallas as pl
from jax.experimental.pallas import tpu as pltpu


def _layernorm(x, gamma, beta, eps=1e-5):
    # PyTorch nn.LayerNorm: biased variance, eps inside sqrt. All f32.
    mean = jnp.mean(x, axis=-1, keepdims=True)
    var = jnp.mean((x - mean) ** 2, axis=-1, keepdims=True)
    return (x - mean) * lax.rsqrt(var + eps) * gamma + beta


def _transformer_block_kernel(n_heads, d_k, tq,
                              x_ref, mask_ref,
                              ln1_g_ref, ln1_b_ref, wqkv_ref,
                              wproj_ref, bproj_ref,
                              ln2_g_ref, ln2_b_ref,
                              wff1_ref, bff1_ref, wff2_ref, bff2_ref,
                              out_ref):
    C = n_heads * d_k

    # Query-tile offset within this batch element's full (T, C) block.
    q0 = pl.multiple_of(pl.program_id(1) * tq, tq)

    x_full = x_ref[0]                             # (T, C) f32 — whole sequence (for K/V)
    x_q = x_ref[0, pl.ds(q0, tq), :]              # (tq, C) f32 — this query tile

    g1 = ln1_g_ref[...]
    b1 = ln1_b_ref[...]
    h_full = _layernorm(x_full, g1, b1).astype(jnp.bfloat16)
    h_q = _layernorm(x_q, g1, b1).astype(jnp.bfloat16)

    # W_qkv columns were pre-permuted to [Q_all | K_all | V_all] (head-major) and
    # the 1/sqrt(d_k) softmax scale was folded into the Q columns, so every slice
    # below is a lane-aligned 128-wide block and no runtime scaling is needed.
    q_all = jnp.dot(h_q, wqkv_ref[:, :C],
                    preferred_element_type=jnp.float32).astype(jnp.bfloat16)   # (tq, C)
    kv = jnp.dot(h_full, wqkv_ref[:, C:],
                 preferred_element_type=jnp.float32).astype(jnp.bfloat16)      # (T, 2C)

    # Additive mask bias built once per tile from the bf16 0/1 mask block
    # (mask == 0 -> -1e9, else 0), then a single f32 add per head.
    mf = mask_ref[...].astype(jnp.float32)                                     # (tq, T)
    mask_bias = jnp.where(mf == 0.0, jnp.float32(-1e9), jnp.float32(0.0))

    # Fused attention + output projection: accumulate ctx_h @ W_proj[rows_h, :]
    # directly into an f32 (tq, C) accumulator (no bf16 ctx scratch round trip).
    acc = jnp.zeros((tq, C), jnp.float32)
    for hd in range(n_heads):                    # small n_heads: static unroll is fine
        lo = hd * d_k
        q = q_all[:, lo:lo + d_k]                # (tq, d_k) bf16 (pre-scaled)
        k = kv[:, lo:lo + d_k]                   # (T,  d_k) bf16
        v = kv[:, C + lo:C + lo + d_k]           # (T,  d_k) bf16

        # q @ k^T without materializing a transpose of k.
        s = lax.dot_general(q, k, (((1,), (1,)), ((), ())),
                            preferred_element_type=jnp.float32)                # (tq, T)
        s = s + mask_bias
        s = s - jnp.max(s, axis=-1, keepdims=True)
        e = jnp.exp(s)
        inv = 1.0 / jnp.sum(e, axis=-1, keepdims=True)      # exact reciprocal (accuracy)
        p = (e * inv).astype(jnp.bfloat16)                   # (tq, T)

        ctx = jnp.dot(p, v, preferred_element_type=jnp.float32)                # (tq, d_k) f32
        acc = acc + jnp.dot(ctx.astype(jnp.bfloat16),
                            wproj_ref[lo:lo + d_k, :],
                            preferred_element_type=jnp.float32)                # (tq, C) f32

    # Residual 1 (f32).
    x1 = x_q + acc + bproj_ref[...]

    # ln2 + MLP + residual 2. Output stays f32 to match the PyTorch module.
    h2 = _layernorm(x1, ln2_g_ref[...], ln2_b_ref[...]).astype(jnp.bfloat16)
    ff = jnp.dot(h2, wff1_ref[...],
                 preferred_element_type=jnp.float32) + bff1_ref[...]
    ff = jnp.maximum(ff, 0.0).astype(jnp.bfloat16)
    x2 = x1 + jnp.dot(ff, wff2_ref[...],
                      preferred_element_type=jnp.float32) + bff2_ref[...]

    out_ref[0] = x2


def prepare_params(params, n_heads):
    """One-time conversion of PyTorch-layout params into the kernel layout."""
    C = params["w_qkv_t"].shape[0]
    d_k = C // n_heads

    # PyTorch chunking: column h*3dk + j is q[h, j]; +dk is k; +2dk is v.
    # New layout: [Q_all | K_all | V_all], head-major inside each slab.
    q_cols = np.concatenate(
        [np.arange(h * 3 * d_k, h * 3 * d_k + d_k) for h in range(n_heads)])
    perm = np.concatenate([q_cols, q_cols + d_k, q_cols + 2 * d_k])

    w_qkv = params["w_qkv_t"][:, perm]
    # Fold the 1/sqrt(d_k) attention scale into the Q columns (zero runtime cost).
    w_qkv = w_qkv.at[:, :C].multiply(d_k ** -0.5)

    return {
        "ln1_g": params["ln1_g"].astype(jnp.float32),
        "ln1_b": params["ln1_b"].astype(jnp.float32),
        "w_qkv": w_qkv.astype(jnp.bfloat16),                  # (C, 3C)
        "w_proj": params["w_proj_t"].astype(jnp.bfloat16),    # (C, C)
        "b_proj": params["b_proj"].astype(jnp.float32),
        "ln2_g": params["ln2_g"].astype(jnp.float32),
        "ln2_b": params["ln2_b"].astype(jnp.float32),
        "w_ff1": params["w_ff1_t"].astype(jnp.bfloat16),      # (C, d_ff)
        "b_ff1": params["b_ff1"].astype(jnp.float32),
        "w_ff2": params["w_ff2_t"].astype(jnp.bfloat16),      # (d_ff, C)
        "b_ff2": params["b_ff2"].astype(jnp.float32),
    }


def transformer_block(x, mask, kparams, n_heads, *, tq=None,
                      single_buffer_weights=True):
    B, T, C = x.shape
    d_k = C // n_heads
    d_ff = kparams["w_ff1"].shape[1]
    assert C % n_heads == 0 and C % 128 == 0 and d_ff % 128 == 0 and T % 8 == 0

    # Query tile: exercises the second ("parallel") grid axis so both v7x
    # TensorCores have work even at batch 1.
    if tq is None:
        tq = 64 if (T % 64 == 0 and T > 64) else T
    assert T % tq == 0 and tq % 8 == 0
    nq = T // tq

    # Mask travels as a compact bf16 0/1 block; the -1e9 bias is built in-kernel.
    mask_b = mask.astype(jnp.bfloat16)

    kernel = functools.partial(_transformer_block_kernel, n_heads, d_k, tq)

    # ---- VMEM budget (per-generation ceiling) --------------------------------
    weight_bytes = int(sum(int(v.size) * v.dtype.itemsize for v in kparams.values()))
    # Conservative (double-buffered-weights) footprint, incl. FF intermediate
    # and per-head score temporaries.
    blk_bytes = 2 * (T * C * 4) + 2 * (tq * C * 4) + 2 * (tq * T * 2)   # x, out, mask
    act_bytes = (T * C * 2 + T * 2 * C * 2 + tq * C * 2                 # h_full, kv, q_all
                 + 2 * tq * T * 4                                        # s / e per head
                 + tq * C * 4                                            # proj accumulator
                 + tq * d_ff * 4                                         # FF intermediate
                 + 4 * tq * C * 4)                                       # x_q / x1 / h2 / x2
    footprint = 2 * weight_bytes + blk_bytes + act_bytes
    try:
        vmem_cap = int(pltpu.get_tpu_info().vmem_capacity_bytes)
    except Exception:
        vmem_cap = 64 * 2 ** 20            # assume the most restrictive (v7x per-TC)
    ceiling = int(0.75 * vmem_cap)         # leave headroom for compiler scratch
    vmem_limit = min(ceiling, max(32 * 2 ** 20, 2 * footprint))

    # ---- Advisory cost estimate ----------------------------------------------
    flops = int(2 * B * T * C * (3 * C + C + 2 * d_ff)       # projections + MLP
                + 4 * B * n_heads * T * T * d_k               # QK^T and P.V
                + 2 * B * (nq - 1) * T * C * 2 * C)           # redundant per-tile K/V proj
    transcendentals = int(B * n_heads * T * T)                # softmax exp
    bytes_accessed = int(2 * B * T * C * 4 + B * T * T * 2 + weight_bytes)

    def build(single_buffer):
        def const_spec(shape):
            # Block index never changes -> single-buffer to halve weight VMEM.
            if single_buffer:
                return pl.BlockSpec(shape, lambda b, qi: (0,) * len(shape),
                                    pipeline_mode=pl.Buffered(1))
            return pl.BlockSpec(shape, lambda b, qi: (0,) * len(shape))

        grid_spec = pltpu.PrefetchScalarGridSpec(
            num_scalar_prefetch=0,
            grid=(B, nq),
            in_specs=[
                pl.BlockSpec((1, T, C), lambda b, qi: (b, 0, 0)),   # x (full seq per batch)
                pl.BlockSpec((tq, T), lambda b, qi: (qi, 0)),       # 0/1 mask tile (bf16)
                const_spec((1, C)),                                 # ln1 gamma
                const_spec((1, C)),                                 # ln1 beta
                const_spec((C, 3 * C)),                             # W_qkv^T (bf16, permuted)
                const_spec((C, C)),                                 # W_proj^T (bf16)
                const_spec((1, C)),                                 # b_proj
                const_spec((1, C)),                                 # ln2 gamma
                const_spec((1, C)),                                 # ln2 beta
                const_spec((C, d_ff)),                              # W_ff1^T (bf16)
                const_spec((1, d_ff)),                              # b_ff1
                const_spec((d_ff, C)),                              # W_ff2^T (bf16)
                const_spec((1, C)),                                 # b_ff2
            ],
            out_specs=pl.BlockSpec((1, tq, C), lambda b, qi: (b, qi, 0)),
        )
        return pl.pallas_call(
            kernel,
            out_shape=jax.ShapeDtypeStruct((B, T, C), jnp.float32),
            grid_spec=grid_spec,
            compiler_params=pltpu.CompilerParams(
                dimension_semantics=("parallel", "parallel"),
                vmem_limit_bytes=vmem_limit),
            cost_estimate=pl.CostEstimate(flops=flops,
                                          transcendentals=transcendentals,
                                          bytes_accessed=bytes_accessed),
        )

    args = (x, mask_b,
            kparams["ln1_g"], kparams["ln1_b"], kparams["w_qkv"],
            kparams["w_proj"], kparams["b_proj"],
            kparams["ln2_g"], kparams["ln2_b"],
            kparams["w_ff1"], kparams["b_ff1"],
            kparams["w_ff2"], kparams["b_ff2"])

    if single_buffer_weights:
        try:
            return build(True)(*args)
        except Exception:
            # pipeline_mode=pl.Buffered(1) unsupported on this jax version:
            # fall back to default double buffering (only extra VMEM here).
            pass
    return build(False)(*args)


# ---------------------------------------------------------------------------
# References for correctness checking.
# ---------------------------------------------------------------------------
def _ln_ref(v, g, b):
    m = jnp.mean(v, axis=-1, keepdims=True)
    var = jnp.mean((v - m) ** 2, axis=-1, keepdims=True)
    return (v - m) / jnp.sqrt(var + 1e-5) * g + b


def _reference(x, mask, params, n_heads):
    """Pure-JAX f32 replica of the PyTorch forward (loose sanity bound)."""
    B, T, C = x.shape
    d_k = C // n_heads
    qkv = _ln_ref(x, params["ln1_g"], params["ln1_b"]) @ params["w_qkv_t"]
    qkv = qkv.reshape(B, T, n_heads, 3 * d_k).transpose(0, 2, 1, 3)
    q, k, v = jnp.split(qkv, 3, axis=-1)
    scores = jnp.einsum("bhtd,bhsd->bhts", q, k) * d_k ** -0.5
    scores = jnp.where(mask[None, None] == 0, -1e9, scores)
    attn = jax.nn.softmax(scores, axis=-1)
    out = jnp.einsum("bhts,bhsd->bhtd", attn, v).transpose(0, 2, 1, 3).reshape(B, T, C)
    x = x + out @ params["w_proj_t"] + params["b_proj"]
    h = _ln_ref(x, params["ln2_g"], params["ln2_b"])
    return x + jnp.maximum(h @ params["w_ff1_t"] + params["b_ff1"], 0.0) @ params["w_ff2_t"] \
             + params["b_ff2"]


def _reference_bf16(x, mask, params, n_heads):
    """PyTorch-semantics forward with bf16 inputs at every matmul (f32 accumulate),
    mirroring the kernel's MXU precision but using the ORIGINAL (un-permuted)
    weight layout — catches permutation / scale-folding bugs at a tight bound."""
    B, T, C = x.shape
    d_k = C // n_heads
    bf = jnp.bfloat16

    def mm(a, b):
        return jnp.matmul(a.astype(bf), b.astype(bf),
                          preferred_element_type=jnp.float32)

    qkv = mm(_ln_ref(x, params["ln1_g"], params["ln1_b"]), params["w_qkv_t"])
    qkv = qkv.reshape(B, T, n_heads, 3 * d_k).transpose(0, 2, 1, 3)
    q, k, v = jnp.split(qkv, 3, axis=-1)
    scores = jnp.einsum("bhtd,bhsd->bhts", q.astype(bf), k.astype(bf),
                        preferred_element_type=jnp.float32) * d_k ** -0.5
    scores = jnp.where(mask[None, None] == 0, -1e9, scores)
    attn = jax.nn.softmax(scores, axis=-1)
    ctx = jnp.einsum("bhts,bhsd->bhtd", attn.astype(bf), v.astype(bf),
                     preferred_element_type=jnp.float32)
    ctx = ctx.transpose(0, 2, 1, 3).reshape(B, T, C)
    x1 = x + mm(ctx, params["w_proj_t"]) + params["b_proj"]
    h = _ln_ref(x1, params["ln2_g"], params["ln2_b"])
    ff = jnp.maximum(mm(h, params["w_ff1_t"]) + params["b_ff1"], 0.0)
    return x1 + mm(ff, params["w_ff2_t"]) + params["b_ff2"]


def init_params(key, d_model, d_ff):
    """PyTorch-layout parameters (f32, pre-transposed linear weights)."""
    ks = jax.random.split(key, 6)

    def linear_w(k, out_f, in_f):
        bound = 1.0 / (in_f ** 0.5)
        return jax.random.uniform(k, (out_f, in_f), jnp.float32, -bound, bound)

    w_qkv = linear_w(ks[0], 3 * d_model, d_model)
    w_proj = linear_w(ks[1], d_model, d_model)
    b_proj = jax.random.uniform(ks[2], (d_model,), jnp.float32,
                                -1.0 / d_model ** 0.5, 1.0 / d_model ** 0.5)
    w_ff1 = linear_w(ks[3], d_ff, d_model)
    b_ff1 = jnp.zeros((d_ff,), jnp.float32) + 0.01
    w_ff2 = linear_w(ks[4], d_model, d_ff)
    b_ff2 = jax.random.uniform(ks[5], (d_model,), jnp.float32,
                               -1.0 / d_ff ** 0.5, 1.0 / d_ff ** 0.5)

    return {
        "ln1_g": jnp.ones((1, d_model), jnp.float32),
        "ln1_b": jnp.zeros((1, d_model), jnp.float32),
        "w_qkv_t": w_qkv.T,            # (C, 3C)
        "w_proj_t": w_proj.T,          # (C, C)
        "b_proj": b_proj.reshape(1, d_model),
        "ln2_g": jnp.ones((1, d_model), jnp.float32),
        "ln2_b": jnp.zeros((1, d_model), jnp.float32),
        "w_ff1_t": w_ff1.T,            # (C, d_ff)
        "b_ff1": b_ff1.reshape(1, d_ff),
        "w_ff2_t": w_ff2.T,            # (d_ff, C)
        "b_ff2": b_ff2.reshape(1, d_model),
    }


if __name__ == "__main__":
    # Lane-dense small shapes: d_model and d_ff multiples of 128, d_k = 128.
    B, T, d_model, n_heads, d_ff = 2, 128, 256, 2, 512

    key = jax.random.PRNGKey(0)
    k_x, k_p = jax.random.split(key)

    x = jax.random.normal(k_x, (B, T, d_model), jnp.float32)
    mask = jnp.tril(jnp.ones((T, T), jnp.int32))          # causal mask, (T, T)

    params = init_params(k_p, d_model, d_ff)              # PyTorch layout (f32)
    kparams = prepare_params(params, n_heads)             # kernel layout (bf16 weights)

    out = jax.block_until_ready(transformer_block(x, mask, kparams, n_heads))
    assert out.shape == (B, T, d_model)

    # Tight check vs a bf16-matched reference (same matmul precision, original
    # un-permuted weight layout), plus a loose sanity check vs the pure-f32 ref.
    ref_bf16 = _reference_bf16(x, mask, params, n_heads)
    ref_f32 = _reference(x, mask, params, n_heads)
    err_bf16 = float(jnp.max(jnp.abs(out - ref_bf16)))
    err_f32 = float(jnp.max(jnp.abs(out - ref_f32)))
    assert err_bf16 < 3e-2, f"mismatch vs bf16-matched reference: {err_bf16}"
    assert err_f32 < 1.5e-1, f"mismatch vs f32 reference: {err_f32}"

    print("KERNEL_OK")
</pallas_src>

<mosaic_0001>
module attributes {stable_mosaic.version = 11 : i64} {
  func.func @_transformer_block_kernel(%arg0: i32, %arg1: i32, %arg2: memref<1x128x256xf32, #tpu.memory_space<vmem>>, %arg3: memref<64x128xbf16, #tpu.memory_space<vmem>>, %arg4: memref<1x256xf32, #tpu.memory_space<vmem>>, %arg5: memref<1x256xf32, #tpu.memory_space<vmem>>, %arg6: memref<256x768xbf16, #tpu.memory_space<vmem>>, %arg7: memref<256x256xbf16, #tpu.memory_space<vmem>>, %arg8: memref<1x256xf32, #tpu.memory_space<vmem>>, %arg9: memref<1x256xf32, #tpu.memory_space<vmem>>, %arg10: memref<1x256xf32, #tpu.memory_space<vmem>>, %arg11: memref<256x512xbf16, #tpu.memory_space<vmem>>, %arg12: memref<1x512xf32, #tpu.memory_space<vmem>>, %arg13: memref<512x256xbf16, #tpu.memory_space<vmem>>, %arg14: memref<1x256xf32, #tpu.memory_space<vmem>>, %arg15: memref<1x64x256xf32, #tpu.memory_space<vmem>>) attributes {dimension_semantics = [#tpu.dimension_semantics<parallel>, #tpu.dimension_semantics<parallel>], iteration_bounds = array<i64: 2, 2>, scalar_prefetch = 0 : i64, scratch_operands = 0 : i64, tpu.core_type = #tpu.core_type<tc>, window_params = [{transform_indices = @transform_0, window_bounds = array<i64: 1, 128, 256>}, {transform_indices = @transform_1, window_bounds = array<i64: 64, 128>}, {pipeline_mode = #tpu.pipeline_mode<synchronous>, transform_indices = @transform_2, window_bounds = array<i64: 1, 256>}, {pipeline_mode = #tpu.pipeline_mode<synchronous>, transform_indices = @transform_3, window_bounds = array<i64: 1, 256>}, {pipeline_mode = #tpu.pipeline_mode<synchronous>, transform_indices = @transform_4, window_bounds = array<i64: 256, 768>}, {pipeline_mode = #tpu.pipeline_mode<synchronous>, transform_indices = @transform_5, window_bounds = array<i64: 256, 256>}, {pipeline_mode = #tpu.pipeline_mode<synchronous>, transform_indices = @transform_6, window_bounds = array<i64: 1, 256>}, {pipeline_mode = #tpu.pipeline_mode<synchronous>, transform_indices = @transform_7, window_bounds = array<i64: 1, 256>}, {pipeline_mode = #tpu.pipeline_mode<synchronous>, transform_indices = @transform_8, window_bounds = array<i64: 1, 256>}, {pipeline_mode = #tpu.pipeline_mode<synchronous>, transform_indices = @transform_9, window_bounds = array<i64: 256, 512>}, {pipeline_mode = #tpu.pipeline_mode<synchronous>, transform_indices = @transform_10, window_bounds = array<i64: 1, 512>}, {pipeline_mode = #tpu.pipeline_mode<synchronous>, transform_indices = @transform_11, window_bounds = array<i64: 512, 256>}, {pipeline_mode = #tpu.pipeline_mode<synchronous>, transform_indices = @transform_12, window_bounds = array<i64: 1, 256>}, {transform_indices = @transform_13, window_bounds = array<i64: 1, 64, 256>}]} {
    %c64_i32 = arith.constant 64 : i32
    %0 = arith.muli %arg1, %c64_i32 : i32
    %1 = tpu.assume_multiple %0, 64 : i32
    %c0 = arith.constant 0 : index
    %c0_0 = arith.constant 0 : index
    %c0_1 = arith.constant 0 : index
    %2 = vector.load %arg2[%c0, %c0_0, %c0_1] : memref<1x128x256xf32, #tpu.memory_space<vmem>>, vector<1x128x256xf32>
    %3 = vector.shape_cast %2 : vector<1x128x256xf32> to vector<128x256xf32>
    %c0_2 = arith.constant 0 : index
    %4 = arith.index_cast %1 : i32 to index
    %c0_3 = arith.constant 0 : index
    %5 = vector.load %arg2[%c0_2, %4, %c0_3] : memref<1x128x256xf32, #tpu.memory_space<vmem>>, vector<1x64x256xf32>
    %6 = vector.shape_cast %5 : vector<1x64x256xf32> to vector<64x256xf32>
    %c0_4 = arith.constant 0 : index
    %c0_5 = arith.constant 0 : index
    %7 = vector.load %arg4[%c0_4, %c0_5] : memref<1x256xf32, #tpu.memory_space<vmem>>, vector<1x256xf32>
    %c0_6 = arith.constant 0 : index
    %c0_7 = arith.constant 0 : index
    %8 = vector.load %arg5[%c0_6, %c0_7] : memref<1x256xf32, #tpu.memory_space<vmem>>, vector<1x256xf32>
    %cst = arith.constant dense<0.000000e+00> : vector<128xf32>
    %9 = vector.multi_reduction <add>, %3, %cst [1] : vector<128x256xf32> to vector<128xf32>
    %10 = vector.shape_cast %9 : vector<128xf32> to vector<128x1xf32>
    %cst_8 = arith.constant 2.560000e+02 : f32
    %11 = vector.broadcast %cst_8 : f32 to vector<128x1xf32>
    %12 = arith.divf %10, %11 : vector<128x1xf32>
    %13 = vector.broadcast %12 : vector<128x1xf32> to vector<128x256xf32>
    %14 = arith.subf %3, %13 : vector<128x256xf32>
    %15 = arith.mulf %14, %14 : vector<128x256xf32>
    %cst_9 = arith.constant dense<0.000000e+00> : vector<128xf32>
    %16 = vector.multi_reduction <add>, %15, %cst_9 [1] : vector<128x256xf32> to vector<128xf32>
    %17 = vector.shape_cast %16 : vector<128xf32> to vector<128x1xf32>
    %cst_10 = arith.constant 2.560000e+02 : f32
    %18 = vector.broadcast %cst_10 : f32 to vector<128x1xf32>
    %19 = arith.divf %17, %18 : vector<128x1xf32>
    %20 = vector.broadcast %12 : vector<128x1xf32> to vector<128x256xf32>
    %21 = arith.subf %3, %20 : vector<128x256xf32>
    %cst_11 = arith.constant 9.99999974E-6 : f32
    %22 = vector.broadcast %cst_11 : f32 to vector<128x1xf32>
    %23 = arith.addf %19, %22 : vector<128x1xf32>
    %24 = math.rsqrt %23 : vector<128x1xf32>
    %25 = vector.broadcast %24 : vector<128x1xf32> to vector<128x256xf32>
    %26 = arith.mulf %21, %25 : vector<128x256xf32>
    %27 = vector.broadcast %7 : vector<1x256xf32> to vector<128x256xf32>
    %28 = arith.mulf %26, %27 : vector<128x256xf32>
    %29 = vector.broadcast %8 : vector<1x256xf32> to vector<128x256xf32>
    %30 = arith.addf %28, %29 : vector<128x256xf32>
    %31 = arith.truncf %30 : vector<128x256xf32> to vector<128x256xbf16>
    %cst_12 = arith.constant dense<0.000000e+00> : vector<64xf32>
    %32 = vector.multi_reduction <add>, %6, %cst_12 [1] : vector<64x256xf32> to vector<64xf32>
    %33 = vector.shape_cast %32 : vector<64xf32> to vector<64x1xf32>
    %cst_13 = arith.constant 2.560000e+02 : f32
    %34 = vector.broadcast %cst_13 : f32 to vector<64x1xf32>
    %35 = arith.divf %33, %34 : vector<64x1xf32>
    %36 = vector.broadcast %35 : vector<64x1xf32> to vector<64x256xf32>
    %37 = arith.subf %6, %36 : vector<64x256xf32>
    %38 = arith.mulf %37, %37 : vector<64x256xf32>
    %cst_14 = arith.constant dense<0.000000e+00> : vector<64xf32>
    %39 = vector.multi_reduction <add>, %38, %cst_14 [1] : vector<64x256xf32> to vector<64xf32>
    %40 = vector.shape_cast %39 : vector<64xf32> to vector<64x1xf32>
    %cst_15 = arith.constant 2.560000e+02 : f32
    %41 = vector.broadcast %cst_15 : f32 to vector<64x1xf32>
    %42 = arith.divf %40, %41 : vector<64x1xf32>
    %43 = vector.broadcast %35 : vector<64x1xf32> to vector<64x256xf32>
    %44 = arith.subf %6, %43 : vector<64x256xf32>
    %cst_16 = arith.constant 9.99999974E-6 : f32
    %45 = vector.broadcast %cst_16 : f32 to vector<64x1xf32>
    %46 = arith.addf %42, %45 : vector<64x1xf32>
    %47 = math.rsqrt %46 : vector<64x1xf32>
    %48 = vector.broadcast %47 : vector<64x1xf32> to vector<64x256xf32>
    %49 = arith.mulf %44, %48 : vector<64x256xf32>
    %50 = vector.broadcast %7 : vector<1x256xf32> to vector<64x256xf32>
    %51 = arith.mulf %49, %50 : vector<64x256xf32>
    %52 = vector.broadcast %8 : vector<1x256xf32> to vector<64x256xf32>
    %53 = arith.addf %51, %52 : vector<64x256xf32>
    %54 = arith.truncf %53 : vector<64x256xf32> to vector<64x256xbf16>
    %c0_17 = arith.constant 0 : index
    %c0_18 = arith.constant 0 : index
    %55 = vector.load %arg6[%c0_17, %c0_18] : memref<256x768xbf16, #tpu.memory_space<vmem>>, vector<256x256xbf16>
    %cst_19 = arith.constant dense<0.000000e+00> : vector<64x256xf32>
    %56 = tpu.matmul %54, %55, %cst_19 {dimension_numbers = #tpu.dot_dimension_numbers<[1], [0], [0], [1], [0, 0, 1, 1], [], []>} : vector<64x256xbf16>, vector<256x256xbf16>, vector<64x256xf32> -> vector<64x256xf32>
    %57 = arith.truncf %56 : vector<64x256xf32> to vector<64x256xbf16>
    %c0_20 = arith.constant 0 : index
    %c256 = arith.constant 256 : index
    %58 = vector.load %arg6[%c0_20, %c256] : memref<256x768xbf16, #tpu.memory_space<vmem>>, vector<256x512xbf16>
    %cst_21 = arith.constant dense<0.000000e+00> : vector<128x512xf32>
    %59 = tpu.matmul %31, %58, %cst_21 {dimension_numbers = #tpu.dot_dimension_numbers<[1], [0], [0], [1], [0, 0, 1, 1], [], []>} : vector<128x256xbf16>, vector<256x512xbf16>, vector<128x512xf32> -> vector<128x512xf32>
    %60 = arith.truncf %59 : vector<128x512xf32> to vector<128x512xbf16>
    %c0_22 = arith.constant 0 : index
    %c0_23 = arith.constant 0 : index
    %61 = vector.load %arg3[%c0_22, %c0_23] : memref<64x128xbf16, #tpu.memory_space<vmem>>, vector<64x128xbf16>
    %62 = arith.extf %61 : vector<64x128xbf16> to vector<64x128xf32>
    %cst_24 = arith.constant 0.000000e+00 : f32
    %63 = vector.broadcast %cst_24 : f32 to vector<64x128xf32>
    %64 = arith.cmpf oeq, %62, %63 : vector<64x128xf32>
    %cst_25 = arith.constant -1.000000e+09 : f32
    %cst_26 = arith.constant 0.000000e+00 : f32
    %65 = vector.broadcast %cst_25 : f32 to vector<64x128xf32>
    %66 = vector.broadcast %cst_26 : f32 to vector<64x128xf32>
    %67 = arith.select %64, %65, %66 : vector<64x128xi1>, vector<64x128xf32>
    %cst_27 = arith.constant 0.000000e+00 : f32
    %68 = vector.broadcast %cst_27 : f32 to vector<64x256xf32>
    %69 = vector.extract_strided_slice %57 {offsets = [0, 0], sizes = [64, 128], strides = [1, 1]} : vector<64x256xbf16> to vector<64x128xbf16>
    %70 = vector.extract_strided_slice %60 {offsets = [0, 0], sizes = [128, 128], strides = [1, 1]} : vector<128x512xbf16> to vector<128x128xbf16>
    %71 = vector.extract_strided_slice %60 {offsets = [0, 256], sizes = [128, 128], strides = [1, 1]} : vector<128x512xbf16> to vector<128x128xbf16>
    %cst_28 = arith.constant dense<0.000000e+00> : vector<64x128xf32>
    %72 = tpu.matmul %69, %70, %cst_28 {dimension_numbers = #tpu.dot_dimension_numbers<[1], [1], [0], [0], [0, 0, 1, 0], [], []>} : vector<64x128xbf16>, vector<128x128xbf16>, vector<64x128xf32> -> vector<64x128xf32>
    %73 = arith.addf %72, %67 : vector<64x128xf32>
    %cst_29 = arith.constant dense<0xFF800000> : vector<64xf32>
    %74 = vector.multi_reduction <maximumf>, %73, %cst_29 [1] : vector<64x128xf32> to vector<64xf32>
    %75 = vector.shape_cast %74 : vector<64xf32> to vector<64x1xf32>
    %76 = vector.broadcast %75 : vector<64x1xf32> to vector<64x128xf32>
    %77 = arith.subf %73, %76 : vector<64x128xf32>
    %78 = math.exp %77 : vector<64x128xf32>
    %cst_30 = arith.constant dense<0.000000e+00> : vector<64xf32>
    %79 = vector.multi_reduction <add>, %78, %cst_30 [1] : vector<64x128xf32> to vector<64xf32>
    %80 = vector.shape_cast %79 : vector<64xf32> to vector<64x1xf32>
    %cst_31 = arith.constant 1.000000e+00 : f32
    %81 = vector.broadcast %cst_31 : f32 to vector<64x1xf32>
    %82 = arith.divf %81, %80 : vector<64x1xf32>
    %83 = vector.broadcast %82 : vector<64x1xf32> to vector<64x128xf32>
    %84 = arith.mulf %78, %83 : vector<64x128xf32>
    %85 = arith.truncf %84 : vector<64x128xf32> to vector<64x128xbf16>
    %cst_32 = arith.constant dense<0.000000e+00> : vector<64x128xf32>
    %86 = tpu.matmul %85, %71, %cst_32 {dimension_numbers = #tpu.dot_dimension_numbers<[1], [0], [0], [1], [0, 0, 1, 1], [], []>} : vector<64x128xbf16>, vector<128x128xbf16>, vector<64x128xf32> -> vector<64x128xf32>
    %87 = arith.truncf %86 : vector<64x128xf32> to vector<64x128xbf16>
    %c0_33 = arith.constant 0 : index
    %c0_34 = arith.constant 0 : index
    %88 = vector.load %arg7[%c0_33, %c0_34] : memref<256x256xbf16, #tpu.memory_space<vmem>>, vector<128x256xbf16>
    %cst_35 = arith.constant dense<0.000000e+00> : vector<64x256xf32>
    %89 = tpu.matmul %87, %88, %cst_35 {dimension_numbers = #tpu.dot_dimension_numbers<[1], [0], [0], [1], [0, 0, 1, 1], [], []>} : vector<64x128xbf16>, vector<128x256xbf16>, vector<64x256xf32> -> vector<64x256xf32>
    %90 = arith.addf %68, %89 : vector<64x256xf32>
    %91 = vector.extract_strided_slice %57 {offsets = [0, 128], sizes = [64, 128], strides = [1, 1]} : vector<64x256xbf16> to vector<64x128xbf16>
    %92 = vector.extract_strided_slice %60 {offsets = [0, 128], sizes = [128, 128], strides = [1, 1]} : vector<128x512xbf16> to vector<128x128xbf16>
    %93 = vector.extract_strided_slice %60 {offsets = [0, 384], sizes = [128, 128], strides = [1, 1]} : vector<128x512xbf16> to vector<128x128xbf16>
    %cst_36 = arith.constant dense<0.000000e+00> : vector<64x128xf32>
    %94 = tpu.matmul %91, %92, %cst_36 {dimension_numbers = #tpu.dot_dimension_numbers<[1], [1], [0], [0], [0, 0, 1, 0], [], []>} : vector<64x128xbf16>, vector<128x128xbf16>, vector<64x128xf32> -> vector<64x128xf32>
    %95 = arith.addf %94, %67 : vector<64x128xf32>
    %cst_37 = arith.constant dense<0xFF800000> : vector<64xf32>
    %96 = vector.multi_reduction <maximumf>, %95, %cst_37 [1] : vector<64x128xf32> to vector<64xf32>
    %97 = vector.shape_cast %96 : vector<64xf32> to vector<64x1xf32>
    %98 = vector.broadcast %97 : vector<64x1xf32> to vector<64x128xf32>
    %99 = arith.subf %95, %98 : vector<64x128xf32>
    %100 = math.exp %99 : vector<64x128xf32>
    %cst_38 = arith.constant dense<0.000000e+00> : vector<64xf32>
    %101 = vector.multi_reduction <add>, %100, %cst_38 [1] : vector<64x128xf32> to vector<64xf32>
    %102 = vector.shape_cast %101 : vector<64xf32> to vector<64x1xf32>
    %cst_39 = arith.constant 1.000000e+00 : f32
    %103 = vector.broadcast %cst_39 : f32 to vector<64x1xf32>
    %104 = arith.divf %103, %102 : vector<64x1xf32>
    %105 = vector.broadcast %104 : vector<64x1xf32> to vector<64x128xf32>
    %106 = arith.mulf %100, %105 : vector<64x128xf32>
    %107 = arith.truncf %106 : vector<64x128xf32> to vector<64x128xbf16>
    %cst_40 = arith.constant dense<0.000000e+00> : vector<64x128xf32>
    %108 = tpu.matmul %107, %93, %cst_40 {dimension_numbers = #tpu.dot_dimension_numbers<[1], [0], [0], [1], [0, 0, 1, 1], [], []>} : vector<64x128xbf16>, vector<128x128xbf16>, vector<64x128xf32> -> vector<64x128xf32>
    %109 = arith.truncf %108 : vector<64x128xf32> to vector<64x128xbf16>
    %c128 = arith.constant 128 : index
    %c0_41 = arith.constant 0 : index
    %110 = vector.load %arg7[%c128, %c0_41] : memref<256x256xbf16, #tpu.memory_space<vmem>>, vector<128x256xbf16>
    %cst_42 = arith.constant dense<0.000000e+00> : vector<64x256xf32>
    %111 = tpu.matmul %109, %110, %cst_42 {dimension_numbers = #tpu.dot_dimension_numbers<[1], [0], [0], [1], [0, 0, 1, 1], [], []>} : vector<64x128xbf16>, vector<128x256xbf16>, vector<64x256xf32> -> vector<64x256xf32>
    %112 = arith.addf %90, %111 : vector<64x256xf32>
    %113 = arith.addf %6, %112 : vector<64x256xf32>
    %c0_43 = arith.constant 0 : index
    %c0_44 = arith.constant 0 : index
    %114 = vector.load %arg8[%c0_43, %c0_44] : memref<1x256xf32, #tpu.memory_space<vmem>>, vector<1x256xf32>
    %115 = vector.broadcast %114 : vector<1x256xf32> to vector<64x256xf32>
    %116 = arith.addf %113, %115 : vector<64x256xf32>
    %c0_45 = arith.constant 0 : index
    %c0_46 = arith.constant 0 : index
    %117 = vector.load %arg9[%c0_45, %c0_46] : memref<1x256xf32, #tpu.memory_space<vmem>>, vector<1x256xf32>
    %c0_47 = arith.constant 0 : index
    %c0_48 = arith.constant 0 : index
    %118 = vector.load %arg10[%c0_47, %c0_48] : memref<1x256xf32, #tpu.memory_space<vmem>>, vector<1x256xf32>
    %cst_49 = arith.constant dense<0.000000e+00> : vector<64xf32>
    %119 = vector.multi_reduction <add>, %116, %cst_49 [1] : vector<64x256xf32> to vector<64xf32>
    %120 = vector.shape_cast %119 : vector<64xf32> to vector<64x1xf32>
    %cst_50 = arith.constant 2.560000e+02 : f32
    %121 = vector.broadcast %cst_50 : f32 to vector<64x1xf32>
    %122 = arith.divf %120, %121 : vector<64x1xf32>
    %123 = vector.broadcast %122 : vector<64x1xf32> to vector<64x256xf32>
    %124 = arith.subf %116, %123 : vector<64x256xf32>
    %125 = arith.mulf %124, %124 : vector<64x256xf32>
    %cst_51 = arith.constant dense<0.000000e+00> : vector<64xf32>
    %126 = vector.multi_reduction <add>, %125, %cst_51 [1] : vector<64x256xf32> to vector<64xf32>
    %127 = vector.shape_cast %126 : vector<64xf32> to vector<64x1xf32>
    %cst_52 = arith.constant 2.560000e+02 : f32
    %128 = vector.broadcast %cst_52 : f32 to vector<64x1xf32>
    %129 = arith.divf %127, %128 : vector<64x1xf32>
    %130 = vector.broadcast %122 : vector<64x1xf32> to vector<64x256xf32>
    %131 = arith.subf %116, %130 : vector<64x256xf32>
    %cst_53 = arith.constant 9.99999974E-6 : f32
    %132 = vector.broadcast %cst_53 : f32 to vector<64x1xf32>
    %133 = arith.addf %129, %132 : vector<64x1xf32>
    %134 = math.rsqrt %133 : vector<64x1xf32>
    %135 = vector.broadcast %134 : vector<64x1xf32> to vector<64x256xf32>
    %136 = arith.mulf %131, %135 : vector<64x256xf32>
    %137 = vector.broadcast %117 : vector<1x256xf32> to vector<64x256xf32>
    %138 = arith.mulf %136, %137 : vector<64x256xf32>
    %139 = vector.broadcast %118 : vector<1x256xf32> to vector<64x256xf32>
    %140 = arith.addf %138, %139 : vector<64x256xf32>
    %141 = arith.truncf %140 : vector<64x256xf32> to vector<64x256xbf16>
    %c0_54 = arith.constant 0 : index
    %c0_55 = arith.constant 0 : index
    %142 = vector.load %arg11[%c0_54, %c0_55] : memref<256x512xbf16, #tpu.memory_space<vmem>>, vector<256x512xbf16>
    %cst_56 = arith.constant dense<0.000000e+00> : vector<64x512xf32>
    %143 = tpu.matmul %141, %142, %cst_56 {dimension_numbers = #tpu.dot_dimension_numbers<[1], [0], [0], [1], [0, 0, 1, 1], [], []>} : vector<64x256xbf16>, vector<256x512xbf16>, vector<64x512xf32> -> vector<64x512xf32>
    %c0_57 = arith.constant 0 : index
    %c0_58 = arith.constant 0 : index
    %144 = vector.load %arg12[%c0_57, %c0_58] : memref<1x512xf32, #tpu.memory_space<vmem>>, vector<1x512xf32>
    %145 = vector.broadcast %144 : vector<1x512xf32> to vector<64x512xf32>
    %146 = arith.addf %143, %145 : vector<64x512xf32>
    %cst_59 = arith.constant 0.000000e+00 : f32
    %147 = vector.broadcast %cst_59 : f32 to vector<64x512xf32>
    %148 = arith.maximumf %146, %147 : vector<64x512xf32>
    %149 = arith.truncf %148 : vector<64x512xf32> to vector<64x512xbf16>
    %c0_60 = arith.constant 0 : index
    %c0_61 = arith.constant 0 : index
    %150 = vector.load %arg13[%c0_60, %c0_61] : memref<512x256xbf16, #tpu.memory_space<vmem>>, vector<512x256xbf16>
    %cst_62 = arith.constant dense<0.000000e+00> : vector<64x256xf32>
    %151 = tpu.matmul %149, %150, %cst_62 {dimension_numbers = #tpu.dot_dimension_numbers<[1], [0], [0], [1], [0, 0, 1, 1], [], []>} : vector<64x512xbf16>, vector<512x256xbf16>, vector<64x256xf32> -> vector<64x256xf32>
    %152 = arith.addf %116, %151 : vector<64x256xf32>
    %c0_63 = arith.constant 0 : index
    %c0_64 = arith.constant 0 : index
    %153 = vector.load %arg14[%c0_63, %c0_64] : memref<1x256xf32, #tpu.memory_space<vmem>>, vector<1x256xf32>
    %154 = vector.broadcast %153 : vector<1x256xf32> to vector<64x256xf32>
    %155 = arith.addf %152, %154 : vector<64x256xf32>
    %c0_65 = arith.constant 0 : index
    %c0_66 = arith.constant 0 : index
    %c0_67 = arith.constant 0 : index
    %156 = vector.load %arg15[%c0_65, %c0_66, %c0_67] : memref<1x64x256xf32, #tpu.memory_space<vmem>>, vector<1x64x256xf32>
    %157 = vector.shape_cast %156 : vector<1x64x256xf32> to vector<64x256xf32>
    %158 = vector.shape_cast %155 : vector<64x256xf32> to vector<1x64x256xf32>
    tpu.vector_store %arg15[%c0_65, %c0_66, %c0_67], %158 {strides = array<i32>} : memref<1x64x256xf32, #tpu.memory_space<vmem>>, vector<1x64x256xf32>,
    return
  }
  func.func @transform_0(%arg0: i32, %arg1: i32) -> (i32, i32, i32) {
    %c0_i32 = arith.constant 0 : i32
    %c0_i32_0 = arith.constant 0 : i32
    %c0_i32_1 = arith.constant 0 : i32
    return %arg0, %c0_i32, %c0_i32_0 : i32, i32, i32
  }
  func.func @transform_1(%arg0: i32, %arg1: i32) -> (i32, i32) {
    %c0_i32 = arith.constant 0 : i32
    %c0_i32_0 = arith.constant 0 : i32
    return %arg1, %c0_i32 : i32, i32
  }
  func.func @transform_2(%arg0: i32, %arg1: i32) -> (i32, i32) {
    %c0_i32 = arith.constant 0 : i32
    %c0_i32_0 = arith.constant 0 : i32
    %c0_i32_1 = arith.constant 0 : i32
    return %c0_i32, %c0_i32_0 : i32, i32
  }
  func.func @transform_3(%arg0: i32, %arg1: i32) -> (i32, i32) {
    %c0_i32 = arith.constant 0 : i32
    %c0_i32_0 = arith.constant 0 : i32
    %c0_i32_1 = arith.constant 0 : i32
    return %c0_i32, %c0_i32_0 : i32, i32
  }
  func.func @transform_4(%arg0: i32, %arg1: i32) -> (i32, i32) {
    %c0_i32 = arith.constant 0 : i32
    %c0_i32_0 = arith.constant 0 : i32
    %c0_i32_1 = arith.constant 0 : i32
    return %c0_i32, %c0_i32_0 : i32, i32
  }
  func.func @transform_5(%arg0: i32, %arg1: i32) -> (i32, i32) {
    %c0_i32 = arith.constant 0 : i32
    %c0_i32_0 = arith.constant 0 : i32
    %c0_i32_1 = arith.constant 0 : i32
    return %c0_i32, %c0_i32_0 : i32, i32
  }
  func.func @transform_6(%arg0: i32, %arg1: i32) -> (i32, i32) {
    %c0_i32 = arith.constant 0 : i32
    %c0_i32_0 = arith.constant 0 : i32
    %c0_i32_1 = arith.constant 0 : i32
    return %c0_i32, %c0_i32_0 : i32, i32
  }
  func.func @transform_7(%arg0: i32, %arg1: i32) -> (i32, i32) {
    %c0_i32 = arith.constant 0 : i32
    %c0_i32_0 = arith.constant 0 : i32
    %c0_i32_1 = arith.constant 0 : i32
    return %c0_i32, %c0_i32_0 : i32, i32
  }
  func.func @transform_8(%arg0: i32, %arg1: i32) -> (i32, i32) {
    %c0_i32 = arith.constant 0 : i32
    %c0_i32_0 = arith.constant 0 : i32
    %c0_i32_1 = arith.constant 0 : i32
    return %c0_i32, %c0_i32_0 : i32, i32
  }
  func.func @transform_9(%arg0: i32, %arg1: i32) -> (i32, i32) {
    %c0_i32 = arith.constant 0 : i32
    %c0_i32_0 = arith.constant 0 : i32
    %c0_i32_1 = arith.constant 0 : i32
    return %c0_i32, %c0_i32_0 : i32, i32
  }
  func.func @transform_10(%arg0: i32, %arg1: i32) -> (i32, i32) {
    %c0_i32 = arith.constant 0 : i32
    %c0_i32_0 = arith.constant 0 : i32
    %c0_i32_1 = arith.constant 0 : i32
    return %c0_i32, %c0_i32_0 : i32, i32
  }
  func.func @transform_11(%arg0: i32, %arg1: i32) -> (i32, i32) {
    %c0_i32 = arith.constant 0 : i32
    %c0_i32_0 = arith.constant 0 : i32
    %c0_i32_1 = arith.constant 0 : i32
    return %c0_i32, %c0_i32_0 : i32, i32
  }
  func.func @transform_12(%arg0: i32, %arg1: i32) -> (i32, i32) {
    %c0_i32 = arith.constant 0 : i32
    %c0_i32_0 = arith.constant 0 : i32
    %c0_i32_1 = arith.constant 0 : i32
    return %c0_i32, %c0_i32_0 : i32, i32
  }
  func.func @transform_13(%arg0: i32, %arg1: i32) -> (i32, i32, i32) {
    %c0_i32 = arith.constant 0 : i32
    %c0_i32_0 = arith.constant 0 : i32
    return %arg0, %arg1, %c0_i32 : i32, i32, i32
  }
}

module attributes {stable_mosaic.version = 11 : i64} {
  func.func @_transformer_block_kernel(%arg0: i32, %arg1: i32, %arg2: memref<1x128x256xf32, #tpu.memory_space<vmem>>, %arg3: memref<64x128xbf16, #tpu.memory_space<vmem>>, %arg4: memref<1x256xf32, #tpu.memory_space<vmem>>, %arg5: memref<1x256xf32, #tpu.memory_space<vmem>>, %arg6: memref<256x768xbf16, #tpu.memory_space<vmem>>, %arg7: memref<256x256xbf16, #tpu.memory_space<vmem>>, %arg8: memref<1x256xf32, #tpu.memory_space<vmem>>, %arg9: memref<1x256xf32, #tpu.memory_space<vmem>>, %arg10: memref<1x256xf32, #tpu.memory_space<vmem>>, %arg11: memref<256x512xbf16, #tpu.memory_space<vmem>>, %arg12: memref<1x512xf32, #tpu.memory_space<vmem>>, %arg13: memref<512x256xbf16, #tpu.memory_space<vmem>>, %arg14: memref<1x256xf32, #tpu.memory_space<vmem>>, %arg15: memref<1x64x256xf32, #tpu.memory_space<vmem>>) attributes {dimension_semantics = [#tpu.dimension_semantics<parallel>, #tpu.dimension_semantics<parallel>], iteration_bounds = array<i64: 2, 2>, scalar_prefetch = 0 : i64, scratch_operands = 0 : i64, tpu.core_type = #tpu.core_type<tc>, window_params = [{transform_indices = @transform_0, window_bounds = array<i64: 1, 128, 256>}, {transform_indices = @transform_1, window_bounds = array<i64: 64, 128>}, {pipeline_mode = #tpu.pipeline_mode<synchronous>, transform_indices = @transform_2, window_bounds = array<i64: 1, 256>}, {pipeline_mode = #tpu.pipeline_mode<synchronous>, transform_indices = @transform_3, window_bounds = array<i64: 1, 256>}, {pipeline_mode = #tpu.pipeline_mode<synchronous>, transform_indices = @transform_4, window_bounds = array<i64: 256, 768>}, {pipeline_mode = #tpu.pipeline_mode<synchronous>, transform_indices = @transform_5, window_bounds = array<i64: 256, 256>}, {pipeline_mode = #tpu.pipeline_mode<synchronous>, transform_indices = @transform_6, window_bounds = array<i64: 1, 256>}, {pipeline_mode = #tpu.pipeline_mode<synchronous>, transform_indices = @transform_7, window_bounds = array<i64: 1, 256>}, {pipeline_mode = #tpu.pipeline_mode<synchronous>, transform_indices = @transform_8, window_bounds = array<i64: 1, 256>}, {pipeline_mode = #tpu.pipeline_mode<synchronous>, transform_indices = @transform_9, window_bounds = array<i64: 256, 512>}, {pipeline_mode = #tpu.pipeline_mode<synchronous>, transform_indices = @transform_10, window_bounds = array<i64: 1, 512>}, {pipeline_mode = #tpu.pipeline_mode<synchronous>, transform_indices = @transform_11, window_bounds = array<i64: 512, 256>}, {pipeline_mode = #tpu.pipeline_mode<synchronous>, transform_indices = @transform_12, window_bounds = array<i64: 1, 256>}, {transform_indices = @transform_13, window_bounds = array<i64: 1, 64, 256>}]} {
    %c64_i32 = arith.constant 64 : i32
    %0 = arith.muli %arg1, %c64_i32 : i32
    %1 = tpu.assume_multiple %0, 64 : i32
    %c0 = arith.constant 0 : index
    %c0_0 = arith.constant 0 : index
    %c0_1 = arith.constant 0 : index
    %2 = vector.load %arg2[%c0, %c0_0, %c0_1] : memref<1x128x256xf32, #tpu.memory_space<vmem>>, vector<1x128x256xf32>
    %3 = vector.shape_cast %2 : vector<1x128x256xf32> to vector<128x256xf32>
    %c0_2 = arith.constant 0 : index
    %4 = arith.index_cast %1 : i32 to index
    %c0_3 = arith.constant 0 : index
    %5 = vector.load %arg2[%c0_2, %4, %c0_3] : memref<1x128x256xf32, #tpu.memory_space<vmem>>, vector<1x64x256xf32>
    %6 = vector.shape_cast %5 : vector<1x64x256xf32> to vector<64x256xf32>
    %c0_4 = arith.constant 0 : index
    %c0_5 = arith.constant 0 : index
    %7 = vector.load %arg4[%c0_4, %c0_5] : memref<1x256xf32, #tpu.memory_space<vmem>>, vector<1x256xf32>
    %c0_6 = arith.constant 0 : index
    %c0_7 = arith.constant 0 : index
    %8 = vector.load %arg5[%c0_6, %c0_7] : memref<1x256xf32, #tpu.memory_space<vmem>>, vector<1x256xf32>
    %cst = arith.constant dense<0.000000e+00> : vector<128xf32>
    %9 = vector.multi_reduction <add>, %3, %cst [1] : vector<128x256xf32> to vector<128xf32>
    %10 = vector.shape_cast %9 : vector<128xf32> to vector<128x1xf32>
    %cst_8 = arith.constant 2.560000e+02 : f32
    %11 = vector.broadcast %cst_8 : f32 to vector<128x1xf32>
    %12 = arith.divf %10, %11 : vector<128x1xf32>
    %13 = vector.broadcast %12 : vector<128x1xf32> to vector<128x256xf32>
    %14 = arith.subf %3, %13 : vector<128x256xf32>
    %15 = arith.mulf %14, %14 : vector<128x256xf32>
    %cst_9 = arith.constant dense<0.000000e+00> : vector<128xf32>
    %16 = vector.multi_reduction <add>, %15, %cst_9 [1] : vector<128x256xf32> to vector<128xf32>
    %17 = vector.shape_cast %16 : vector<128xf32> to vector<128x1xf32>
    %cst_10 = arith.constant 2.560000e+02 : f32
    %18 = vector.broadcast %cst_10 : f32 to vector<128x1xf32>
    %19 = arith.divf %17, %18 : vector<128x1xf32>
    %20 = vector.broadcast %12 : vector<128x1xf32> to vector<128x256xf32>
    %21 = arith.subf %3, %20 : vector<128x256xf32>
    %cst_11 = arith.constant 9.99999974E-6 : f32
    %22 = vector.broadcast %cst_11 : f32 to vector<128x1xf32>
    %23 = arith.addf %19, %22 : vector<128x1xf32>
    %24 = math.rsqrt %23 : vector<128x1xf32>
    %25 = vector.broadcast %24 : vector<128x1xf32> to vector<128x256xf32>
    %26 = arith.mulf %21, %25 : vector<128x256xf32>
    %27 = vector.broadcast %7 : vector<1x256xf32> to vector<128x256xf32>
    %28 = arith.mulf %26, %27 : vector<128x256xf32>
    %29 = vector.broadcast %8 : vector<1x256xf32> to vector<128x256xf32>
    %30 = arith.addf %28, %29 : vector<128x256xf32>
    %31 = arith.truncf %30 : vector<128x256xf32> to vector<128x256xbf16>
    %cst_12 = arith.constant dense<0.000000e+00> : vector<64xf32>
    %32 = vector.multi_reduction <add>, %6, %cst_12 [1] : vector<64x256xf32> to vector<64xf32>
    %33 = vector.shape_cast %32 : vector<64xf32> to vector<64x1xf32>
    %cst_13 = arith.constant 2.560000e+02 : f32
    %34 = vector.broadcast %cst_13 : f32 to vector<64x1xf32>
    %35 = arith.divf %33, %34 : vector<64x1xf32>
    %36 = vector.broadcast %35 : vector<64x1xf32> to vector<64x256xf32>
    %37 = arith.subf %6, %36 : vector<64x256xf32>
    %38 = arith.mulf %37, %37 : vector<64x256xf32>
    %cst_14 = arith.constant dense<0.000000e+00> : vector<64xf32>
    %39 = vector.multi_reduction <add>, %38, %cst_14 [1] : vector<64x256xf32> to vector<64xf32>
    %40 = vector.shape_cast %39 : vector<64xf32> to vector<64x1xf32>
    %cst_15 = arith.constant 2.560000e+02 : f32
    %41 = vector.broadcast %cst_15 : f32 to vector<64x1xf32>
    %42 = arith.divf %40, %41 : vector<64x1xf32>
    %43 = vector.broadcast %35 : vector<64x1xf32> to vector<64x256xf32>
    %44 = arith.subf %6, %43 : vector<64x256xf32>
    %cst_16 = arith.constant 9.99999974E-6 : f32
    %45 = vector.broadcast %cst_16 : f32 to vector<64x1xf32>
    %46 = arith.addf %42, %45 : vector<64x1xf32>
    %47 = math.rsqrt %46 : vector<64x1xf32>
    %48 = vector.broadcast %47 : vector<64x1xf32> to vector<64x256xf32>
    %49 = arith.mulf %44, %48 : vector<64x256xf32>
    %50 = vector.broadcast %7 : vector<1x256xf32> to vector<64x256xf32>
    %51 = arith.mulf %49, %50 : vector<64x256xf32>
    %52 = vector.broadcast %8 : vector<1x256xf32> to vector<64x256xf32>
    %53 = arith.addf %51, %52 : vector<64x256xf32>
    %54 = arith.truncf %53 : vector<64x256xf32> to vector<64x256xbf16>
    %c0_17 = arith.constant 0 : index
    %c0_18 = arith.constant 0 : index
    %55 = vector.load %arg6[%c0_17, %c0_18] : memref<256x768xbf16, #tpu.memory_space<vmem>>, vector<256x256xbf16>
    %cst_19 = arith.constant dense<0.000000e+00> : vector<64x256xf32>
    %56 = tpu.matmul %54, %55, %cst_19 {dimension_numbers = #tpu.dot_dimension_numbers<[1], [0], [0], [1], [0, 0, 1, 1], [], []>} : vector<64x256xbf16>, vector<256x256xbf16>, vector<64x256xf32> -> vector<64x256xf32>
    %57 = arith.truncf %56 : vector<64x256xf32> to vector<64x256xbf16>
    %c0_20 = arith.constant 0 : index
    %c256 = arith.constant 256 : index
    %58 = vector.load %arg6[%c0_20, %c256] : memref<256x768xbf16, #tpu.memory_space<vmem>>, vector<256x512xbf16>
    %cst_21 = arith.constant dense<0.000000e+00> : vector<128x512xf32>
    %59 = tpu.matmul %31, %58, %cst_21 {dimension_numbers = #tpu.dot_dimension_numbers<[1], [0], [0], [1], [0, 0, 1, 1], [], []>} : vector<128x256xbf16>, vector<256x512xbf16>, vector<128x512xf32> -> vector<128x512xf32>
    %60 = arith.truncf %59 : vector<128x512xf32> to vector<128x512xbf16>
    %c0_22 = arith.constant 0 : index
    %c0_23 = arith.constant 0 : index
    %61 = vector.load %arg3[%c0_22, %c0_23] : memref<64x128xbf16, #tpu.memory_space<vmem>>, vector<64x128xbf16>
    %62 = arith.extf %61 : vector<64x128xbf16> to vector<64x128xf32>
    %cst_24 = arith.constant 0.000000e+00 : f32
    %63 = vector.broadcast %cst_24 : f32 to vector<64x128xf32>
    %64 = arith.cmpf oeq, %62, %63 : vector<64x128xf32>
    %cst_25 = arith.constant -1.000000e+09 : f32
    %cst_26 = arith.constant 0.000000e+00 : f32
    %65 = vector.broadcast %cst_25 : f32 to vector<64x128xf32>
    %66 = vector.broadcast %cst_26 : f32 to vector<64x128xf32>
    %67 = arith.select %64, %65, %66 : vector<64x128xi1>, vector<64x128xf32>
    %cst_27 = arith.constant 0.000000e+00 : f32
    %68 = vector.broadcast %cst_27 : f32 to vector<64x256xf32>
    %69 = vector.extract_strided_slice %57 {offsets = [0, 0], sizes = [64, 128], strides = [1, 1]} : vector<64x256xbf16> to vector<64x128xbf16>
    %70 = vector.extract_strided_slice %60 {offsets = [0, 0], sizes = [128, 128], strides = [1, 1]} : vector<128x512xbf16> to vector<128x128xbf16>
    %71 = vector.extract_strided_slice %60 {offsets = [0, 256], sizes = [128, 128], strides = [1, 1]} : vector<128x512xbf16> to vector<128x128xbf16>
    %cst_28 = arith.constant dense<0.000000e+00> : vector<64x128xf32>
    %72 = tpu.matmul %69, %70, %cst_28 {dimension_numbers = #tpu.dot_dimension_numbers<[1], [1], [0], [0], [0, 0, 1, 0], [], []>} : vector<64x128xbf16>, vector<128x128xbf16>, vector<64x128xf32> -> vector<64x128xf32>
    %73 = arith.addf %72, %67 : vector<64x128xf32>
    %cst_29 = arith.constant dense<0xFF800000> : vector<64xf32>
    %74 = vector.multi_reduction <maximumf>, %73, %cst_29 [1] : vector<64x128xf32> to vector<64xf32>
    %75 = vector.shape_cast %74 : vector<64xf32> to vector<64x1xf32>
    %76 = vector.broadcast %75 : vector<64x1xf32> to vector<64x128xf32>
    %77 = arith.subf %73, %76 : vector<64x128xf32>
    %78 = math.exp %77 : vector<64x128xf32>
    %cst_30 = arith.constant dense<0.000000e+00> : vector<64xf32>
    %79 = vector.multi_reduction <add>, %78, %cst_30 [1] : vector<64x128xf32> to vector<64xf32>
    %80 = vector.shape_cast %79 : vector<64xf32> to vector<64x1xf32>
    %cst_31 = arith.constant 1.000000e+00 : f32
    %81 = vector.broadcast %cst_31 : f32 to vector<64x1xf32>
    %82 = arith.divf %81, %80 : vector<64x1xf32>
    %83 = vector.broadcast %82 : vector<64x1xf32> to vector<64x128xf32>
    %84 = arith.mulf %78, %83 : vector<64x128xf32>
    %85 = arith.truncf %84 : vector<64x128xf32> to vector<64x128xbf16>
    %cst_32 = arith.constant dense<0.000000e+00> : vector<64x128xf32>
    %86 = tpu.matmul %85, %71, %cst_32 {dimension_numbers = #tpu.dot_dimension_numbers<[1], [0], [0], [1], [0, 0, 1, 1], [], []>} : vector<64x128xbf16>, vector<128x128xbf16>, vector<64x128xf32> -> vector<64x128xf32>
    %87 = arith.truncf %86 : vector<64x128xf32> to vector<64x128xbf16>
    %c0_33 = arith.constant 0 : index
    %c0_34 = arith.constant 0 : index
    %88 = vector.load %arg7[%c0_33, %c0_34] : memref<256x256xbf16, #tpu.memory_space<vmem>>, vector<128x256xbf16>
    %cst_35 = arith.constant dense<0.000000e+00> : vector<64x256xf32>
    %89 = tpu.matmul %87, %88, %cst_35 {dimension_numbers = #tpu.dot_dimension_numbers<[1], [0], [0], [1], [0, 0, 1, 1], [], []>} : vector<64x128xbf16>, vector<128x256xbf16>, vector<64x256xf32> -> vector<64x256xf32>
    %90 = arith.addf %68, %89 : vector<64x256xf32>
    %91 = vector.extract_strided_slice %57 {offsets = [0, 128], sizes = [64, 128], strides = [1, 1]} : vector<64x256xbf16> to vector<64x128xbf16>
    %92 = vector.extract_strided_slice %60 {offsets = [0, 128], sizes = [128, 128], strides = [1, 1]} : vector<128x512xbf16> to vector<128x128xbf16>
    %93 = vector.extract_strided_slice %60 {offsets = [0, 384], sizes = [128, 128], strides = [1, 1]} : vector<128x512xbf16> to vector<128x128xbf16>
    %cst_36 = arith.constant dense<0.000000e+00> : vector<64x128xf32>
    %94 = tpu.matmul %91, %92, %cst_36 {dimension_numbers = #tpu.dot_dimension_numbers<[1], [1], [0], [0], [0, 0, 1, 0], [], []>} : vector<64x128xbf16>, vector<128x128xbf16>, vector<64x128xf32> -> vector<64x128xf32>
    %95 = arith.addf %94, %67 : vector<64x128xf32>
    %cst_37 = arith.constant dense<0xFF800000> : vector<64xf32>
    %96 = vector.multi_reduction <maximumf>, %95, %cst_37 [1] : vector<64x128xf32> to vector<64xf32>
    %97 = vector.shape_cast %96 : vector<64xf32> to vector<64x1xf32>
    %98 = vector.broadcast %97 : vector<64x1xf32> to vector<64x128xf32>
    %99 = arith.subf %95, %98 : vector<64x128xf32>
    %100 = math.exp %99 : vector<64x128xf32>
    %cst_38 = arith.constant dense<0.000000e+00> : vector<64xf32>
    %101 = vector.multi_reduction <add>, %100, %cst_38 [1] : vector<64x128xf32> to vector<64xf32>
    %102 = vector.shape_cast %101 : vector<64xf32> to vector<64x1xf32>
    %cst_39 = arith.constant 1.000000e+00 : f32
    %103 = vector.broadcast %cst_39 : f32 to vector<64x1xf32>
    %104 = arith.divf %103, %102 : vector<64x1xf32>
    %105 = vector.broadcast %104 : vector<64x1xf32> to vector<64x128xf32>
    %106 = arith.mulf %100, %105 : vector<64x128xf32>
    %107 = arith.truncf %106 : vector<64x128xf32> to vector<64x128xbf16>
    %cst_40 = arith.constant dense<0.000000e+00> : vector<64x128xf32>
    %108 = tpu.matmul %107, %93, %cst_40 {dimension_numbers = #tpu.dot_dimension_numbers<[1], [0], [0], [1], [0, 0, 1, 1], [], []>} : vector<64x128xbf16>, vector<128x128xbf16>, vector<64x128xf32> -> vector<64x128xf32>
    %109 = arith.truncf %108 : vector<64x128xf32> to vector<64x128xbf16>
    %c128 = arith.constant 128 : index
    %c0_41 = arith.constant 0 : index
    %110 = vector.load %arg7[%c128, %c0_41] : memref<256x256xbf16, #tpu.memory_space<vmem>>, vector<128x256xbf16>
    %cst_42 = arith.constant dense<0.000000e+00> : vector<64x256xf32>
    %111 = tpu.matmul %109, %110, %cst_42 {dimension_numbers = #tpu.dot_dimension_numbers<[1], [0], [0], [1], [0, 0, 1, 1], [], []>} : vector<64x128xbf16>, vector<128x256xbf16>, vector<64x256xf32> -> vector<64x256xf32>
    %112 = arith.addf %90, %111 : vector<64x256xf32>
    %113 = arith.addf %6, %112 : vector<64x256xf32>
    %c0_43 = arith.constant 0 : index
    %c0_44 = arith.constant 0 : index
    %114 = vector.load %arg8[%c0_43, %c0_44] : memref<1x256xf32, #tpu.memory_space<vmem>>, vector<1x256xf32>
    %115 = vector.broadcast %114 : vector<1x256xf32> to vector<64x256xf32>
    %116 = arith.addf %113, %115 : vector<64x256xf32>
    %c0_45 = arith.constant 0 : index
    %c0_46 = arith.constant 0 : index
    %117 = vector.load %arg9[%c0_45, %c0_46] : memref<1x256xf32, #tpu.memory_space<vmem>>, vector<1x256xf32>
    %c0_47 = arith.constant 0 : index
    %c0_48 = arith.constant 0 : index
    %118 = vector.load %arg10[%c0_47, %c0_48] : memref<1x256xf32, #tpu.memory_space<vmem>>, vector<1x256xf32>
    %cst_49 = arith.constant dense<0.000000e+00> : vector<64xf32>
    %119 = vector.multi_reduction <add>, %116, %cst_49 [1] : vector<64x256xf32> to vector<64xf32>
    %120 = vector.shape_cast %119 : vector<64xf32> to vector<64x1xf32>
    %cst_50 = arith.constant 2.560000e+02 : f32
    %121 = vector.broadcast %cst_50 : f32 to vector<64x1xf32>
    %122 = arith.divf %120, %121 : vector<64x1xf32>
    %123 = vector.broadcast %122 : vector<64x1xf32> to vector<64x256xf32>
    %124 = arith.subf %116, %123 : vector<64x256xf32>
    %125 = arith.mulf %124, %124 : vector<64x256xf32>
    %cst_51 = arith.constant dense<0.000000e+00> : vector<64xf32>
    %126 = vector.multi_reduction <add>, %125, %cst_51 [1] : vector<64x256xf32> to vector<64xf32>
    %127 = vector.shape_cast %126 : vector<64xf32> to vector<64x1xf32>
    %cst_52 = arith.constant 2.560000e+02 : f32
    %128 = vector.broadcast %cst_52 : f32 to vector<64x1xf32>
    %129 = arith.divf %127, %128 : vector<64x1xf32>
    %130 = vector.broadcast %122 : vector<64x1xf32> to vector<64x256xf32>
    %131 = arith.subf %116, %130 : vector<64x256xf32>
    %cst_53 = arith.constant 9.99999974E-6 : f32
    %132 = vector.broadcast %cst_53 : f32 to vector<64x1xf32>
    %133 = arith.addf %129, %132 : vector<64x1xf32>
    %134 = math.rsqrt %133 : vector<64x1xf32>
    %135 = vector.broadcast %134 : vector<64x1xf32> to vector<64x256xf32>
    %136 = arith.mulf %131, %135 : vector<64x256xf32>
    %137 = vector.broadcast %117 : vector<1x256xf32> to vector<64x256xf32>
    %138 = arith.mulf %136, %137 : vector<64x256xf32>
    %139 = vector.broadcast %118 : vector<1x256xf32> to vector<64x256xf32>
    %140 = arith.addf %138, %139 : vector<64x256xf32>
    %141 = arith.truncf %140 : vector<64x256xf32> to vector<64x256xbf16>
    %c0_54 = arith.constant 0 : index
    %c0_55 = arith.constant 0 : index
    %142 = vector.load %arg11[%c0_54, %c0_55] : memref<256x512xbf16, #tpu.memory_space<vmem>>, vector<256x512xbf16>
    %cst_56 = arith.constant dense<0.000000e+00> : vector<64x512xf32>
    %143 = tpu.matmul %141, %142, %cst_56 {dimension_numbers = #tpu.dot_dimension_numbers<[1], [0], [0], [1], [0, 0, 1, 1], [], []>} : vector<64x256xbf16>, vector<256x512xbf16>, vector<64x512xf32> -> vector<64x512xf32>
    %c0_57 = arith.constant 0 : index
    %c0_58 = arith.constant 0 : index
    %144 = vector.load %arg12[%c0_57, %c0_58] : memref<1x512xf32, #tpu.memory_space<vmem>>, vector<1x512xf32>
    %145 = vector.broadcast %144 : vector<1x512xf32> to vector<64x512xf32>
    %146 = arith.addf %143, %145 : vector<64x512xf32>
    %cst_59 = arith.constant 0.000000e+00 : f32
    %147 = vector.broadcast %cst_59 : f32 to vector<64x512xf32>
    %148 = arith.maximumf %146, %147 : vector<64x512xf32>
    %149 = arith.truncf %148 : vector<64x512xf32> to vector<64x512xbf16>
    %c0_60 = arith.constant 0 : index
    %c0_61 = arith.constant 0 : index
    %150 = vector.load %arg13[%c0_60, %c0_61] : memref<512x256xbf16, #tpu.memory_space<vmem>>, vector<512x256xbf16>
    %cst_62 = arith.constant dense<0.000000e+00> : vector<64x256xf32>
    %151 = tpu.matmul %149, %150, %cst_62 {dimension_numbers = #tpu.dot_dimension_numbers<[1], [0], [0], [1], [0, 0, 1, 1], [], []>} : vector<64x512xbf16>, vector<512x256xbf16>, vector<64x256xf32> -> vector<64x256xf32>
    %152 = arith.addf %116, %151 : vector<64x256xf32>
    %c0_63 = arith.constant 0 : index
    %c0_64 = arith.constant 0 : index
    %153 = vector.load %arg14[%c0_63, %c0_64] : memref<1x256xf32, #tpu.memory_space<vmem>>, vector<1x256xf32>
    %154 = vector.broadcast %153 : vector<1x256xf32> to vector<64x256xf32>
    %155 = arith.addf %152, %154 : vector<64x256xf32>
    %c0_65 = arith.constant 0 : index
    %c0_66 = arith.constant 0 : index
    %c0_67 = arith.constant 0 : index
    %156 = vector.load %arg15[%c0_65, %c0_66, %c0_67] : memref<1x64x256xf32, #tpu.memory_space<vmem>>, vector<1x64x256xf32>
    %157 = vector.shape_cast %156 : vector<1x64x256xf32> to vector<64x256xf32>
    %158 = vector.shape_cast %155 : vector<64x256xf32> to vector<1x64x256xf32>
    tpu.vector_store %arg15[%c0_65, %c0_66, %c0_67], %158 {strides = array<i32>} : memref<1x64x256xf32, #tpu.memory_space<vmem>>, vector<1x64x256xf32>,
    return
  }
  func.func @transform_0(%arg0: i32, %arg1: i32) -> (i32, i32, i32) {
    %c0_i32 = arith.constant 0 : i32
    %c0_i32_0 = arith.constant 0 : i32
    %c0_i32_1 = arith.constant 0 : i32
    return %arg0, %c0_i32, %c0_i32_0 : i32, i32, i32
  }
  func.func @transform_1(%arg0: i32, %arg1: i32) -> (i32, i32) {
    %c0_i32 = arith.constant 0 : i32
    %c0_i32_0 = arith.constant 0 : i32
    return %arg1, %c0_i32 : i32, i32
  }
  func.func @transform_2(%arg0: i32, %arg1: i32) -> (i32, i32) {
    %c0_i32 = arith.constant 0 : i32
    %c0_i32_0 = arith.constant 0 : i32
    %c0_i32_1 = arith.constant 0 : i32
    return %c0_i32, %c0_i32_0 : i32, i32
  }
  func.func @transform_3(%arg0: i32, %arg1: i32) -> (i32, i32) {
    %c0_i32 = arith.constant 0 : i32
    %c0_i32_0 = arith.constant 0 : i32
    %c0_i32_1 = arith.constant 0 : i32
    return %c0_i32, %c0_i32_0 : i32, i32
  }
  func.func @transform_4(%arg0: i32, %arg1: i32) -> (i32, i32) {
    %c0_i32 = arith.constant 0 : i32
    %c0_i32_0 = arith.constant 0 : i32
    %c0_i32_1 = arith.constant 0 : i32
    return %c0_i32, %c0_i32_0 : i32, i32
  }
  func.func @transform_5(%arg0: i32, %arg1: i32) -> (i32, i32) {
    %c0_i32 = arith.constant 0 : i32
    %c0_i32_0 = arith.constant 0 : i32
    %c0_i32_1 = arith.constant 0 : i32
    return %c0_i32, %c0_i32_0 : i32, i32
  }
  func.func @transform_6(%arg0: i32, %arg1: i32) -> (i32, i32) {
    %c0_i32 = arith.constant 0 : i32
    %c0_i32_0 = arith.constant 0 : i32
    %c0_i32_1 = arith.constant 0 : i32
    return %c0_i32, %c0_i32_0 : i32, i32
  }
  func.func @transform_7(%arg0: i32, %arg1: i32) -> (i32, i32) {
    %c0_i32 = arith.constant 0 : i32
    %c0_i32_0 = arith.constant 0 : i32
    %c0_i32_1 = arith.constant 0 : i32
    return %c0_i32, %c0_i32_0 : i32, i32
  }
  func.func @transform_8(%arg0: i32, %arg1: i32) -> (i32, i32) {
    %c0_i32 = arith.constant 0 : i32
    %c0_i32_0 = arith.constant 0 : i32
    %c0_i32_1 = arith.constant 0 : i32
    return %c0_i32, %c0_i32_0 : i32, i32
  }
  func.func @transform_9(%arg0: i32, %arg1: i32) -> (i32, i32) {
    %c0_i32 = arith.constant 0 : i32
    %c0_i32_0 = arith.constant 0 : i32
    %c0_i32_1 = arith.constant 0 : i32
    return %c0_i32, %c0_i32_0 : i32, i32
  }
  func.func @transform_10(%arg0: i32, %arg1: i32) -> (i32, i32) {
    %c0_i32 = arith.constant 0 : i32
    %c0_i32_0 = arith.constant 0 : i32
    %c0_i32_1 = arith.constant 0 : i32
    return %c0_i32, %c0_i32_0 : i32, i32
  }
  func.func @transform_11(%arg0: i32, %arg1: i32) -> (i32, i32) {
    %c0_i32 = arith.constant 0 : i32
    %c0_i32_0 = arith.constant 0 : i32
    %c0_i32_1 = arith.constant 0 : i32
    return %c0_i32, %c0_i32_0 : i32, i32
  }
  func.func @transform_12(%arg0: i32, %arg1: i32) -> (i32, i32) {
    %c0_i32 = arith.constant 0 : i32
    %c0_i32_0 = arith.constant 0 : i32
    %c0_i32_1 = arith.constant 0 : i32
    return %c0_i32, %c0_i32_0 : i32, i32
  }
  func.func @transform_13(%arg0: i32, %arg1: i32) -> (i32, i32, i32) {
    %c0_i32 = arith.constant 0 : i32
    %c0_i32_0 = arith.constant 0 : i32
    return %arg0, %arg1, %c0_i32 : i32, i32, i32
  }
}

</mosaic_0001>

<llo_original>
// kernel: tpu_custom_call.1
$region0: #{tpu_custom_call.1}
  #allocation0 [shape = 'u32[]', space=smem, size = 0x4, offset = 0x4, fixed_abs, tag = 'smem constant byte address 0x4 - core index']
  #allocation1 [shape = 'u32[144,128]{1,0:T(1,128)}', space=vmem, size = 0x12000, scoped, tag = 'internal scratch']
  %s0 = inlined_call_operand.hbm [shape: f32[2,128,256], index: 0, kind: input, shape index: {}]
  %s1 = inlined_call_operand.hbm [shape: bf16[128,128], index: 1, kind: input, shape index: {}]
  %s2 = inlined_call_operand.vmem [shape: f32[1,256], index: 2, kind: input, shape index: {}]
  %s3 = inlined_call_operand.hbm [shape: f32[1,256], index: 3, kind: input, shape index: {}]
  %s4 = inlined_call_operand.hbm [shape: bf16[256,768], index: 4, kind: input, shape index: {}]
  %s5 = inlined_call_operand.hbm [shape: bf16[256,256], index: 5, kind: input, shape index: {}]
  %s6 = inlined_call_operand.vmem [shape: f32[1,256], index: 6, kind: input, shape index: {}]
  %s7 = inlined_call_operand.vmem [shape: f32[1,256], index: 7, kind: input, shape index: {}]
  %s8 = inlined_call_operand.vmem [shape: f32[1,256], index: 8, kind: input, shape index: {}]
  %s9 = inlined_call_operand.hbm [shape: bf16[256,512], index: 9, kind: input, shape index: {}]
  %s10 = inlined_call_operand.vmem [shape: f32[1,512], index: 10, kind: input, shape index: {}]
  %s11 = inlined_call_operand.hbm [shape: bf16[512,256], index: 11, kind: input, shape index: {}]
  %s12 = inlined_call_operand.vmem [shape: f32[1,256], index: 12, kind: input, shape index: {}]
  %s13 = inlined_call_operand.hbm [shape: f32[2,128,256], index: 13, kind: output, shape index: {}]
  %s14 = sld [smem:[#allocation0]]
  $region113: #{tpu_custom_call.1} parent=0
    _
  %s16 = ssub.s32 1, %s14
  %s17 = scalar_select 0, %s16, %s14
  $region1: #{tpu_custom_call.1} parent=0
    #allocation2 [shape = 'u8[262144]{0}', space=vmem, size = 0x40000, scoped, tag = 'input window, operand 0']
    #allocation3 [shape = 's32[2]{0}', space=sflag, size = 0x8, scoped, tag = 'scoped memory for tpu_custom_call.1']
    #allocation4 [shape = 's32[2]{0}', space=sflag, size = 0x8, scoped, tag = 'scoped memory for tpu_custom_call.1']
    #allocation5 [shape = 'u8[32768]{0}', space=vmem, size = 0x8000, scoped, tag = 'input window, operand 1']
    #allocation6 [shape = 's32[2]{0}', space=sflag, size = 0x8, scoped, tag = 'scoped memory for tpu_custom_call.1']
    #allocation7 [shape = 'u8[1024]{0}', space=vmem, size = 0x400, scoped, tag = 'input window, operand 3, single buffered']
    #allocation8 [shape = 'u8[393216]{0}', space=vmem, size = 0x60000, scoped, tag = 'input window, operand 4, single buffered']
    #allocation9 [shape = 's32[1]{0}', space=sflag, size = 0x4, scoped, tag = 'scoped memory for tpu_custom_call.1']
    #allocation10 [shape = 'u8[131072]{0}', space=vmem, size = 0x20000, scoped, tag = 'input window, operand 5, single buffered']
    #allocation11 [shape = 'u8[262144]{0}', space=vmem, size = 0x40000, scoped, tag = 'input window, operand 9, single buffered']
    #allocation12 [shape = 's32[1]{0}', space=sflag, size = 0x4, scoped, tag = 'scoped memory for tpu_custom_call.1']
    #allocation13 [shape = 'u8[262144]{0}', space=vmem, size = 0x40000, scoped, tag = 'input window, operand 11, single buffered']
    #allocation14 [shape = 'u8[131072]{0}', space=vmem, size = 0x20000, scoped, tag = 'output window, operand 0']
    %18 = vsyncpa [#allocation3], 0
    %s19 = scalar_lea.sflag [#allocation3], 1
    %20 = vsyncpa %s19, 0
    %21 = vsyncpa [#allocation6], 0
    %s22 = scalar_lea.sflag [#allocation6], 1
    %23 = vsyncpa %s22, 0
    %24 = vsyncpa [#allocation9], 0
    %25 = vsyncpa [#allocation12], 0
    %26 = vsyncpa [#allocation4], 0
    %s27 = scalar_lea.sflag [#allocation4], 1
    %28 = vsyncpa %s27, 0
    loop: start=0, step=1, limit=6
    $region2: #{tpu_custom_call.1} parent=1 // loop_pre_header
      _
    $region3: #{tpu_custom_call.1} parent=1 // loop_header
      %s30 = sphi 0, %s34
      %p31 = scmp.ge.s32.totalorder %s30, 6
      %s37 = sphi 0, %s49
      %s38 = sphi 0, %s45
      %s39 = sphi 0, %s37
      %s40 = sphi 0, %s38
      %s41 = sphi 0, %s39
      %s42 = sphi 0, %s40
      %s52 = sphi 0, %s54
      %s55 = sphi 0, %s52
      %s56 = sphi 0, %s55
      %s72 = sphi 0, %s56
      %s78 = sphi 0, %s80
      %s81 = sphi 0, %s78
      %s82 = sphi 0, %s81
      %s98 = sphi 0, %s82
      %s102 = sphi 0, %s102
      %s104 = sphi 0, %s102
      %s105 = sphi 0, %s104
      %s119 = sphi 0, %s105
      %s123 = sphi 0, %s123
      %s125 = sphi 0, %s123
      %s126 = sphi 0, %s125
      %s140 = sphi 0, %s126
      %s144 = sphi 0, %s144
      %s146 = sphi 0, %s144
      %s147 = sphi 0, %s146
      %s161 = sphi 0, %s147
      %s165 = sphi 0, %s165
      %s167 = sphi 0, %s165
      %s168 = sphi 0, %s167
      %s182 = sphi 0, %s168
      %s186 = sphi 0, %s186
      %s188 = sphi 0, %s186
      %s189 = sphi 0, %s188
      %s203 = sphi 0, %s189
      %s207 = sphi 0, %s207
      %s209 = sphi 0, %s207
      %s210 = sphi 0, %s209
      %s224 = sphi 0, %s210
      %s228 = sphi 0, %s228
      %s230 = sphi 0, %s228
      %s231 = sphi 0, %s230
      %s245 = sphi 0, %s231
      %s249 = sphi 0, %s249
      %s251 = sphi 0, %s249
      %s252 = sphi 0, %s251
      %s266 = sphi 0, %s252
      %s270 = sphi 0, %s270
      %s272 = sphi 0, %s270
      %s273 = sphi 0, %s272
      %s287 = sphi 0, %s273
      %s291 = sphi 0, %s291
      %s293 = sphi 0, %s291
      %s294 = sphi 0, %s293
      %s308 = sphi 0, %s294
      %s312 = sphi 0, %s312
      %s314 = sphi 0, %s312
      %s315 = sphi 0, %s314
      %s329 = sphi 0, %s315
      %s337 = sphi 0, %s339
      %s340 = sphi 0, %s337
      %s341 = sphi 0, %s340
      %s357 = sphi 0, %s341
    $region4: #{tpu_custom_call.1} parent=1 // loop_header_branch
      %33 = sbr.rel (%p31) target = $region8
    $region5: #{tpu_custom_call.1} parent=1 // loop_body
      %s35 = ssub.s32 %s30, 1
      %s36 = ssub.s32 %s30, 2
      %s43 = sadd.s32 1, %s38
      %p44 = scmp.ge.s32.totalorder %s43, 2
      %s45 = scalar_select %p44, 0, %s43
      %s46 = sadd.s32 1, %s37
      %s47 = scalar_select %p44, %s46, %s37
      %p48 = scmp.ge.s32.totalorder %s47, 2
      %s49 = scalar_select %p48, 0, %s47
      %s50 = ssub.s32 %s37, %s49
      %p51 = scmp.eq.s32.totalorder %s50, 0
      %s53 = sadd.s32 %s52, 1
      %s54 = scalar_select %p51, %s52, %s53
      %p57 = pneg %p51
      %p58 = scmp.eq.s32.totalorder %s30, 3
      %p59 = por %p57, %p58
      %p60 = scmp.ne.s32.totalorder %s52, %s55
      %p61 = scmp.eq.s32.totalorder %s30, 0
      %p62 = por %p60, %p61
      %p63 = scmp.ne.s32.totalorder %s52, %s55
      %p64 = scmp.eq.s32.totalorder %s35, 3
      %p65 = por %p63, %p64
      %p66 = scmp.ne.s32.totalorder %s55, %s56
      %p67 = scmp.eq.s32.totalorder %s35, 0
      %p68 = por %p66, %p67
      %p69 = scmp.ne.s32.totalorder %s55, %s56
      %p70 = scmp.eq.s32.totalorder %s36, 3
      %p71 = por %p69, %p70
      %p73 = scmp.ne.s32.totalorder %s56, %s72
      %p74 = scmp.eq.s32.totalorder %s36, 0
      %p75 = por %p73, %p74
      %s76 = ssub.s32 %s38, %s45
      %p77 = scmp.eq.s32.totalorder %s76, 0
      %s79 = sadd.s32 %s78, 1
      %s80 = scalar_select %p77, %s78, %s79
      %p83 = pneg %p77
      %p84 = scmp.eq.s32.totalorder %s30, 3
      %p85 = por %p83, %p84
      %p86 = scmp.ne.s32.totalorder %s78, %s81
      %p87 = scmp.eq.s32.totalorder %s30, 0
      %p88 = por %p86, %p87
      %p89 = scmp.ne.s32.totalorder %s78, %s81
      %p90 = scmp.eq.s32.totalorder %s35, 3
      %p91 = por %p89, %p90
      %p92 = scmp.ne.s32.totalorder %s81, %s82
      %p93 = scmp.eq.s32.totalorder %s35, 0
      %p94 = por %p92, %p93
      %p95 = scmp.ne.s32.totalorder %s81, %s82
      %p96 = scmp.eq.s32.totalorder %s36, 3
      %p97 = por %p95, %p96
      %p99 = scmp.ne.s32.totalorder %s82, %s98
      %p100 = scmp.eq.s32.totalorder %s36, 0
      %p101 = por %p99, %p100
      %s103 = sadd.s32 %s102, 1
      %p106 = scmp.eq.s32.totalorder %s30, 3
      %p107 = scmp.ne.s32.totalorder %s102, %s104
      %p108 = scmp.eq.s32.totalorder %s30, 0
      %p109 = por %p107, %p108
      %p110 = scmp.ne.s32.totalorder %s102, %s104
      %p111 = scmp.eq.s32.totalorder %s35, 3
      %p112 = por %p110, %p111
      %p113 = scmp.ne.s32.totalorder %s104, %s105
      %p114 = scmp.eq.s32.totalorder %s35, 0
      %p115 = por %p113, %p114
      %p116 = scmp.ne.s32.totalorder %s104, %s105
      %p117 = scmp.eq.s32.totalorder %s36, 3
      %p118 = por %p116, %p117
      %p120 = scmp.ne.s32.totalorder %s105, %s119
      %p121 = scmp.eq.s32.totalorder %s36, 0
      %p122 = por %p120, %p121
      %s124 = sadd.s32 %s123, 1
      %p127 = scmp.eq.s32.totalorder %s30, 3
      %p128 = scmp.ne.s32.totalorder %s123, %s125
      %p129 = scmp.eq.s32.totalorder %s30, 0
      %p130 = por %p128, %p129
      %p131 = scmp.ne.s32.totalorder %s123, %s125
      %p132 = scmp.eq.s32.totalorder %s35, 3
      %p133 = por %p131, %p132
      %p134 = scmp.ne.s32.totalorder %s125, %s126
      %p135 = scmp.eq.s32.totalorder %s35, 0
      %p136 = por %p134, %p135
      %p137 = scmp.ne.s32.totalorder %s125, %s126
      %p138 = scmp.eq.s32.totalorder %s36, 3
      %p139 = por %p137, %p138
      %p141 = scmp.ne.s32.totalorder %s126, %s140
      %p142 = scmp.eq.s32.totalorder %s36, 0
      %p143 = por %p141, %p142
      %s145 = sadd.s32 %s144, 1
      %p148 = scmp.eq.s32.totalorder %s30, 3
      %p149 = scmp.ne.s32.totalorder %s144, %s146
      %p150 = scmp.eq.s32.totalorder %s30, 0
      %p151 = por %p149, %p150
      %p152 = scmp.ne.s32.totalorder %s144, %s146
      %p153 = scmp.eq.s32.totalorder %s35, 3
      %p154 = por %p152, %p153
      %p155 = scmp.ne.s32.totalorder %s146, %s147
      %p156 = scmp.eq.s32.totalorder %s35, 0
      %p157 = por %p155, %p156
      %p158 = scmp.ne.s32.totalorder %s146, %s147
      %p159 = scmp.eq.s32.totalorder %s36, 3
      %p160 = por %p158, %p159
      %p162 = scmp.ne.s32.totalorder %s147, %s161
      %p163 = scmp.eq.s32.totalorder %s36, 0
      %p164 = por %p162, %p163
      %s166 = sadd.s32 %s165, 1
      %p169 = scmp.eq.s32.totalorder %s30, 3
      %p170 = scmp.ne.s32.totalorder %s165, %s167
      %p171 = scmp.eq.s32.totalorder %s30, 0
      %p172 = por %p170, %p171
      %p173 = scmp.ne.s32.totalorder %s165, %s167
      %p174 = scmp.eq.s32.totalorder %s35, 3
      %p175 = por %p173, %p174
      %p176 = scmp.ne.s32.totalorder %s167, %s168
      %p177 = scmp.eq.s32.totalorder %s35, 0
      %p178 = por %p176, %p177
      %p179 = scmp.ne.s32.totalorder %s167, %s168
      %p180 = scmp.eq.s32.totalorder %s36, 3
      %p181 = por %p179, %p180
      %p183 = scmp.ne.s32.totalorder %s168, %s182
      %p184 = scmp.eq.s32.totalorder %s36, 0
      %p185 = por %p183, %p184
      %s187 = sadd.s32 %s186, 1
      %p190 = scmp.eq.s32.totalorder %s30, 3
      %p191 = scmp.ne.s32.totalorder %s186, %s188
      %p192 = scmp.eq.s32.totalorder %s30, 0
      %p193 = por %p191, %p192
      %p194 = scmp.ne.s32.totalorder %s186, %s188
      %p195 = scmp.eq.s32.totalorder %s35, 3
      %p196 = por %p194, %p195
      %p197 = scmp.ne.s32.totalorder %s188, %s189
      %p198 = scmp.eq.s32.totalorder %s35, 0
      %p199 = por %p197, %p198
      %p200 = scmp.ne.s32.totalorder %s188, %s189
      %p201 = scmp.eq.s32.totalorder %s36, 3
      %p202 = por %p200, %p201
      %p204 = scmp.ne.s32.totalorder %s189, %s203
      %p205 = scmp.eq.s32.totalorder %s36, 0
      %p206 = por %p204, %p205
      %s208 = sadd.s32 %s207, 1
      %p211 = scmp.eq.s32.totalorder %s30, 3
      %p212 = scmp.ne.s32.totalorder %s207, %s209
      %p213 = scmp.eq.s32.totalorder %s30, 0
      %p214 = por %p212, %p213
      %p215 = scmp.ne.s32.totalorder %s207, %s209
      %p216 = scmp.eq.s32.totalorder %s35, 3
      %p217 = por %p215, %p216
      %p218 = scmp.ne.s32.totalorder %s209, %s210
      %p219 = scmp.eq.s32.totalorder %s35, 0
      %p220 = por %p218, %p219
      %p221 = scmp.ne.s32.totalorder %s209, %s210
      %p222 = scmp.eq.s32.totalorder %s36, 3
      %p223 = por %p221, %p222
      %p225 = scmp.ne.s32.totalorder %s210, %s224
      %p226 = scmp.eq.s32.totalorder %s36, 0
      %p227 = por %p225, %p226
      %s229 = sadd.s32 %s228, 1
      %p232 = scmp.eq.s32.totalorder %s30, 3
      %p233 = scmp.ne.s32.totalorder %s228, %s230
      %p234 = scmp.eq.s32.totalorder %s30, 0
      %p235 = por %p233, %p234
      %p236 = scmp.ne.s32.totalorder %s228, %s230
      %p237 = scmp.eq.s32.totalorder %s35, 3
      %p238 = por %p236, %p237
      %p239 = scmp.ne.s32.totalorder %s230, %s231
      %p240 = scmp.eq.s32.totalorder %s35, 0
      %p241 = por %p239, %p240
      %p242 = scmp.ne.s32.totalorder %s230, %s231
      %p243 = scmp.eq.s32.totalorder %s36, 3
      %p244 = por %p242, %p243
      %p246 = scmp.ne.s32.totalorder %s231, %s245
      %p247 = scmp.eq.s32.totalorder %s36, 0
      %p248 = por %p246, %p247
      %s250 = sadd.s32 %s249, 1
      %p253 = scmp.eq.s32.totalorder %s30, 3
      %p254 = scmp.ne.s32.totalorder %s249, %s251
      %p255 = scmp.eq.s32.totalorder %s30, 0
      %p256 = por %p254, %p255
      %p257 = scmp.ne.s32.totalorder %s249, %s251
      %p258 = scmp.eq.s32.totalorder %s35, 3
      %p259 = por %p257, %p258
      %p260 = scmp.ne.s32.totalorder %s251, %s252
      %p261 = scmp.eq.s32.totalorder %s35, 0
      %p262 = por %p260, %p261
      %p263 = scmp.ne.s32.totalorder %s251, %s252
      %p264 = scmp.eq.s32.totalorder %s36, 3
      %p265 = por %p263, %p264
      %p267 = scmp.ne.s32.totalorder %s252, %s266
      %p268 = scmp.eq.s32.totalorder %s36, 0
      %p269 = por %p267, %p268
      %s271 = sadd.s32 %s270, 1
      %p274 = scmp.eq.s32.totalorder %s30, 3
      %p275 = scmp.ne.s32.totalorder %s270, %s272
      %p276 = scmp.eq.s32.totalorder %s30, 0
      %p277 = por %p275, %p276
      %p278 = scmp.ne.s32.totalorder %s270, %s272
      %p279 = scmp.eq.s32.totalorder %s35, 3
      %p280 = por %p278, %p279
      %p281 = scmp.ne.s32.totalorder %s272, %s273
      %p282 = scmp.eq.s32.totalorder %s35, 0
      %p283 = por %p281, %p282
      %p284 = scmp.ne.s32.totalorder %s272, %s273
      %p285 = scmp.eq.s32.totalorder %s36, 3
      %p286 = por %p284, %p285
      %p288 = scmp.ne.s32.totalorder %s273, %s287
      %p289 = scmp.eq.s32.totalorder %s36, 0
      %p290 = por %p288, %p289
      %s292 = sadd.s32 %s291, 1
      %p295 = scmp.eq.s32.totalorder %s30, 3
      %p296 = scmp.ne.s32.totalorder %s291, %s293
      %p297 = scmp.eq.s32.totalorder %s30, 0
      %p298 = por %p296, %p297
      %p299 = scmp.ne.s32.totalorder %s291, %s293
      %p300 = scmp.eq.s32.totalorder %s35, 3
      %p301 = por %p299, %p300
      %p302 = scmp.ne.s32.totalorder %s293, %s294
      %p303 = scmp.eq.s32.totalorder %s35, 0
      %p304 = por %p302, %p303
      %p305 = scmp.ne.s32.totalorder %s293, %s294
      %p306 = scmp.eq.s32.totalorder %s36, 3
      %p307 = por %p305, %p306
      %p309 = scmp.ne.s32.totalorder %s294, %s308
      %p310 = scmp.eq.s32.totalorder %s36, 0
      %p311 = por %p309, %p310
      %s313 = sadd.s32 %s312, 1
      %p316 = scmp.eq.s32.totalorder %s30, 3
      %p317 = scmp.ne.s32.totalorder %s312, %s314
      %p318 = scmp.eq.s32.totalorder %s30, 0
      %p319 = por %p317, %p318
      %p320 = scmp.ne.s32.totalorder %s312, %s314
      %p321 = scmp.eq.s32.totalorder %s35, 3
      %p322 = por %p320, %p321
      %p323 = scmp.ne.s32.totalorder %s314, %s315
      %p324 = scmp.eq.s32.totalorder %s35, 0
      %p325 = por %p323, %p324
      %p326 = scmp.ne.s32.totalorder %s314, %s315
      %p327 = scmp.eq.s32.totalorder %s36, 3
      %p328 = por %p326, %p327
      %p330 = scmp.ne.s32.totalorder %s315, %s329
      %p331 = scmp.eq.s32.totalorder %s36, 0
      %p332 = por %p330, %p331
      %s333 = ssub.s32 %s37, %s49
      %s334 = ssub.s32 %s38, %s45
      %s335 = sor.u32 %s333, %s334
      %p336 = scmp.eq.s32.totalorder %s335, 0
      %s338 = sadd.s32 %s337, 1
      %s339 = scalar_select %p336, %s337, %s338
      %p342 = pneg %p336
      %p343 = scmp.eq.s32.totalorder %s30, 3
      %p344 = por %p342, %p343
      %p345 = scmp.ne.s32.totalorder %s337, %s340
      %p346 = scmp.eq.s32.totalorder %s30, 0
      %p347 = por %p345, %p346
      %p348 = scmp.ne.s32.totalorder %s337, %s340
      %p349 = scmp.eq.s32.totalorder %s35, 3
      %p350 = por %p348, %p349
      %p351 = scmp.ne.s32.totalorder %s340, %s341
      %p352 = scmp.eq.s32.totalorder %s35, 0
      %p353 = por %p351, %p352
      %p354 = scmp.ne.s32.totalorder %s340, %s341
      %p355 = scmp.eq.s32.totalorder %s36, 3
      %p356 = por %p354, %p355
      %p358 = scmp.ne.s32.totalorder %s341, %s357
      %p359 = scmp.eq.s32.totalorder %s36, 0
      %p360 = por %p358, %p359
      %p361 = scmp.le.s32.totalorder 1, %s30
      %p362 = scmp.lt.s32.totalorder %s30, 5
      %p363 = pnand %p361, %p362
      %p364 = pneg %p363
      // Predicated region
      $region9: #{tpu_custom_call.1} parent=5 // pred_check
        _
      $region10: #{tpu_custom_call.1} parent=5 // pred_check_branch
        %366 = sbr.rel (%p363) target = $region12
      $region11: #{tpu_custom_call.1} parent=5 // pred_region
        %s367 = ssub.s32 %s30, 1
        // Predicated region
        $region13: #{tpu_custom_call.1} parent=11 // pred_check
          %p368 = pneg %p115
        $region14: #{tpu_custom_call.1} parent=11 // pred_check_branch
          %370 = sbr.rel (%p368) target = $region16
        $region15: #{tpu_custom_call.1} parent=11 // pred_region
          _
        $region16: #{tpu_custom_call.1} parent=11 // pred_fallthru
          _
        // Predicated region
        $region17: #{tpu_custom_call.1} parent=11 // pred_check
          %p371 = pneg %p136
        $region18: #{tpu_custom_call.1} parent=11 // pred_check_branch
          %373 = sbr.rel (%p371) target = $region20
        $region19: #{tpu_custom_call.1} parent=11 // pred_region
          %s375 = ssub.s32 32, 32
          %376 = vsyncadd [#allocation6], %s375
          %s378 = sshll.u32 [#allocation7], 4
          %s379 = int_to_ptr.vmem [resolvable:$true] %s378
          %381 = dma.hbm_to_vmem [thread:$0]  %s3, 32, %s379, [#allocation6]
        $region20: #{tpu_custom_call.1} parent=11 // pred_fallthru
          _
        // Predicated region
        $region21: #{tpu_custom_call.1} parent=11 // pred_check
          %p382 = pneg %p157
        $region22: #{tpu_custom_call.1} parent=11 // pred_check_branch
          %384 = sbr.rel (%p382) target = $region24
        $region23: #{tpu_custom_call.1} parent=11 // pred_region
          %s386 = ssub.s32 12288, 12288
          %387 = vsyncadd [#allocation9], %s386
          %s388 = sshll.u32 [#allocation8], 4
          %s389 = int_to_ptr.vmem [resolvable:$true] %s388
          %394 = dma.hbm_to_vmem [thread:$0]  %s4, 12288, %s389, [#allocation9], 384, 384, 24
        $region24: #{tpu_custom_call.1} parent=11 // pred_fallthru
          _
        // Predicated region
        $region25: #{tpu_custom_call.1} parent=11 // pred_check
          %p395 = pneg %p178
        $region26: #{tpu_custom_call.1} parent=11 // pred_check_branch
          %397 = sbr.rel (%p395) target = $region28
        $region27: #{tpu_custom_call.1} parent=11 // pred_region
          %s399 = ssub.s32 4096, 4096
          %400 = vsyncadd [#allocation9], %s399
          %s401 = sshll.u32 [#allocation10], 4
          %s402 = int_to_ptr.vmem [resolvable:$true] %s401
          %407 = dma.hbm_to_vmem [thread:$0]  %s5, 4096, %s402, [#allocation9], 128, 128, 8
        $region28: #{tpu_custom_call.1} parent=11 // pred_fallthru
          _
        // Predicated region
        $region29: #{tpu_custom_call.1} parent=11 // pred_check
          %p408 = pneg %p199
        $region30: #{tpu_custom_call.1} parent=11 // pred_check_branch
          %410 = sbr.rel (%p408) target = $region32
        $region31: #{tpu_custom_call.1} parent=11 // pred_region
          _
        $region32: #{tpu_custom_call.1} parent=11 // pred_fallthru
          _
        // Predicated region
        $region33: #{tpu_custom_call.1} parent=11 // pred_check
          %p411 = pneg %p220
        $region34: #{tpu_custom_call.1} parent=11 // pred_check_branch
          %413 = sbr.rel (%p411) target = $region36
        $region35: #{tpu_custom_call.1} parent=11 // pred_region
          _
        $region36: #{tpu_custom_call.1} parent=11 // pred_fallthru
          _
        // Predicated region
        $region37: #{tpu_custom_call.1} parent=11 // pred_check
          %p414 = pneg %p241
        $region38: #{tpu_custom_call.1} parent=11 // pred_check_branch
          %416 = sbr.rel (%p414) target = $region40
        $region39: #{tpu_custom_call.1} parent=11 // pred_region
          _
        $region40: #{tpu_custom_call.1} parent=11 // pred_fallthru
          _
        // Predicated region
        $region41: #{tpu_custom_call.1} parent=11 // pred_check
          %p417 = pneg %p262
        $region42: #{tpu_custom_call.1} parent=11 // pred_check_branch
          %419 = sbr.rel (%p417) target = $region44
        $region43: #{tpu_custom_call.1} parent=11 // pred_region
          %s421 = ssub.s32 8192, 8192
          %422 = vsyncadd [#allocation12], %s421
          %s423 = sshll.u32 [#allocation11], 4
          %s424 = int_to_ptr.vmem [resolvable:$true] %s423
          %429 = dma.hbm_to_vmem [thread:$0]  %s9, 8192, %s424, [#allocation12], 256, 256, 16
        $region44: #{tpu_custom_call.1} parent=11 // pred_fallthru
          _
        // Predicated region
        $region45: #{tpu_custom_call.1} parent=11 // pred_check
          %p430 = pneg %p283
        $region46: #{tpu_custom_call.1} parent=11 // pred_check_branch
          %432 = sbr.rel (%p430) target = $region48
        $region47: #{tpu_custom_call.1} parent=11 // pred_region
          _
        $region48: #{tpu_custom_call.1} parent=11 // pred_fallthru
          _
        // Predicated region
        $region49: #{tpu_custom_call.1} parent=11 // pred_check
          %p433 = pneg %p304
        $region50: #{tpu_custom_call.1} parent=11 // pred_check_branch
          %435 = sbr.rel (%p433) target = $region52
        $region51: #{tpu_custom_call.1} parent=11 // pred_region
          %s437 = ssub.s32 8192, 8192
          %438 = vsyncadd [#allocation12], %s437
          %s439 = sshll.u32 [#allocation13], 4
          %s440 = int_to_ptr.vmem [resolvable:$true] %s439
          %445 = dma.hbm_to_vmem [thread:$0]  %s11, 8192, %s440, [#allocation12], 128, 128, 8
        $region52: #{tpu_custom_call.1} parent=11 // pred_fallthru
          _
        // Predicated region
        $region53: #{tpu_custom_call.1} parent=11 // pred_check
          %p446 = pneg %p325
        $region54: #{tpu_custom_call.1} parent=11 // pred_check_branch
          %448 = sbr.rel (%p446) target = $region56
        $region55: #{tpu_custom_call.1} parent=11 // pred_region
          _
        $region56: #{tpu_custom_call.1} parent=11 // pred_fallthru
          _
      $region12: #{tpu_custom_call.1} parent=5 // pred_fallthru
        _
      %p449 = scmp.lt.s32.totalorder %s30, 4
      // Predicated region
      $region57: #{tpu_custom_call.1} parent=5 // pred_check
        %p450 = pneg %p449
      $region58: #{tpu_custom_call.1} parent=5 // pred_check_branch
        %452 = sbr.rel (%p450) target = $region60
      $region59: #{tpu_custom_call.1} parent=5 // pred_region
        // Predicated region
        $region61: #{tpu_custom_call.1} parent=59 // pred_check
          %p453 = pneg %p62
        $region62: #{tpu_custom_call.1} parent=59 // pred_check_branch
          %455 = sbr.rel (%p453) target = $region64
        $region63: #{tpu_custom_call.1} parent=59 // pred_region
          %s456 = sand.u32 %s52, 1
          %s457 = scalar_lea.sflag [#allocation3], %s456
          %s458 = sand.u32 %s52, 1
          %s459 = smul.addr %s458, 256
          %s460 = scalar_lea.vmem [#allocation2], %s459
          %s462 = ssub.s32 4096, 4096
          %463 = vsyncadd %s457, %s462
          %s464 = smul.addr %s37, 32
          %s465 = smul.addr %s464, 128
          %s466 = scalar_lea.hbm %s0, %s465
          %s467 = sshll.u32 %s460, 4
          %s468 = int_to_ptr.vmem [resolvable:$true] %s467
          %473 = dma.hbm_to_vmem [thread:$0]  %s466, 4096, %s468, %s457, 256, 256, 16
        $region64: #{tpu_custom_call.1} parent=59 // pred_fallthru
          _
        // Predicated region
        $region65: #{tpu_custom_call.1} parent=59 // pred_check
          %p474 = pneg %p88
        $region66: #{tpu_custom_call.1} parent=59 // pred_check_branch
          %476 = sbr.rel (%p474) target = $region68
        $region67: #{tpu_custom_call.1} parent=59 // pred_region
          %s477 = sand.u32 %s30, 1
          %s478 = scalar_lea.sflag [#allocation6], %s477
          %s479 = sand.u32 %s78, 1
          %s480 = smul.addr %s479, 32
          %s481 = scalar_lea.vmem [#allocation5], %s480
          %s482 = smul.u32 8, %s38
          %s484 = ssub.s32 512, 512
          %485 = vsyncadd %s478, %s484
          %s486 = smul.addr %s482, 64
          %s487 = scalar_lea.hbm %s1, %s486
          %s488 = sshll.u32 %s481, 4
          %s489 = int_to_ptr.vmem [resolvable:$true] %s488
          %494 = dma.hbm_to_vmem [thread:$0]  %s487, 512, %s489, %s478, 64, 64, 4
        $region68: #{tpu_custom_call.1} parent=59 // pred_fallthru
          _
      $region60: #{tpu_custom_call.1} parent=5 // pred_fallthru
        _
      %p495 = scmp.le.s32.totalorder 1, %s30
      %p496 = scmp.lt.s32.totalorder %s30, 5
      %p497 = pnand %p495, %p496
      %p498 = pneg %p497
      // Predicated region
      $region69: #{tpu_custom_call.1} parent=5 // pred_check
        _
      $region70: #{tpu_custom_call.1} parent=5 // pred_check_branch
        %500 = sbr.rel (%p497) target = $region72
      $region71: #{tpu_custom_call.1} parent=5 // pred_region
        %s501 = ssub.s32 %s30, 1
        %s502 = sand.u32 %s55, 1
        %s503 = scalar_lea.sflag [#allocation3], %s502
        %s504 = sand.u32 %s55, 1
        %s505 = smul.addr %s504, 256
        %s506 = scalar_lea.vmem [#allocation2], %s505
        // Predicated region
        $region73: #{tpu_custom_call.1} parent=71 // pred_check
          %p507 = pneg %p68
        $region74: #{tpu_custom_call.1} parent=71 // pred_check_branch
          %509 = sbr.rel (%p507) target = $region76
        $region75: #{tpu_custom_call.1} parent=71 // pred_region
          %510 = dma.done %s503, 4096
        $region76: #{tpu_custom_call.1} parent=71 // pred_fallthru
          _
        %s511 = sand.u32 %s35, 1
        %s512 = scalar_lea.sflag [#allocation6], %s511
        %s513 = sand.u32 %s81, 1
        %s514 = smul.addr %s513, 32
        %s515 = scalar_lea.vmem [#allocation5], %s514
        // Predicated region
        $region77: #{tpu_custom_call.1} parent=71 // pred_check
          %p516 = pneg %p94
        $region78: #{tpu_custom_call.1} parent=71 // pred_check_branch
          %518 = sbr.rel (%p516) target = $region80
        $region79: #{tpu_custom_call.1} parent=71 // pred_region
          %519 = dma.done %s512, 512
        $region80: #{tpu_custom_call.1} parent=71 // pred_fallthru
          _
        // Predicated region
        $region81: #{tpu_custom_call.1} parent=71 // pred_check
          %p520 = pneg %p136
        $region82: #{tpu_custom_call.1} parent=71 // pred_check_branch
          %522 = sbr.rel (%p520) target = $region84
        $region83: #{tpu_custom_call.1} parent=71 // pred_region
          %523 = dma.done [#allocation6], 32
        $region84: #{tpu_custom_call.1} parent=71 // pred_fallthru
          _
        // Predicated region
        $region85: #{tpu_custom_call.1} parent=71 // pred_check
          %p524 = pneg %p157
        $region86: #{tpu_custom_call.1} parent=71 // pred_check_branch
          %526 = sbr.rel (%p524) target = $region88
        $region87: #{tpu_custom_call.1} parent=71 // pred_region
          %527 = dma.done [#allocation9], 12288
        $region88: #{tpu_custom_call.1} parent=71 // pred_fallthru
          _
        // Predicated region
        $region89: #{tpu_custom_call.1} parent=71 // pred_check
          %p528 = pneg %p178
        $region90: #{tpu_custom_call.1} parent=71 // pred_check_branch
          %530 = sbr.rel (%p528) target = $region92
        $region91: #{tpu_custom_call.1} parent=71 // pred_region
          %531 = dma.done [#allocation9], 4096
        $region92: #{tpu_custom_call.1} parent=71 // pred_fallthru
          _
        // Predicated region
        $region93: #{tpu_custom_call.1} parent=71 // pred_check
          %p532 = pneg %p262
        $region94: #{tpu_custom_call.1} parent=71 // pred_check_branch
          %534 = sbr.rel (%p532) target = $region96
        $region95: #{tpu_custom_call.1} parent=71 // pred_region
          %535 = dma.done [#allocation12], 8192
        $region96: #{tpu_custom_call.1} parent=71 // pred_fallthru
          _
        // Predicated region
        $region97: #{tpu_custom_call.1} parent=71 // pred_check
          %p536 = pneg %p304
        $region98: #{tpu_custom_call.1} parent=71 // pred_check_branch
          %538 = sbr.rel (%p536) target = $region100
        $region99: #{tpu_custom_call.1} parent=71 // pred_region
          %539 = dma.done [#allocation12], 8192
        $region100: #{tpu_custom_call.1} parent=71 // pred_fallthru
          _
        %s540 = sand.u32 %s55, 1
        %s541 = scalar_lea.sflag [#allocation3], %s540
        %s542 = sand.u32 %s55, 1
        %s543 = smul.addr %s542, 256
        %s544 = scalar_lea.vmem [#allocation2], %s543
        %p545 = pneg %p68
        %p546 = pneg %p65
        %s547 = sand.u32 %s35, 1
        %s548 = scalar_lea.sflag [#allocation6], %s547
        %s549 = sand.u32 %s81, 1
        %s550 = smul.addr %s549, 32
        %s551 = scalar_lea.vmem [#allocation5], %s550
        %p552 = pneg %p94
        %p553 = pneg %p91
        %p554 = pneg %p115
        %p555 = pneg %p112
        %p556 = pneg %p136
        %p557 = pneg %p133
        %p558 = pneg %p157
        %p559 = pneg %p154
        %p560 = pneg %p178
        %p561 = pneg %p175
        %p562 = pneg %p199
        %p563 = pneg %p196
        %p564 = pneg %p220
        %p565 = pneg %p217
        %p566 = pneg %p241
        %p567 = pneg %p238
        %p568 = pneg %p262
        %p569 = pneg %p259
        %p570 = pneg %p283
        %p571 = pneg %p280
        %p572 = pneg %p304
        %p573 = pneg %p301
        %p574 = pneg %p325
        %p575 = pneg %p322
        %p576 = pneg %p353
        %p577 = pneg %p350
        %s578 = sand.u32 %s340, 1
        %s579 = scalar_lea.sflag [#allocation4], %s578
        %s580 = sand.u32 %s340, 1
        %s581 = smul.addr %s580, 128
        %s582 = scalar_lea.vmem [#allocation14], %s581
        %s583 = smul.u32 8, %s40
        %s584 = smul.u32 8, %s40
        %s586 = smul.u32 %s40, 64
        %v587 = vld [vmem:[%s506] sm:$0xff]
        %v588 = vld [vmem:[%s506 + $0x8] sm:$0xff]
        %v589 = vld [vmem:[%s506 + $0x10] sm:$0xff]
        %v590 = vld [vmem:[%s506 + $0x18] sm:$0xff]
        %v591 = vld [vmem:[%s506 + $0x20] sm:$0xff]
        %v592 = vld [vmem:[%s506 + $0x28] sm:$0xff]
        %v593 = vld [vmem:[%s506 + $0x30] sm:$0xff]
        %v594 = vld [vmem:[%s506 + $0x38] sm:$0xff]
        %v595 = vld [vmem:[%s506 + $0x40] sm:$0xff]
        %v596 = vld [vmem:[%s506 + $0x48] sm:$0xff]
        %v597 = vld [vmem:[%s506 + $0x50] sm:$0xff]
        %v598 = vld [vmem:[%s506 + $0x58] sm:$0xff]
        %v599 = vld [vmem:[%s506 + $0x60] sm:$0xff]
        %v600 = vld [vmem:[%s506 + $0x68] sm:$0xff]
        %v601 = vld [vmem:[%s506 + $0x70] sm:$0xff]
        %v602 = vld [vmem:[%s506 + $0x78] sm:$0xff]
        %v603 = vld [vmem:[%s506 + $0x80] sm:$0xff]
        %v604 = vld [vmem:[%s506 + $0x88] sm:$0xff]
        %v605 = vld [vmem:[%s506 + $0x90] sm:$0xff]
        %v606 = vld [vmem:[%s506 + $0x98] sm:$0xff]
        %v607 = vld [vmem:[%s506 + $0xa0] sm:$0xff]
        %v608 = vld [vmem:[%s506 + $0xa8] sm:$0xff]
        %v609 = vld [vmem:[%s506 + $0xb0] sm:$0xff]
        %v610 = vld [vmem:[%s506 + $0xb8] sm:$0xff]
        %v611 = vld [vmem:[%s506 + $0xc0] sm:$0xff]
        %v612 = vld [vmem:[%s506 + $0xc8] sm:$0xff]
        %v613 = vld [vmem:[%s506 + $0xd0] sm:$0xff]
        %v614 = vld [vmem:[%s506 + $0xd8] sm:$0xff]
        %v615 = vld [vmem:[%s506 + $0xe0] sm:$0xff]
        %v616 = vld [vmem:[%s506 + $0xe8] sm:$0xff]
        %v617 = vld [vmem:[%s506 + $0xf0] sm:$0xff]
        %v618 = vld [vmem:[%s506 + $0xf8] sm:$0xff]
        %s619 = sshra.s32 %s586, 3
        %s620 = sand.u32 %s586, 7
        %s621 = smul.u32 %s619, 2
        %s622 = smul.addr %s621, 8
        %s623 = scalar_lea.vmem %s506, %s622 [#allocation2]
        %v624 = vld [vmem:[%s623] sm:$0xff]
        %v625 = vld [vmem:[%s623 + $0x8] sm:$0xff]
        %v626 = vld [vmem:[%s623 + $0x10] sm:$0xff]
        %v627 = vld [vmem:[%s623 + $0x18] sm:$0xff]
        %v628 = vld [vmem:[%s623 + $0x20] sm:$0xff]
        %v629 = vld [vmem:[%s623 + $0x28] sm:$0xff]
        %v630 = vld [vmem:[%s623 + $0x30] sm:$0xff]
        %v631 = vld [vmem:[%s623 + $0x38] sm:$0xff]
        %v632 = vld [vmem:[%s623 + $0x40] sm:$0xff]
        %v633 = vld [vmem:[%s623 + $0x48] sm:$0xff]
        %v634 = vld [vmem:[%s623 + $0x50] sm:$0xff]
        %v635 = vld [vmem:[%s623 + $0x58] sm:$0xff]
        %v636 = vld [vmem:[%s623 + $0x60] sm:$0xff]
        %v637 = vld [vmem:[%s623 + $0x68] sm:$0xff]
        %v638 = vld [vmem:[%s623 + $0x70] sm:$0xff]
        %v639 = vld [vmem:[%s623 + $0x78] sm:$0xff]
        %v640 = vld [vmem:[%s2] sm:$0x3]
        %v641 = vld [vmem:[#allocation7] sm:$0x3]
        %v642 = vadd.f32 %v587, %v588
        %643 = vadd.xlane.f32.xlu0 %v642
        %v644 = vpop.xlane.xlu0 %643
        %v645 = vadd.f32 %v589, %v590
        %646 = vadd.xlane.f32.xlu0 %v645
        %v647 = vpop.xlane.xlu0 %646
        %v648 = vadd.f32 %v591, %v592
        %649 = vadd.xlane.f32.xlu0 %v648
        %v650 = vpop.xlane.xlu0 %649
        %v651 = vadd.f32 %v593, %v594
        %652 = vadd.xlane.f32.xlu0 %v651
        %v653 = vpop.xlane.xlu0 %652
        %v654 = vadd.f32 %v595, %v596
        %655 = vadd.xlane.f32.xlu0 %v654
        %v656 = vpop.xlane.xlu0 %655
        %v657 = vadd.f32 %v597, %v598
        %658 = vadd.xlane.f32.xlu0 %v657
        %v659 = vpop.xlane.xlu0 %658
        %v660 = vadd.f32 %v599, %v600
        %661 = vadd.xlane.f32.xlu0 %v660
        %v662 = vpop.xlane.xlu0 %661
        %v663 = vadd.f32 %v601, %v602
        %664 = vadd.xlane.f32.xlu0 %v663
        %v665 = vpop.xlane.xlu0 %664
        %v666 = vadd.f32 %v603, %v604
        %667 = vadd.xlane.f32.xlu0 %v666
        %v668 = vpop.xlane.xlu0 %667
        %v669 = vadd.f32 %v605, %v606
        %670 = vadd.xlane.f32.xlu0 %v669
        %v671 = vpop.xlane.xlu0 %670
        %v672 = vadd.f32 %v607, %v608
        %673 = vadd.xlane.f32.xlu0 %v672
        %v674 = vpop.xlane.xlu0 %673
        %v675 = vadd.f32 %v609, %v610
        %676 = vadd.xlane.f32.xlu0 %v675
        %v677 = vpop.xlane.xlu0 %676
        %v678 = vadd.f32 %v611, %v612
        %679 = vadd.xlane.f32.xlu0 %v678
        %v680 = vpop.xlane.xlu0 %679
        %v681 = vadd.f32 %v613, %v614
        %682 = vadd.xlane.f32.xlu0 %v681
        %v683 = vpop.xlane.xlu0 %682
        %v684 = vadd.f32 %v615, %v616
        %685 = vadd.xlane.f32.xlu0 %v684
        %v686 = vpop.xlane.xlu0 %685
        %v687 = vadd.f32 %v617, %v618
        %688 = vadd.xlane.f32.xlu0 %v687
        %v689 = vpop.xlane.xlu0 %688
        %v690 = vrcp.pop 256.0
        %v691 = vmul.f32 %v644, %v690
        %v692 = vmul.f32 %v647, %v690
        %v693 = vmul.f32 %v650, %v690
        %v694 = vmul.f32 %v653, %v690
        %v695 = vmul.f32 %v656, %v690
        %v696 = vmul.f32 %v659, %v690
        %v697 = vmul.f32 %v662, %v690
        %v698 = vmul.f32 %v665, %v690
        %v699 = vmul.f32 %v668, %v690
        %v700 = vmul.f32 %v671, %v690
        %v701 = vmul.f32 %v674, %v690
        %v702 = vmul.f32 %v677, %v690
        %v703 = vmul.f32 %v680, %v690
        %v704 = vmul.f32 %v683, %v690
        %v705 = vmul.f32 %v686, %v690
        %v706 = vmul.f32 %v689, %v690
        %v707 = vsub.f32 %v587, %v691
        %v708 = vsub.f32 %v588, %v691
        %v709 = vsub.f32 %v589, %v692
        %v710 = vsub.f32 %v590, %v692
        %v711 = vsub.f32 %v591, %v693
        %v712 = vsub.f32 %v592, %v693
        %v713 = vsub.f32 %v593, %v694
        %v714 = vsub.f32 %v594, %v694
        %v715 = vsub.f32 %v595, %v695
        %v716 = vsub.f32 %v596, %v695
        %v717 = vsub.f32 %v597, %v696
        %v718 = vsub.f32 %v598, %v696
        %v719 = vsub.f32 %v599, %v697
        %v720 = vsub.f32 %v600, %v697
        %v721 = vsub.f32 %v601, %v698
        %v722 = vsub.f32 %v602, %v698
        %v723 = vsub.f32 %v603, %v699
        %v724 = vsub.f32 %v604, %v699
        %v725 = vsub.f32 %v605, %v700
        %v726 = vsub.f32 %v606, %v700
        %v727 = vsub.f32 %v607, %v701
        %v728 = vsub.f32 %v608, %v701
        %v729 = vsub.f32 %v609, %v702
        %v730 = vsub.f32 %v610, %v702
        %v731 = vsub.f32 %v611, %v703
        %v732 = vsub.f32 %v612, %v703
        %v733 = vsub.f32 %v613, %v704
        %v734 = vsub.f32 %v614, %v704
        %v735 = vsub.f32 %v615, %v705
        %v736 = vsub.f32 %v616, %v705
        %v737 = vsub.f32 %v617, %v706
        %v738 = vsub.f32 %v618, %v706
        %v739 = vmul.f32 %v707, %v707
        %v740 = vmul.f32 %v708, %v708
        %v741 = vmul.f32 %v709, %v709
        %v742 = vmul.f32 %v710, %v710
        %v743 = vmul.f32 %v711, %v711
        %v744 = vmul.f32 %v712, %v712
        %v745 = vmul.f32 %v713, %v713
        %v746 = vmul.f32 %v714, %v714
        %v747 = vmul.f32 %v715, %v715
        %v748 = vmul.f32 %v716, %v716
        %v749 = vmul.f32 %v717, %v717
        %v750 = vmul.f32 %v718, %v718
        %v751 = vmul.f32 %v719, %v719
        %v752 = vmul.f32 %v720, %v720
        %v753 = vmul.f32 %v721, %v721
        %v754 = vmul.f32 %v722, %v722
        %v755 = vmul.f32 %v723, %v723
        %v756 = vmul.f32 %v724, %v724
        %v757 = vmul.f32 %v725, %v725
        %v758 = vmul.f32 %v726, %v726
        %v759 = vmul.f32 %v727, %v727
        %v760 = vmul.f32 %v728, %v728
        %v761 = vmul.f32 %v729, %v729
        %v762 = vmul.f32 %v730, %v730
        %v763 = vmul.f32 %v731, %v731
        %v764 = vmul.f32 %v732, %v732
        %v765 = vmul.f32 %v733, %v733
        %v766 = vmul.f32 %v734, %v734
        %v767 = vmul.f32 %v735, %v735
        %v768 = vmul.f32 %v736, %v736
        %v769 = vmul.f32 %v737, %v737
        %v770 = vmul.f32 %v738, %v738
        %v771 = vadd.f32 %v739, %v740
        %772 = vadd.xlane.f32.xlu0 %v771
        %v773 = vpop.xlane.xlu0 %772
        %v774 = vadd.f32 %v741, %v742
        %775 = vadd.xlane.f32.xlu0 %v774
        %v776 = vpop.xlane.xlu0 %775
        %v777 = vadd.f32 %v743, %v744
        %778 = vadd.xlane.f32.xlu0 %v777
        %v779 = vpop.xlane.xlu0 %778
        %v780 = vadd.f32 %v745, %v746
        %781 = vadd.xlane.f32.xlu0 %v780
        %v782 = vpop.xlane.xlu0 %781
        %v783 = vadd.f32 %v747, %v748
        %784 = vadd.xlane.f32.xlu0 %v783
        %v785 = vpop.xlane.xlu0 %784
        %v786 = vadd.f32 %v749, %v750
        %787 = vadd.xlane.f32.xlu0 %v786
        %v788 = vpop.xlane.xlu0 %787
        %v789 = vadd.f32 %v751, %v752
        %790 = vadd.xlane.f32.xlu0 %v789
        %v791 = vpop.xlane.xlu0 %790
        %v792 = vadd.f32 %v753, %v754
        %793 = vadd.xlane.f32.xlu0 %v792
        %v794 = vpop.xlane.xlu0 %793
        %v795 = vadd.f32 %v755, %v756
        %796 = vadd.xlane.f32.xlu0 %v795
        %v797 = vpop.xlane.xlu0 %796
        %v798 = vadd.f32 %v757, %v758
        %799 = vadd.xlane.f32.xlu0 %v798
        %v800 = vpop.xlane.xlu0 %799
        %v801 = vadd.f32 %v759, %v760
        %802 = vadd.xlane.f32.xlu0 %v801
        %v803 = vpop.xlane.xlu0 %802
        %v804 = vadd.f32 %v761, %v762
        %805 = vadd.xlane.f32.xlu0 %v804
        %v806 = vpop.xlane.xlu0 %805
        %v807 = vadd.f32 %v763, %v764
        %808 = vadd.xlane.f32.xlu0 %v807
        %v809 = vpop.xlane.xlu0 %808
        %v810 = vadd.f32 %v765, %v766
        %811 = vadd.xlane.f32.xlu0 %v810
        %v812 = vpop.xlane.xlu0 %811
        %v813 = vadd.f32 %v767, %v768
        %814 = vadd.xlane.f32.xlu0 %v813
        %v815 = vpop.xlane.xlu0 %814
        %v816 = vadd.f32 %v769, %v770
        %817 = vadd.xlane.f32.xlu0 %v816
        %v818 = vpop.xlane.xlu0 %817
        %v819 = vmul.f32 %v773, %v690
        %v820 = vmul.f32 %v776, %v690
        %v821 = vmul.f32 %v779, %v690
        %v822 = vmul.f32 %v782, %v690
        %v823 = vmul.f32 %v785, %v690
        %v824 = vmul.f32 %v788, %v690
        %v825 = vmul.f32 %v791, %v690
        %v826 = vmul.f32 %v794, %v690
        %v827 = vmul.f32 %v797, %v690
        %v828 = vmul.f32 %v800, %v690
        %v829 = vmul.f32 %v803, %v690
        %v830 = vmul.f32 %v806, %v690
        %v831 = vmul.f32 %v809, %v690
        %v832 = vmul.f32 %v812, %v690
        %v833 = vmul.f32 %v815, %v690
        %v834 = vmul.f32 %v818, %v690
        %v835 = vadd.f32 %v819, 1e-05
        %v836 = vadd.f32 %v820, 1e-05
        %v837 = vadd.f32 %v821, 1e-05
        %v838 = vadd.f32 %v822, 1e-05
        %v839 = vadd.f32 %v823, 1e-05
        %v840 = vadd.f32 %v824, 1e-05
        %v841 = vadd.f32 %v825, 1e-05
        %v842 = vadd.f32 %v826, 1e-05
        %v843 = vadd.f32 %v827, 1e-05
        %v844 = vadd.f32 %v828, 1e-05
        %v845 = vadd.f32 %v829, 1e-05
        %v846 = vadd.f32 %v830, 1e-05
        %v847 = vadd.f32 %v831, 1e-05
        %v848 = vadd.f32 %v832, 1e-05
        %v849 = vadd.f32 %v833, 1e-05
        %v850 = vadd.f32 %v834, 1e-05
        %v851 = vrsqrt.pop %v835
        %v852 = vrsqrt.pop %v836
        %v853 = vrsqrt.pop %v837
        %v854 = vrsqrt.pop %v838
        %v855 = vrsqrt.pop %v839
        %v856 = vrsqrt.pop %v840
        %v857 = vrsqrt.pop %v841
        %v858 = vrsqrt.pop %v842
        %v859 = vrsqrt.pop %v843
        %v860 = vrsqrt.pop %v844
        %v861 = vrsqrt.pop %v845
        %v862 = vrsqrt.pop %v846
        %v863 = vrsqrt.pop %v847
        %v864 = vrsqrt.pop %v848
        %v865 = vrsqrt.pop %v849
        %v866 = vrsqrt.pop %v850
        %v867 = vmul.f32 %v707, %v851
        %v868 = vmul.f32 %v708, %v851
        %v869 = vmul.f32 %v709, %v852
        %v870 = vmul.f32 %v710, %v852
        %v871 = vmul.f32 %v711, %v853
        %v872 = vmul.f32 %v712, %v853
        %v873 = vmul.f32 %v713, %v854
        %v874 = vmul.f32 %v714, %v854
        %v875 = vmul.f32 %v715, %v855
        %v876 = vmul.f32 %v716, %v855
        %v877 = vmul.f32 %v717, %v856
        %v878 = vmul.f32 %v718, %v856
        %v879 = vmul.f32 %v719, %v857
        %v880 = vmul.f32 %v720, %v857
        %v881 = vmul.f32 %v721, %v858
        %v882 = vmul.f32 %v722, %v858
        %v883 = vmul.f32 %v723, %v859
        %v884 = vmul.f32 %v724, %v859
        %v885 = vmul.f32 %v725, %v860
        %v886 = vmul.f32 %v726, %v860
        %v887 = vmul.f32 %v727, %v861
        %v888 = vmul.f32 %v728, %v861
        %v889 = vmul.f32 %v729, %v862
        %v890 = vmul.f32 %v730, %v862
        %v891 = vmul.f32 %v731, %v863
        %v892 = vmul.f32 %v732, %v863
        %v893 = vmul.f32 %v733, %v864
        %v894 = vmul.f32 %v734, %v864
        %v895 = vmul.f32 %v735, %v865
        %v896 = vmul.f32 %v736, %v865
        %v897 = vmul.f32 %v737, %v866
        %v898 = vmul.f32 %v738, %v866
        %v900 = vlaneseq
        %v901 = vshrl.u32 %v900, 7
        %v902 = vsub.s32 0, %v901
        %v903 = vrot.slane %v640, %v902
        %v904 = vlaneseq
        %v905 = vshrl.u32 %v904, 7
        %v906 = vsub.s32 1, %v905
        %v907 = vrot.slane %v640, %v906
        %v910 = vmul.f32 %v867, %v903
        %v911 = vmul.f32 %v868, %v907
        %v912 = vmul.f32 %v869, %v903
        %v913 = vmul.f32 %v870, %v907
        %v914 = vmul.f32 %v871, %v903
        %v915 = vmul.f32 %v872, %v907
        %v916 = vmul.f32 %v873, %v903
        %v917 = vmul.f32 %v874, %v907
        %v918 = vmul.f32 %v875, %v903
        %v919 = vmul.f32 %v876, %v907
        %v920 = vmul.f32 %v877, %v903
        %v921 = vmul.f32 %v878, %v907
        %v922 = vmul.f32 %v879, %v903
        %v923 = vmul.f32 %v880, %v907
        %v924 = vmul.f32 %v881, %v903
        %v925 = vmul.f32 %v882, %v907
        %v926 = vmul.f32 %v883, %v903
        %v927 = vmul.f32 %v884, %v907
        %v928 = vmul.f32 %v885, %v903
        %v929 = vmul.f32 %v886, %v907
        %v930 = vmul.f32 %v887, %v903
        %v931 = vmul.f32 %v888, %v907
        %v932 = vmul.f32 %v889, %v903
        %v933 = vmul.f32 %v890, %v907
        %v934 = vmul.f32 %v891, %v903
        %v935 = vmul.f32 %v892, %v907
        %v936 = vmul.f32 %v893, %v903
        %v937 = vmul.f32 %v894, %v907
        %v938 = vmul.f32 %v895, %v903
        %v939 = vmul.f32 %v896, %v907
        %v940 = vmul.f32 %v897, %v903
        %v941 = vmul.f32 %v898, %v907
        %v943 = vlaneseq
        %v944 = vshrl.u32 %v943, 7
        %v945 = vsub.s32 0, %v944
        %v946 = vrot.slane %v641, %v945
        %v947 = vlaneseq
        %v948 = vshrl.u32 %v947, 7
        %v949 = vsub.s32 1, %v948
        %v950 = vrot.slane %v641, %v949
        %v953 = vadd.f32 %v910, %v946
        %v954 = vadd.f32 %v911, %v950
        %v955 = vadd.f32 %v912, %v946
        %v956 = vadd.f32 %v913, %v950
        %v957 = vadd.f32 %v914, %v946
        %v958 = vadd.f32 %v915, %v950
        %v959 = vadd.f32 %v916, %v946
        %v960 = vadd.f32 %v917, %v950
        %v961 = vadd.f32 %v918, %v946
        %v962 = vadd.f32 %v919, %v950
        %v963 = vadd.f32 %v920, %v946
        %v964 = vadd.f32 %v921, %v950
        %v965 = vadd.f32 %v922, %v946
        %v966 = vadd.f32 %v923, %v950
        %v967 = vadd.f32 %v924, %v946
        %v968 = vadd.f32 %v925, %v950
        %v969 = vadd.f32 %v926, %v946
        %v970 = vadd.f32 %v927, %v950
        %v971 = vadd.f32 %v928, %v946
        %v972 = vadd.f32 %v929, %v950
        %v973 = vadd.f32 %v930, %v946
        %v974 = vadd.f32 %v931, %v950
        %v975 = vadd.f32 %v932, %v946
        %v976 = vadd.f32 %v933, %v950
        %v977 = vadd.f32 %v934, %v946
        %v978 = vadd.f32 %v935, %v950
        %v979 = vadd.f32 %v936, %v946
        %v980 = vadd.f32 %v937, %v950
        %v981 = vadd.f32 %v938, %v946
        %v982 = vadd.f32 %v939, %v950
        %v983 = vadd.f32 %v940, %v946
        %v984 = vadd.f32 %v941, %v950
        %v985 = vpack.c.bf16 %v955, %v953
        %v986 = vpack.c.bf16 %v956, %v954
        %v987 = vpack.c.bf16 %v959, %v957
        %v988 = vpack.c.bf16 %v960, %v958
        %v989 = vpack.c.bf16 %v963, %v961
        %v990 = vpack.c.bf16 %v964, %v962
        %v991 = vpack.c.bf16 %v967, %v965
        %v992 = vpack.c.bf16 %v968, %v966
        %v993 = vpack.c.bf16 %v971, %v969
        %v994 = vpack.c.bf16 %v972, %v970
        %v995 = vpack.c.bf16 %v975, %v973
        %v996 = vpack.c.bf16 %v976, %v974
        %v997 = vpack.c.bf16 %v979, %v977
        %v998 = vpack.c.bf16 %v980, %v978
        %v999 = vpack.c.bf16 %v983, %v981
        %v1000 = vpack.c.bf16 %v984, %v982
        %v1001 = vadd.f32 %v624, %v625
        %1002 = vadd.xlane.f32.xlu0 %v1001
        %v1003 = vpop.xlane.xlu0 %1002
        %v1004 = vadd.f32 %v626, %v627
        %1005 = vadd.xlane.f32.xlu0 %v1004
        %v1006 = vpop.xlane.xlu0 %1005
        %v1007 = vadd.f32 %v628, %v629
        %1008 = vadd.xlane.f32.xlu0 %v1007
        %v1009 = vpop.xlane.xlu0 %1008
        %v1010 = vadd.f32 %v630, %v631
        %1011 = vadd.xlane.f32.xlu0 %v1010
        %v1012 = vpop.xlane.xlu0 %1011
        %v1013 = vadd.f32 %v632, %v633
        %1014 = vadd.xlane.f32.xlu0 %v1013
        %v1015 = vpop.xlane.xlu0 %1014
        %v1016 = vadd.f32 %v634, %v635
        %1017 = vadd.xlane.f32.xlu0 %v1016
        %v1018 = vpop.xlane.xlu0 %1017
        %v1019 = vadd.f32 %v636, %v637
        %1020 = vadd.xlane.f32.xlu0 %v1019
        %v1021 = vpop.xlane.xlu0 %1020
        %v1022 = vadd.f32 %v638, %v639
        %1023 = vadd.xlane.f32.xlu0 %v1022
        %v1024 = vpop.xlane.xlu0 %1023
        %v1025 = vmul.f32 %v1003, %v690
        %v1026 = vmul.f32 %v1006, %v690
        %v1027 = vmul.f32 %v1009, %v690
        %v1028 = vmul.f32 %v1012, %v690
        %v1029 = vmul.f32 %v1015, %v690
        %v1030 = vmul.f32 %v1018, %v690
        %v1031 = vmul.f32 %v1021, %v690
        %v1032 = vmul.f32 %v1024, %v690
        %v1033 = vsub.f32 %v624, %v1025
        %v1034 = vsub.f32 %v625, %v1025
        %v1035 = vsub.f32 %v626, %v1026
        %v1036 = vsub.f32 %v627, %v1026
        %v1037 = vsub.f32 %v628, %v1027
        %v1038 = vsub.f32 %v629, %v1027
        %v1039 = vsub.f32 %v630, %v1028
        %v1040 = vsub.f32 %v631, %v1028
        %v1041 = vsub.f32 %v632, %v1029
        %v1042 = vsub.f32 %v633, %v1029
        %v1043 = vsub.f32 %v634, %v1030
        %v1044 = vsub.f32 %v635, %v1030
        %v1045 = vsub.f32 %v636, %v1031
        %v1046 = vsub.f32 %v637, %v1031
        %v1047 = vsub.f32 %v638, %v1032
        %v1048 = vsub.f32 %v639, %v1032
        %v1049 = vmul.f32 %v1033, %v1033
        %v1050 = vmul.f32 %v1034, %v1034
        %v1051 = vmul.f32 %v1035, %v1035
        %v1052 = vmul.f32 %v1036, %v1036
        %v1053 = vmul.f32 %v1037, %v1037
        %v1054 = vmul.f32 %v1038, %v1038
        %v1055 = vmul.f32 %v1039, %v1039
        %v1056 = vmul.f32 %v1040, %v1040
        %v1057 = vmul.f32 %v1041, %v1041
        %v1058 = vmul.f32 %v1042, %v1042
        %v1059 = vmul.f32 %v1043, %v1043
        %v1060 = vmul.f32 %v1044, %v1044
        %v1061 = vmul.f32 %v1045, %v1045
        %v1062 = vmul.f32 %v1046, %v1046
        %v1063 = vmul.f32 %v1047, %v1047
        %v1064 = vmul.f32 %v1048, %v1048
        %v1065 = vadd.f32 %v1049, %v1050
        %1066 = vadd.xlane.f32.xlu0 %v1065
        %v1067 = vpop.xlane.xlu0 %1066
        %v1068 = vadd.f32 %v1051, %v1052
        %1069 = vadd.xlane.f32.xlu0 %v1068
        %v1070 = vpop.xlane.xlu0 %1069
        %v1071 = vadd.f32 %v1053, %v1054
        %1072 = vadd.xlane.f32.xlu0 %v1071
        %v1073 = vpop.xlane.xlu0 %1072
        %v1074 = vadd.f32 %v1055, %v1056
        %1075 = vadd.xlane.f32.xlu0 %v1074
        %v1076 = vpop.xlane.xlu0 %1075
        %v1077 = vadd.f32 %v1057, %v1058
        %1078 = vadd.xlane.f32.xlu0 %v1077
        %v1079 = vpop.xlane.xlu0 %1078
        %v1080 = vadd.f32 %v1059, %v1060
        %1081 = vadd.xlane.f32.xlu0 %v1080
        %v1082 = vpop.xlane.xlu0 %1081
        %v1083 = vadd.f32 %v1061, %v1062
        %1084 = vadd.xlane.f32.xlu0 %v1083
        %v1085 = vpop.xlane.xlu0 %1084
        %v1086 = vadd.f32 %v1063, %v1064
        %1087 = vadd.xlane.f32.xlu0 %v1086
        %v1088 = vpop.xlane.xlu0 %1087
        %v1089 = vmul.f32 %v1067, %v690
        %v1090 = vmul.f32 %v1070, %v690
        %v1091 = vmul.f32 %v1073, %v690
        %v1092 = vmul.f32 %v1076, %v690
        %v1093 = vmul.f32 %v1079, %v690
        %v1094 = vmul.f32 %v1082, %v690
        %v1095 = vmul.f32 %v1085, %v690
        %v1096 = vmul.f32 %v1088, %v690
        %v1097 = vadd.f32 %v1089, 1e-05
        %v1098 = vadd.f32 %v1090, 1e-05
        %v1099 = vadd.f32 %v1091, 1e-05
        %v1100 = vadd.f32 %v1092, 1e-05
        %v1101 = vadd.f32 %v1093, 1e-05
        %v1102 = vadd.f32 %v1094, 1e-05
        %v1103 = vadd.f32 %v1095, 1e-05
        %v1104 = vadd.f32 %v1096, 1e-05
        %v1105 = vrsqrt.pop %v1097
        %v1106 = vrsqrt.pop %v1098
        %v1107 = vrsqrt.pop %v1099
        %v1108 = vrsqrt.pop %v1100
        %v1109 = vrsqrt.pop %v1101
        %v1110 = vrsqrt.pop %v1102
        %v1111 = vrsqrt.pop %v1103
        %v1112 = vrsqrt.pop %v1104
        %v1113 = vmul.f32 %v1033, %v1105
        %v1114 = vmul.f32 %v1034, %v1105
        %v1115 = vmul.f32 %v1035, %v1106
        %v1116 = vmul.f32 %v1036, %v1106
        %v1117 = vmul.f32 %v1037, %v1107
        %v1118 = vmul.f32 %v1038, %v1107
        %v1119 = vmul.f32 %v1039, %v1108
        %v1120 = vmul.f32 %v1040, %v1108
        %v1121 = vmul.f32 %v1041, %v1109
        %v1122 = vmul.f32 %v1042, %v1109
        %v1123 = vmul.f32 %v1043, %v1110
        %v1124 = vmul.f32 %v1044, %v1110
        %v1125 = vmul.f32 %v1045, %v1111
        %v1126 = vmul.f32 %v1046, %v1111
        %v1127 = vmul.f32 %v1047, %v1112
        %v1128 = vmul.f32 %v1048, %v1112
        %v1129 = vmul.f32 %v1113, %v903
        %v1130 = vmul.f32 %v1114, %v907
        %v1131 = vmul.f32 %v1115, %v903
        %v1132 = vmul.f32 %v1116, %v907
        %v1133 = vmul.f32 %v1117, %v903
        %v1134 = vmul.f32 %v1118, %v907
        %v1135 = vmul.f32 %v1119, %v903
        %v1136 = vmul.f32 %v1120, %v907
        %v1137 = vmul.f32 %v1121, %v903
        %v1138 = vmul.f32 %v1122, %v907
        %v1139 = vmul.f32 %v1123, %v903
        %v1140 = vmul.f32 %v1124, %v907
        %v1141 = vmul.f32 %v1125, %v903
        %v1142 = vmul.f32 %v1126, %v907
        %v1143 = vmul.f32 %v1127, %v903
        %v1144 = vmul.f32 %v1128, %v907
        %v1145 = vadd.f32 %v1129, %v946
        %v1146 = vadd.f32 %v1130, %v950
        %v1147 = vadd.f32 %v1131, %v946
        %v1148 = vadd.f32 %v1132, %v950
        %v1149 = vadd.f32 %v1133, %v946
        %v1150 = vadd.f32 %v1134, %v950
        %v1151 = vadd.f32 %v1135, %v946
        %v1152 = vadd.f32 %v1136, %v950
        %v1153 = vadd.f32 %v1137, %v946
        %v1154 = vadd.f32 %v1138, %v950
        %v1155 = vadd.f32 %v1139, %v946
        %v1156 = vadd.f32 %v1140, %v950
        %v1157 = vadd.f32 %v1141, %v946
        %v1158 = vadd.f32 %v1142, %v950
        %v1159 = vadd.f32 %v1143, %v946
        %v1160 = vadd.f32 %v1144, %v950
        %v1161 = vpack.c.bf16 %v1147, %v1145
        %v1162 = vpack.c.bf16 %v1148, %v1146
        %v1163 = vpack.c.bf16 %v1151, %v1149
        %v1164 = vpack.c.bf16 %v1152, %v1150
        %v1165 = vpack.c.bf16 %v1155, %v1153
        %v1166 = vpack.c.bf16 %v1156, %v1154
        %v1167 = vpack.c.bf16 %v1159, %v1157
        %v1168 = vpack.c.bf16 %v1160, %v1158
        %v1169 = vld [vmem:[#allocation8] sm:$0xff]
        %v1170 = vld [vmem:[#allocation8 + $0x18] sm:$0xff]
        %v1171 = vld [vmem:[#allocation8 + $0x30] sm:$0xff]
        %v1172 = vld [vmem:[#allocation8 + $0x48] sm:$0xff]
        %v1173 = vld [vmem:[#allocation8 + $0x60] sm:$0xff]
        %v1174 = vld [vmem:[#allocation8 + $0x78] sm:$0xff]
        %v1175 = vld [vmem:[#allocation8 + $0x90] sm:$0xff]
        %v1176 = vld [vmem:[#allocation8 + $0xa8] sm:$0xff]
        %v1177 = vld [vmem:[#allocation8 + $0xc0] sm:$0xff]
        %v1178 = vld [vmem:[#allocation8 + $0xd8] sm:$0xff]
        %v1179 = vld [vmem:[#allocation8 + $0xf0] sm:$0xff]
        %v1180 = vld [vmem:[#allocation8 + $0x108] sm:$0xff]
        %v1181 = vld [vmem:[#allocation8 + $0x120] sm:$0xff]
        %v1182 = vld [vmem:[#allocation8 + $0x138] sm:$0xff]
        %v1183 = vld [vmem:[#allocation8 + $0x150] sm:$0xff]
        %v1184 = vld [vmem:[#allocation8 + $0x168] sm:$0xff]
        %v1185 = vld [vmem:[#allocation8 + $0x180] sm:$0xff]
        %v1186 = vld [vmem:[#allocation8 + $0x198] sm:$0xff]
        %v1187 = vld [vmem:[#allocation8 + $0x1b0] sm:$0xff]
        %v1188 = vld [vmem:[#allocation8 + $0x1c8] sm:$0xff]
        %v1189 = vld [vmem:[#allocation8 + $0x1e0] sm:$0xff]
        %v1190 = vld [vmem:[#allocation8 + $0x1f8] sm:$0xff]
        %v1191 = vld [vmem:[#allocation8 + $0x210] sm:$0xff]
        %v1192 = vld [vmem:[#allocation8 + $0x228] sm:$0xff]
        %v1193 = vld [vmem:[#allocation8 + $0x240] sm:$0xff]
        %v1194 = vld [vmem:[#allocation8 + $0x258] sm:$0xff]
        %v1195 = vld [vmem:[#allocation8 + $0x270] sm:$0xff]
        %v1196 = vld [vmem:[#allocation8 + $0x288] sm:$0xff]
        %v1197 = vld [vmem:[#allocation8 + $0x2a0] sm:$0xff]
        %v1198 = vld [vmem:[#allocation8 + $0x2b8] sm:$0xff]
        %v1199 = vld [vmem:[#allocation8 + $0x2d0] sm:$0xff]
        %v1200 = vld [vmem:[#allocation8 + $0x2e8] sm:$0xff]
        %v1233 = vunpack.c.l.b16 %v1169
        %v1234 = vunpack.c.h.b16 %v1169
        %v1235 = vunpack.c.l.b16 %v1170
        %v1236 = vunpack.c.h.b16 %v1170
        %v1237 = vunpack.c.l.b16 %v1171
        %v1238 = vunpack.c.h.b16 %v1171
        %v1239 = vunpack.c.l.b16 %v1172
        %v1240 = vunpack.c.h.b16 %v1172
        %v1241 = vunpack.c.l.b16 %v1173
        %v1242 = vunpack.c.h.b16 %v1173
        %v1243 = vunpack.c.l.b16 %v1174
        %v1244 = vunpack.c.h.b16 %v1174
        %v1245 = vunpack.c.l.b16 %v1175
        %v1246 = vunpack.c.h.b16 %v1175
        %v1247 = vunpack.c.l.b16 %v1176
        %v1248 = vunpack.c.h.b16 %v1176
        %v1249 = vunpack.c.l.b16 %v1177
        %v1250 = vunpack.c.h.b16 %v1177
        %v1251 = vunpack.c.l.b16 %v1178
        %v1252 = vunpack.c.h.b16 %v1178
        %v1253 = vunpack.c.l.b16 %v1179
        %v1254 = vunpack.c.h.b16 %v1179
        %v1255 = vunpack.c.l.b16 %v1180
        %v1256 = vunpack.c.h.b16 %v1180
        %v1257 = vunpack.c.l.b16 %v1181
        %v1258 = vunpack.c.h.b16 %v1181
        %v1259 = vunpack.c.l.b16 %v1182
        %v1260 = vunpack.c.h.b16 %v1182
        %v1261 = vunpack.c.l.b16 %v1183
        %v1262 = vunpack.c.h.b16 %v1183
        %v1263 = vunpack.c.l.b16 %v1184
        %v1264 = vunpack.c.h.b16 %v1184
        %v1265 = vunpack.c.l.b16 %v1185
        %v1266 = vunpack.c.h.b16 %v1185
        %v1267 = vunpack.c.l.b16 %v1186
        %v1268 = vunpack.c.h.b16 %v1186
        %v1269 = vunpack.c.l.b16 %v1187
        %v1270 = vunpack.c.h.b16 %v1187
        %v1271 = vunpack.c.l.b16 %v1188
        %v1272 = vunpack.c.h.b16 %v1188
        %v1273 = vunpack.c.l.b16 %v1189
        %v1274 = vunpack.c.h.b16 %v1189
        %v1275 = vunpack.c.l.b16 %v1190
        %v1276 = vunpack.c.h.b16 %v1190
        %v1277 = vunpack.c.l.b16 %v1191
        %v1278 = vunpack.c.h.b16 %v1191
        %v1279 = vunpack.c.l.b16 %v1192
        %v1280 = vunpack.c.h.b16 %v1192
        %v1281 = vunpack.c.l.b16 %v1193
        %v1282 = vunpack.c.h.b16 %v1193
        %v1283 = vunpack.c.l.b16 %v1194
        %v1284 = vunpack.c.h.b16 %v1194
        %v1285 = vunpack.c.l.b16 %v1195
        %v1286 = vunpack.c.h.b16 %v1195
        %v1287 = vunpack.c.l.b16 %v1196
        %v1288 = vunpack.c.h.b16 %v1196
        %v1289 = vunpack.c.l.b16 %v1197
        %v1290 = vunpack.c.h.b16 %v1197
        %v1291 = vunpack.c.l.b16 %v1198
        %v1292 = vunpack.c.h.b16 %v1198
        %v1293 = vunpack.c.l.b16 %v1199
        %v1294 = vunpack.c.h.b16 %v1199
        %v1295 = vunpack.c.l.b16 %v1200
        %v1296 = vunpack.c.h.b16 %v1200
        %v1297 = vpack.c.b16 %v1235, %v1233
        %v1298 = vpack.c.b16 %v1236, %v1234
        %v1299 = vpack.c.b16 %v1239, %v1237
        %v1300 = vpack.c.b16 %v1240, %v1238
        %v1301 = vpack.c.b16 %v1243, %v1241
        %v1302 = vpack.c.b16 %v1244, %v1242
        %v1303 = vpack.c.b16 %v1247, %v1245
        %v1304 = vpack.c.b16 %v1248, %v1246
        %v1305 = vpack.c.b16 %v1251, %v1249
        %v1306 = vpack.c.b16 %v1252, %v1250
        %v1307 = vpack.c.b16 %v1255, %v1253
        %v1308 = vpack.c.b16 %v1256, %v1254
        %v1309 = vpack.c.b16 %v1259, %v1257
        %v1310 = vpack.c.b16 %v1260, %v1258
        %v1311 = vpack.c.b16 %v1263, %v1261
        %v1312 = vpack.c.b16 %v1264, %v1262
        %v1313 = vpack.c.b16 %v1267, %v1265
        %v1314 = vpack.c.b16 %v1268, %v1266
        %v1315 = vpack.c.b16 %v1271, %v1269
        %v1316 = vpack.c.b16 %v1272, %v1270
        %v1317 = vpack.c.b16 %v1275, %v1273
        %v1318 = vpack.c.b16 %v1276, %v1274
        %v1319 = vpack.c.b16 %v1279, %v1277
        %v1320 = vpack.c.b16 %v1280, %v1278
        %v1321 = vpack.c.b16 %v1283, %v1281
        %v1322 = vpack.c.b16 %v1284, %v1282
        %v1323 = vpack.c.b16 %v1287, %v1285
        %v1324 = vpack.c.b16 %v1288, %v1286
        %v1325 = vpack.c.b16 %v1291, %v1289
        %v1326 = vpack.c.b16 %v1292, %v1290
        %v1327 = vpack.c.b16 %v1295, %v1293
        %v1328 = vpack.c.b16 %v1296, %v1294
        %1361 = vmatprep.subr.bf16.mxu0 %v1312
        %1362 = vmatpush1.bf16.msra.mxu0 %v1311
        %1363 = vmatprep.subr.bf16.mxu0 %v1310
        %1364 = vmatpush1.bf16.msra.mxu0 %v1309
        %1365 = vmatprep.subr.bf16.mxu0 %v1308
        %1366 = vmatpush1.bf16.msra.mxu0 %v1307
        %1367 = vmatprep.subr.bf16.mxu0 %v1306
        %1368 = vmatpush1.bf16.msra.mxu0 %v1305
        %1369 = vmatprep.subr.bf16.mxu0 %v1304
        %1370 = vmatpush1.bf16.msra.mxu0 %v1303
        %1371 = vmatprep.subr.bf16.mxu0 %v1302
        %1372 = vmatpush1.bf16.msra.mxu0 %v1301
        %1373 = vmatprep.subr.bf16.mxu0 %v1300
        %1374 = vmatpush1.bf16.msra.mxu0 %v1299
        %1375 = vmatprep.subr.bf16.mxu0 %v1298
        %1376 = vmatpush1.bf16.msra.mxu0 %v1297
        %1377 = vmatprep.subr.bf16.mxu0 %v1328
        %1378 = vmatpush2.bf16.msra.mxu0 %v1327
        %1379 = vmatprep.subr.bf16.mxu0 %v1326
        %1380 = vmatpush2.bf16.msra.mxu0 %v1325
        %1381 = vmatprep.subr.bf16.mxu0 %v1324
        %1382 = vmatpush2.bf16.msra.mxu0 %v1323
        %1383 = vmatprep.subr.bf16.mxu0 %v1322
        %1384 = vmatpush2.bf16.msra.mxu0 %v1321
        %1385 = vmatprep.subr.bf16.mxu0 %v1320
        %1386 = vmatpush2.bf16.msra.mxu0 %v1319
        %1387 = vmatprep.subr.bf16.mxu0 %v1318
        %1388 = vmatpush2.bf16.msra.mxu0 %v1317
        %1389 = vmatprep.subr.bf16.mxu0 %v1316
        %1390 = vmatpush2.bf16.msra.mxu0 %v1315
        %1391 = vmatprep.subr.bf16.mxu0 %v1314
        %1392 = vmatpush2.bf16.msra.mxu0 %v1313
        %1393 = vmatprep.mubr.bf16.mxu0 %v1162
        %1394 = vmatmul.mubr.bf16.gmra.mxu0 %v1161
        %v1395 = vpop.f32.mrf.mxu0
        %v1396 = vadd.f32 0.0, %v1395
        %v1397 = vpop.f32.mrf.mxu0
        %v1398 = vadd.f32 0.0, %v1397
        %v1399 = vpop.f32.mrf.mxu0
        %v1400 = vadd.f32 0.0, %v1399
        %v1401 = vpop.f32.mrf.mxu0
        %v1402 = vadd.f32 0.0, %v1401
        %1403 = vmatprep.mubr.bf16.mxu0 %v1164
        %1404 = vmatmul.mubr.bf16.gmra.mxu0 %v1163
        %v1405 = vpop.f32.mrf.mxu0
        %v1406 = vadd.f32 0.0, %v1405
        %v1407 = vpop.f32.mrf.mxu0
        %v1408 = vadd.f32 0.0, %v1407
        %v1409 = vpop.f32.mrf.mxu0
        %v1410 = vadd.f32 0.0, %v1409
        %v1411 = vpop.f32.mrf.mxu0
        %v1412 = vadd.f32 0.0, %v1411
        %1413 = vmatprep.mubr.bf16.mxu0 %v1166
        %1414 = vmatmul.mubr.bf16.gmra.mxu0 %v1165
        %v1415 = vpop.f32.mrf.mxu0
        %v1416 = vadd.f32 0.0, %v1415
        %v1417 = vpop.f32.mrf.mxu0
        %v1418 = vadd.f32 0.0, %v1417
        %v1419 = vpop.f32.mrf.mxu0
        %v1420 = vadd.f32 0.0, %v1419
        %v1421 = vpop.f32.mrf.mxu0
        %v1422 = vadd.f32 0.0, %v1421
        %1423 = vmatprep.mubr.bf16.mxu0 %v1168
        %1424 = vmatmul.mubr.bf16.gmra.mxu0 %v1167
        %v1425 = vpop.f32.mrf.mxu0
        %v1426 = vadd.f32 0.0, %v1425
        %v1427 = vpop.f32.mrf.mxu0
        %v1428 = vadd.f32 0.0, %v1427
        %v1429 = vpop.f32.mrf.mxu0
        %v1430 = vadd.f32 0.0, %v1429
        %v1431 = vpop.f32.mrf.mxu0
        %v1432 = vadd.f32 0.0, %v1431
        %1433 = vdwg.mxu0
        %v1434 = vpack.c.bf16 %v1400, %v1396
        %v1435 = vpack.c.bf16 %v1402, %v1398
        %v1436 = vpack.c.bf16 %v1410, %v1406
        %v1437 = vpack.c.bf16 %v1412, %v1408
        %v1438 = vpack.c.bf16 %v1420, %v1416
        %v1439 = vpack.c.bf16 %v1422, %v1418
        %v1440 = vpack.c.bf16 %v1430, %v1426
        %v1441 = vpack.c.bf16 %v1432, %v1428
        %v1442 = vld [vmem:[#allocation8 + $0x8] sm:$0xff]
        %v1443 = vld [vmem:[#allocation8 + $0x10] sm:$0xff]
        %v1444 = vld [vmem:[#allocation8 + $0x20] sm:$0xff]
        %v1445 = vld [vmem:[#allocation8 + $0x28] sm:$0xff]
        %v1446 = vld [vmem:[#allocation8 + $0x38] sm:$0xff]
        %v1447 = vld [vmem:[#allocation8 + $0x40] sm:$0xff]
        %v1448 = vld [vmem:[#allocation8 + $0x50] sm:$0xff]
        %v1449 = vld [vmem:[#allocation8 + $0x58] sm:$0xff]
        %v1450 = vld [vmem:[#allocation8 + $0x68] sm:$0xff]
        %v1451 = vld [vmem:[#allocation8 + $0x70] sm:$0xff]
        %v1452 = vld [vmem:[#allocation8 + $0x80] sm:$0xff]
        %v1453 = vld [vmem:[#allocation8 + $0x88] sm:$0xff]
        %v1454 = vld [vmem:[#allocation8 + $0x98] sm:$0xff]
        %v1455 = vld [vmem:[#allocation8 + $0xa0] sm:$0xff]
        %v1456 = vld [vmem:[#allocation8 + $0xb0] sm:$0xff]
        %v1457 = vld [vmem:[#allocation8 + $0xb8] sm:$0xff]
        %v1458 = vld [vmem:[#allocation8 + $0xc8] sm:$0xff]
        %v1459 = vld [vmem:[#allocation8 + $0xd0] sm:$0xff]
        %v1460 = vld [vmem:[#allocation8 + $0xe0] sm:$0xff]
        %v1461 = vld [vmem:[#allocation8 + $0xe8] sm:$0xff]
        %v1462 = vld [vmem:[#allocation8 + $0xf8] sm:$0xff]
        %v1463 = vld [vmem:[#allocation8 + $0x100] sm:$0xff]
        %v1464 = vld [vmem:[#allocation8 + $0x110] sm:$0xff]
        %v1465 = vld [vmem:[#allocation8 + $0x118] sm:$0xff]
        %v1466 = vld [vmem:[#allocation8 + $0x128] sm:$0xff]
        %v1467 = vld [vmem:[#allocation8 + $0x130] sm:$0xff]
        %v1468 = vld [vmem:[#allocation8 + $0x140] sm:$0xff]
        %v1469 = vld [vmem:[#allocation8 + $0x148] sm:$0xff]
        %v1470 = vld [vmem:[#allocation8 + $0x158] sm:$0xff]
        %v1471 = vld [vmem:[#allocation8 + $0x160] sm:$0xff]
        %v1472 = vld [vmem:[#allocation8 + $0x170] sm:$0xff]
        %v1473 = vld [vmem:[#allocation8 + $0x178] sm:$0xff]
        %v1474 = vld [vmem:[#allocation8 + $0x188] sm:$0xff]
        %v1475 = vld [vmem:[#allocation8 + $0x190] sm:$0xff]
        %v1476 = vld [vmem:[#allocation8 + $0x1a0] sm:$0xff]
        %v1477 = vld [vmem:[#allocation8 + $0x1a8] sm:$0xff]
        %v1478 = vld [vmem:[#allocation8 + $0x1b8] sm:$0xff]
        %v1479 = vld [vmem:[#allocation8 + $0x1c0] sm:$0xff]
        %v1480 = vld [vmem:[#allocation8 + $0x1d0] sm:$0xff]
        %v1481 = vld [vmem:[#allocation8 + $0x1d8] sm:$0xff]
        %v1482 = vld [vmem:[#allocation8 + $0x1e8] sm:$0xff]
        %v1483 = vld [vmem:[#allocation8 + $0x1f0] sm:$0xff]
        %v1484 = vld [vmem:[#allocation8 + $0x200] sm:$0xff]
        %v1485 = vld [vmem:[#allocation8 + $0x208] sm:$0xff]
        %v1486 = vld [vmem:[#allocation8 + $0x218] sm:$0xff]
        %v1487 = vld [vmem:[#allocation8 + $0x220] sm:$0xff]
        %v1488 = vld [vmem:[#allocation8 + $0x230] sm:$0xff]
        %v1489 = vld [vmem:[#allocation8 + $0x238] sm:$0xff]
        %v1490 = vld [vmem:[#allocation8 + $0x248] sm:$0xff]
        %v1491 = vld [vmem:[#allocation8 + $0x250] sm:$0xff]
        %v1492 = vld [vmem:[#allocation8 + $0x260] sm:$0xff]
        %v1493 = vld [vmem:[#allocation8 + $0x268] sm:$0xff]
        %v1494 = vld [vmem:[#allocation8 + $0x278] sm:$0xff]
        %v1495 = vld [vmem:[#allocation8 + $0x280] sm:$0xff]
        %v1496 = vld [vmem:[#allocation8 + $0x290] sm:$0xff]
        %v1497 = vld [vmem:[#allocation8 + $0x298] sm:$0xff]
        %v1498 = vld [vmem:[#allocation8 + $0x2a8] sm:$0xff]
        %v1499 = vld [vmem:[#allocation8 + $0x2b0] sm:$0xff]
        %v1500 = vld [vmem:[#allocation8 + $0x2c0] sm:$0xff]
        %v1501 = vld [vmem:[#allocation8 + $0x2c8] sm:$0xff]
        %v1502 = vld [vmem:[#allocation8 + $0x2d8] sm:$0xff]
        %v1503 = vld [vmem:[#allocation8 + $0x2e0] sm:$0xff]
        %v1504 = vld [vmem:[#allocation8 + $0x2f0] sm:$0xff]
        %v1505 = vld [vmem:[#allocation8 + $0x2f8] sm:$0xff]
        %v1570 = vunpack.c.l.b16 %v1442
        %v1571 = vunpack.c.h.b16 %v1442
        %v1572 = vunpack.c.l.b16 %v1443
        %v1573 = vunpack.c.h.b16 %v1443
        %v1574 = vunpack.c.l.b16 %v1444
        %v1575 = vunpack.c.h.b16 %v1444
        %v1576 = vunpack.c.l.b16 %v1445
        %v1577 = vunpack.c.h.b16 %v1445
        %v1578 = vunpack.c.l.b16 %v1446
        %v1579 = vunpack.c.h.b16 %v1446
        %v1580 = vunpack.c.l.b16 %v1447
        %v1581 = vunpack.c.h.b16 %v1447
        %v1582 = vunpack.c.l.b16 %v1448
        %v1583 = vunpack.c.h.b16 %v1448
        %v1584 = vunpack.c.l.b16 %v1449
        %v1585 = vunpack.c.h.b16 %v1449
        %v1586 = vunpack.c.l.b16 %v1450
        %v1587 = vunpack.c.h.b16 %v1450
        %v1588 = vunpack.c.l.b16 %v1451
        %v1589 = vunpack.c.h.b16 %v1451
        %v1590 = vunpack.c.l.b16 %v1452
        %v1591 = vunpack.c.h.b16 %v1452
        %v1592 = vunpack.c.l.b16 %v1453
        %v1593 = vunpack.c.h.b16 %v1453
        %v1594 = vunpack.c.l.b16 %v1454
        %v1595 = vunpack.c.h.b16 %v1454
        %v1596 = vunpack.c.l.b16 %v1455
        %v1597 = vunpack.c.h.b16 %v1455
        %v1598 = vunpack.c.l.b16 %v1456
        %v1599 = vunpack.c.h.b16 %v1456
        %v1600 = vunpack.c.l.b16 %v1457
        %v1601 = vunpack.c.h.b16 %v1457
        %v1602 = vunpack.c.l.b16 %v1458
        %v1603 = vunpack.c.h.b16 %v1458
        %v1604 = vunpack.c.l.b16 %v1459
        %v1605 = vunpack.c.h.b16 %v1459
        %v1606 = vunpack.c.l.b16 %v1460
        %v1607 = vunpack.c.h.b16 %v1460
        %v1608 = vunpack.c.l.b16 %v1461
        %v1609 = vunpack.c.h.b16 %v1461
        %v1610 = vunpack.c.l.b16 %v1462
        %v1611 = vunpack.c.h.b16 %v1462
        %v1612 = vunpack.c.l.b16 %v1463
        %v1613 = vunpack.c.h.b16 %v1463
        %v1614 = vunpack.c.l.b16 %v1464
        %v1615 = vunpack.c.h.b16 %v1464
        %v1616 = vunpack.c.l.b16 %v1465
        %v1617 = vunpack.c.h.b16 %v1465
        %v1618 = vunpack.c.l.b16 %v1466
        %v1619 = vunpack.c.h.b16 %v1466
        %v1620 = vunpack.c.l.b16 %v1467
        %v1621 = vunpack.c.h.b16 %v1467
        %v1622 = vunpack.c.l.b16 %v1468
        %v1623 = vunpack.c.h.b16 %v1468
        %v1624 = vunpack.c.l.b16 %v1469
        %v1625 = vunpack.c.h.b16 %v1469
        %v1626 = vunpack.c.l.b16 %v1470
        %v1627 = vunpack.c.h.b16 %v1470
        %v1628 = vunpack.c.l.b16 %v1471
        %v1629 = vunpack.c.h.b16 %v1471
        %v1630 = vunpack.c.l.b16 %v1472
        %v1631 = vunpack.c.h.b16 %v1472
        %v1632 = vunpack.c.l.b16 %v1473
        %v1633 = vunpack.c.h.b16 %v1473
        %v1634 = vunpack.c.l.b16 %v1474
        %v1635 = vunpack.c.h.b16 %v1474
        %v1636 = vunpack.c.l.b16 %v1475
        %v1637 = vunpack.c.h.b16 %v1475
        %v1638 = vunpack.c.l.b16 %v1476
        %v1639 = vunpack.c.h.b16 %v1476
        %v1640 = vunpack.c.l.b16 %v1477
        %v1641 = vunpack.c.h.b16 %v1477
        %v1642 = vunpack.c.l.b16 %v1478
        %v1643 = vunpack.c.h.b16 %v1478
        %v1644 = vunpack.c.l.b16 %v1479
        %v1645 = vunpack.c.h.b16 %v1479
        %v1646 = vunpack.c.l.b16 %v1480
        %v1647 = vunpack.c.h.b16 %v1480
        %v1648 = vunpack.c.l.b16 %v1481
        %v1649 = vunpack.c.h.b16 %v1481
        %v1650 = vunpack.c.l.b16 %v1482
        %v1651 = vunpack.c.h.b16 %v1482
        %v1652 = vunpack.c.l.b16 %v1483
        %v1653 = vunpack.c.h.b16 %v1483
        %v1654 = vunpack.c.l.b16 %v1484
        %v1655 = vunpack.c.h.b16 %v1484
        %v1656 = vunpack.c.l.b16 %v1485
        %v1657 = vunpack.c.h.b16 %v1485
        %v1658 = vunpack.c.l.b16 %v1486
        %v1659 = vunpack.c.h.b16 %v1486
        %v1660 = vunpack.c.l.b16 %v1487
        %v1661 = vunpack.c.h.b16 %v1487
        %v1662 = vunpack.c.l.b16 %v1488
        %v1663 = vunpack.c.h.b16 %v1488
        %v1664 = vunpack.c.l.b16 %v1489
        %v1665 = vunpack.c.h.b16 %v1489
        %v1666 = vunpack.c.l.b16 %v1490
        %v1667 = vunpack.c.h.b16 %v1490
        %v1668 = vunpack.c.l.b16 %v1491
        %v1669 = vunpack.c.h.b16 %v1491
        %v1670 = vunpack.c.l.b16 %v1492
        %v1671 = vunpack.c.h.b16 %v1492
        %v1672 = vunpack.c.l.b16 %v1493
        %v1673 = vunpack.c.h.b16 %v1493
        %v1674 = vunpack.c.l.b16 %v1494
        %v1675 = vunpack.c.h.b16 %v1494
        %v1676 = vunpack.c.l.b16 %v1495
        %v1677 = vunpack.c.h.b16 %v1495
        %v1678 = vunpack.c.l.b16 %v1496
        %v1679 = vunpack.c.h.b16 %v1496
        %v1680 = vunpack.c.l.b16 %v1497
        %v1681 = vunpack.c.h.b16 %v1497
        %v1682 = vunpack.c.l.b16 %v1498
        %v1683 = vunpack.c.h.b16 %v1498
        %v1684 = vunpack.c.l.b16 %v1499
        %v1685 = vunpack.c.h.b16 %v1499
        %v1686 = vunpack.c.l.b16 %v1500
        %v1687 = vunpack.c.h.b16 %v1500
        %v1688 = vunpack.c.l.b16 %v1501
        %v1689 = vunpack.c.h.b16 %v1501
        %v1690 = vunpack.c.l.b16 %v1502
        %v1691 = vunpack.c.h.b16 %v1502
        %v1692 = vunpack.c.l.b16 %v1503
        %v1693 = vunpack.c.h.b16 %v1503
        %v1694 = vunpack.c.l.b16 %v1504
        %v1695 = vunpack.c.h.b16 %v1504
        %v1696 = vunpack.c.l.b16 %v1505
        %v1697 = vunpack.c.h.b16 %v1505
        %v1698 = vpack.c.b16 %v1574, %v1570
        %v1699 = vpack.c.b16 %v1575, %v1571
        %v1700 = vpack.c.b16 %v1576, %v1572
        %v1701 = vpack.c.b16 %v1577, %v1573
        %v1702 = vpack.c.b16 %v1582, %v1578
        %v1703 = vpack.c.b16 %v1583, %v1579
        %v1704 = vpack.c.b16 %v1584, %v1580
        %v1705 = vpack.c.b16 %v1585, %v1581
        %v1706 = vpack.c.b16 %v1590, %v1586
        %v1707 = vpack.c.b16 %v1591, %v1587
        %v1708 = vpack.c.b16 %v1592, %v1588
        %v1709 = vpack.c.b16 %v1593, %v1589
        %v1710 = vpack.c.b16 %v1598, %v1594
        %v1711 = vpack.c.b16 %v1599, %v1595
        %v1712 = vpack.c.b16 %v1600, %v1596
        %v1713 = vpack.c.b16 %v1601, %v1597
        %v1714 = vpack.c.b16 %v1606, %v1602
        %v1715 = vpack.c.b16 %v1607, %v1603
        %v1716 = vpack.c.b16 %v1608, %v1604
        %v1717 = vpack.c.b16 %v1609, %v1605
        %v1718 = vpack.c.b16 %v1614, %v1610
        %v1719 = vpack.c.b16 %v1615, %v1611
        %v1720 = vpack.c.b16 %v1616, %v1612
        %v1721 = vpack.c.b16 %v1617, %v1613
        %v1722 = vpack.c.b16 %v1622, %v1618
        %v1723 = vpack.c.b16 %v1623, %v1619
        %v1724 = vpack.c.b16 %v1624, %v1620
        %v1725 = vpack.c.b16 %v1625, %v1621
        %v1726 = vpack.c.b16 %v1630, %v1626
        %v1727 = vpack.c.b16 %v1631, %v1627
        %v1728 = vpack.c.b16 %v1632, %v1628
        %v1729 = vpack.c.b16 %v1633, %v1629
        %v1730 = vpack.c.b16 %v1638, %v1634
        %v1731 = vpack.c.b16 %v1639, %v1635
        %v1732 = vpack.c.b16 %v1640, %v1636
        %v1733 = vpack.c.b16 %v1641, %v1637
        %v1734 = vpack.c.b16 %v1646, %v1642
        %v1735 = vpack.c.b16 %v1647, %v1643
        %v1736 = vpack.c.b16 %v1648, %v1644
        %v1737 = vpack.c.b16 %v1649, %v1645
        %v1738 = vpack.c.b16 %v1654, %v1650
        %v1739 = vpack.c.b16 %v1655, %v1651
        %v1740 = vpack.c.b16 %v1656, %v1652
        %v1741 = vpack.c.b16 %v1657, %v1653
        %v1742 = vpack.c.b16 %v1662, %v1658
        %v1743 = vpack.c.b16 %v1663, %v1659
        %v1744 = vpack.c.b16 %v1664, %v1660
        %v1745 = vpack.c.b16 %v1665, %v1661
        %v1746 = vpack.c.b16 %v1670, %v1666
        %v1747 = vpack.c.b16 %v1671, %v1667
        %v1748 = vpack.c.b16 %v1672, %v1668
        %v1749 = vpack.c.b16 %v1673, %v1669
        %v1750 = vpack.c.b16 %v1678, %v1674
        %v1751 = vpack.c.b16 %v1679, %v1675
        %v1752 = vpack.c.b16 %v1680, %v1676
        %v1753 = vpack.c.b16 %v1681, %v1677
        %v1754 = vpack.c.b16 %v1686, %v1682
        %v1755 = vpack.c.b16 %v1687, %v1683
        %v1756 = vpack.c.b16 %v1688, %v1684
        %v1757 = vpack.c.b16 %v1689, %v1685
        %v1758 = vpack.c.b16 %v1694, %v1690
        %v1759 = vpack.c.b16 %v1695, %v1691
        %v1760 = vpack.c.b16 %v1696, %v1692
        %v1761 = vpack.c.b16 %v1697, %v1693
        %1826 = vmatprep.subr.bf16.mxu0 %v1727
        %1827 = vmatpush1.bf16.msra.mxu0 %v1726
        %1828 = vmatprep.subr.bf16.mxu0 %v1723
        %1829 = vmatpush1.bf16.msra.mxu0 %v1722
        %1830 = vmatprep.subr.bf16.mxu0 %v1719
        %1831 = vmatpush1.bf16.msra.mxu0 %v1718
        %1832 = vmatprep.subr.bf16.mxu0 %v1715
        %1833 = vmatpush1.bf16.msra.mxu0 %v1714
        %1834 = vmatprep.subr.bf16.mxu0 %v1711
        %1835 = vmatpush1.bf16.msra.mxu0 %v1710
        %1836 = vmatprep.subr.bf16.mxu0 %v1707
        %1837 = vmatpush1.bf16.msra.mxu0 %v1706
        %1838 = vmatprep.subr.bf16.mxu0 %v1703
        %1839 = vmatpush1.bf16.msra.mxu0 %v1702
        %1840 = vmatprep.subr.bf16.mxu0 %v1699
        %1841 = vmatpush1.bf16.msra.mxu0 %v1698
        %1842 = vmatprep.subr.bf16.mxu0 %v1759
        %1843 = vmatpush2.bf16.msra.mxu0 %v1758
        %1844 = vmatprep.subr.bf16.mxu0 %v1755
        %1845 = vmatpush2.bf16.msra.mxu0 %v1754
        %1846 = vmatprep.subr.bf16.mxu0 %v1751
        %1847 = vmatpush2.bf16.msra.mxu0 %v1750
        %1848 = vmatprep.subr.bf16.mxu0 %v1747
        %1849 = vmatpush2.bf16.msra.mxu0 %v1746
        %1850 = vmatprep.subr.bf16.mxu0 %v1743
        %1851 = vmatpush2.bf16.msra.mxu0 %v1742
        %1852 = vmatprep.subr.bf16.mxu0 %v1739
        %1853 = vmatpush2.bf16.msra.mxu0 %v1738
        %1854 = vmatprep.subr.bf16.mxu0 %v1735
        %1855 = vmatpush2.bf16.msra.mxu0 %v1734
        %1856 = vmatprep.subr.bf16.mxu0 %v1731
        %1857 = vmatpush2.bf16.msra.mxu0 %v1730
        %1858 = vmatprep.mubr.bf16.mxu0 %v986
        %1859 = vmatmul.mubr.bf16.gmra.mxu0 %v985
        %v1860 = vpop.f32.mrf.mxu0
        %v1861 = vadd.f32 0.0, %v1860
        %v1862 = vpop.f32.mrf.mxu0
        %v1863 = vadd.f32 0.0, %v1862
        %v1864 = vpop.f32.mrf.mxu0
        %v1865 = vadd.f32 0.0, %v1864
        %v1866 = vpop.f32.mrf.mxu0
        %v1867 = vadd.f32 0.0, %v1866
        %1868 = vmatprep.mubr.bf16.mxu0 %v988
        %1869 = vmatmul.mubr.bf16.gmra.mxu0 %v987
        %v1870 = vpop.f32.mrf.mxu0
        %v1871 = vadd.f32 0.0, %v1870
        %v1872 = vpop.f32.mrf.mxu0
        %v1873 = vadd.f32 0.0, %v1872
        %v1874 = vpop.f32.mrf.mxu0
        %v1875 = vadd.f32 0.0, %v1874
        %v1876 = vpop.f32.mrf.mxu0
        %v1877 = vadd.f32 0.0, %v1876
        %1878 = vmatprep.mubr.bf16.mxu0 %v990
        %1879 = vmatmul.mubr.bf16.gmra.mxu0 %v989
        %v1880 = vpop.f32.mrf.mxu0
        %v1881 = vadd.f32 0.0, %v1880
        %v1882 = vpop.f32.mrf.mxu0
        %v1883 = vadd.f32 0.0, %v1882
        %v1884 = vpop.f32.mrf.mxu0
        %v1885 = vadd.f32 0.0, %v1884
        %v1886 = vpop.f32.mrf.mxu0
        %v1887 = vadd.f32 0.0, %v1886
        %1888 = vmatprep.mubr.bf16.mxu0 %v992
        %1889 = vmatmul.mubr.bf16.gmra.mxu0 %v991
        %v1890 = vpop.f32.mrf.mxu0
        %v1891 = vadd.f32 0.0, %v1890
        %v1892 = vpop.f32.mrf.mxu0
        %v1893 = vadd.f32 0.0, %v1892
        %v1894 = vpop.f32.mrf.mxu0
        %v1895 = vadd.f32 0.0, %v1894
        %v1896 = vpop.f32.mrf.mxu0
        %v1897 = vadd.f32 0.0, %v1896
        %1898 = vmatprep.mubr.bf16.mxu0 %v994
        %1899 = vmatmul.mubr.bf16.gmra.mxu0 %v993
        %v1900 = vpop.f32.mrf.mxu0
        %v1901 = vadd.f32 0.0, %v1900
        %v1902 = vpop.f32.mrf.mxu0
        %v1903 = vadd.f32 0.0, %v1902
        %v1904 = vpop.f32.mrf.mxu0
        %v1905 = vadd.f32 0.0, %v1904
        %v1906 = vpop.f32.mrf.mxu0
        %v1907 = vadd.f32 0.0, %v1906
        %1908 = vmatprep.mubr.bf16.mxu0 %v996
        %1909 = vmatmul.mubr.bf16.gmra.mxu0 %v995
        %v1910 = vpop.f32.mrf.mxu0
        %v1911 = vadd.f32 0.0, %v1910
        %v1912 = vpop.f32.mrf.mxu0
        %v1913 = vadd.f32 0.0, %v1912
        %v1914 = vpop.f32.mrf.mxu0
        %v1915 = vadd.f32 0.0, %v1914
        %v1916 = vpop.f32.mrf.mxu0
        %v1917 = vadd.f32 0.0, %v1916
        %1918 = vmatprep.mubr.bf16.mxu0 %v998
        %1919 = vmatmul.mubr.bf16.gmra.mxu0 %v997
        %v1920 = vpop.f32.mrf.mxu0
        %v1921 = vadd.f32 0.0, %v1920
        %v1922 = vpop.f32.mrf.mxu0
        %v1923 = vadd.f32 0.0, %v1922
        %v1924 = vpop.f32.mrf.mxu0
        %v1925 = vadd.f32 0.0, %v1924
        %v1926 = vpop.f32.mrf.mxu0
        %v1927 = vadd.f32 0.0, %v1926
        %1928 = vmatprep.mubr.bf16.mxu0 %v1000
        %1929 = vmatmul.mubr.bf16.gmra.mxu0 %v999
        %v1930 = vpop.f32.mrf.mxu0
        %v1931 = vadd.f32 0.0, %v1930
        %v1932 = vpop.f32.mrf.mxu0
        %v1933 = vadd.f32 0.0, %v1932
        %v1934 = vpop.f32.mrf.mxu0
        %v1935 = vadd.f32 0.0, %v1934
        %v1936 = vpop.f32.mrf.mxu0
        %v1937 = vadd.f32 0.0, %v1936
        %1938 = vdwg.mxu0
        %1939 = vmatprep.subr.bf16.mxu0 %v1729
        %1940 = vmatpush1.bf16.msra.mxu0 %v1728
        %1941 = vmatprep.subr.bf16.mxu0 %v1725
        %1942 = vmatpush1.bf16.msra.mxu0 %v1724
        %1943 = vmatprep.subr.bf16.mxu0 %v1721
        %1944 = vmatpush1.bf16.msra.mxu0 %v1720
        %1945 = vmatprep.subr.bf16.mxu0 %v1717
        %1946 = vmatpush1.bf16.msra.mxu0 %v1716
        %1947 = vmatprep.subr.bf16.mxu0 %v1713
        %1948 = vmatpush1.bf16.msra.mxu0 %v1712
        %1949 = vmatprep.subr.bf16.mxu0 %v1709
        %1950 = vmatpush1.bf16.msra.mxu0 %v1708
        %1951 = vmatprep.subr.bf16.mxu0 %v1705
        %1952 = vmatpush1.bf16.msra.mxu0 %v1704
        %1953 = vmatprep.subr.bf16.mxu0 %v1701
        %1954 = vmatpush1.bf16.msra.mxu0 %v1700
        %1955 = vmatprep.subr.bf16.mxu0 %v1761
        %1956 = vmatpush2.bf16.msra.mxu0 %v1760
        %1957 = vmatprep.subr.bf16.mxu0 %v1757
        %1958 = vmatpush2.bf16.msra.mxu0 %v1756
        %1959 = vmatprep.subr.bf16.mxu0 %v1753
        %1960 = vmatpush2.bf16.msra.mxu0 %v1752
        %1961 = vmatprep.subr.bf16.mxu0 %v1749
        %1962 = vmatpush2.bf16.msra.mxu0 %v1748
        %1963 = vmatprep.subr.bf16.mxu0 %v1745
        %1964 = vmatpush2.bf16.msra.mxu0 %v1744
        %1965 = vmatprep.subr.bf16.mxu0 %v1741
        %1966 = vmatpush2.bf16.msra.mxu0 %v1740
        %1967 = vmatprep.subr.bf16.mxu0 %v1737
        %1968 = vmatpush2.bf16.msra.mxu0 %v1736
        %1969 = vmatprep.subr.bf16.mxu0 %v1733
        %1970 = vmatpush2.bf16.msra.mxu0 %v1732
        %1971 = vmatprep.mubr.bf16.mxu0 %v986
        %1972 = vmatmul.mubr.bf16.gmra.mxu0 %v985
        %v1973 = vpop.f32.mrf.mxu0
        %v1974 = vadd.f32 0.0, %v1973
        %v1975 = vpop.f32.mrf.mxu0
        %v1976 = vadd.f32 0.0, %v1975
        %v1977 = vpop.f32.mrf.mxu0
        %v1978 = vadd.f32 0.0, %v1977
        %v1979 = vpop.f32.mrf.mxu0
        %v1980 = vadd.f32 0.0, %v1979
        %1981 = vmatprep.mubr.bf16.mxu0 %v988
        %1982 = vmatmul.mubr.bf16.gmra.mxu0 %v987
        %v1983 = vpop.f32.mrf.mxu0
        %v1984 = vadd.f32 0.0, %v1983
        %v1985 = vpop.f32.mrf.mxu0
        %v1986 = vadd.f32 0.0, %v1985
        %v1987 = vpop.f32.mrf.mxu0
        %v1988 = vadd.f32 0.0, %v1987
        %v1989 = vpop.f32.mrf.mxu0
        %v1990 = vadd.f32 0.0, %v1989
        %1991 = vmatprep.mubr.bf16.mxu0 %v990
        %1992 = vmatmul.mubr.bf16.gmra.mxu0 %v989
        %v1993 = vpop.f32.mrf.mxu0
        %v1994 = vadd.f32 0.0, %v1993
        %v1995 = vpop.f32.mrf.mxu0
        %v1996 = vadd.f32 0.0, %v1995
        %v1997 = vpop.f32.mrf.mxu0
        %v1998 = vadd.f32 0.0, %v1997
        %v1999 = vpop.f32.mrf.mxu0
        %v2000 = vadd.f32 0.0, %v1999
        %2001 = vmatprep.mubr.bf16.mxu0 %v992
        %2002 = vmatmul.mubr.bf16.gmra.mxu0 %v991
        %v2003 = vpop.f32.mrf.mxu0
        %v2004 = vadd.f32 0.0, %v2003
        %v2005 = vpop.f32.mrf.mxu0
        %v2006 = vadd.f32 0.0, %v2005
        %v2007 = vpop.f32.mrf.mxu0
        %v2008 = vadd.f32 0.0, %v2007
        %v2009 = vpop.f32.mrf.mxu0
        %v2010 = vadd.f32 0.0, %v2009
        %2011 = vmatprep.mubr.bf16.mxu0 %v994
        %2012 = vmatmul.mubr.bf16.gmra.mxu0 %v993
        %v2013 = vpop.f32.mrf.mxu0
        %v2014 = vadd.f32 0.0, %v2013
        %v2015 = vpop.f32.mrf.mxu0
        %v2016 = vadd.f32 0.0, %v2015
        %v2017 = vpop.f32.mrf.mxu0
        %v2018 = vadd.f32 0.0, %v2017
        %v2019 = vpop.f32.mrf.mxu0
        %v2020 = vadd.f32 0.0, %v2019
        %2021 = vmatprep.mubr.bf16.mxu0 %v996
        %2022 = vmatmul.mubr.bf16.gmra.mxu0 %v995
        %v2023 = vpop.f32.mrf.mxu0
        %v2024 = vadd.f32 0.0, %v2023
        %v2025 = vpop.f32.mrf.mxu0
        %v2026 = vadd.f32 0.0, %v2025
        %v2027 = vpop.f32.mrf.mxu0
        %v2028 = vadd.f32 0.0, %v2027
        %v2029 = vpop.f32.mrf.mxu0
        %v2030 = vadd.f32 0.0, %v2029
        %2031 = vmatprep.mubr.bf16.mxu0 %v998
        %2032 = vmatmul.mubr.bf16.gmra.mxu0 %v997
        %v2033 = vpop.f32.mrf.mxu0
        %v2034 = vadd.f32 0.0, %v2033
        %v2035 = vpop.f32.mrf.mxu0
        %v2036 = vadd.f32 0.0, %v2035
        %v2037 = vpop.f32.mrf.mxu0
        %v2038 = vadd.f32 0.0, %v2037
        %v2039 = vpop.f32.mrf.mxu0
        %v2040 = vadd.f32 0.0, %v2039
        %2041 = vmatprep.mubr.bf16.mxu0 %v1000
        %2042 = vmatmul.mubr.bf16.gmra.mxu0 %v999
        %v2043 = vpop.f32.mrf.mxu0
        %v2044 = vadd.f32 0.0, %v2043
        %v2045 = vpop.f32.mrf.mxu0
        %v2046 = vadd.f32 0.0, %v2045
        %v2047 = vpop.f32.mrf.mxu0
        %v2048 = vadd.f32 0.0, %v2047
        %v2049 = vpop.f32.mrf.mxu0
        %v2050 = vadd.f32 0.0, %v2049
        %2051 = vdwg.mxu0
        %v2052 = vpack.c.bf16 %v1865, %v1861
        %v2053 = vpack.c.bf16 %v1867, %v1863
        %v2054 = vpack.c.bf16 %v1978, %v1974
        %v2055 = vpack.c.bf16 %v1980, %v1976
        %v2056 = vpack.c.bf16 %v1875, %v1871
        %v2057 = vpack.c.bf16 %v1877, %v1873
        %v2058 = vpack.c.bf16 %v1988, %v1984
        %v2059 = vpack.c.bf16 %v1990, %v1986
        %v2060 = vpack.c.bf16 %v1885, %v1881
        %v2061 = vpack.c.bf16 %v1887, %v1883
        %v2062 = vpack.c.bf16 %v1998, %v1994
        %v2063 = vpack.c.bf16 %v2000, %v1996
        %v2064 = vpack.c.bf16 %v1895, %v1891
        %v2065 = vpack.c.bf16 %v1897, %v1893
        %v2066 = vpack.c.bf16 %v2008, %v2004
        %v2067 = vpack.c.bf16 %v2010, %v2006
        %v2068 = vpack.c.bf16 %v1905, %v1901
        %v2069 = vpack.c.bf16 %v1907, %v1903
        %v2070 = vpack.c.bf16 %v2018, %v2014
        %v2071 = vpack.c.bf16 %v2020, %v2016
        %v2072 = vpack.c.bf16 %v1915, %v1911
        %v2073 = vpack.c.bf16 %v1917, %v1913
        %v2074 = vpack.c.bf16 %v2028, %v2024
        %v2075 = vpack.c.bf16 %v2030, %v2026
        %v2076 = vpack.c.bf16 %v1925, %v1921
        %v2077 = vpack.c.bf16 %v1927, %v1923
        %v2078 = vpack.c.bf16 %v2038, %v2034
        %v2079 = vpack.c.bf16 %v2040, %v2036
        %v2080 = vpack.c.bf16 %v1935, %v1931
        %v2081 = vpack.c.bf16 %v1937, %v1933
        %v2082 = vpack.c.bf16 %v2048, %v2044
        %v2083 = vpack.c.bf16 %v2050, %v2046
        %v2084 = vld [vmem:[%s515] sm:$0xf]
        %v2085 = vld [vmem:[%s515 + $0x4] sm:$0xf]
        %v2086 = vld [vmem:[%s515 + $0x8] sm:$0xf]
        %v2087 = vld [vmem:[%s515 + $0xc] sm:$0xf]
        %v2088 = vld [vmem:[%s515 + $0x10] sm:$0xf]
        %v2089 = vld [vmem:[%s515 + $0x14] sm:$0xf]
        %v2090 = vld [vmem:[%s515 + $0x18] sm:$0xf]
        %v2091 = vld [vmem:[%s515 + $0x1c] sm:$0xf]
        %v2092 = vunpack.c.l.bf16 %v2084
        %v2093 = vunpack.c.l.bf16 %v2085
        %v2094 = vunpack.c.l.bf16 %v2086
        %v2095 = vunpack.c.l.bf16 %v2087
        %v2096 = vunpack.c.l.bf16 %v2088
        %v2097 = vunpack.c.l.bf16 %v2089
        %v2098 = vunpack.c.l.bf16 %v2090
        %v2099 = vunpack.c.l.bf16 %v2091
        %vm2100 = vcmp.eq.f32.partialorder %v2092, 0.0
        %vm2101 = vcmp.eq.f32.partialorder %v2093, 0.0
        %vm2102 = vcmp.eq.f32.partialorder %v2094, 0.0
        %vm2103 = vcmp.eq.f32.partialorder %v2095, 0.0
        %vm2104 = vcmp.eq.f32.partialorder %v2096, 0.0
        %vm2105 = vcmp.eq.f32.partialorder %v2097, 0.0
        %vm2106 = vcmp.eq.f32.partialorder %v2098, 0.0
        %vm2107 = vcmp.eq.f32.partialorder %v2099, 0.0
        %v2108 = vsel %vm2100, -1e+09, 0.0
        %v2109 = vsel %vm2101, -1e+09, 0.0
        %v2110 = vsel %vm2102, -1e+09, 0.0
        %v2111 = vsel %vm2103, -1e+09, 0.0
        %v2112 = vsel %vm2104, -1e+09, 0.0
        %v2113 = vsel %vm2105, -1e+09, 0.0
        %v2114 = vsel %vm2106, -1e+09, 0.0
        %v2115 = vsel %vm2107, -1e+09, 0.0
        %2116 = vmatprep.subr.bf16.mxu0 0
        %2117 = vmatpush1.bf16.xpose.msra.mxu0 %v2080
        %2118 = vmatprep.subr.bf16.mxu0 0
        %2119 = vmatpush1.bf16.xpose.msra.mxu0 %v2076
        %2120 = vmatprep.subr.bf16.mxu0 0
        %2121 = vmatpush1.bf16.xpose.msra.mxu0 %v2072
        %2122 = vmatprep.subr.bf16.mxu0 0
        %2123 = vmatpush1.bf16.xpose.msra.mxu0 %v2068
        %2124 = vmatprep.subr.bf16.mxu0 0
        %2125 = vmatpush1.bf16.xpose.msra.mxu0 %v2064
        %2126 = vmatprep.subr.bf16.mxu0 0
        %2127 = vmatpush1.bf16.xpose.msra.mxu0 %v2060
        %2128 = vmatprep.subr.bf16.mxu0 0
        %2129 = vmatpush1.bf16.xpose.msra.mxu0 %v2056
        %2130 = vmatprep.subr.bf16.mxu0 0
        %2131 = vmatpush1.bf16.xpose.msra.mxu0 %v2052
        %2132 = vmatprep.subr.bf16.mxu0 0
        %2133 = vmatpush2.bf16.xpose.msra.mxu0 0
        %2134 = vmatprep.subr.bf16.mxu0 0
        %2135 = vmatpush2.bf16.xpose.msra.mxu0 0
        %2136 = vmatprep.subr.bf16.mxu0 0
        %2137 = vmatpush2.bf16.xpose.msra.mxu0 0
        %2138 = vmatprep.subr.bf16.mxu0 0
        %2139 = vmatpush2.bf16.xpose.msra.mxu0 0
        %2140 = vmatprep.subr.bf16.mxu0 0
        %2141 = vmatpush2.bf16.xpose.msra.mxu0 0
        %2142 = vmatprep.subr.bf16.mxu0 0
        %2143 = vmatpush2.bf16.xpose.msra.mxu0 0
        %2144 = vmatprep.subr.bf16.mxu0 0
        %2145 = vmatpush2.bf16.xpose.msra.mxu0 0
        %2146 = vmatprep.subr.bf16.mxu0 0
        %2147 = vmatpush2.bf16.xpose.msra.mxu0 0
        %2148 = vmatprep.mubr.bf16.mxu0 0
        %2149 = vmatmul.mubr.bf16.gmra.mxu0 %v1434
        %v2150 = vpop.f32.mrf.mxu0
        %v2151 = vadd.f32 %v2108, %v2150
        %v2152 = vpop.f32.mrf.mxu0
        %v2153 = vpop.f32.mrf.mxu0
        %v2154 = vadd.f32 %v2109, %v2153
        %v2155 = vpop.f32.mrf.mxu0
        %2156 = vmatprep.mubr.bf16.mxu0 0
        %2157 = vmatmul.mubr.bf16.gmra.mxu0 %v1436
        %v2158 = vpop.f32.mrf.mxu0
        %v2159 = vadd.f32 %v2110, %v2158
        %v2160 = vpop.f32.mrf.mxu0
        %v2161 = vpop.f32.mrf.mxu0
        %v2162 = vadd.f32 %v2111, %v2161
        %v2163 = vpop.f32.mrf.mxu0
        %2164 = vmatprep.mubr.bf16.mxu0 0
        %2165 = vmatmul.mubr.bf16.gmra.mxu0 %v1438
        %v2166 = vpop.f32.mrf.mxu0
        %v2167 = vadd.f32 %v2112, %v2166
        %v2168 = vpop.f32.mrf.mxu0
        %v2169 = vpop.f32.mrf.mxu0
        %v2170 = vadd.f32 %v2113, %v2169
        %v2171 = vpop.f32.mrf.mxu0
        %2172 = vmatprep.mubr.bf16.mxu0 0
        %2173 = vmatmul.mubr.bf16.gmra.mxu0 %v1440
        %v2174 = vpop.f32.mrf.mxu0
        %v2175 = vadd.f32 %v2114, %v2174
        %v2176 = vpop.f32.mrf.mxu0
        %v2177 = vpop.f32.mrf.mxu0
        %v2178 = vadd.f32 %v2115, %v2177
        %v2179 = vpop.f32.mrf.mxu0
        %2180 = vdwg.mxu0
        %2181 = vmax.xlane.f32.xlu0 %v2151
        %v2182 = vpop.xlane.xlu0 %2181
        %2183 = vmax.xlane.f32.xlu0 %v2154
        %v2184 = vpop.xlane.xlu0 %2183
        %2185 = vmax.xlane.f32.xlu0 %v2159
        %v2186 = vpop.xlane.xlu0 %2185
        %2187 = vmax.xlane.f32.xlu0 %v2162
        %v2188 = vpop.xlane.xlu0 %2187
        %2189 = vmax.xlane.f32.xlu0 %v2167
        %v2190 = vpop.xlane.xlu0 %2189
        %2191 = vmax.xlane.f32.xlu0 %v2170
        %v2192 = vpop.xlane.xlu0 %2191
        %2193 = vmax.xlane.f32.xlu0 %v2175
        %v2194 = vpop.xlane.xlu0 %2193
        %2195 = vmax.xlane.f32.xlu0 %v2178
        %v2196 = vpop.xlane.xlu0 %2195
        %v2197 = vsub.f32 %v2151, %v2182
        %v2198 = vsub.f32 %v2154, %v2184
        %v2199 = vsub.f32 %v2159, %v2186
        %v2200 = vsub.f32 %v2162, %v2188
        %v2201 = vsub.f32 %v2167, %v2190
        %v2202 = vsub.f32 %v2170, %v2192
        %v2203 = vsub.f32 %v2175, %v2194
        %v2204 = vsub.f32 %v2178, %v2196
        %v2205 = vmul.f32 %v2197, 1.442695
        %v2206 = vpow.pop %v2205
        %v2207 = vmul.f32 %v2198, 1.442695
        %v2208 = vpow.pop %v2207
        %v2209 = vmul.f32 %v2199, 1.442695
        %v2210 = vpow.pop %v2209
        %v2211 = vmul.f32 %v2200, 1.442695
        %v2212 = vpow.pop %v2211
        %v2213 = vmul.f32 %v2201, 1.442695
        %v2214 = vpow.pop %v2213
        %v2215 = vmul.f32 %v2202, 1.442695
        %v2216 = vpow.pop %v2215
        %v2217 = vmul.f32 %v2203, 1.442695
        %v2218 = vpow.pop %v2217
        %v2219 = vmul.f32 %v2204, 1.442695
        %v2220 = vpow.pop %v2219
        %2221 = vadd.xlane.f32.xlu0 %v2206
        %v2222 = vpop.xlane.xlu0 %2221
        %2223 = vadd.xlane.f32.xlu0 %v2208
        %v2224 = vpop.xlane.xlu0 %2223
        %2225 = vadd.xlane.f32.xlu0 %v2210
        %v2226 = vpop.xlane.xlu0 %2225
        %2227 = vadd.xlane.f32.xlu0 %v2212
        %v2228 = vpop.xlane.xlu0 %2227
        %2229 = vadd.xlane.f32.xlu0 %v2214
        %v2230 = vpop.xlane.xlu0 %2229
        %2231 = vadd.xlane.f32.xlu0 %v2216
        %v2232 = vpop.xlane.xlu0 %2231
        %2233 = vadd.xlane.f32.xlu0 %v2218
        %v2234 = vpop.xlane.xlu0 %2233
        %2235 = vadd.xlane.f32.xlu0 %v2220
        %v2236 = vpop.xlane.xlu0 %2235
        %v2237 = vrcp.pop %v2222
        %v2238 = vmul.f32 1.0, %v2237
        %v2239 = vrcp.pop %v2224
        %v2240 = vmul.f32 1.0, %v2239
        %v2241 = vrcp.pop %v2226
        %v2242 = vmul.f32 1.0, %v2241
        %v2243 = vrcp.pop %v2228
        %v2244 = vmul.f32 1.0, %v2243
        %v2245 = vrcp.pop %v2230
        %v2246 = vmul.f32 1.0, %v2245
        %v2247 = vrcp.pop %v2232
        %v2248 = vmul.f32 1.0, %v2247
        %v2249 = vrcp.pop %v2234
        %v2250 = vmul.f32 1.0, %v2249
        %v2251 = vrcp.pop %v2236
        %v2252 = vmul.f32 1.0, %v2251
        %v2253 = vmul.f32 %v2206, %v2238
        %v2254 = vmul.f32 %v2208, %v2240
        %v2255 = vmul.f32 %v2210, %v2242
        %v2256 = vmul.f32 %v2212, %v2244
        %v2257 = vmul.f32 %v2214, %v2246
        %v2258 = vmul.f32 %v2216, %v2248
        %v2259 = vmul.f32 %v2218, %v2250
        %v2260 = vmul.f32 %v2220, %v2252
        %v2261 = vpack.c.bf16 %v2254, %v2253
        %v2262 = vpack.c.bf16 %v2256, %v2255
        %v2263 = vpack.c.bf16 %v2258, %v2257
        %v2264 = vpack.c.bf16 %v2260, %v2259
        %2265 = vmatprep.subr.bf16.mxu0 0
        %2266 = vmatpush1.bf16.msra.mxu0 %v2082
        %2267 = vmatprep.subr.bf16.mxu0 0
        %2268 = vmatpush1.bf16.msra.mxu0 %v2078
        %2269 = vmatprep.subr.bf16.mxu0 0
        %2270 = vmatpush1.bf16.msra.mxu0 %v2074
        %2271 = vmatprep.subr.bf16.mxu0 0
        %2272 = vmatpush1.bf16.msra.mxu0 %v2070
        %2273 = vmatprep.subr.bf16.mxu0 0
        %2274 = vmatpush1.bf16.msra.mxu0 %v2066
        %2275 = vmatprep.subr.bf16.mxu0 0
        %2276 = vmatpush1.bf16.msra.mxu0 %v2062
        %2277 = vmatprep.subr.bf16.mxu0 0
        %2278 = vmatpush1.bf16.msra.mxu0 %v2058
        %2279 = vmatprep.subr.bf16.mxu0 0
        %2280 = vmatpush1.bf16.msra.mxu0 %v2054
        %2281 = vmatprep.subr.bf16.mxu0 0
        %2282 = vmatpush2.bf16.msra.mxu0 0
        %2283 = vmatprep.subr.bf16.mxu0 0
        %2284 = vmatpush2.bf16.msra.mxu0 0
        %2285 = vmatprep.subr.bf16.mxu0 0
        %2286 = vmatpush2.bf16.msra.mxu0 0
        %2287 = vmatprep.subr.bf16.mxu0 0
        %2288 = vmatpush2.bf16.msra.mxu0 0
        %2289 = vmatprep.subr.bf16.mxu0 0
        %2290 = vmatpush2.bf16.msra.mxu0 0
        %2291 = vmatprep.subr.bf16.mxu0 0
        %2292 = vmatpush2.bf16.msra.mxu0 0
        %2293 = vmatprep.subr.bf16.mxu0 0
        %2294 = vmatpush2.bf16.msra.mxu0 0
        %2295 = vmatprep.subr.bf16.mxu0 0
        %2296 = vmatpush2.bf16.msra.mxu0 0
        %2297 = vmatprep.mubr.bf16.mxu0 0
        %2298 = vmatmul.mubr.bf16.gmra.mxu0 %v2261
        %v2299 = vpop.f32.mrf.mxu0
        %v2300 = vadd.f32 0.0, %v2299
        %v2301 = vpop.f32.mrf.mxu0
        %v2302 = vpop.f32.mrf.mxu0
        %v2303 = vadd.f32 0.0, %v2302
        %v2304 = vpop.f32.mrf.mxu0
        %2305 = vmatprep.mubr.bf16.mxu0 0
        %2306 = vmatmul.mubr.bf16.gmra.mxu0 %v2262
        %v2307 = vpop.f32.mrf.mxu0
        %v2308 = vadd.f32 0.0, %v2307
        %v2309 = vpop.f32.mrf.mxu0
        %v2310 = vpop.f32.mrf.mxu0
        %v2311 = vadd.f32 0.0, %v2310
        %v2312 = vpop.f32.mrf.mxu0
        %2313 = vmatprep.mubr.bf16.mxu0 0
        %2314 = vmatmul.mubr.bf16.gmra.mxu0 %v2263
        %v2315 = vpop.f32.mrf.mxu0
        %v2316 = vadd.f32 0.0, %v2315
        %v2317 = vpop.f32.mrf.mxu0
        %v2318 = vpop.f32.mrf.mxu0
        %v2319 = vadd.f32 0.0, %v2318
        %v2320 = vpop.f32.mrf.mxu0
        %2321 = vmatprep.mubr.bf16.mxu0 0
        %2322 = vmatmul.mubr.bf16.gmra.mxu0 %v2264
        %v2323 = vpop.f32.mrf.mxu0
        %v2324 = vadd.f32 0.0, %v2323
        %v2325 = vpop.f32.mrf.mxu0
        %v2326 = vpop.f32.mrf.mxu0
        %v2327 = vadd.f32 0.0, %v2326
        %v2328 = vpop.f32.mrf.mxu0
        %2329 = vdwg.mxu0
        %v2330 = vpack.c.bf16 %v2303, %v2300
        %v2331 = vpack.c.bf16 %v2311, %v2308
        %v2332 = vpack.c.bf16 %v2319, %v2316
        %v2333 = vpack.c.bf16 %v2327, %v2324
        %v2334 = vld [vmem:[#allocation10] sm:$0xff]
        %v2335 = vld [vmem:[#allocation10 + $0x8] sm:$0xff]
        %v2336 = vld [vmem:[#allocation10 + $0x10] sm:$0xff]
        %v2337 = vld [vmem:[#allocation10 + $0x18] sm:$0xff]
        %v2338 = vld [vmem:[#allocation10 + $0x20] sm:$0xff]
        %v2339 = vld [vmem:[#allocation10 + $0x28] sm:$0xff]
        %v2340 = vld [vmem:[#allocation10 + $0x30] sm:$0xff]
        %v2341 = vld [vmem:[#allocation10 + $0x38] sm:$0xff]
        %v2342 = vld [vmem:[#allocation10 + $0x40] sm:$0xff]
        %v2343 = vld [vmem:[#allocation10 + $0x48] sm:$0xff]
        %v2344 = vld [vmem:[#allocation10 + $0x50] sm:$0xff]
        %v2345 = vld [vmem:[#allocation10 + $0x58] sm:$0xff]
        %v2346 = vld [vmem:[#allocation10 + $0x60] sm:$0xff]
        %v2347 = vld [vmem:[#allocation10 + $0x68] sm:$0xff]
        %v2348 = vld [vmem:[#allocation10 + $0x70] sm:$0xff]
        %v2349 = vld [vmem:[#allocation10 + $0x78] sm:$0xff]
        %2350 = vmatprep.subr.bf16.mxu0 0
        %2351 = vmatpush1.bf16.xpose.msra.mxu0 %v2081
        %2352 = vmatprep.subr.bf16.mxu0 0
        %2353 = vmatpush1.bf16.xpose.msra.mxu0 %v2077
        %2354 = vmatprep.subr.bf16.mxu0 0
        %2355 = vmatpush1.bf16.xpose.msra.mxu0 %v2073
        %2356 = vmatprep.subr.bf16.mxu0 0
        %2357 = vmatpush1.bf16.xpose.msra.mxu0 %v2069
        %2358 = vmatprep.subr.bf16.mxu0 0
        %2359 = vmatpush1.bf16.xpose.msra.mxu0 %v2065
        %2360 = vmatprep.subr.bf16.mxu0 0
        %2361 = vmatpush1.bf16.xpose.msra.mxu0 %v2061
        %2362 = vmatprep.subr.bf16.mxu0 0
        %2363 = vmatpush1.bf16.xpose.msra.mxu0 %v2057
        %2364 = vmatprep.subr.bf16.mxu0 0
        %2365 = vmatpush1.bf16.xpose.msra.mxu0 %v2053
        %2366 = vmatprep.subr.bf16.mxu0 0
        %2367 = vmatpush2.bf16.xpose.msra.mxu0 0
        %2368 = vmatprep.subr.bf16.mxu0 0
        %2369 = vmatpush2.bf16.xpose.msra.mxu0 0
        %2370 = vmatprep.subr.bf16.mxu0 0
        %2371 = vmatpush2.bf16.xpose.msra.mxu0 0
        %2372 = vmatprep.subr.bf16.mxu0 0
        %2373 = vmatpush2.bf16.xpose.msra.mxu0 0
        %2374 = vmatprep.subr.bf16.mxu0 0
        %2375 = vmatpush2.bf16.xpose.msra.mxu0 0
        %2376 = vmatprep.subr.bf16.mxu0 0
        %2377 = vmatpush2.bf16.xpose.msra.mxu0 0
        %2378 = vmatprep.subr.bf16.mxu0 0
        %2379 = vmatpush2.bf16.xpose.msra.mxu0 0
        %2380 = vmatprep.subr.bf16.mxu0 0
        %2381 = vmatpush2.bf16.xpose.msra.mxu0 0
        %2382 = vmatprep.mubr.bf16.mxu0 0
        %2383 = vmatmul.mubr.bf16.gmra.mxu0 %v1435
        %v2384 = vpop.f32.mrf.mxu0
        %v2385 = vadd.f32 %v2108, %v2384
        %v2386 = vpop.f32.mrf.mxu0
        %v2387 = vpop.f32.mrf.mxu0
        %v2388 = vadd.f32 %v2109, %v2387
        %v2389 = vpop.f32.mrf.mxu0
        %2390 = vmatprep.mubr.bf16.mxu0 0
        %2391 = vmatmul.mubr.bf16.gmra.mxu0 %v1437
        %v2392 = vpop.f32.mrf.mxu0
        %v2393 = vadd.f32 %v2110, %v2392
        %v2394 = vpop.f32.mrf.mxu0
        %v2395 = vpop.f32.mrf.mxu0
        %v2396 = vadd.f32 %v2111, %v2395
        %v2397 = vpop.f32.mrf.mxu0
        %2398 = vmatprep.mubr.bf16.mxu0 0
        %2399 = vmatmul.mubr.bf16.gmra.mxu0 %v1439
        %v2400 = vpop.f32.mrf.mxu0
        %v2401 = vadd.f32 %v2112, %v2400
        %v2402 = vpop.f32.mrf.mxu0
        %v2403 = vpop.f32.mrf.mxu0
        %v2404 = vadd.f32 %v2113, %v2403
        %v2405 = vpop.f32.mrf.mxu0
        %2406 = vmatprep.mubr.bf16.mxu0 0
        %2407 = vmatmul.mubr.bf16.gmra.mxu0 %v1441
        %v2408 = vpop.f32.mrf.mxu0
        %v2409 = vadd.f32 %v2114, %v2408
        %v2410 = vpop.f32.mrf.mxu0
        %v2411 = vpop.f32.mrf.mxu0
        %v2412 = vadd.f32 %v2115, %v2411
        %v2413 = vpop.f32.mrf.mxu0
        %2414 = vdwg.mxu0
        %2415 = vmax.xlane.f32.xlu0 %v2385
        %v2416 = vpop.xlane.xlu0 %2415
        %2417 = vmax.xlane.f32.xlu0 %v2388
        %v2418 = vpop.xlane.xlu0 %2417
        %2419 = vmax.xlane.f32.xlu0 %v2393
        %v2420 = vpop.xlane.xlu0 %2419
        %2421 = vmax.xlane.f32.xlu0 %v2396
        %v2422 = vpop.xlane.xlu0 %2421
        %2423 = vmax.xlane.f32.xlu0 %v2401
        %v2424 = vpop.xlane.xlu0 %2423
        %2425 = vmax.xlane.f32.xlu0 %v2404
        %v2426 = vpop.xlane.xlu0 %2425
        %2427 = vmax.xlane.f32.xlu0 %v2409
        %v2428 = vpop.xlane.xlu0 %2427
        %2429 = vmax.xlane.f32.xlu0 %v2412
        %v2430 = vpop.xlane.xlu0 %2429
        %v2431 = vsub.f32 %v2385, %v2416
        %v2432 = vsub.f32 %v2388, %v2418
        %v2433 = vsub.f32 %v2393, %v2420
        %v2434 = vsub.f32 %v2396, %v2422
        %v2435 = vsub.f32 %v2401, %v2424
        %v2436 = vsub.f32 %v2404, %v2426
        %v2437 = vsub.f32 %v2409, %v2428
        %v2438 = vsub.f32 %v2412, %v2430
        %v2439 = vmul.f32 %v2431, 1.442695
        %v2440 = vpow.pop %v2439
        %v2441 = vmul.f32 %v2432, 1.442695
        %v2442 = vpow.pop %v2441
        %v2443 = vmul.f32 %v2433, 1.442695
        %v2444 = vpow.pop %v2443
        %v2445 = vmul.f32 %v2434, 1.442695
        %v2446 = vpow.pop %v2445
        %v2447 = vmul.f32 %v2435, 1.442695
        %v2448 = vpow.pop %v2447
        %v2449 = vmul.f32 %v2436, 1.442695
        %v2450 = vpow.pop %v2449
        %v2451 = vmul.f32 %v2437, 1.442695
        %v2452 = vpow.pop %v2451
        %v2453 = vmul.f32 %v2438, 1.442695
        %v2454 = vpow.pop %v2453
        %2455 = vadd.xlane.f32.xlu0 %v2440
        %v2456 = vpop.xlane.xlu0 %2455
        %2457 = vadd.xlane.f32.xlu0 %v2442
        %v2458 = vpop.xlane.xlu0 %2457
        %2459 = vadd.xlane.f32.xlu0 %v2444
        %v2460 = vpop.xlane.xlu0 %2459
        %2461 = vadd.xlane.f32.xlu0 %v2446
        %v2462 = vpop.xlane.xlu0 %2461
        %2463 = vadd.xlane.f32.xlu0 %v2448
        %v2464 = vpop.xlane.xlu0 %2463
        %2465 = vadd.xlane.f32.xlu0 %v2450
        %v2466 = vpop.xlane.xlu0 %2465
        %2467 = vadd.xlane.f32.xlu0 %v2452
        %v2468 = vpop.xlane.xlu0 %2467
        %2469 = vadd.xlane.f32.xlu0 %v2454
        %v2470 = vpop.xlane.xlu0 %2469
        %v2471 = vrcp.pop %v2456
        %v2472 = vmul.f32 1.0, %v2471
        %v2473 = vrcp.pop %v2458
        %v2474 = vmul.f32 1.0, %v2473
        %v2475 = vrcp.pop %v2460
        %v2476 = vmul.f32 1.0, %v2475
        %v2477 = vrcp.pop %v2462
        %v2478 = vmul.f32 1.0, %v2477
        %v2479 = vrcp.pop %v2464
        %v2480 = vmul.f32 1.0, %v2479
        %v2481 = vrcp.pop %v2466
        %v2482 = vmul.f32 1.0, %v2481
        %v2483 = vrcp.pop %v2468
        %v2484 = vmul.f32 1.0, %v2483
        %v2485 = vrcp.pop %v2470
        %v2486 = vmul.f32 1.0, %v2485
        %v2487 = vmul.f32 %v2440, %v2472
        %v2488 = vmul.f32 %v2442, %v2474
        %v2489 = vmul.f32 %v2444, %v2476
        %v2490 = vmul.f32 %v2446, %v2478
        %v2491 = vmul.f32 %v2448, %v2480
        %v2492 = vmul.f32 %v2450, %v2482
        %v2493 = vmul.f32 %v2452, %v2484
        %v2494 = vmul.f32 %v2454, %v2486
        %v2495 = vpack.c.bf16 %v2488, %v2487
        %v2496 = vpack.c.bf16 %v2490, %v2489
        %v2497 = vpack.c.bf16 %v2492, %v2491
        %v2498 = vpack.c.bf16 %v2494, %v2493
        %2499 = vmatprep.subr.bf16.mxu0 0
        %2500 = vmatpush1.bf16.msra.mxu0 %v2083
        %2501 = vmatprep.subr.bf16.mxu0 0
        %2502 = vmatpush1.bf16.msra.mxu0 %v2079
        %2503 = vmatprep.subr.bf16.mxu0 0
        %2504 = vmatpush1.bf16.msra.mxu0 %v2075
        %2505 = vmatprep.subr.bf16.mxu0 0
        %2506 = vmatpush1.bf16.msra.mxu0 %v2071
        %2507 = vmatprep.subr.bf16.mxu0 0
        %2508 = vmatpush1.bf16.msra.mxu0 %v2067
        %2509 = vmatprep.subr.bf16.mxu0 0
        %2510 = vmatpush1.bf16.msra.mxu0 %v2063
        %2511 = vmatprep.subr.bf16.mxu0 0
        %2512 = vmatpush1.bf16.msra.mxu0 %v2059
        %2513 = vmatprep.subr.bf16.mxu0 0
        %2514 = vmatpush1.bf16.msra.mxu0 %v2055
        %2515 = vmatprep.subr.bf16.mxu0 0
        %2516 = vmatpush2.bf16.msra.mxu0 0
        %2517 = vmatprep.subr.bf16.mxu0 0
        %2518 = vmatpush2.bf16.msra.mxu0 0
        %2519 = vmatprep.subr.bf16.mxu0 0
        %2520 = vmatpush2.bf16.msra.mxu0 0
        %2521 = vmatprep.subr.bf16.mxu0 0
        %2522 = vmatpush2.bf16.msra.mxu0 0
        %2523 = vmatprep.subr.bf16.mxu0 0
        %2524 = vmatpush2.bf16.msra.mxu0 0
        %2525 = vmatprep.subr.bf16.mxu0 0
        %2526 = vmatpush2.bf16.msra.mxu0 0
        %2527 = vmatprep.subr.bf16.mxu0 0
        %2528 = vmatpush2.bf16.msra.mxu0 0
        %2529 = vmatprep.subr.bf16.mxu0 0
        %2530 = vmatpush2.bf16.msra.mxu0 0
        %2531 = vmatprep.mubr.bf16.mxu0 0
        %2532 = vmatmul.mubr.bf16.gmra.mxu0 %v2495
        %v2533 = vpop.f32.mrf.mxu0
        %v2534 = vadd.f32 0.0, %v2533
        %v2535 = vpop.f32.mrf.mxu0
        %v2536 = vpop.f32.mrf.mxu0
        %v2537 = vadd.f32 0.0, %v2536
        %v2538 = vpop.f32.mrf.mxu0
        %2539 = vmatprep.mubr.bf16.mxu0 0
        %2540 = vmatmul.mubr.bf16.gmra.mxu0 %v2496
        %v2541 = vpop.f32.mrf.mxu0
        %v2542 = vadd.f32 0.0, %v2541
        %v2543 = vpop.f32.mrf.mxu0
        %v2544 = vpop.f32.mrf.mxu0
        %v2545 = vadd.f32 0.0, %v2544
        %v2546 = vpop.f32.mrf.mxu0
        %2547 = vmatprep.mubr.bf16.mxu0 0
        %2548 = vmatmul.mubr.bf16.gmra.mxu0 %v2497
        %v2549 = vpop.f32.mrf.mxu0
        %v2550 = vadd.f32 0.0, %v2549
        %v2551 = vpop.f32.mrf.mxu0
        %v2552 = vpop.f32.mrf.mxu0
        %v2553 = vadd.f32 0.0, %v2552
        %v2554 = vpop.f32.mrf.mxu0
        %2555 = vmatprep.mubr.bf16.mxu0 0
        %2556 = vmatmul.mubr.bf16.gmra.mxu0 %v2498
        %v2557 = vpop.f32.mrf.mxu0
        %v2558 = vadd.f32 0.0, %v2557
        %v2559 = vpop.f32.mrf.mxu0
        %v2560 = vpop.f32.mrf.mxu0
        %v2561 = vadd.f32 0.0, %v2560
        %v2562 = vpop.f32.mrf.mxu0
        %2563 = vdwg.mxu0
        %v2564 = vpack.c.bf16 %v2537, %v2534
        %v2565 = vpack.c.bf16 %v2545, %v2542
        %v2566 = vpack.c.bf16 %v2553, %v2550
        %v2567 = vpack.c.bf16 %v2561, %v2558
        %v2568 = vld [vmem:[#allocation10 + $0x80] sm:$0xff]
        %v2569 = vld [vmem:[#allocation10 + $0x88] sm:$0xff]
        %v2570 = vld [vmem:[#allocation10 + $0x90] sm:$0xff]
        %v2571 = vld [vmem:[#allocation10 + $0x98] sm:$0xff]
        %v2572 = vld [vmem:[#allocation10 + $0xa0] sm:$0xff]
        %v2573 = vld [vmem:[#allocation10 + $0xa8] sm:$0xff]
        %v2574 = vld [vmem:[#allocation10 + $0xb0] sm:$0xff]
        %v2575 = vld [vmem:[#allocation10 + $0xb8] sm:$0xff]
        %v2576 = vld [vmem:[#allocation10 + $0xc0] sm:$0xff]
        %v2577 = vld [vmem:[#allocation10 + $0xc8] sm:$0xff]
        %v2578 = vld [vmem:[#allocation10 + $0xd0] sm:$0xff]
        %v2579 = vld [vmem:[#allocation10 + $0xd8] sm:$0xff]
        %v2580 = vld [vmem:[#allocation10 + $0xe0] sm:$0xff]
        %v2581 = vld [vmem:[#allocation10 + $0xe8] sm:$0xff]
        %v2582 = vld [vmem:[#allocation10 + $0xf0] sm:$0xff]
        %v2583 = vld [vmem:[#allocation10 + $0xf8] sm:$0xff]
        %v2600 = vunpack.c.l.b16 %v2568
        %v2601 = vunpack.c.h.b16 %v2568
        %v2602 = vunpack.c.l.b16 %v2569
        %v2603 = vunpack.c.h.b16 %v2569
        %v2604 = vunpack.c.l.b16 %v2570
        %v2605 = vunpack.c.h.b16 %v2570
        %v2606 = vunpack.c.l.b16 %v2571
        %v2607 = vunpack.c.h.b16 %v2571
        %v2608 = vunpack.c.l.b16 %v2572
        %v2609 = vunpack.c.h.b16 %v2572
        %v2610 = vunpack.c.l.b16 %v2573
        %v2611 = vunpack.c.h.b16 %v2573
        %v2612 = vunpack.c.l.b16 %v2574
        %v2613 = vunpack.c.h.b16 %v2574
        %v2614 = vunpack.c.l.b16 %v2575
        %v2615 = vunpack.c.h.b16 %v2575
        %v2616 = vunpack.c.l.b16 %v2576
        %v2617 = vunpack.c.h.b16 %v2576
        %v2618 = vunpack.c.l.b16 %v2577
        %v2619 = vunpack.c.h.b16 %v2577
        %v2620 = vunpack.c.l.b16 %v2578
        %v2621 = vunpack.c.h.b16 %v2578
        %v2622 = vunpack.c.l.b16 %v2579
        %v2623 = vunpack.c.h.b16 %v2579
        %v2624 = vunpack.c.l.b16 %v2580
        %v2625 = vunpack.c.h.b16 %v2580
        %v2626 = vunpack.c.l.b16 %v2581
        %v2627 = vunpack.c.h.b16 %v2581
        %v2628 = vunpack.c.l.b16 %v2582
        %v2629 = vunpack.c.h.b16 %v2582
        %v2630 = vunpack.c.l.b16 %v2583
        %v2631 = vunpack.c.h.b16 %v2583
        %v2632 = vpack.c.b16 %v2602, %v2600
        %v2633 = vpack.c.b16 %v2603, %v2601
        %v2634 = vpack.c.b16 %v2606, %v2604
        %v2635 = vpack.c.b16 %v2607, %v2605
        %v2636 = vpack.c.b16 %v2610, %v2608
        %v2637 = vpack.c.b16 %v2611, %v2609
        %v2638 = vpack.c.b16 %v2614, %v2612
        %v2639 = vpack.c.b16 %v2615, %v2613
        %v2640 = vpack.c.b16 %v2618, %v2616
        %v2641 = vpack.c.b16 %v2619, %v2617
        %v2642 = vpack.c.b16 %v2622, %v2620
        %v2643 = vpack.c.b16 %v2623, %v2621
        %v2644 = vpack.c.b16 %v2626, %v2624
        %v2645 = vpack.c.b16 %v2627, %v2625
        %v2646 = vpack.c.b16 %v2630, %v2628
        %v2647 = vpack.c.b16 %v2631, %v2629
        %2664 = vmatprep.subr.bf16.mxu0 %v2647
        %2665 = vmatpush1.bf16.msra.mxu0 %v2646
        %2666 = vmatprep.subr.bf16.mxu0 %v2645
        %2667 = vmatpush1.bf16.msra.mxu0 %v2644
        %2668 = vmatprep.subr.bf16.mxu0 %v2643
        %2669 = vmatpush1.bf16.msra.mxu0 %v2642
        %2670 = vmatprep.subr.bf16.mxu0 %v2641
        %2671 = vmatpush1.bf16.msra.mxu0 %v2640
        %2672 = vmatprep.subr.bf16.mxu0 %v2639
        %2673 = vmatpush1.bf16.msra.mxu0 %v2638
        %2674 = vmatprep.subr.bf16.mxu0 %v2637
        %2675 = vmatpush1.bf16.msra.mxu0 %v2636
        %2676 = vmatprep.subr.bf16.mxu0 %v2635
        %2677 = vmatpush1.bf16.msra.mxu0 %v2634
        %2678 = vmatprep.subr.bf16.mxu0 %v2633
        %2679 = vmatpush1.bf16.msra.mxu0 %v2632
        %2680 = vmatprep.subr.bf16.mxu0 0
        %2681 = vmatpush2.bf16.msra.mxu0 0
        %2682 = vmatprep.subr.bf16.mxu0 0
        %2683 = vmatpush2.bf16.msra.mxu0 0
        %2684 = vmatprep.subr.bf16.mxu0 0
        %2685 = vmatpush2.bf16.msra.mxu0 0
        %2686 = vmatprep.subr.bf16.mxu0 0
        %2687 = vmatpush2.bf16.msra.mxu0 0
        %2688 = vmatprep.subr.bf16.mxu0 0
        %2689 = vmatpush2.bf16.msra.mxu0 0
        %2690 = vmatprep.subr.bf16.mxu0 0
        %2691 = vmatpush2.bf16.msra.mxu0 0
        %2692 = vmatprep.subr.bf16.mxu0 0
        %2693 = vmatpush2.bf16.msra.mxu0 0
        %2694 = vmatprep.subr.bf16.mxu0 0
        %2695 = vmatpush2.bf16.msra.mxu0 0
        %2696 = vmatprep.mubr.bf16.mxu0 0
        %2697 = vmatmul.mubr.bf16.gmra.mxu0 %v2564
        %v2698 = vpop.f32.mrf.mxu0
        %v2699 = vadd.f32 0.0, %v2698
        %v2700 = vpop.f32.mrf.mxu0
        %v2701 = vadd.f32 0.0, %v2700
        %v2702 = vpop.f32.mrf.mxu0
        %v2703 = vadd.f32 0.0, %v2702
        %v2704 = vpop.f32.mrf.mxu0
        %v2705 = vadd.f32 0.0, %v2704
        %2706 = vmatprep.mubr.bf16.mxu0 0
        %2707 = vmatmul.mubr.bf16.gmra.mxu0 %v2565
        %v2708 = vpop.f32.mrf.mxu0
        %v2709 = vadd.f32 0.0, %v2708
        %v2710 = vpop.f32.mrf.mxu0
        %v2711 = vadd.f32 0.0, %v2710
        %v2712 = vpop.f32.mrf.mxu0
        %v2713 = vadd.f32 0.0, %v2712
        %v2714 = vpop.f32.mrf.mxu0
        %v2715 = vadd.f32 0.0, %v2714
        %2716 = vmatprep.mubr.bf16.mxu0 0
        %2717 = vmatmul.mubr.bf16.gmra.mxu0 %v2566
        %v2718 = vpop.f32.mrf.mxu0
        %v2719 = vadd.f32 0.0, %v2718
        %v2720 = vpop.f32.mrf.mxu0
        %v2721 = vadd.f32 0.0, %v2720
        %v2722 = vpop.f32.mrf.mxu0
        %v2723 = vadd.f32 0.0, %v2722
        %v2724 = vpop.f32.mrf.mxu0
        %v2725 = vadd.f32 0.0, %v2724
        %2726 = vmatprep.mubr.bf16.mxu0 0
        %2727 = vmatmul.mubr.bf16.gmra.mxu0 %v2567
        %v2728 = vpop.f32.mrf.mxu0
        %v2729 = vadd.f32 0.0, %v2728
        %v2730 = vpop.f32.mrf.mxu0
        %v2731 = vadd.f32 0.0, %v2730
        %v2732 = vpop.f32.mrf.mxu0
        %v2733 = vadd.f32 0.0, %v2732
        %v2734 = vpop.f32.mrf.mxu0
        %v2735 = vadd.f32 0.0, %v2734
        %2736 = vdwg.mxu0
        %v2753 = vunpack.c.l.b16 %v2334
        %v2754 = vunpack.c.h.b16 %v2334
        %v2755 = vunpack.c.l.b16 %v2335
        %v2756 = vunpack.c.h.b16 %v2335
        %v2757 = vunpack.c.l.b16 %v2336
        %v2758 = vunpack.c.h.b16 %v2336
        %v2759 = vunpack.c.l.b16 %v2337
        %v2760 = vunpack.c.h.b16 %v2337
        %v2761 = vunpack.c.l.b16 %v2338
        %v2762 = vunpack.c.h.b16 %v2338
        %v2763 = vunpack.c.l.b16 %v2339
        %v2764 = vunpack.c.h.b16 %v2339
        %v2765 = vunpack.c.l.b16 %v2340
        %v2766 = vunpack.c.h.b16 %v2340
        %v2767 = vunpack.c.l.b16 %v2341
        %v2768 = vunpack.c.h.b16 %v2341
        %v2769 = vunpack.c.l.b16 %v2342
        %v2770 = vunpack.c.h.b16 %v2342
        %v2771 = vunpack.c.l.b16 %v2343
        %v2772 = vunpack.c.h.b16 %v2343
        %v2773 = vunpack.c.l.b16 %v2344
        %v2774 = vunpack.c.h.b16 %v2344
        %v2775 = vunpack.c.l.b16 %v2345
        %v2776 = vunpack.c.h.b16 %v2345
        %v2777 = vunpack.c.l.b16 %v2346
        %v2778 = vunpack.c.h.b16 %v2346
        %v2779 = vunpack.c.l.b16 %v2347
        %v2780 = vunpack.c.h.b16 %v2347
        %v2781 = vunpack.c.l.b16 %v2348
        %v2782 = vunpack.c.h.b16 %v2348
        %v2783 = vunpack.c.l.b16 %v2349
        %v2784 = vunpack.c.h.b16 %v2349
        %v2785 = vpack.c.b16 %v2755, %v2753
        %v2786 = vpack.c.b16 %v2756, %v2754
        %v2787 = vpack.c.b16 %v2759, %v2757
        %v2788 = vpack.c.b16 %v2760, %v2758
        %v2789 = vpack.c.b16 %v2763, %v2761
        %v2790 = vpack.c.b16 %v2764, %v2762
        %v2791 = vpack.c.b16 %v2767, %v2765
        %v2792 = vpack.c.b16 %v2768, %v2766
        %v2793 = vpack.c.b16 %v2771, %v2769
        %v2794 = vpack.c.b16 %v2772, %v2770
        %v2795 = vpack.c.b16 %v2775, %v2773
        %v2796 = vpack.c.b16 %v2776, %v2774
        %v2797 = vpack.c.b16 %v2779, %v2777
        %v2798 = vpack.c.b16 %v2780, %v2778
        %v2799 = vpack.c.b16 %v2783, %v2781
        %v2800 = vpack.c.b16 %v2784, %v2782
        %2817 = vmatprep.subr.bf16.mxu0 %v2800
        %2818 = vmatpush1.bf16.msra.mxu0 %v2799
        %2819 = vmatprep.subr.bf16.mxu0 %v2798
        %2820 = vmatpush1.bf16.msra.mxu0 %v2797
        %2821 = vmatprep.subr.bf16.mxu0 %v2796
        %2822 = vmatpush1.bf16.msra.mxu0 %v2795
        %2823 = vmatprep.subr.bf16.mxu0 %v2794
        %2824 = vmatpush1.bf16.msra.mxu0 %v2793
        %2825 = vmatprep.subr.bf16.mxu0 %v2792
        %2826 = vmatpush1.bf16.msra.mxu0 %v2791
        %2827 = vmatprep.subr.bf16.mxu0 %v2790
        %2828 = vmatpush1.bf16.msra.mxu0 %v2789
        %2829 = vmatprep.subr.bf16.mxu0 %v2788
        %2830 = vmatpush1.bf16.msra.mxu0 %v2787
        %2831 = vmatprep.subr.bf16.mxu0 %v2786
        %2832 = vmatpush1.bf16.msra.mxu0 %v2785
        %2833 = vmatprep.subr.bf16.mxu0 0
        %2834 = vmatpush2.bf16.msra.mxu0 0
        %2835 = vmatprep.subr.bf16.mxu0 0
        %2836 = vmatpush2.bf16.msra.mxu0 0
        %2837 = vmatprep.subr.bf16.mxu0 0
        %2838 = vmatpush2.bf16.msra.mxu0 0
        %2839 = vmatprep.subr.bf16.mxu0 0
        %2840 = vmatpush2.bf16.msra.mxu0 0
        %2841 = vmatprep.subr.bf16.mxu0 0
        %2842 = vmatpush2.bf16.msra.mxu0 0
        %2843 = vmatprep.subr.bf16.mxu0 0
        %2844 = vmatpush2.bf16.msra.mxu0 0
        %2845 = vmatprep.subr.bf16.mxu0 0
        %2846 = vmatpush2.bf16.msra.mxu0 0
        %2847 = vmatprep.subr.bf16.mxu0 0
        %2848 = vmatpush2.bf16.msra.mxu0 0
        %2849 = vmatprep.mubr.bf16.mxu0 0
        %2850 = vmatmul.mubr.bf16.gmra.mxu0 %v2330
        %v2851 = vpop.f32.mrf.mxu0
        %v2852 = vadd.f32 %v2699, %v2851
        %v2853 = vpop.f32.mrf.mxu0
        %v2854 = vadd.f32 %v2701, %v2853
        %v2855 = vpop.f32.mrf.mxu0
        %v2856 = vadd.f32 %v2703, %v2855
        %v2857 = vpop.f32.mrf.mxu0
        %v2858 = vadd.f32 %v2705, %v2857
        %2859 = vmatprep.mubr.bf16.mxu0 0
        %2860 = vmatmul.mubr.bf16.gmra.mxu0 %v2331
        %v2861 = vpop.f32.mrf.mxu0
        %v2862 = vadd.f32 %v2709, %v2861
        %v2863 = vpop.f32.mrf.mxu0
        %v2864 = vadd.f32 %v2711, %v2863
        %v2865 = vpop.f32.mrf.mxu0
        %v2866 = vadd.f32 %v2713, %v2865
        %v2867 = vpop.f32.mrf.mxu0
        %v2868 = vadd.f32 %v2715, %v2867
        %2869 = vmatprep.mubr.bf16.mxu0 0
        %2870 = vmatmul.mubr.bf16.gmra.mxu0 %v2332
        %v2871 = vpop.f32.mrf.mxu0
        %v2872 = vadd.f32 %v2719, %v2871
        %v2873 = vpop.f32.mrf.mxu0
        %v2874 = vadd.f32 %v2721, %v2873
        %v2875 = vpop.f32.mrf.mxu0
        %v2876 = vadd.f32 %v2723, %v2875
        %v2877 = vpop.f32.mrf.mxu0
        %v2878 = vadd.f32 %v2725, %v2877
        %2879 = vmatprep.mubr.bf16.mxu0 0
        %2880 = vmatmul.mubr.bf16.gmra.mxu0 %v2333
        %v2881 = vpop.f32.mrf.mxu0
        %v2882 = vadd.f32 %v2729, %v2881
        %v2883 = vpop.f32.mrf.mxu0
        %v2884 = vadd.f32 %v2731, %v2883
        %v2885 = vpop.f32.mrf.mxu0
        %v2886 = vadd.f32 %v2733, %v2885
        %v2887 = vpop.f32.mrf.mxu0
        %v2888 = vadd.f32 %v2735, %v2887
        %2889 = vdwg.mxu0
        %v2890 = vadd.f32 %v624, %v2852
        %v2891 = vadd.f32 %v625, %v2854
        %v2892 = vadd.f32 %v626, %v2856
        %v2893 = vadd.f32 %v627, %v2858
        %v2894 = vadd.f32 %v628, %v2862
        %v2895 = vadd.f32 %v629, %v2864
        %v2896 = vadd.f32 %v630, %v2866
        %v2897 = vadd.f32 %v631, %v2868
        %v2898 = vadd.f32 %v632, %v2872
        %v2899 = vadd.f32 %v633, %v2874
        %v2900 = vadd.f32 %v634, %v2876
        %v2901 = vadd.f32 %v635, %v2878
        %v2902 = vadd.f32 %v636, %v2882
        %v2903 = vadd.f32 %v637, %v2884
        %v2904 = vadd.f32 %v638, %v2886
        %v2905 = vadd.f32 %v639, %v2888
        %v2906 = vld [vmem:[%s6] sm:$0x3]
        %v2908 = vlaneseq
        %v2909 = vshrl.u32 %v2908, 7
        %v2910 = vsub.s32 0, %v2909
        %v2911 = vrot.slane %v2906, %v2910
        %v2912 = vlaneseq
        %v2913 = vshrl.u32 %v2912, 7
        %v2914 = vsub.s32 1, %v2913
        %v2915 = vrot.slane %v2906, %v2914
        %v2918 = vadd.f32 %v2890, %v2911
        %v2919 = vadd.f32 %v2891, %v2915
        %v2920 = vadd.f32 %v2892, %v2911
        %v2921 = vadd.f32 %v2893, %v2915
        %v2922 = vadd.f32 %v2894, %v2911
        %v2923 = vadd.f32 %v2895, %v2915
        %v2924 = vadd.f32 %v2896, %v2911
        %v2925 = vadd.f32 %v2897, %v2915
        %v2926 = vadd.f32 %v2898, %v2911
        %v2927 = vadd.f32 %v2899, %v2915
        %v2928 = vadd.f32 %v2900, %v2911
        %v2929 = vadd.f32 %v2901, %v2915
        %v2930 = vadd.f32 %v2902, %v2911
        %v2931 = vadd.f32 %v2903, %v2915
        %v2932 = vadd.f32 %v2904, %v2911
        %v2933 = vadd.f32 %v2905, %v2915
        %v2934 = vld [vmem:[%s7] sm:$0x3]
        %v2935 = vld [vmem:[%s8] sm:$0x3]
        %v2936 = vadd.f32 %v2918, %v2919
        %2937 = vadd.xlane.f32.xlu0 %v2936
        %v2938 = vpop.xlane.xlu0 %2937
        %v2939 = vadd.f32 %v2920, %v2921
        %2940 = vadd.xlane.f32.xlu0 %v2939
        %v2941 = vpop.xlane.xlu0 %2940
        %v2942 = vadd.f32 %v2922, %v2923
        %2943 = vadd.xlane.f32.xlu0 %v2942
        %v2944 = vpop.xlane.xlu0 %2943
        %v2945 = vadd.f32 %v2924, %v2925
        %2946 = vadd.xlane.f32.xlu0 %v2945
        %v2947 = vpop.xlane.xlu0 %2946
        %v2948 = vadd.f32 %v2926, %v2927
        %2949 = vadd.xlane.f32.xlu0 %v2948
        %v2950 = vpop.xlane.xlu0 %2949
        %v2951 = vadd.f32 %v2928, %v2929
        %2952 = vadd.xlane.f32.xlu0 %v2951
        %v2953 = vpop.xlane.xlu0 %2952
        %v2954 = vadd.f32 %v2930, %v2931
        %2955 = vadd.xlane.f32.xlu0 %v2954
        %v2956 = vpop.xlane.xlu0 %2955
        %v2957 = vadd.f32 %v2932, %v2933
        %2958 = vadd.xlane.f32.xlu0 %v2957
        %v2959 = vpop.xlane.xlu0 %2958
        %v2960 = vmul.f32 %v2938, %v690
        %v2961 = vmul.f32 %v2941, %v690
        %v2962 = vmul.f32 %v2944, %v690
        %v2963 = vmul.f32 %v2947, %v690
        %v2964 = vmul.f32 %v2950, %v690
        %v2965 = vmul.f32 %v2953, %v690
        %v2966 = vmul.f32 %v2956, %v690
        %v2967 = vmul.f32 %v2959, %v690
        %v2968 = vsub.f32 %v2918, %v2960
        %v2969 = vsub.f32 %v2919, %v2960
        %v2970 = vsub.f32 %v2920, %v2961
        %v2971 = vsub.f32 %v2921, %v2961
        %v2972 = vsub.f32 %v2922, %v2962
        %v2973 = vsub.f32 %v2923, %v2962
        %v2974 = vsub.f32 %v2924, %v2963
        %v2975 = vsub.f32 %v2925, %v2963
        %v2976 = vsub.f32 %v2926, %v2964
        %v2977 = vsub.f32 %v2927, %v2964
        %v2978 = vsub.f32 %v2928, %v2965
        %v2979 = vsub.f32 %v2929, %v2965
        %v2980 = vsub.f32 %v2930, %v2966
        %v2981 = vsub.f32 %v2931, %v2966
        %v2982 = vsub.f32 %v2932, %v2967
        %v2983 = vsub.f32 %v2933, %v2967
        %v2984 = vmul.f32 %v2968, %v2968
        %v2985 = vmul.f32 %v2969, %v2969
        %v2986 = vmul.f32 %v2970, %v2970
        %v2987 = vmul.f32 %v2971, %v2971
        %v2988 = vmul.f32 %v2972, %v2972
        %v2989 = vmul.f32 %v2973, %v2973
        %v2990 = vmul.f32 %v2974, %v2974
        %v2991 = vmul.f32 %v2975, %v2975
        %v2992 = vmul.f32 %v2976, %v2976
        %v2993 = vmul.f32 %v2977, %v2977
        %v2994 = vmul.f32 %v2978, %v2978
        %v2995 = vmul.f32 %v2979, %v2979
        %v2996 = vmul.f32 %v2980, %v2980
        %v2997 = vmul.f32 %v2981, %v2981
        %v2998 = vmul.f32 %v2982, %v2982
        %v2999 = vmul.f32 %v2983, %v2983
        %v3000 = vadd.f32 %v2984, %v2985
        %3001 = vadd.xlane.f32.xlu0 %v3000
        %v3002 = vpop.xlane.xlu0 %3001
        %v3003 = vadd.f32 %v2986, %v2987
        %3004 = vadd.xlane.f32.xlu0 %v3003
        %v3005 = vpop.xlane.xlu0 %3004
        %v3006 = vadd.f32 %v2988, %v2989
        %3007 = vadd.xlane.f32.xlu0 %v3006
        %v3008 = vpop.xlane.xlu0 %3007
        %v3009 = vadd.f32 %v2990, %v2991
        %3010 = vadd.xlane.f32.xlu0 %v3009
        %v3011 = vpop.xlane.xlu0 %3010
        %v3012 = vadd.f32 %v2992, %v2993
        %3013 = vadd.xlane.f32.xlu0 %v3012
        %v3014 = vpop.xlane.xlu0 %3013
        %v3015 = vadd.f32 %v2994, %v2995
        %3016 = vadd.xlane.f32.xlu0 %v3015
        %v3017 = vpop.xlane.xlu0 %3016
        %v3018 = vadd.f32 %v2996, %v2997
        %3019 = vadd.xlane.f32.xlu0 %v3018
        %v3020 = vpop.xlane.xlu0 %3019
        %v3021 = vadd.f32 %v2998, %v2999
        %3022 = vadd.xlane.f32.xlu0 %v3021
        %v3023 = vpop.xlane.xlu0 %3022
        %v3024 = vmul.f32 %v3002, %v690
        %v3025 = vmul.f32 %v3005, %v690
        %v3026 = vmul.f32 %v3008, %v690
        %v3027 = vmul.f32 %v3011, %v690
        %v3028 = vmul.f32 %v3014, %v690
        %v3029 = vmul.f32 %v3017, %v690
        %v3030 = vmul.f32 %v3020, %v690
        %v3031 = vmul.f32 %v3023, %v690
        %v3032 = vadd.f32 %v3024, 1e-05
        %v3033 = vadd.f32 %v3025, 1e-05
        %v3034 = vadd.f32 %v3026, 1e-05
        %v3035 = vadd.f32 %v3027, 1e-05
        %v3036 = vadd.f32 %v3028, 1e-05
        %v3037 = vadd.f32 %v3029, 1e-05
        %v3038 = vadd.f32 %v3030, 1e-05
        %v3039 = vadd.f32 %v3031, 1e-05
        %v3040 = vrsqrt.pop %v3032
        %v3041 = vrsqrt.pop %v3033
        %v3042 = vrsqrt.pop %v3034
        %v3043 = vrsqrt.pop %v3035
        %v3044 = vrsqrt.pop %v3036
        %v3045 = vrsqrt.pop %v3037
        %v3046 = vrsqrt.pop %v3038
        %v3047 = vrsqrt.pop %v3039
        %v3048 = vmul.f32 %v2968, %v3040
        %v3049 = vmul.f32 %v2969, %v3040
        %v3050 = vmul.f32 %v2970, %v3041
        %v3051 = vmul.f32 %v2971, %v3041
        %v3052 = vmul.f32 %v2972, %v3042
        %v3053 = vmul.f32 %v2973, %v3042
        %v3054 = vmul.f32 %v2974, %v3043
        %v3055 = vmul.f32 %v2975, %v3043
        %v3056 = vmul.f32 %v2976, %v3044
        %v3057 = vmul.f32 %v2977, %v3044
        %v3058 = vmul.f32 %v2978, %v3045
        %v3059 = vmul.f32 %v2979, %v3045
        %v3060 = vmul.f32 %v2980, %v3046
        %v3061 = vmul.f32 %v2981, %v3046
        %v3062 = vmul.f32 %v2982, %v3047
        %v3063 = vmul.f32 %v2983, %v3047
        %v3065 = vlaneseq
        %v3066 = vshrl.u32 %v3065, 7
        %v3067 = vsub.s32 0, %v3066
        %v3068 = vrot.slane %v2934, %v3067
        %v3069 = vlaneseq
        %v3070 = vshrl.u32 %v3069, 7
        %v3071 = vsub.s32 1, %v3070
        %v3072 = vrot.slane %v2934, %v3071
        %v3075 = vmul.f32 %v3048, %v3068
        %v3076 = vmul.f32 %v3049, %v3072
        %v3077 = vmul.f32 %v3050, %v3068
        %v3078 = vmul.f32 %v3051, %v3072
        %v3079 = vmul.f32 %v3052, %v3068
        %v3080 = vmul.f32 %v3053, %v3072
        %v3081 = vmul.f32 %v3054, %v3068
        %v3082 = vmul.f32 %v3055, %v3072
        %v3083 = vmul.f32 %v3056, %v3068
        %v3084 = vmul.f32 %v3057, %v3072
        %v3085 = vmul.f32 %v3058, %v3068
        %v3086 = vmul.f32 %v3059, %v3072
        %v3087 = vmul.f32 %v3060, %v3068
        %v3088 = vmul.f32 %v3061, %v3072
        %v3089 = vmul.f32 %v3062, %v3068
        %v3090 = vmul.f32 %v3063, %v3072
        %v3092 = vlaneseq
        %v3093 = vshrl.u32 %v3092, 7
        %v3094 = vsub.s32 0, %v3093
        %v3095 = vrot.slane %v2935, %v3094
        %v3096 = vlaneseq
        %v3097 = vshrl.u32 %v3096, 7
        %v3098 = vsub.s32 1, %v3097
        %v3099 = vrot.slane %v2935, %v3098
        %v3102 = vadd.f32 %v3075, %v3095
        %v3103 = vadd.f32 %v3076, %v3099
        %v3104 = vadd.f32 %v3077, %v3095
        %v3105 = vadd.f32 %v3078, %v3099
        %v3106 = vadd.f32 %v3079, %v3095
        %v3107 = vadd.f32 %v3080, %v3099
        %v3108 = vadd.f32 %v3081, %v3095
        %v3109 = vadd.f32 %v3082, %v3099
        %v3110 = vadd.f32 %v3083, %v3095
        %v3111 = vadd.f32 %v3084, %v3099
        %v3112 = vadd.f32 %v3085, %v3095
        %v3113 = vadd.f32 %v3086, %v3099
        %v3114 = vadd.f32 %v3087, %v3095
        %v3115 = vadd.f32 %v3088, %v3099
        %v3116 = vadd.f32 %v3089, %v3095
        %v3117 = vadd.f32 %v3090, %v3099
        %v3118 = vpack.c.bf16 %v3104, %v3102
        %v3119 = vpack.c.bf16 %v3105, %v3103
        %v3120 = vpack.c.bf16 %v3108, %v3106
        %v3121 = vpack.c.bf16 %v3109, %v3107
        %v3122 = vpack.c.bf16 %v3112, %v3110
        %v3123 = vpack.c.bf16 %v3113, %v3111
        %v3124 = vpack.c.bf16 %v3116, %v3114
        %v3125 = vpack.c.bf16 %v3117, %v3115
        %v3126 = vld [vmem:[#allocation11] sm:$0xff]
        %v3127 = vld [vmem:[#allocation11 + $0x8] sm:$0xff]
        %v3128 = vld [vmem:[#allocation11 + $0x10] sm:$0xff]
        %v3129 = vld [vmem:[#allocation11 + $0x18] sm:$0xff]
        %v3130 = vld [vmem:[#allocation11 + $0x20] sm:$0xff]
        %v3131 = vld [vmem:[#allocation11 + $0x28] sm:$0xff]
        %v3132 = vld [vmem:[#allocation11 + $0x30] sm:$0xff]
        %v3133 = vld [vmem:[#allocation11 + $0x38] sm:$0xff]
        %v3134 = vld [vmem:[#allocation11 + $0x40] sm:$0xff]
        %v3135 = vld [vmem:[#allocation11 + $0x48] sm:$0xff]
        %v3136 = vld [vmem:[#allocation11 + $0x50] sm:$0xff]
        %v3137 = vld [vmem:[#allocation11 + $0x58] sm:$0xff]
        %v3138 = vld [vmem:[#allocation11 + $0x60] sm:$0xff]
        %v3139 = vld [vmem:[#allocation11 + $0x68] sm:$0xff]
        %v3140 = vld [vmem:[#allocation11 + $0x70] sm:$0xff]
        %v3141 = vld [vmem:[#allocation11 + $0x78] sm:$0xff]
        %v3142 = vld [vmem:[#allocation11 + $0x80] sm:$0xff]
        %v3143 = vld [vmem:[#allocation11 + $0x88] sm:$0xff]
        %v3144 = vld [vmem:[#allocation11 + $0x90] sm:$0xff]
        %v3145 = vld [vmem:[#allocation11 + $0x98] sm:$0xff]
        %v3146 = vld [vmem:[#allocation11 + $0xa0] sm:$0xff]
        %v3147 = vld [vmem:[#allocation11 + $0xa8] sm:$0xff]
        %v3148 = vld [vmem:[#allocation11 + $0xb0] sm:$0xff]
        %v3149 = vld [vmem:[#allocation11 + $0xb8] sm:$0xff]
        %v3150 = vld [vmem:[#allocation11 + $0xc0] sm:$0xff]
        %v3151 = vld [vmem:[#allocation11 + $0xc8] sm:$0xff]
        %v3152 = vld [vmem:[#allocation11 + $0xd0] sm:$0xff]
        %v3153 = vld [vmem:[#allocation11 + $0xd8] sm:$0xff]
        %v3154 = vld [vmem:[#allocation11 + $0xe0] sm:$0xff]
        %v3155 = vld [vmem:[#allocation11 + $0xe8] sm:$0xff]
        %v3156 = vld [vmem:[#allocation11 + $0xf0] sm:$0xff]
        %v3157 = vld [vmem:[#allocation11 + $0xf8] sm:$0xff]
        %v3158 = vld [vmem:[#allocation11 + $0x100] sm:$0xff]
        %v3159 = vld [vmem:[#allocation11 + $0x108] sm:$0xff]
        %v3160 = vld [vmem:[#allocation11 + $0x110] sm:$0xff]
        %v3161 = vld [vmem:[#allocation11 + $0x118] sm:$0xff]
        %v3162 = vld [vmem:[#allocation11 + $0x120] sm:$0xff]
        %v3163 = vld [vmem:[#allocation11 + $0x128] sm:$0xff]
        %v3164 = vld [vmem:[#allocation11 + $0x130] sm:$0xff]
        %v3165 = vld [vmem:[#allocation11 + $0x138] sm:$0xff]
        %v3166 = vld [vmem:[#allocation11 + $0x140] sm:$0xff]
        %v3167 = vld [vmem:[#allocation11 + $0x148] sm:$0xff]
        %v3168 = vld [vmem:[#allocation11 + $0x150] sm:$0xff]
        %v3169 = vld [vmem:[#allocation11 + $0x158] sm:$0xff]
        %v3170 = vld [vmem:[#allocation11 + $0x160] sm:$0xff]
        %v3171 = vld [vmem:[#allocation11 + $0x168] sm:$0xff]
        %v3172 = vld [vmem:[#allocation11 + $0x170] sm:$0xff]
        %v3173 = vld [vmem:[#allocation11 + $0x178] sm:$0xff]
        %v3174 = vld [vmem:[#allocation11 + $0x180] sm:$0xff]
        %v3175 = vld [vmem:[#allocation11 + $0x188] sm:$0xff]
        %v3176 = vld [vmem:[#allocation11 + $0x190] sm:$0xff]
        %v3177 = vld [vmem:[#allocation11 + $0x198] sm:$0xff]
        %v3178 = vld [vmem:[#allocation11 + $0x1a0] sm:$0xff]
        %v3179 = vld [vmem:[#allocation11 + $0x1a8] sm:$0xff]
        %v3180 = vld [vmem:[#allocation11 + $0x1b0] sm:$0xff]
        %v3181 = vld [vmem:[#allocation11 + $0x1b8] sm:$0xff]
        %v3182 = vld [vmem:[#allocation11 + $0x1c0] sm:$0xff]
        %v3183 = vld [vmem:[#allocation11 + $0x1c8] sm:$0xff]
        %v3184 = vld [vmem:[#allocation11 + $0x1d0] sm:$0xff]
        %v3185 = vld [vmem:[#allocation11 + $0x1d8] sm:$0xff]
        %v3186 = vld [vmem:[#allocation11 + $0x1e0] sm:$0xff]
        %v3187 = vld [vmem:[#allocation11 + $0x1e8] sm:$0xff]
        %v3188 = vld [vmem:[#allocation11 + $0x1f0] sm:$0xff]
        %v3189 = vld [vmem:[#allocation11 + $0x1f8] sm:$0xff]
        %v3190 = vld [vmem:[%s10] sm:$0xf]
        %v3192 = vlaneseq
        %v3193 = vshrl.u32 %v3192, 7
        %v3194 = vsub.s32 0, %v3193
        %v3195 = vrot.slane %v3190, %v3194
        %v3196 = vlaneseq
        %v3197 = vshrl.u32 %v3196, 7
        %v3198 = vsub.s32 1, %v3197
        %v3199 = vrot.slane %v3190, %v3198
        %v3200 = vlaneseq
        %v3201 = vshrl.u32 %v3200, 7
        %v3202 = vsub.s32 2, %v3201
        %v3203 = vrot.slane %v3190, %v3202
        %v3204 = vlaneseq
        %v3205 = vshrl.u32 %v3204, 7
        %v3206 = vsub.s32 3, %v3205
        %v3207 = vrot.slane %v3190, %v3206
        %v3276 = vunpack.c.l.b16 %v3126
        %v3277 = vunpack.c.h.b16 %v3126
        %v3278 = vunpack.c.l.b16 %v3127
        %v3279 = vunpack.c.h.b16 %v3127
        %v3280 = vunpack.c.l.b16 %v3128
        %v3281 = vunpack.c.h.b16 %v3128
        %v3282 = vunpack.c.l.b16 %v3129
        %v3283 = vunpack.c.h.b16 %v3129
        %v3284 = vunpack.c.l.b16 %v3130
        %v3285 = vunpack.c.h.b16 %v3130
        %v3286 = vunpack.c.l.b16 %v3131
        %v3287 = vunpack.c.h.b16 %v3131
        %v3288 = vunpack.c.l.b16 %v3132
        %v3289 = vunpack.c.h.b16 %v3132
        %v3290 = vunpack.c.l.b16 %v3133
        %v3291 = vunpack.c.h.b16 %v3133
        %v3292 = vunpack.c.l.b16 %v3134
        %v3293 = vunpack.c.h.b16 %v3134
        %v3294 = vunpack.c.l.b16 %v3135
        %v3295 = vunpack.c.h.b16 %v3135
        %v3296 = vunpack.c.l.b16 %v3136
        %v3297 = vunpack.c.h.b16 %v3136
        %v3298 = vunpack.c.l.b16 %v3137
        %v3299 = vunpack.c.h.b16 %v3137
        %v3300 = vunpack.c.l.b16 %v3138
        %v3301 = vunpack.c.h.b16 %v3138
        %v3302 = vunpack.c.l.b16 %v3139
        %v3303 = vunpack.c.h.b16 %v3139
        %v3304 = vunpack.c.l.b16 %v3140
        %v3305 = vunpack.c.h.b16 %v3140
        %v3306 = vunpack.c.l.b16 %v3141
        %v3307 = vunpack.c.h.b16 %v3141
        %v3308 = vunpack.c.l.b16 %v3142
        %v3309 = vunpack.c.h.b16 %v3142
        %v3310 = vunpack.c.l.b16 %v3143
        %v3311 = vunpack.c.h.b16 %v3143
        %v3312 = vunpack.c.l.b16 %v3144
        %v3313 = vunpack.c.h.b16 %v3144
        %v3314 = vunpack.c.l.b16 %v3145
        %v3315 = vunpack.c.h.b16 %v3145
        %v3316 = vunpack.c.l.b16 %v3146
        %v3317 = vunpack.c.h.b16 %v3146
        %v3318 = vunpack.c.l.b16 %v3147
        %v3319 = vunpack.c.h.b16 %v3147
        %v3320 = vunpack.c.l.b16 %v3148
        %v3321 = vunpack.c.h.b16 %v3148
        %v3322 = vunpack.c.l.b16 %v3149
        %v3323 = vunpack.c.h.b16 %v3149
        %v3324 = vunpack.c.l.b16 %v3150
        %v3325 = vunpack.c.h.b16 %v3150
        %v3326 = vunpack.c.l.b16 %v3151
        %v3327 = vunpack.c.h.b16 %v3151
        %v3328 = vunpack.c.l.b16 %v3152
        %v3329 = vunpack.c.h.b16 %v3152
        %v3330 = vunpack.c.l.b16 %v3153
        %v3331 = vunpack.c.h.b16 %v3153
        %v3332 = vunpack.c.l.b16 %v3154
        %v3333 = vunpack.c.h.b16 %v3154
        %v3334 = vunpack.c.l.b16 %v3155
        %v3335 = vunpack.c.h.b16 %v3155
        %v3336 = vunpack.c.l.b16 %v3156
        %v3337 = vunpack.c.h.b16 %v3156
        %v3338 = vunpack.c.l.b16 %v3157
        %v3339 = vunpack.c.h.b16 %v3157
        %v3340 = vunpack.c.l.b16 %v3158
        %v3341 = vunpack.c.h.b16 %v3158
        %v3342 = vunpack.c.l.b16 %v3159
        %v3343 = vunpack.c.h.b16 %v3159
        %v3344 = vunpack.c.l.b16 %v3160
        %v3345 = vunpack.c.h.b16 %v3160
        %v3346 = vunpack.c.l.b16 %v3161
        %v3347 = vunpack.c.h.b16 %v3161
        %v3348 = vunpack.c.l.b16 %v3162
        %v3349 = vunpack.c.h.b16 %v3162
        %v3350 = vunpack.c.l.b16 %v3163
        %v3351 = vunpack.c.h.b16 %v3163
        %v3352 = vunpack.c.l.b16 %v3164
        %v3353 = vunpack.c.h.b16 %v3164
        %v3354 = vunpack.c.l.b16 %v3165
        %v3355 = vunpack.c.h.b16 %v3165
        %v3356 = vunpack.c.l.b16 %v3166
        %v3357 = vunpack.c.h.b16 %v3166
        %v3358 = vunpack.c.l.b16 %v3167
        %v3359 = vunpack.c.h.b16 %v3167
        %v3360 = vunpack.c.l.b16 %v3168
        %v3361 = vunpack.c.h.b16 %v3168
        %v3362 = vunpack.c.l.b16 %v3169
        %v3363 = vunpack.c.h.b16 %v3169
        %v3364 = vunpack.c.l.b16 %v3170
        %v3365 = vunpack.c.h.b16 %v3170
        %v3366 = vunpack.c.l.b16 %v3171
        %v3367 = vunpack.c.h.b16 %v3171
        %v3368 = vunpack.c.l.b16 %v3172
        %v3369 = vunpack.c.h.b16 %v3172
        %v3370 = vunpack.c.l.b16 %v3173
        %v3371 = vunpack.c.h.b16 %v3173
        %v3372 = vunpack.c.l.b16 %v3174
        %v3373 = vunpack.c.h.b16 %v3174
        %v3374 = vunpack.c.l.b16 %v3175
        %v3375 = vunpack.c.h.b16 %v3175
        %v3376 = vunpack.c.l.b16 %v3176
        %v3377 = vunpack.c.h.b16 %v3176
        %v3378 = vunpack.c.l.b16 %v3177
        %v3379 = vunpack.c.h.b16 %v3177
        %v3380 = vunpack.c.l.b16 %v3178
        %v3381 = vunpack.c.h.b16 %v3178
        %v3382 = vunpack.c.l.b16 %v3179
        %v3383 = vunpack.c.h.b16 %v3179
        %v3384 = vunpack.c.l.b16 %v3180
        %v3385 = vunpack.c.h.b16 %v3180
        %v3386 = vunpack.c.l.b16 %v3181
        %v3387 = vunpack.c.h.b16 %v3181
        %v3388 = vunpack.c.l.b16 %v3182
        %v3389 = vunpack.c.h.b16 %v3182
        %v3390 = vunpack.c.l.b16 %v3183
        %v3391 = vunpack.c.h.b16 %v3183
        %v3392 = vunpack.c.l.b16 %v3184
        %v3393 = vunpack.c.h.b16 %v3184
        %v3394 = vunpack.c.l.b16 %v3185
        %v3395 = vunpack.c.h.b16 %v3185
        %v3396 = vunpack.c.l.b16 %v3186
        %v3397 = vunpack.c.h.b16 %v3186
        %v3398 = vunpack.c.l.b16 %v3187
        %v3399 = vunpack.c.h.b16 %v3187
        %v3400 = vunpack.c.l.b16 %v3188
        %v3401 = vunpack.c.h.b16 %v3188
        %v3402 = vunpack.c.l.b16 %v3189
        %v3403 = vunpack.c.h.b16 %v3189
        %v3404 = vpack.c.b16 %v3280, %v3276
        %v3405 = vpack.c.b16 %v3281, %v3277
        %v3406 = vpack.c.b16 %v3282, %v3278
        %v3407 = vpack.c.b16 %v3283, %v3279
        %v3408 = vpack.c.b16 %v3288, %v3284
        %v3409 = vpack.c.b16 %v3289, %v3285
        %v3410 = vpack.c.b16 %v3290, %v3286
        %v3411 = vpack.c.b16 %v3291, %v3287
        %v3412 = vpack.c.b16 %v3296, %v3292
        %v3413 = vpack.c.b16 %v3297, %v3293
        %v3414 = vpack.c.b16 %v3298, %v3294
        %v3415 = vpack.c.b16 %v3299, %v3295
        %v3416 = vpack.c.b16 %v3304, %v3300
        %v3417 = vpack.c.b16 %v3305, %v3301
        %v3418 = vpack.c.b16 %v3306, %v3302
        %v3419 = vpack.c.b16 %v3307, %v3303
        %v3420 = vpack.c.b16 %v3312, %v3308
        %v3421 = vpack.c.b16 %v3313, %v3309
        %v3422 = vpack.c.b16 %v3314, %v3310
        %v3423 = vpack.c.b16 %v3315, %v3311
        %v3424 = vpack.c.b16 %v3320, %v3316
        %v3425 = vpack.c.b16 %v3321, %v3317
        %v3426 = vpack.c.b16 %v3322, %v3318
        %v3427 = vpack.c.b16 %v3323, %v3319
        %v3428 = vpack.c.b16 %v3328, %v3324
        %v3429 = vpack.c.b16 %v3329, %v3325
        %v3430 = vpack.c.b16 %v3330, %v3326
        %v3431 = vpack.c.b16 %v3331, %v3327
        %v3432 = vpack.c.b16 %v3336, %v3332
        %v3433 = vpack.c.b16 %v3337, %v3333
        %v3434 = vpack.c.b16 %v3338, %v3334
        %v3435 = vpack.c.b16 %v3339, %v3335
        %v3436 = vpack.c.b16 %v3344, %v3340
        %v3437 = vpack.c.b16 %v3345, %v3341
        %v3438 = vpack.c.b16 %v3346, %v3342
        %v3439 = vpack.c.b16 %v3347, %v3343
        %v3440 = vpack.c.b16 %v3352, %v3348
        %v3441 = vpack.c.b16 %v3353, %v3349
        %v3442 = vpack.c.b16 %v3354, %v3350
        %v3443 = vpack.c.b16 %v3355, %v3351
        %v3444 = vpack.c.b16 %v3360, %v3356
        %v3445 = vpack.c.b16 %v3361, %v3357
        %v3446 = vpack.c.b16 %v3362, %v3358
        %v3447 = vpack.c.b16 %v3363, %v3359
        %v3448 = vpack.c.b16 %v3368, %v3364
        %v3449 = vpack.c.b16 %v3369, %v3365
        %v3450 = vpack.c.b16 %v3370, %v3366
        %v3451 = vpack.c.b16 %v3371, %v3367
        %v3452 = vpack.c.b16 %v3376, %v3372
        %v3453 = vpack.c.b16 %v3377, %v3373
        %v3454 = vpack.c.b16 %v3378, %v3374
        %v3455 = vpack.c.b16 %v3379, %v3375
        %v3456 = vpack.c.b16 %v3384, %v3380
        %v3457 = vpack.c.b16 %v3385, %v3381
        %v3458 = vpack.c.b16 %v3386, %v3382
        %v3459 = vpack.c.b16 %v3387, %v3383
        %v3460 = vpack.c.b16 %v3392, %v3388
        %v3461 = vpack.c.b16 %v3393, %v3389
        %v3462 = vpack.c.b16 %v3394, %v3390
        %v3463 = vpack.c.b16 %v3395, %v3391
        %v3464 = vpack.c.b16 %v3400, %v3396
        %v3465 = vpack.c.b16 %v3401, %v3397
        %v3466 = vpack.c.b16 %v3402, %v3398
        %v3467 = vpack.c.b16 %v3403, %v3399
        %3532 = vmatprep.subr.bf16.mxu0 %v3433
        %3533 = vmatpush1.bf16.msra.mxu0 %v3432
        %3534 = vmatprep.subr.bf16.mxu0 %v3429
        %3535 = vmatpush1.bf16.msra.mxu0 %v3428
        %3536 = vmatprep.subr.bf16.mxu0 %v3425
        %3537 = vmatpush1.bf16.msra.mxu0 %v3424
        %3538 = vmatprep.subr.bf16.mxu0 %v3421
        %3539 = vmatpush1.bf16.msra.mxu0 %v3420
        %3540 = vmatprep.subr.bf16.mxu0 %v3417
        %3541 = vmatpush1.bf16.msra.mxu0 %v3416
        %3542 = vmatprep.subr.bf16.mxu0 %v3413
        %3543 = vmatpush1.bf16.msra.mxu0 %v3412
        %3544 = vmatprep.subr.bf16.mxu0 %v3409
        %3545 = vmatpush1.bf16.msra.mxu0 %v3408
        %3546 = vmatprep.subr.bf16.mxu0 %v3405
        %3547 = vmatpush1.bf16.msra.mxu0 %v3404
        %3548 = vmatprep.subr.bf16.mxu0 %v3465
        %3549 = vmatpush2.bf16.msra.mxu0 %v3464
        %3550 = vmatprep.subr.bf16.mxu0 %v3461
        %3551 = vmatpush2.bf16.msra.mxu0 %v3460
        %3552 = vmatprep.subr.bf16.mxu0 %v3457
        %3553 = vmatpush2.bf16.msra.mxu0 %v3456
        %3554 = vmatprep.subr.bf16.mxu0 %v3453
        %3555 = vmatpush2.bf16.msra.mxu0 %v3452
        %3556 = vmatprep.subr.bf16.mxu0 %v3449
        %3557 = vmatpush2.bf16.msra.mxu0 %v3448
        %3558 = vmatprep.subr.bf16.mxu0 %v3445
        %3559 = vmatpush2.bf16.msra.mxu0 %v3444
        %3560 = vmatprep.subr.bf16.mxu0 %v3441
        %3561 = vmatpush2.bf16.msra.mxu0 %v3440
        %3562 = vmatprep.subr.bf16.mxu0 %v3437
        %3563 = vmatpush2.bf16.msra.mxu0 %v3436
        %3564 = vmatprep.mubr.bf16.mxu0 %v3119
        %3565 = vmatmul.mubr.bf16.gmra.mxu0 %v3118
        %v3566 = vpop.f32.mrf.mxu0
        %v3567 = vadd.f32 %v3195, %v3566
        %v3568 = vpop.f32.mrf.mxu0
        %v3569 = vadd.f32 %v3199, %v3568
        %v3570 = vpop.f32.mrf.mxu0
        %v3571 = vadd.f32 %v3195, %v3570
        %v3572 = vpop.f32.mrf.mxu0
        %v3573 = vadd.f32 %v3199, %v3572
        %3574 = vmatprep.mubr.bf16.mxu0 %v3121
        %3575 = vmatmul.mubr.bf16.gmra.mxu0 %v3120
        %v3576 = vpop.f32.mrf.mxu0
        %v3577 = vadd.f32 %v3195, %v3576
        %v3578 = vpop.f32.mrf.mxu0
        %v3579 = vadd.f32 %v3199, %v3578
        %v3580 = vpop.f32.mrf.mxu0
        %v3581 = vadd.f32 %v3195, %v3580
        %v3582 = vpop.f32.mrf.mxu0
        %v3583 = vadd.f32 %v3199, %v3582
        %3584 = vmatprep.mubr.bf16.mxu0 %v3123
        %3585 = vmatmul.mubr.bf16.gmra.mxu0 %v3122
        %v3586 = vpop.f32.mrf.mxu0
        %v3587 = vadd.f32 %v3195, %v3586
        %v3588 = vpop.f32.mrf.mxu0
        %v3589 = vadd.f32 %v3199, %v3588
        %v3590 = vpop.f32.mrf.mxu0
        %v3591 = vadd.f32 %v3195, %v3590
        %v3592 = vpop.f32.mrf.mxu0
        %v3593 = vadd.f32 %v3199, %v3592
        %3594 = vmatprep.mubr.bf16.mxu0 %v3125
        %3595 = vmatmul.mubr.bf16.gmra.mxu0 %v3124
        %v3596 = vpop.f32.mrf.mxu0
        %v3597 = vadd.f32 %v3195, %v3596
        %v3598 = vpop.f32.mrf.mxu0
        %v3599 = vadd.f32 %v3199, %v3598
        %v3600 = vpop.f32.mrf.mxu0
        %v3601 = vadd.f32 %v3195, %v3600
        %v3602 = vpop.f32.mrf.mxu0
        %v3603 = vadd.f32 %v3199, %v3602
        %3604 = vdwg.mxu0
        %3605 = vmatprep.subr.bf16.mxu0 %v3435
        %3606 = vmatpush1.bf16.msra.mxu0 %v3434
        %3607 = vmatprep.subr.bf16.mxu0 %v3431
        %3608 = vmatpush1.bf16.msra.mxu0 %v3430
        %3609 = vmatprep.subr.bf16.mxu0 %v3427
        %3610 = vmatpush1.bf16.msra.mxu0 %v3426
        %3611 = vmatprep.subr.bf16.mxu0 %v3423
        %3612 = vmatpush1.bf16.msra.mxu0 %v3422
        %3613 = vmatprep.subr.bf16.mxu0 %v3419
        %3614 = vmatpush1.bf16.msra.mxu0 %v3418
        %3615 = vmatprep.subr.bf16.mxu0 %v3415
        %3616 = vmatpush1.bf16.msra.mxu0 %v3414
        %3617 = vmatprep.subr.bf16.mxu0 %v3411
        %3618 = vmatpush1.bf16.msra.mxu0 %v3410
        %3619 = vmatprep.subr.bf16.mxu0 %v3407
        %3620 = vmatpush1.bf16.msra.mxu0 %v3406
        %3621 = vmatprep.subr.bf16.mxu0 %v3467
        %3622 = vmatpush2.bf16.msra.mxu0 %v3466
        %3623 = vmatprep.subr.bf16.mxu0 %v3463
        %3624 = vmatpush2.bf16.msra.mxu0 %v3462
        %3625 = vmatprep.subr.bf16.mxu0 %v3459
        %3626 = vmatpush2.bf16.msra.mxu0 %v3458
        %3627 = vmatprep.subr.bf16.mxu0 %v3455
        %3628 = vmatpush2.bf16.msra.mxu0 %v3454
        %3629 = vmatprep.subr.bf16.mxu0 %v3451
        %3630 = vmatpush2.bf16.msra.mxu0 %v3450
        %3631 = vmatprep.subr.bf16.mxu0 %v3447
        %3632 = vmatpush2.bf16.msra.mxu0 %v3446
        %3633 = vmatprep.subr.bf16.mxu0 %v3443
        %3634 = vmatpush2.bf16.msra.mxu0 %v3442
        %3635 = vmatprep.subr.bf16.mxu0 %v3439
        %3636 = vmatpush2.bf16.msra.mxu0 %v3438
        %3637 = vmatprep.mubr.bf16.mxu0 %v3119
        %3638 = vmatmul.mubr.bf16.gmra.mxu0 %v3118
        %v3639 = vpop.f32.mrf.mxu0
        %v3640 = vadd.f32 %v3203, %v3639
        %v3641 = vpop.f32.mrf.mxu0
        %v3642 = vadd.f32 %v3207, %v3641
        %v3643 = vpop.f32.mrf.mxu0
        %v3644 = vadd.f32 %v3203, %v3643
        %v3645 = vpop.f32.mrf.mxu0
        %v3646 = vadd.f32 %v3207, %v3645
        %3647 = vmatprep.mubr.bf16.mxu0 %v3121
        %3648 = vmatmul.mubr.bf16.gmra.mxu0 %v3120
        %v3649 = vpop.f32.mrf.mxu0
        %v3650 = vadd.f32 %v3203, %v3649
        %v3651 = vpop.f32.mrf.mxu0
        %v3652 = vadd.f32 %v3207, %v3651
        %v3653 = vpop.f32.mrf.mxu0
        %v3654 = vadd.f32 %v3203, %v3653
        %v3655 = vpop.f32.mrf.mxu0
        %v3656 = vadd.f32 %v3207, %v3655
        %3657 = vmatprep.mubr.bf16.mxu0 %v3123
        %3658 = vmatmul.mubr.bf16.gmra.mxu0 %v3122
        %v3659 = vpop.f32.mrf.mxu0
        %v3660 = vadd.f32 %v3203, %v3659
        %v3661 = vpop.f32.mrf.mxu0
        %v3662 = vadd.f32 %v3207, %v3661
        %v3663 = vpop.f32.mrf.mxu0
        %v3664 = vadd.f32 %v3203, %v3663
        %v3665 = vpop.f32.mrf.mxu0
        %v3666 = vadd.f32 %v3207, %v3665
        %3667 = vmatprep.mubr.bf16.mxu0 %v3125
        %3668 = vmatmul.mubr.bf16.gmra.mxu0 %v3124
        %v3669 = vpop.f32.mrf.mxu0
        %v3670 = vadd.f32 %v3203, %v3669
        %v3671 = vpop.f32.mrf.mxu0
        %v3672 = vadd.f32 %v3207, %v3671
        %v3673 = vpop.f32.mrf.mxu0
        %v3674 = vadd.f32 %v3203, %v3673
        %v3675 = vpop.f32.mrf.mxu0
        %v3676 = vadd.f32 %v3207, %v3675
        %3677 = vdwg.mxu0
        %v3678 = vmax.f32 %v3567, 0.0
        %v3679 = vmax.f32 %v3569, 0.0
        %v3680 = vmax.f32 %v3640, 0.0
        %v3681 = vmax.f32 %v3642, 0.0
        %v3682 = vmax.f32 %v3571, 0.0
        %v3683 = vmax.f32 %v3573, 0.0
        %v3684 = vmax.f32 %v3644, 0.0
        %v3685 = vmax.f32 %v3646, 0.0
        %v3686 = vmax.f32 %v3577, 0.0
        %v3687 = vmax.f32 %v3579, 0.0
        %v3688 = vmax.f32 %v3650, 0.0
        %v3689 = vmax.f32 %v3652, 0.0
        %v3690 = vmax.f32 %v3581, 0.0
        %v3691 = vmax.f32 %v3583, 0.0
        %v3692 = vmax.f32 %v3654, 0.0
        %v3693 = vmax.f32 %v3656, 0.0
        %v3694 = vmax.f32 %v3587, 0.0
        %v3695 = vmax.f32 %v3589, 0.0
        %v3696 = vmax.f32 %v3660, 0.0
        %v3697 = vmax.f32 %v3662, 0.0
        %v3698 = vmax.f32 %v3591, 0.0
        %v3699 = vmax.f32 %v3593, 0.0
        %v3700 = vmax.f32 %v3664, 0.0
        %v3701 = vmax.f32 %v3666, 0.0
        %v3702 = vmax.f32 %v3597, 0.0
        %v3703 = vmax.f32 %v3599, 0.0
        %v3704 = vmax.f32 %v3670, 0.0
        %v3705 = vmax.f32 %v3672, 0.0
        %v3706 = vmax.f32 %v3601, 0.0
        %v3707 = vmax.f32 %v3603, 0.0
        %v3708 = vmax.f32 %v3674, 0.0
        %v3709 = vmax.f32 %v3676, 0.0
        %v3710 = vpack.c.bf16 %v3682, %v3678
        %v3711 = vpack.c.bf16 %v3683, %v3679
        %v3712 = vpack.c.bf16 %v3684, %v3680
        %v3713 = vpack.c.bf16 %v3685, %v3681
        %v3714 = vpack.c.bf16 %v3690, %v3686
        %v3715 = vpack.c.bf16 %v3691, %v3687
        %v3716 = vpack.c.bf16 %v3692, %v3688
        %v3717 = vpack.c.bf16 %v3693, %v3689
        %v3718 = vpack.c.bf16 %v3698, %v3694
        %v3719 = vpack.c.bf16 %v3699, %v3695
        %v3720 = vpack.c.bf16 %v3700, %v3696
        %v3721 = vpack.c.bf16 %v3701, %v3697
        %v3722 = vpack.c.bf16 %v3706, %v3702
        %v3723 = vpack.c.bf16 %v3707, %v3703
        %v3724 = vpack.c.bf16 %v3708, %v3704
        %v3725 = vpack.c.bf16 %v3709, %v3705
        %v3726 = vld [vmem:[#allocation13] sm:$0xff]
        %v3727 = vld [vmem:[#allocation13 + $0x8] sm:$0xff]
        %v3728 = vld [vmem:[#allocation13 + $0x10] sm:$0xff]
        %v3729 = vld [vmem:[#allocation13 + $0x18] sm:$0xff]
        %v3730 = vld [vmem:[#allocation13 + $0x20] sm:$0xff]
        %v3731 = vld [vmem:[#allocation13 + $0x28] sm:$0xff]
        %v3732 = vld [vmem:[#allocation13 + $0x30] sm:$0xff]
        %v3733 = vld [vmem:[#allocation13 + $0x38] sm:$0xff]
        %v3734 = vld [vmem:[#allocation13 + $0x40] sm:$0xff]
        %v3735 = vld [vmem:[#allocation13 + $0x48] sm:$0xff]
        %v3736 = vld [vmem:[#allocation13 + $0x50] sm:$0xff]
        %v3737 = vld [vmem:[#allocation13 + $0x58] sm:$0xff]
        %v3738 = vld [vmem:[#allocation13 + $0x60] sm:$0xff]
        %v3739 = vld [vmem:[#allocation13 + $0x68] sm:$0xff]
        %v3740 = vld [vmem:[#allocation13 + $0x70] sm:$0xff]
        %v3741 = vld [vmem:[#allocation13 + $0x78] sm:$0xff]
        %v3742 = vld [vmem:[#allocation13 + $0x80] sm:$0xff]
        %v3743 = vld [vmem:[#allocation13 + $0x88] sm:$0xff]
        %v3744 = vld [vmem:[#allocation13 + $0x90] sm:$0xff]
        %v3745 = vld [vmem:[#allocation13 + $0x98] sm:$0xff]
        %v3746 = vld [vmem:[#allocation13 + $0xa0] sm:$0xff]
        %v3747 = vld [vmem:[#allocation13 + $0xa8] sm:$0xff]
        %v3748 = vld [vmem:[#allocation13 + $0xb0] sm:$0xff]
        %v3749 = vld [vmem:[#allocation13 + $0xb8] sm:$0xff]
        %v3750 = vld [vmem:[#allocation13 + $0xc0] sm:$0xff]
        %v3751 = vld [vmem:[#allocation13 + $0xc8] sm:$0xff]
        %v3752 = vld [vmem:[#allocation13 + $0xd0] sm:$0xff]
        %v3753 = vld [vmem:[#allocation13 + $0xd8] sm:$0xff]
        %v3754 = vld [vmem:[#allocation13 + $0xe0] sm:$0xff]
        %v3755 = vld [vmem:[#allocation13 + $0xe8] sm:$0xff]
        %v3756 = vld [vmem:[#allocation13 + $0xf0] sm:$0xff]
        %v3757 = vld [vmem:[#allocation13 + $0xf8] sm:$0xff]
        %v3758 = vld [vmem:[#allocation13 + $0x100] sm:$0xff]
        %v3759 = vld [vmem:[#allocation13 + $0x108] sm:$0xff]
        %v3760 = vld [vmem:[#allocation13 + $0x110] sm:$0xff]
        %v3761 = vld [vmem:[#allocation13 + $0x118] sm:$0xff]
        %v3762 = vld [vmem:[#allocation13 + $0x120] sm:$0xff]
        %v3763 = vld [vmem:[#allocation13 + $0x128] sm:$0xff]
        %v3764 = vld [vmem:[#allocation13 + $0x130] sm:$0xff]
        %v3765 = vld [vmem:[#allocation13 + $0x138] sm:$0xff]
        %v3766 = vld [vmem:[#allocation13 + $0x140] sm:$0xff]
        %v3767 = vld [vmem:[#allocation13 + $0x148] sm:$0xff]
        %v3768 = vld [vmem:[#allocation13 + $0x150] sm:$0xff]
        %v3769 = vld [vmem:[#allocation13 + $0x158] sm:$0xff]
        %v3770 = vld [vmem:[#allocation13 + $0x160] sm:$0xff]
        %v3771 = vld [vmem:[#allocation13 + $0x168] sm:$0xff]
        %v3772 = vld [vmem:[#allocation13 + $0x170] sm:$0xff]
        %v3773 = vld [vmem:[#allocation13 + $0x178] sm:$0xff]
        %v3774 = vld [vmem:[#allocation13 + $0x180] sm:$0xff]
        %v3775 = vld [vmem:[#allocation13 + $0x188] sm:$0xff]
        %v3776 = vld [vmem:[#allocation13 + $0x190] sm:$0xff]
        %v3777 = vld [vmem:[#allocation13 + $0x198] sm:$0xff]
        %v3778 = vld [vmem:[#allocation13 + $0x1a0] sm:$0xff]
        %v3779 = vld [vmem:[#allocation13 + $0x1a8] sm:$0xff]
        %v3780 = vld [vmem:[#allocation13 + $0x1b0] sm:$0xff]
        %v3781 = vld [vmem:[#allocation13 + $0x1b8] sm:$0xff]
        %v3782 = vld [vmem:[#allocation13 + $0x1c0] sm:$0xff]
        %v3783 = vld [vmem:[#allocation13 + $0x1c8] sm:$0xff]
        %v3784 = vld [vmem:[#allocation13 + $0x1d0] sm:$0xff]
        %v3785 = vld [vmem:[#allocation13 + $0x1d8] sm:$0xff]
        %v3786 = vld [vmem:[#allocation13 + $0x1e0] sm:$0xff]
        %v3787 = vld [vmem:[#allocation13 + $0x1e8] sm:$0xff]
        %v3788 = vld [vmem:[#allocation13 + $0x1f0] sm:$0xff]
        %v3789 = vld [vmem:[#allocation13 + $0x1f8] sm:$0xff]
        %v3854 = vunpack.c.l.b16 %v3726
        %v3855 = vunpack.c.h.b16 %v3726
        %v3856 = vunpack.c.l.b16 %v3727
        %v3857 = vunpack.c.h.b16 %v3727
        %v3858 = vunpack.c.l.b16 %v3728
        %v3859 = vunpack.c.h.b16 %v3728
        %v3860 = vunpack.c.l.b16 %v3729
        %v3861 = vunpack.c.h.b16 %v3729
        %v3862 = vunpack.c.l.b16 %v3730
        %v3863 = vunpack.c.h.b16 %v3730
        %v3864 = vunpack.c.l.b16 %v3731
        %v3865 = vunpack.c.h.b16 %v3731
        %v3866 = vunpack.c.l.b16 %v3732
        %v3867 = vunpack.c.h.b16 %v3732
        %v3868 = vunpack.c.l.b16 %v3733
        %v3869 = vunpack.c.h.b16 %v3733
        %v3870 = vunpack.c.l.b16 %v3734
        %v3871 = vunpack.c.h.b16 %v3734
        %v3872 = vunpack.c.l.b16 %v3735
        %v3873 = vunpack.c.h.b16 %v3735
        %v3874 = vunpack.c.l.b16 %v3736
        %v3875 = vunpack.c.h.b16 %v3736
        %v3876 = vunpack.c.l.b16 %v3737
        %v3877 = vunpack.c.h.b16 %v3737
        %v3878 = vunpack.c.l.b16 %v3738
        %v3879 = vunpack.c.h.b16 %v3738
        %v3880 = vunpack.c.l.b16 %v3739
        %v3881 = vunpack.c.h.b16 %v3739
        %v3882 = vunpack.c.l.b16 %v3740
        %v3883 = vunpack.c.h.b16 %v3740
        %v3884 = vunpack.c.l.b16 %v3741
        %v3885 = vunpack.c.h.b16 %v3741
        %v3886 = vunpack.c.l.b16 %v3742
        %v3887 = vunpack.c.h.b16 %v3742
        %v3888 = vunpack.c.l.b16 %v3743
        %v3889 = vunpack.c.h.b16 %v3743
        %v3890 = vunpack.c.l.b16 %v3744
        %v3891 = vunpack.c.h.b16 %v3744
        %v3892 = vunpack.c.l.b16 %v3745
        %v3893 = vunpack.c.h.b16 %v3745
        %v3894 = vunpack.c.l.b16 %v3746
        %v3895 = vunpack.c.h.b16 %v3746
        %v3896 = vunpack.c.l.b16 %v3747
        %v3897 = vunpack.c.h.b16 %v3747
        %v3898 = vunpack.c.l.b16 %v3748
        %v3899 = vunpack.c.h.b16 %v3748
        %v3900 = vunpack.c.l.b16 %v3749
        %v3901 = vunpack.c.h.b16 %v3749
        %v3902 = vunpack.c.l.b16 %v3750
        %v3903 = vunpack.c.h.b16 %v3750
        %v3904 = vunpack.c.l.b16 %v3751
        %v3905 = vunpack.c.h.b16 %v3751
        %v3906 = vunpack.c.l.b16 %v3752
        %v3907 = vunpack.c.h.b16 %v3752
        %v3908 = vunpack.c.l.b16 %v3753
        %v3909 = vunpack.c.h.b16 %v3753
        %v3910 = vunpack.c.l.b16 %v3754
        %v3911 = vunpack.c.h.b16 %v3754
        %v3912 = vunpack.c.l.b16 %v3755
        %v3913 = vunpack.c.h.b16 %v3755
        %v3914 = vunpack.c.l.b16 %v3756
        %v3915 = vunpack.c.h.b16 %v3756
        %v3916 = vunpack.c.l.b16 %v3757
        %v3917 = vunpack.c.h.b16 %v3757
        %v3918 = vunpack.c.l.b16 %v3758
        %v3919 = vunpack.c.h.b16 %v3758
        %v3920 = vunpack.c.l.b16 %v3759
        %v3921 = vunpack.c.h.b16 %v3759
        %v3922 = vunpack.c.l.b16 %v3760
        %v3923 = vunpack.c.h.b16 %v3760
        %v3924 = vunpack.c.l.b16 %v3761
        %v3925 = vunpack.c.h.b16 %v3761
        %v3926 = vunpack.c.l.b16 %v3762
        %v3927 = vunpack.c.h.b16 %v3762
        %v3928 = vunpack.c.l.b16 %v3763
        %v3929 = vunpack.c.h.b16 %v3763
        %v3930 = vunpack.c.l.b16 %v3764
        %v3931 = vunpack.c.h.b16 %v3764
        %v3932 = vunpack.c.l.b16 %v3765
        %v3933 = vunpack.c.h.b16 %v3765
        %v3934 = vunpack.c.l.b16 %v3766
        %v3935 = vunpack.c.h.b16 %v3766
        %v3936 = vunpack.c.l.b16 %v3767
        %v3937 = vunpack.c.h.b16 %v3767
        %v3938 = vunpack.c.l.b16 %v3768
        %v3939 = vunpack.c.h.b16 %v3768
        %v3940 = vunpack.c.l.b16 %v3769
        %v3941 = vunpack.c.h.b16 %v3769
        %v3942 = vunpack.c.l.b16 %v3770
        %v3943 = vunpack.c.h.b16 %v3770
        %v3944 = vunpack.c.l.b16 %v3771
        %v3945 = vunpack.c.h.b16 %v3771
        %v3946 = vunpack.c.l.b16 %v3772
        %v3947 = vunpack.c.h.b16 %v3772
        %v3948 = vunpack.c.l.b16 %v3773
        %v3949 = vunpack.c.h.b16 %v3773
        %v3950 = vunpack.c.l.b16 %v3774
        %v3951 = vunpack.c.h.b16 %v3774
        %v3952 = vunpack.c.l.b16 %v3775
        %v3953 = vunpack.c.h.b16 %v3775
        %v3954 = vunpack.c.l.b16 %v3776
        %v3955 = vunpack.c.h.b16 %v3776
        %v3956 = vunpack.c.l.b16 %v3777
        %v3957 = vunpack.c.h.b16 %v3777
        %v3958 = vunpack.c.l.b16 %v3778
        %v3959 = vunpack.c.h.b16 %v3778
        %v3960 = vunpack.c.l.b16 %v3779
        %v3961 = vunpack.c.h.b16 %v3779
        %v3962 = vunpack.c.l.b16 %v3780
        %v3963 = vunpack.c.h.b16 %v3780
        %v3964 = vunpack.c.l.b16 %v3781
        %v3965 = vunpack.c.h.b16 %v3781
        %v3966 = vunpack.c.l.b16 %v3782
        %v3967 = vunpack.c.h.b16 %v3782
        %v3968 = vunpack.c.l.b16 %v3783
        %v3969 = vunpack.c.h.b16 %v3783
        %v3970 = vunpack.c.l.b16 %v3784
        %v3971 = vunpack.c.h.b16 %v3784
        %v3972 = vunpack.c.l.b16 %v3785
        %v3973 = vunpack.c.h.b16 %v3785
        %v3974 = vunpack.c.l.b16 %v3786
        %v3975 = vunpack.c.h.b16 %v3786
        %v3976 = vunpack.c.l.b16 %v3787
        %v3977 = vunpack.c.h.b16 %v3787
        %v3978 = vunpack.c.l.b16 %v3788
        %v3979 = vunpack.c.h.b16 %v3788
        %v3980 = vunpack.c.l.b16 %v3789
        %v3981 = vunpack.c.h.b16 %v3789
        %v3982 = vpack.c.b16 %v3856, %v3854
        %v3983 = vpack.c.b16 %v3857, %v3855
        %v3984 = vpack.c.b16 %v3860, %v3858
        %v3985 = vpack.c.b16 %v3861, %v3859
        %v3986 = vpack.c.b16 %v3864, %v3862
        %v3987 = vpack.c.b16 %v3865, %v3863
        %v3988 = vpack.c.b16 %v3868, %v3866
        %v3989 = vpack.c.b16 %v3869, %v3867
        %v3990 = vpack.c.b16 %v3872, %v3870
        %v3991 = vpack.c.b16 %v3873, %v3871
        %v3992 = vpack.c.b16 %v3876, %v3874
        %v3993 = vpack.c.b16 %v3877, %v3875
        %v3994 = vpack.c.b16 %v3880, %v3878
        %v3995 = vpack.c.b16 %v3881, %v3879
        %v3996 = vpack.c.b16 %v3884, %v3882
        %v3997 = vpack.c.b16 %v3885, %v3883
        %v3998 = vpack.c.b16 %v3888, %v3886
        %v3999 = vpack.c.b16 %v3889, %v3887
        %v4000 = vpack.c.b16 %v3892, %v3890
        %v4001 = vpack.c.b16 %v3893, %v3891
        %v4002 = vpack.c.b16 %v3896, %v3894
        %v4003 = vpack.c.b16 %v3897, %v3895
        %v4004 = vpack.c.b16 %v3900, %v3898
        %v4005 = vpack.c.b16 %v3901, %v3899
        %v4006 = vpack.c.b16 %v3904, %v3902
        %v4007 = vpack.c.b16 %v3905, %v3903
        %v4008 = vpack.c.b16 %v3908, %v3906
        %v4009 = vpack.c.b16 %v3909, %v3907
        %v4010 = vpack.c.b16 %v3912, %v3910
        %v4011 = vpack.c.b16 %v3913, %v3911
        %v4012 = vpack.c.b16 %v3916, %v3914
        %v4013 = vpack.c.b16 %v3917, %v3915
        %v4014 = vpack.c.b16 %v3920, %v3918
        %v4015 = vpack.c.b16 %v3921, %v3919
        %v4016 = vpack.c.b16 %v3924, %v3922
        %v4017 = vpack.c.b16 %v3925, %v3923
        %v4018 = vpack.c.b16 %v3928, %v3926
        %v4019 = vpack.c.b16 %v3929, %v3927
        %v4020 = vpack.c.b16 %v3932, %v3930
        %v4021 = vpack.c.b16 %v3933, %v3931
        %v4022 = vpack.c.b16 %v3936, %v3934
        %v4023 = vpack.c.b16 %v3937, %v3935
        %v4024 = vpack.c.b16 %v3940, %v3938
        %v4025 = vpack.c.b16 %v3941, %v3939
        %v4026 = vpack.c.b16 %v3944, %v3942
        %v4027 = vpack.c.b16 %v3945, %v3943
        %v4028 = vpack.c.b16 %v3948, %v3946
        %v4029 = vpack.c.b16 %v3949, %v3947
        %v4030 = vpack.c.b16 %v3952, %v3950
        %v4031 = vpack.c.b16 %v3953, %v3951
        %v4032 = vpack.c.b16 %v3956, %v3954
        %v4033 = vpack.c.b16 %v3957, %v3955
        %v4034 = vpack.c.b16 %v3960, %v3958
        %v4035 = vpack.c.b16 %v3961, %v3959
        %v4036 = vpack.c.b16 %v3964, %v3962
        %v4037 = vpack.c.b16 %v3965, %v3963
        %v4038 = vpack.c.b16 %v3968, %v3966
        %v4039 = vpack.c.b16 %v3969, %v3967
        %v4040 = vpack.c.b16 %v3972, %v3970
        %v4041 = vpack.c.b16 %v3973, %v3971
        %v4042 = vpack.c.b16 %v3976, %v3974
        %v4043 = vpack.c.b16 %v3977, %v3975
        %v4044 = vpack.c.b16 %v3980, %v3978
        %v4045 = vpack.c.b16 %v3981, %v3979
        %4110 = vmatprep.subr.bf16.mxu0 %v3997
        %4111 = vmatpush1.bf16.msra.mxu0 %v3996
        %4112 = vmatprep.subr.bf16.mxu0 %v3995
        %4113 = vmatpush1.bf16.msra.mxu0 %v3994
        %4114 = vmatprep.subr.bf16.mxu0 %v3993
        %4115 = vmatpush1.bf16.msra.mxu0 %v3992
        %4116 = vmatprep.subr.bf16.mxu0 %v3991
        %4117 = vmatpush1.bf16.msra.mxu0 %v3990
        %4118 = vmatprep.subr.bf16.mxu0 %v3989
        %4119 = vmatpush1.bf16.msra.mxu0 %v3988
        %4120 = vmatprep.subr.bf16.mxu0 %v3987
        %4121 = vmatpush1.bf16.msra.mxu0 %v3986
        %4122 = vmatprep.subr.bf16.mxu0 %v3985
        %4123 = vmatpush1.bf16.msra.mxu0 %v3984
        %4124 = vmatprep.subr.bf16.mxu0 %v3983
        %4125 = vmatpush1.bf16.msra.mxu0 %v3982
        %4126 = vmatprep.subr.bf16.mxu0 %v4013
        %4127 = vmatpush2.bf16.msra.mxu0 %v4012
        %4128 = vmatprep.subr.bf16.mxu0 %v4011
        %4129 = vmatpush2.bf16.msra.mxu0 %v4010
        %4130 = vmatprep.subr.bf16.mxu0 %v4009
        %4131 = vmatpush2.bf16.msra.mxu0 %v4008
        %4132 = vmatprep.subr.bf16.mxu0 %v4007
        %4133 = vmatpush2.bf16.msra.mxu0 %v4006
        %4134 = vmatprep.subr.bf16.mxu0 %v4005
        %4135 = vmatpush2.bf16.msra.mxu0 %v4004
        %4136 = vmatprep.subr.bf16.mxu0 %v4003
        %4137 = vmatpush2.bf16.msra.mxu0 %v4002
        %4138 = vmatprep.subr.bf16.mxu0 %v4001
        %4139 = vmatpush2.bf16.msra.mxu0 %v4000
        %4140 = vmatprep.subr.bf16.mxu0 %v3999
        %4141 = vmatpush2.bf16.msra.mxu0 %v3998
        %4142 = vmatprep.mubr.bf16.mxu0 %v3711
        %4143 = vmatmul.mubr.bf16.gmra.mxu0 %v3710
        %v4144 = vpop.f32.mrf.mxu0
        %v4145 = vadd.f32 0.0, %v4144
        %v4146 = vpop.f32.mrf.mxu0
        %v4147 = vadd.f32 0.0, %v4146
        %v4148 = vpop.f32.mrf.mxu0
        %v4149 = vadd.f32 0.0, %v4148
        %v4150 = vpop.f32.mrf.mxu0
        %v4151 = vadd.f32 0.0, %v4150
        %4152 = vmatprep.mubr.bf16.mxu0 %v3715
        %4153 = vmatmul.mubr.bf16.gmra.mxu0 %v3714
        %v4154 = vpop.f32.mrf.mxu0
        %v4155 = vadd.f32 0.0, %v4154
        %v4156 = vpop.f32.mrf.mxu0
        %v4157 = vadd.f32 0.0, %v4156
        %v4158 = vpop.f32.mrf.mxu0
        %v4159 = vadd.f32 0.0, %v4158
        %v4160 = vpop.f32.mrf.mxu0
        %v4161 = vadd.f32 0.0, %v4160
        %4162 = vmatprep.mubr.bf16.mxu0 %v3719
        %4163 = vmatmul.mubr.bf16.gmra.mxu0 %v3718
        %v4164 = vpop.f32.mrf.mxu0
        %v4165 = vadd.f32 0.0, %v4164
        %v4166 = vpop.f32.mrf.mxu0
        %v4167 = vadd.f32 0.0, %v4166
        %v4168 = vpop.f32.mrf.mxu0
        %v4169 = vadd.f32 0.0, %v4168
        %v4170 = vpop.f32.mrf.mxu0
        %v4171 = vadd.f32 0.0, %v4170
        %4172 = vmatprep.mubr.bf16.mxu0 %v3723
        %4173 = vmatmul.mubr.bf16.gmra.mxu0 %v3722
        %v4174 = vpop.f32.mrf.mxu0
        %v4175 = vadd.f32 0.0, %v4174
        %v4176 = vpop.f32.mrf.mxu0
        %v4177 = vadd.f32 0.0, %v4176
        %v4178 = vpop.f32.mrf.mxu0
        %v4179 = vadd.f32 0.0, %v4178
        %v4180 = vpop.f32.mrf.mxu0
        %v4181 = vadd.f32 0.0, %v4180
        %4182 = vdwg.mxu0
        %4183 = vmatprep.subr.bf16.mxu0 %v4029
        %4184 = vmatpush1.bf16.msra.mxu0 %v4028
        %4185 = vmatprep.subr.bf16.mxu0 %v4027
        %4186 = vmatpush1.bf16.msra.mxu0 %v4026
        %4187 = vmatprep.subr.bf16.mxu0 %v4025
        %4188 = vmatpush1.bf16.msra.mxu0 %v4024
        %4189 = vmatprep.subr.bf16.mxu0 %v4023
        %4190 = vmatpush1.bf16.msra.mxu0 %v4022
        %4191 = vmatprep.subr.bf16.mxu0 %v4021
        %4192 = vmatpush1.bf16.msra.mxu0 %v4020
        %4193 = vmatprep.subr.bf16.mxu0 %v4019
        %4194 = vmatpush1.bf16.msra.mxu0 %v4018
        %4195 = vmatprep.subr.bf16.mxu0 %v4017
        %4196 = vmatpush1.bf16.msra.mxu0 %v4016
        %4197 = vmatprep.subr.bf16.mxu0 %v4015
        %4198 = vmatpush1.bf16.msra.mxu0 %v4014
        %4199 = vmatprep.subr.bf16.mxu0 %v4045
        %4200 = vmatpush2.bf16.msra.mxu0 %v4044
        %4201 = vmatprep.subr.bf16.mxu0 %v4043
        %4202 = vmatpush2.bf16.msra.mxu0 %v4042
        %4203 = vmatprep.subr.bf16.mxu0 %v4041
        %4204 = vmatpush2.bf16.msra.mxu0 %v4040
        %4205 = vmatprep.subr.bf16.mxu0 %v4039
        %4206 = vmatpush2.bf16.msra.mxu0 %v4038
        %4207 = vmatprep.subr.bf16.mxu0 %v4037
        %4208 = vmatpush2.bf16.msra.mxu0 %v4036
        %4209 = vmatprep.subr.bf16.mxu0 %v4035
        %4210 = vmatpush2.bf16.msra.mxu0 %v4034
        %4211 = vmatprep.subr.bf16.mxu0 %v4033
        %4212 = vmatpush2.bf16.msra.mxu0 %v4032
        %4213 = vmatprep.subr.bf16.mxu0 %v4031
        %4214 = vmatpush2.bf16.msra.mxu0 %v4030
        %4215 = vmatprep.mubr.bf16.mxu0 %v3713
        %4216 = vmatmul.mubr.bf16.gmra.mxu0 %v3712
        %v4217 = vpop.f32.mrf.mxu0
        %v4218 = vadd.f32 %v4145, %v4217
        %v4219 = vpop.f32.mrf.mxu0
        %v4220 = vadd.f32 %v4147, %v4219
        %v4221 = vpop.f32.mrf.mxu0
        %v4222 = vadd.f32 %v4149, %v4221
        %v4223 = vpop.f32.mrf.mxu0
        %v4224 = vadd.f32 %v4151, %v4223
        %4225 = vmatprep.mubr.bf16.mxu0 %v3717
        %4226 = vmatmul.mubr.bf16.gmra.mxu0 %v3716
        %v4227 = vpop.f32.mrf.mxu0
        %v4228 = vadd.f32 %v4155, %v4227
        %v4229 = vpop.f32.mrf.mxu0
        %v4230 = vadd.f32 %v4157, %v4229
        %v4231 = vpop.f32.mrf.mxu0
        %v4232 = vadd.f32 %v4159, %v4231
        %v4233 = vpop.f32.mrf.mxu0
        %v4234 = vadd.f32 %v4161, %v4233
        %4235 = vmatprep.mubr.bf16.mxu0 %v3721
        %4236 = vmatmul.mubr.bf16.gmra.mxu0 %v3720
        %v4237 = vpop.f32.mrf.mxu0
        %v4238 = vadd.f32 %v4165, %v4237
        %v4239 = vpop.f32.mrf.mxu0
        %v4240 = vadd.f32 %v4167, %v4239
        %v4241 = vpop.f32.mrf.mxu0
        %v4242 = vadd.f32 %v4169, %v4241
        %v4243 = vpop.f32.mrf.mxu0
        %v4244 = vadd.f32 %v4171, %v4243
        %4245 = vmatprep.mubr.bf16.mxu0 %v3725
        %4246 = vmatmul.mubr.bf16.gmra.mxu0 %v3724
        %v4247 = vpop.f32.mrf.mxu0
        %v4248 = vadd.f32 %v4175, %v4247
        %v4249 = vpop.f32.mrf.mxu0
        %v4250 = vadd.f32 %v4177, %v4249
        %v4251 = vpop.f32.mrf.mxu0
        %v4252 = vadd.f32 %v4179, %v4251
        %v4253 = vpop.f32.mrf.mxu0
        %v4254 = vadd.f32 %v4181, %v4253
        %4255 = vdwg.mxu0
        %v4256 = vadd.f32 %v2918, %v4218
        %v4257 = vadd.f32 %v2919, %v4220
        %v4258 = vadd.f32 %v2920, %v4222
        %v4259 = vadd.f32 %v2921, %v4224
        %v4260 = vadd.f32 %v2922, %v4228
        %v4261 = vadd.f32 %v2923, %v4230
        %v4262 = vadd.f32 %v2924, %v4232
        %v4263 = vadd.f32 %v2925, %v4234
        %v4264 = vadd.f32 %v2926, %v4238
        %v4265 = vadd.f32 %v2927, %v4240
        %v4266 = vadd.f32 %v2928, %v4242
        %v4267 = vadd.f32 %v2929, %v4244
        %v4268 = vadd.f32 %v2930, %v4248
        %v4269 = vadd.f32 %v2931, %v4250
        %v4270 = vadd.f32 %v2932, %v4252
        %v4271 = vadd.f32 %v2933, %v4254
        %v4272 = vld [vmem:[%s12] sm:$0x3]
        %v4274 = vlaneseq
        %v4275 = vshrl.u32 %v4274, 7
        %v4276 = vsub.s32 0, %v4275
        %v4277 = vrot.slane %v4272, %v4276
        %v4278 = vlaneseq
        %v4279 = vshrl.u32 %v4278, 7
        %v4280 = vsub.s32 1, %v4279
        %v4281 = vrot.slane %v4272, %v4280
        %v4284 = vadd.f32 %v4256, %v4277
        %v4285 = vadd.f32 %v4257, %v4281
        %v4286 = vadd.f32 %v4258, %v4277
        %v4287 = vadd.f32 %v4259, %v4281
        %v4288 = vadd.f32 %v4260, %v4277
        %v4289 = vadd.f32 %v4261, %v4281
        %v4290 = vadd.f32 %v4262, %v4277
        %v4291 = vadd.f32 %v4263, %v4281
        %v4292 = vadd.f32 %v4264, %v4277
        %v4293 = vadd.f32 %v4265, %v4281
        %v4294 = vadd.f32 %v4266, %v4277
        %v4295 = vadd.f32 %v4267, %v4281
        %v4296 = vadd.f32 %v4268, %v4277
        %v4297 = vadd.f32 %v4269, %v4281
        %v4298 = vadd.f32 %v4270, %v4277
        %v4299 = vadd.f32 %v4271, %v4281
        %4300 = vst [vmem:[%s582] sm:$0xff] %v4284
        %4301 = vst [vmem:[%s582 + $0x8] sm:$0xff] %v4285
        %4302 = vst [vmem:[%s582 + $0x10] sm:$0xff] %v4286
        %4303 = vst [vmem:[%s582 + $0x18] sm:$0xff] %v4287
        %4304 = vst [vmem:[%s582 + $0x20] sm:$0xff] %v4288
        %4305 = vst [vmem:[%s582 + $0x28] sm:$0xff] %v4289
        %4306 = vst [vmem:[%s582 + $0x30] sm:$0xff] %v4290
        %4307 = vst [vmem:[%s582 + $0x38] sm:$0xff] %v4291
        %4308 = vst [vmem:[%s582 + $0x40] sm:$0xff] %v4292
        %4309 = vst [vmem:[%s582 + $0x48] sm:$0xff] %v4293
        %4310 = vst [vmem:[%s582 + $0x50] sm:$0xff] %v4294
        %4311 = vst [vmem:[%s582 + $0x58] sm:$0xff] %v4295
        %4312 = vst [vmem:[%s582 + $0x60] sm:$0xff] %v4296
        %4313 = vst [vmem:[%s582 + $0x68] sm:$0xff] %v4297
        %4314 = vst [vmem:[%s582 + $0x70] sm:$0xff] %v4298
        %4315 = vst [vmem:[%s582 + $0x78] sm:$0xff] %v4299
        %s4316 = sand.u32 %s340, 1
        %s4317 = scalar_lea.sflag [#allocation4], %s4316
        %s4318 = sand.u32 %s340, 1
        %s4319 = smul.addr %s4318, 128
        %s4320 = scalar_lea.vmem [#allocation14], %s4319
        // Predicated region
        $region101: #{tpu_custom_call.1} parent=71 // pred_check
          %p4321 = pneg %p350
        $region102: #{tpu_custom_call.1} parent=71 // pred_check_branch
          %4323 = sbr.rel (%p4321) target = $region104
        $region103: #{tpu_custom_call.1} parent=71 // pred_region
          %s4324 = smul.u32 8, %s40
          %s4326 = ssub.s32 2048, 2048
          %4327 = vsyncadd %s4317, %s4326
          %s4328 = smul.addr %s4324, 2
          %s4329 = smul.addr %s39, 32
          %s4330 = sadd.s32 %s4328, %s4329
          %s4331 = smul.addr %s4330, 128
          %s4332 = scalar_lea.hbm %s13, %s4331
          %s4333 = sshll.u32 %s4320, 4
          %s4334 = int_to_ptr.vmem [resolvable:$true] %s4333
          %4339 = dma.vmem_to_hbm [thread:$0]  %s4334, 2048, %s4332, %s4317, 256, 256, 16
        $region104: #{tpu_custom_call.1} parent=71 // pred_fallthru
          _
      $region72: #{tpu_custom_call.1} parent=5 // pred_fallthru
        _
      %p4340 = scmp.le.s32.totalorder 2, %s30
      // Predicated region
      $region105: #{tpu_custom_call.1} parent=5 // pred_check
        %p4341 = pneg %p4340
      $region106: #{tpu_custom_call.1} parent=5 // pred_check_branch
        %4343 = sbr.rel (%p4341) target = $region108
      $region107: #{tpu_custom_call.1} parent=5 // pred_region
        %s4344 = ssub.s32 %s30, 2
        // Predicated region
        $region109: #{tpu_custom_call.1} parent=107 // pred_check
          %p4345 = pneg %p356
        $region110: #{tpu_custom_call.1} parent=107 // pred_check_branch
          %4347 = sbr.rel (%p4345) target = $region112
        $region111: #{tpu_custom_call.1} parent=107 // pred_region
          %s4348 = sand.u32 %s341, 1
          %s4349 = scalar_lea.sflag [#allocation4], %s4348
          %s4350 = sand.u32 %s341, 1
          %s4351 = smul.addr %s4350, 128
          %s4352 = scalar_lea.vmem [#allocation14], %s4351
          %4353 = dma.done %s4349, 2048
        $region112: #{tpu_custom_call.1} parent=107 // pred_fallthru
          _
      $region108: #{tpu_custom_call.1} parent=5 // pred_fallthru
        _
    $region6: #{tpu_custom_call.1} parent=1 // loop_footer
      %s34 = sadd.s32 1, %s30
    $region7: #{tpu_custom_call.1} parent=1 // loop_footer_branch
      %29 = sbr.rel target = $region3
    $region8: #{tpu_custom_call.1} parent=1 // loop_exit
      _
    %4354 = vsyncpa [#allocation3], 1
    %s4355 = scalar_lea.sflag [#allocation3], 1
    %4356 = vsyncpa %s4355, 1
    %4357 = vsyncpa [#allocation6], 1
    %s4358 = scalar_lea.sflag [#allocation6], 1
    %4359 = vsyncpa %s4358, 1
    %4360 = vsyncpa [#allocation9], 1
    %4361 = vsyncpa [#allocation12], 1
    %4362 = vsyncpa [#allocation4], 1
    %s4363 = scalar_lea.sflag [#allocation4], 1
    %4364 = vsyncpa %s4363, 1

// kernel: tpu_custom_call.1
$region0: #{tpu_custom_call.1}
  #allocation0 [shape = 'u32[]', space=smem, size = 0x4, offset = 0x4, fixed_abs, tag = 'smem constant byte address 0x4 - core index']
  #allocation1 [shape = 'u32[144,128]{1,0:T(1,128)}', space=vmem, size = 0x12000, scoped, tag = 'internal scratch']
  %s0 = inlined_call_operand.hbm [shape: f32[2,128,256], index: 0, kind: input, shape index: {}]
  %s1 = inlined_call_operand.hbm [shape: bf16[128,128], index: 1, kind: input, shape index: {}]
  %s2 = inlined_call_operand.vmem [shape: f32[1,256], index: 2, kind: input, shape index: {}]
  %s3 = inlined_call_operand.hbm [shape: f32[1,256], index: 3, kind: input, shape index: {}]
  %s4 = inlined_call_operand.hbm [shape: bf16[256,768], index: 4, kind: input, shape index: {}]
  %s5 = inlined_call_operand.hbm [shape: bf16[256,256], index: 5, kind: input, shape index: {}]
  %s6 = inlined_call_operand.vmem [shape: f32[1,256], index: 6, kind: input, shape index: {}]
  %s7 = inlined_call_operand.vmem [shape: f32[1,256], index: 7, kind: input, shape index: {}]
  %s8 = inlined_call_operand.vmem [shape: f32[1,256], index: 8, kind: input, shape index: {}]
  %s9 = inlined_call_operand.hbm [shape: bf16[256,512], index: 9, kind: input, shape index: {}]
  %s10 = inlined_call_operand.vmem [shape: f32[1,512], index: 10, kind: input, shape index: {}]
  %s11 = inlined_call_operand.hbm [shape: bf16[512,256], index: 11, kind: input, shape index: {}]
  %s12 = inlined_call_operand.vmem [shape: f32[1,256], index: 12, kind: input, shape index: {}]
  %s13 = inlined_call_operand.hbm [shape: f32[2,128,256], index: 13, kind: output, shape index: {}]
  %s14 = sld [smem:[#allocation0]]
  $region113: #{tpu_custom_call.1} parent=0
    _
  %s16 = ssub.s32 1, %s14
  %s17 = scalar_select 0, %s16, %s14
  $region1: #{tpu_custom_call.1} parent=0
    #allocation2 [shape = 'u8[262144]{0}', space=vmem, size = 0x40000, scoped, tag = 'input window, operand 0']
    #allocation3 [shape = 's32[2]{0}', space=sflag, size = 0x8, scoped, tag = 'scoped memory for tpu_custom_call.1']
    #allocation4 [shape = 's32[2]{0}', space=sflag, size = 0x8, scoped, tag = 'scoped memory for tpu_custom_call.1']
    #allocation5 [shape = 'u8[32768]{0}', space=vmem, size = 0x8000, scoped, tag = 'input window, operand 1']
    #allocation6 [shape = 's32[2]{0}', space=sflag, size = 0x8, scoped, tag = 'scoped memory for tpu_custom_call.1']
    #allocation7 [shape = 'u8[1024]{0}', space=vmem, size = 0x400, scoped, tag = 'input window, operand 3, single buffered']
    #allocation8 [shape = 'u8[393216]{0}', space=vmem, size = 0x60000, scoped, tag = 'input window, operand 4, single buffered']
    #allocation9 [shape = 's32[1]{0}', space=sflag, size = 0x4, scoped, tag = 'scoped memory for tpu_custom_call.1']
    #allocation10 [shape = 'u8[131072]{0}', space=vmem, size = 0x20000, scoped, tag = 'input window, operand 5, single buffered']
    #allocation11 [shape = 'u8[262144]{0}', space=vmem, size = 0x40000, scoped, tag = 'input window, operand 9, single buffered']
    #allocation12 [shape = 's32[1]{0}', space=sflag, size = 0x4, scoped, tag = 'scoped memory for tpu_custom_call.1']
    #allocation13 [shape = 'u8[262144]{0}', space=vmem, size = 0x40000, scoped, tag = 'input window, operand 11, single buffered']
    #allocation14 [shape = 'u8[131072]{0}', space=vmem, size = 0x20000, scoped, tag = 'output window, operand 0']
    %18 = vsyncpa [#allocation3], 0
    %s19 = scalar_lea.sflag [#allocation3], 1
    %20 = vsyncpa %s19, 0
    %21 = vsyncpa [#allocation6], 0
    %s22 = scalar_lea.sflag [#allocation6], 1
    %23 = vsyncpa %s22, 0
    %24 = vsyncpa [#allocation9], 0
    %25 = vsyncpa [#allocation12], 0
    %26 = vsyncpa [#allocation4], 0
    %s27 = scalar_lea.sflag [#allocation4], 1
    %28 = vsyncpa %s27, 0
    loop: start=0, step=1, limit=6
    $region2: #{tpu_custom_call.1} parent=1 // loop_pre_header
      _
    $region3: #{tpu_custom_call.1} parent=1 // loop_header
      %s30 = sphi 0, %s34
      %p31 = scmp.ge.s32.totalorder %s30, 6
      %s37 = sphi 0, %s49
      %s38 = sphi 0, %s45
      %s39 = sphi 0, %s37
      %s40 = sphi 0, %s38
      %s41 = sphi 0, %s39
      %s42 = sphi 0, %s40
      %s52 = sphi 0, %s54
      %s55 = sphi 0, %s52
      %s56 = sphi 0, %s55
      %s72 = sphi 0, %s56
      %s78 = sphi 0, %s80
      %s81 = sphi 0, %s78
      %s82 = sphi 0, %s81
      %s98 = sphi 0, %s82
      %s102 = sphi 0, %s102
      %s104 = sphi 0, %s102
      %s105 = sphi 0, %s104
      %s119 = sphi 0, %s105
      %s123 = sphi 0, %s123
      %s125 = sphi 0, %s123
      %s126 = sphi 0, %s125
      %s140 = sphi 0, %s126
      %s144 = sphi 0, %s144
      %s146 = sphi 0, %s144
      %s147 = sphi 0, %s146
      %s161 = sphi 0, %s147
      %s165 = sphi 0, %s165
      %s167 = sphi 0, %s165
      %s168 = sphi 0, %s167
      %s182 = sphi 0, %s168
      %s186 = sphi 0, %s186
      %s188 = sphi 0, %s186
      %s189 = sphi 0, %s188
      %s203 = sphi 0, %s189
      %s207 = sphi 0, %s207
      %s209 = sphi 0, %s207
      %s210 = sphi 0, %s209
      %s224 = sphi 0, %s210
      %s228 = sphi 0, %s228
      %s230 = sphi 0, %s228
      %s231 = sphi 0, %s230
      %s245 = sphi 0, %s231
      %s249 = sphi 0, %s249
      %s251 = sphi 0, %s249
      %s252 = sphi 0, %s251
      %s266 = sphi 0, %s252
      %s270 = sphi 0, %s270
      %s272 = sphi 0, %s270
      %s273 = sphi 0, %s272
      %s287 = sphi 0, %s273
      %s291 = sphi 0, %s291
      %s293 = sphi 0, %s291
      %s294 = sphi 0, %s293
      %s308 = sphi 0, %s294
      %s312 = sphi 0, %s312
      %s314 = sphi 0, %s312
      %s315 = sphi 0, %s314
      %s329 = sphi 0, %s315
      %s337 = sphi 0, %s339
      %s340 = sphi 0, %s337
      %s341 = sphi 0, %s340
      %s357 = sphi 0, %s341
    $region4: #{tpu_custom_call.1} parent=1 // loop_header_branch
      %33 = sbr.rel (%p31) target = $region8
    $region5: #{tpu_custom_call.1} parent=1 // loop_body
      %s35 = ssub.s32 %s30, 1
      %s36 = ssub.s32 %s30, 2
      %s43 = sadd.s32 1, %s38
      %p44 = scmp.ge.s32.totalorder %s43, 2
      %s45 = scalar_select %p44, 0, %s43
      %s46 = sadd.s32 1, %s37
      %s47 = scalar_select %p44, %s46, %s37
      %p48 = scmp.ge.s32.totalorder %s47, 2
      %s49 = scalar_select %p48, 0, %s47
      %s50 = ssub.s32 %s37, %s49
      %p51 = scmp.eq.s32.totalorder %s50, 0
      %s53 = sadd.s32 %s52, 1
      %s54 = scalar_select %p51, %s52, %s53
      %p57 = pneg %p51
      %p58 = scmp.eq.s32.totalorder %s30, 3
      %p59 = por %p57, %p58
      %p60 = scmp.ne.s32.totalorder %s52, %s55
      %p61 = scmp.eq.s32.totalorder %s30, 0
      %p62 = por %p60, %p61
      %p63 = scmp.ne.s32.totalorder %s52, %s55
      %p64 = scmp.eq.s32.totalorder %s35, 3
      %p65 = por %p63, %p64
      %p66 = scmp.ne.s32.totalorder %s55, %s56
      %p67 = scmp.eq.s32.totalorder %s35, 0
      %p68 = por %p66, %p67
      %p69 = scmp.ne.s32.totalorder %s55, %s56
      %p70 = scmp.eq.s32.totalorder %s36, 3
      %p71 = por %p69, %p70
      %p73 = scmp.ne.s32.totalorder %s56, %s72
      %p74 = scmp.eq.s32.totalorder %s36, 0
      %p75 = por %p73, %p74
      %s76 = ssub.s32 %s38, %s45
      %p77 = scmp.eq.s32.totalorder %s76, 0
      %s79 = sadd.s32 %s78, 1
      %s80 = scalar_select %p77, %s78, %s79
      %p83 = pneg %p77
      %p84 = scmp.eq.s32.totalorder %s30, 3
      %p85 = por %p83, %p84
      %p86 = scmp.ne.s32.totalorder %s78, %s81
      %p87 = scmp.eq.s32.totalorder %s30, 0
      %p88 = por %p86, %p87
      %p89 = scmp.ne.s32.totalorder %s78, %s81
      %p90 = scmp.eq.s32.totalorder %s35, 3
      %p91 = por %p89, %p90
      %p92 = scmp.ne.s32.totalorder %s81, %s82
      %p93 = scmp.eq.s32.totalorder %s35, 0
      %p94 = por %p92, %p93
      %p95 = scmp.ne.s32.totalorder %s81, %s82
      %p96 = scmp.eq.s32.totalorder %s36, 3
      %p97 = por %p95, %p96
      %p99 = scmp.ne.s32.totalorder %s82, %s98
      %p100 = scmp.eq.s32.totalorder %s36, 0
      %p101 = por %p99, %p100
      %s103 = sadd.s32 %s102, 1
      %p106 = scmp.eq.s32.totalorder %s30, 3
      %p107 = scmp.ne.s32.totalorder %s102, %s104
      %p108 = scmp.eq.s32.totalorder %s30, 0
      %p109 = por %p107, %p108
      %p110 = scmp.ne.s32.totalorder %s102, %s104
      %p111 = scmp.eq.s32.totalorder %s35, 3
      %p112 = por %p110, %p111
      %p113 = scmp.ne.s32.totalorder %s104, %s105
      %p114 = scmp.eq.s32.totalorder %s35, 0
      %p115 = por %p113, %p114
      %p116 = scmp.ne.s32.totalorder %s104, %s105
      %p117 = scmp.eq.s32.totalorder %s36, 3
      %p118 = por %p116, %p117
      %p120 = scmp.ne.s32.totalorder %s105, %s119
      %p121 = scmp.eq.s32.totalorder %s36, 0
      %p122 = por %p120, %p121
      %s124 = sadd.s32 %s123, 1
      %p127 = scmp.eq.s32.totalorder %s30, 3
      %p128 = scmp.ne.s32.totalorder %s123, %s125
      %p129 = scmp.eq.s32.totalorder %s30, 0
      %p130 = por %p128, %p129
      %p131 = scmp.ne.s32.totalorder %s123, %s125
      %p132 = scmp.eq.s32.totalorder %s35, 3
      %p133 = por %p131, %p132
      %p134 = scmp.ne.s32.totalorder %s125, %s126
      %p135 = scmp.eq.s32.totalorder %s35, 0
      %p136 = por %p134, %p135
      %p137 = scmp.ne.s32.totalorder %s125, %s126
      %p138 = scmp.eq.s32.totalorder %s36, 3
      %p139 = por %p137, %p138
      %p141 = scmp.ne.s32.totalorder %s126, %s140
      %p142 = scmp.eq.s32.totalorder %s36, 0
      %p143 = por %p141, %p142
      %s145 = sadd.s32 %s144, 1
      %p148 = scmp.eq.s32.totalorder %s30, 3
      %p149 = scmp.ne.s32.totalorder %s144, %s146
      %p150 = scmp.eq.s32.totalorder %s30, 0
      %p151 = por %p149, %p150
      %p152 = scmp.ne.s32.totalorder %s144, %s146
      %p153 = scmp.eq.s32.totalorder %s35, 3
      %p154 = por %p152, %p153
      %p155 = scmp.ne.s32.totalorder %s146, %s147
      %p156 = scmp.eq.s32.totalorder %s35, 0
      %p157 = por %p155, %p156
      %p158 = scmp.ne.s32.totalorder %s146, %s147
      %p159 = scmp.eq.s32.totalorder %s36, 3
      %p160 = por %p158, %p159
      %p162 = scmp.ne.s32.totalorder %s147, %s161
      %p163 = scmp.eq.s32.totalorder %s36, 0
      %p164 = por %p162, %p163
      %s166 = sadd.s32 %s165, 1
      %p169 = scmp.eq.s32.totalorder %s30, 3
      %p170 = scmp.ne.s32.totalorder %s165, %s167
      %p171 = scmp.eq.s32.totalorder %s30, 0
      %p172 = por %p170, %p171
      %p173 = scmp.ne.s32.totalorder %s165, %s167
      %p174 = scmp.eq.s32.totalorder %s35, 3
      %p175 = por %p173, %p174
      %p176 = scmp.ne.s32.totalorder %s167, %s168
      %p177 = scmp.eq.s32.totalorder %s35, 0
      %p178 = por %p176, %p177
      %p179 = scmp.ne.s32.totalorder %s167, %s168
      %p180 = scmp.eq.s32.totalorder %s36, 3
      %p181 = por %p179, %p180
      %p183 = scmp.ne.s32.totalorder %s168, %s182
      %p184 = scmp.eq.s32.totalorder %s36, 0
      %p185 = por %p183, %p184
      %s187 = sadd.s32 %s186, 1
      %p190 = scmp.eq.s32.totalorder %s30, 3
      %p191 = scmp.ne.s32.totalorder %s186, %s188
      %p192 = scmp.eq.s32.totalorder %s30, 0
      %p193 = por %p191, %p192
      %p194 = scmp.ne.s32.totalorder %s186, %s188
      %p195 = scmp.eq.s32.totalorder %s35, 3
      %p196 = por %p194, %p195
      %p197 = scmp.ne.s32.totalorder %s188, %s189
      %p198 = scmp.eq.s32.totalorder %s35, 0
      %p199 = por %p197, %p198
      %p200 = scmp.ne.s32.totalorder %s188, %s189
      %p201 = scmp.eq.s32.totalorder %s36, 3
      %p202 = por %p200, %p201
      %p204 = scmp.ne.s32.totalorder %s189, %s203
      %p205 = scmp.eq.s32.totalorder %s36, 0
      %p206 = por %p204, %p205
      %s208 = sadd.s32 %s207, 1
      %p211 = scmp.eq.s32.totalorder %s30, 3
      %p212 = scmp.ne.s32.totalorder %s207, %s209
      %p213 = scmp.eq.s32.totalorder %s30, 0
      %p214 = por %p212, %p213
      %p215 = scmp.ne.s32.totalorder %s207, %s209
      %p216 = scmp.eq.s32.totalorder %s35, 3
      %p217 = por %p215, %p216
      %p218 = scmp.ne.s32.totalorder %s209, %s210
      %p219 = scmp.eq.s32.totalorder %s35, 0
      %p220 = por %p218, %p219
      %p221 = scmp.ne.s32.totalorder %s209, %s210
      %p222 = scmp.eq.s32.totalorder %s36, 3
      %p223 = por %p221, %p222
      %p225 = scmp.ne.s32.totalorder %s210, %s224
      %p226 = scmp.eq.s32.totalorder %s36, 0
      %p227 = por %p225, %p226
      %s229 = sadd.s32 %s228, 1
      %p232 = scmp.eq.s32.totalorder %s30, 3
      %p233 = scmp.ne.s32.totalorder %s228, %s230
      %p234 = scmp.eq.s32.totalorder %s30, 0
      %p235 = por %p233, %p234
      %p236 = scmp.ne.s32.totalorder %s228, %s230
      %p237 = scmp.eq.s32.totalorder %s35, 3
      %p238 = por %p236, %p237
      %p239 = scmp.ne.s32.totalorder %s230, %s231
      %p240 = scmp.eq.s32.totalorder %s35, 0
      %p241 = por %p239, %p240
      %p242 = scmp.ne.s32.totalorder %s230, %s231
      %p243 = scmp.eq.s32.totalorder %s36, 3
      %p244 = por %p242, %p243
      %p246 = scmp.ne.s32.totalorder %s231, %s245
      %p247 = scmp.eq.s32.totalorder %s36, 0
      %p248 = por %p246, %p247
      %s250 = sadd.s32 %s249, 1
      %p253 = scmp.eq.s32.totalorder %s30, 3
      %p254 = scmp.ne.s32.totalorder %s249, %s251
      %p255 = scmp.eq.s32.totalorder %s30, 0
      %p256 = por %p254, %p255
      %p257 = scmp.ne.s32.totalorder %s249, %s251
      %p258 = scmp.eq.s32.totalorder %s35, 3
      %p259 = por %p257, %p258
      %p260 = scmp.ne.s32.totalorder %s251, %s252
      %p261 = scmp.eq.s32.totalorder %s35, 0
      %p262 = por %p260, %p261
      %p263 = scmp.ne.s32.totalorder %s251, %s252
      %p264 = scmp.eq.s32.totalorder %s36, 3
      %p265 = por %p263, %p264
      %p267 = scmp.ne.s32.totalorder %s252, %s266
      %p268 = scmp.eq.s32.totalorder %s36, 0
      %p269 = por %p267, %p268
      %s271 = sadd.s32 %s270, 1
      %p274 = scmp.eq.s32.totalorder %s30, 3
      %p275 = scmp.ne.s32.totalorder %s270, %s272
      %p276 = scmp.eq.s32.totalorder %s30, 0
      %p277 = por %p275, %p276
      %p278 = scmp.ne.s32.totalorder %s270, %s272
      %p279 = scmp.eq.s32.totalorder %s35, 3
      %p280 = por %p278, %p279
      %p281 = scmp.ne.s32.totalorder %s272, %s273
      %p282 = scmp.eq.s32.totalorder %s35, 0
      %p283 = por %p281, %p282
      %p284 = scmp.ne.s32.totalorder %s272, %s273
      %p285 = scmp.eq.s32.totalorder %s36, 3
      %p286 = por %p284, %p285
      %p288 = scmp.ne.s32.totalorder %s273, %s287
      %p289 = scmp.eq.s32.totalorder %s36, 0
      %p290 = por %p288, %p289
      %s292 = sadd.s32 %s291, 1
      %p295 = scmp.eq.s32.totalorder %s30, 3
      %p296 = scmp.ne.s32.totalorder %s291, %s293
      %p297 = scmp.eq.s32.totalorder %s30, 0
      %p298 = por %p296, %p297
      %p299 = scmp.ne.s32.totalorder %s291, %s293
      %p300 = scmp.eq.s32.totalorder %s35, 3
      %p301 = por %p299, %p300
      %p302 = scmp.ne.s32.totalorder %s293, %s294
      %p303 = scmp.eq.s32.totalorder %s35, 0
      %p304 = por %p302, %p303
      %p305 = scmp.ne.s32.totalorder %s293, %s294
      %p306 = scmp.eq.s32.totalorder %s36, 3
      %p307 = por %p305, %p306
      %p309 = scmp.ne.s32.totalorder %s294, %s308
      %p310 = scmp.eq.s32.totalorder %s36, 0
      %p311 = por %p309, %p310
      %s313 = sadd.s32 %s312, 1
      %p316 = scmp.eq.s32.totalorder %s30, 3
      %p317 = scmp.ne.s32.totalorder %s312, %s314
      %p318 = scmp.eq.s32.totalorder %s30, 0
      %p319 = por %p317, %p318
      %p320 = scmp.ne.s32.totalorder %s312, %s314
      %p321 = scmp.eq.s32.totalorder %s35, 3
      %p322 = por %p320, %p321
      %p323 = scmp.ne.s32.totalorder %s314, %s315
      %p324 = scmp.eq.s32.totalorder %s35, 0
      %p325 = por %p323, %p324
      %p326 = scmp.ne.s32.totalorder %s314, %s315
      %p327 = scmp.eq.s32.totalorder %s36, 3
      %p328 = por %p326, %p327
      %p330 = scmp.ne.s32.totalorder %s315, %s329
      %p331 = scmp.eq.s32.totalorder %s36, 0
      %p332 = por %p330, %p331
      %s333 = ssub.s32 %s37, %s49
      %s334 = ssub.s32 %s38, %s45
      %s335 = sor.u32 %s333, %s334
      %p336 = scmp.eq.s32.totalorder %s335, 0
      %s338 = sadd.s32 %s337, 1
      %s339 = scalar_select %p336, %s337, %s338
      %p342 = pneg %p336
      %p343 = scmp.eq.s32.totalorder %s30, 3
      %p344 = por %p342, %p343
      %p345 = scmp.ne.s32.totalorder %s337, %s340
      %p346 = scmp.eq.s32.totalorder %s30, 0
      %p347 = por %p345, %p346
      %p348 = scmp.ne.s32.totalorder %s337, %s340
      %p349 = scmp.eq.s32.totalorder %s35, 3
      %p350 = por %p348, %p349
      %p351 = scmp.ne.s32.totalorder %s340, %s341
      %p352 = scmp.eq.s32.totalorder %s35, 0
      %p353 = por %p351, %p352
      %p354 = scmp.ne.s32.totalorder %s340, %s341
      %p355 = scmp.eq.s32.totalorder %s36, 3
      %p356 = por %p354, %p355
      %p358 = scmp.ne.s32.totalorder %s341, %s357
      %p359 = scmp.eq.s32.totalorder %s36, 0
      %p360 = por %p358, %p359
      %p361 = scmp.le.s32.totalorder 1, %s30
      %p362 = scmp.lt.s32.totalorder %s30, 5
      %p363 = pnand %p361, %p362
      %p364 = pneg %p363
      // Predicated region
      $region9: #{tpu_custom_call.1} parent=5 // pred_check
        _
      $region10: #{tpu_custom_call.1} parent=5 // pred_check_branch
        %366 = sbr.rel (%p363) target = $region12
      $region11: #{tpu_custom_call.1} parent=5 // pred_region
        %s367 = ssub.s32 %s30, 1
        // Predicated region
        $region13: #{tpu_custom_call.1} parent=11 // pred_check
          %p368 = pneg %p115
        $region14: #{tpu_custom_call.1} parent=11 // pred_check_branch
          %370 = sbr.rel (%p368) target = $region16
        $region15: #{tpu_custom_call.1} parent=11 // pred_region
          _
        $region16: #{tpu_custom_call.1} parent=11 // pred_fallthru
          _
        // Predicated region
        $region17: #{tpu_custom_call.1} parent=11 // pred_check
          %p371 = pneg %p136
        $region18: #{tpu_custom_call.1} parent=11 // pred_check_branch
          %373 = sbr.rel (%p371) target = $region20
        $region19: #{tpu_custom_call.1} parent=11 // pred_region
          %s375 = ssub.s32 32, 32
          %376 = vsyncadd [#allocation6], %s375
          %s378 = sshll.u32 [#allocation7], 4
          %s379 = int_to_ptr.vmem [resolvable:$true] %s378
          %381 = dma.hbm_to_vmem [thread:$0]  %s3, 32, %s379, [#allocation6]
        $region20: #{tpu_custom_call.1} parent=11 // pred_fallthru
          _
        // Predicated region
        $region21: #{tpu_custom_call.1} parent=11 // pred_check
          %p382 = pneg %p157
        $region22: #{tpu_custom_call.1} parent=11 // pred_check_branch
          %384 = sbr.rel (%p382) target = $region24
        $region23: #{tpu_custom_call.1} parent=11 // pred_region
          %s386 = ssub.s32 12288, 12288
          %387 = vsyncadd [#allocation9], %s386
          %s388 = sshll.u32 [#allocation8], 4
          %s389 = int_to_ptr.vmem [resolvable:$true] %s388
          %394 = dma.hbm_to_vmem [thread:$0]  %s4, 12288, %s389, [#allocation9], 384, 384, 24
        $region24: #{tpu_custom_call.1} parent=11 // pred_fallthru
          _
        // Predicated region
        $region25: #{tpu_custom_call.1} parent=11 // pred_check
          %p395 = pneg %p178
        $region26: #{tpu_custom_call.1} parent=11 // pred_check_branch
          %397 = sbr.rel (%p395) target = $region28
        $region27: #{tpu_custom_call.1} parent=11 // pred_region
          %s399 = ssub.s32 4096, 4096
          %400 = vsyncadd [#allocation9], %s399
          %s401 = sshll.u32 [#allocation10], 4
          %s402 = int_to_ptr.vmem [resolvable:$true] %s401
          %407 = dma.hbm_to_vmem [thread:$0]  %s5, 4096, %s402, [#allocation9], 128, 128, 8
        $region28: #{tpu_custom_call.1} parent=11 // pred_fallthru
          _
        // Predicated region
        $region29: #{tpu_custom_call.1} parent=11 // pred_check
          %p408 = pneg %p199
        $region30: #{tpu_custom_call.1} parent=11 // pred_check_branch
          %410 = sbr.rel (%p408) target = $region32
        $region31: #{tpu_custom_call.1} parent=11 // pred_region
          _
        $region32: #{tpu_custom_call.1} parent=11 // pred_fallthru
          _
        // Predicated region
        $region33: #{tpu_custom_call.1} parent=11 // pred_check
          %p411 = pneg %p220
        $region34: #{tpu_custom_call.1} parent=11 // pred_check_branch
          %413 = sbr.rel (%p411) target = $region36
        $region35: #{tpu_custom_call.1} parent=11 // pred_region
          _
        $region36: #{tpu_custom_call.1} parent=11 // pred_fallthru
          _
        // Predicated region
        $region37: #{tpu_custom_call.1} parent=11 // pred_check
          %p414 = pneg %p241
        $region38: #{tpu_custom_call.1} parent=11 // pred_check_branch
          %416 = sbr.rel (%p414) target = $region40
        $region39: #{tpu_custom_call.1} parent=11 // pred_region
          _
        $region40: #{tpu_custom_call.1} parent=11 // pred_fallthru
          _
        // Predicated region
        $region41: #{tpu_custom_call.1} parent=11 // pred_check
          %p417 = pneg %p262
        $region42: #{tpu_custom_call.1} parent=11 // pred_check_branch
          %419 = sbr.rel (%p417) target = $region44
        $region43: #{tpu_custom_call.1} parent=11 // pred_region
          %s421 = ssub.s32 8192, 8192
          %422 = vsyncadd [#allocation12], %s421
          %s423 = sshll.u32 [#allocation11], 4
          %s424 = int_to_ptr.vmem [resolvable:$true] %s423
          %429 = dma.hbm_to_vmem [thread:$0]  %s9, 8192, %s424, [#allocation12], 256, 256, 16
        $region44: #{tpu_custom_call.1} parent=11 // pred_fallthru
          _
        // Predicated region
        $region45: #{tpu_custom_call.1} parent=11 // pred_check
          %p430 = pneg %p283
        $region46: #{tpu_custom_call.1} parent=11 // pred_check_branch
          %432 = sbr.rel (%p430) target = $region48
        $region47: #{tpu_custom_call.1} parent=11 // pred_region
          _
        $region48: #{tpu_custom_call.1} parent=11 // pred_fallthru
          _
        // Predicated region
        $region49: #{tpu_custom_call.1} parent=11 // pred_check
          %p433 = pneg %p304
        $region50: #{tpu_custom_call.1} parent=11 // pred_check_branch
          %435 = sbr.rel (%p433) target = $region52
        $region51: #{tpu_custom_call.1} parent=11 // pred_region
          %s437 = ssub.s32 8192, 8192
          %438 = vsyncadd [#allocation12], %s437
          %s439 = sshll.u32 [#allocation13], 4
          %s440 = int_to_ptr.vmem [resolvable:$true] %s439
          %445 = dma.hbm_to_vmem [thread:$0]  %s11, 8192, %s440, [#allocation12], 128, 128, 8
        $region52: #{tpu_custom_call.1} parent=11 // pred_fallthru
          _
        // Predicated region
        $region53: #{tpu_custom_call.1} parent=11 // pred_check
          %p446 = pneg %p325
        $region54: #{tpu_custom_call.1} parent=11 // pred_check_branch
          %448 = sbr.rel (%p446) target = $region56
        $region55: #{tpu_custom_call.1} parent=11 // pred_region
          _
        $region56: #{tpu_custom_call.1} parent=11 // pred_fallthru
          _
      $region12: #{tpu_custom_call.1} parent=5 // pred_fallthru
        _
      %p449 = scmp.lt.s32.totalorder %s30, 4
      // Predicated region
      $region57: #{tpu_custom_call.1} parent=5 // pred_check
        %p450 = pneg %p449
      $region58: #{tpu_custom_call.1} parent=5 // pred_check_branch
        %452 = sbr.rel (%p450) target = $region60
      $region59: #{tpu_custom_call.1} parent=5 // pred_region
        // Predicated region
        $region61: #{tpu_custom_call.1} parent=59 // pred_check
          %p453 = pneg %p62
        $region62: #{tpu_custom_call.1} parent=59 // pred_check_branch
          %455 = sbr.rel (%p453) target = $region64
        $region63: #{tpu_custom_call.1} parent=59 // pred_region
          %s456 = sand.u32 %s52, 1
          %s457 = scalar_lea.sflag [#allocation3], %s456
          %s458 = sand.u32 %s52, 1
          %s459 = smul.addr %s458, 256
          %s460 = scalar_lea.vmem [#allocation2], %s459
          %s462 = ssub.s32 4096, 4096
          %463 = vsyncadd %s457, %s462
          %s464 = smul.addr %s37, 32
          %s465 = smul.addr %s464, 128
          %s466 = scalar_lea.hbm %s0, %s465
          %s467 = sshll.u32 %s460, 4
          %s468 = int_to_ptr.vmem [resolvable:$true] %s467
          %473 = dma.hbm_to_vmem [thread:$0]  %s466, 4096, %s468, %s457, 256, 256, 16
        $region64: #{tpu_custom_call.1} parent=59 // pred_fallthru
          _
        // Predicated region
        $region65: #{tpu_custom_call.1} parent=59 // pred_check
          %p474 = pneg %p88
        $region66: #{tpu_custom_call.1} parent=59 // pred_check_branch
          %476 = sbr.rel (%p474) target = $region68
        $region67: #{tpu_custom_call.1} parent=59 // pred_region
          %s477 = sand.u32 %s30, 1
          %s478 = scalar_lea.sflag [#allocation6], %s477
          %s479 = sand.u32 %s78, 1
          %s480 = smul.addr %s479, 32
          %s481 = scalar_lea.vmem [#allocation5], %s480
          %s482 = smul.u32 8, %s38
          %s484 = ssub.s32 512, 512
          %485 = vsyncadd %s478, %s484
          %s486 = smul.addr %s482, 64
          %s487 = scalar_lea.hbm %s1, %s486
          %s488 = sshll.u32 %s481, 4
          %s489 = int_to_ptr.vmem [resolvable:$true] %s488
          %494 = dma.hbm_to_vmem [thread:$0]  %s487, 512, %s489, %s478, 64, 64, 4
        $region68: #{tpu_custom_call.1} parent=59 // pred_fallthru
          _
      $region60: #{tpu_custom_call.1} parent=5 // pred_fallthru
        _
      %p495 = scmp.le.s32.totalorder 1, %s30
      %p496 = scmp.lt.s32.totalorder %s30, 5
      %p497 = pnand %p495, %p496
      %p498 = pneg %p497
      // Predicated region
      $region69: #{tpu_custom_call.1} parent=5 // pred_check
        _
      $region70: #{tpu_custom_call.1} parent=5 // pred_check_branch
        %500 = sbr.rel (%p497) target = $region72
      $region71: #{tpu_custom_call.1} parent=5 // pred_region
        %s501 = ssub.s32 %s30, 1
        %s502 = sand.u32 %s55, 1
        %s503 = scalar_lea.sflag [#allocation3], %s502
        %s504 = sand.u32 %s55, 1
        %s505 = smul.addr %s504, 256
        %s506 = scalar_lea.vmem [#allocation2], %s505
        // Predicated region
        $region73: #{tpu_custom_call.1} parent=71 // pred_check
          %p507 = pneg %p68
        $region74: #{tpu_custom_call.1} parent=71 // pred_check_branch
          %509 = sbr.rel (%p507) target = $region76
        $region75: #{tpu_custom_call.1} parent=71 // pred_region
          %510 = dma.done %s503, 4096
        $region76: #{tpu_custom_call.1} parent=71 // pred_fallthru
          _
        %s511 = sand.u32 %s35, 1
        %s512 = scalar_lea.sflag [#allocation6], %s511
        %s513 = sand.u32 %s81, 1
        %s514 = smul.addr %s513, 32
        %s515 = scalar_lea.vmem [#allocation5], %s514
        // Predicated region
        $region77: #{tpu_custom_call.1} parent=71 // pred_check
          %p516 = pneg %p94
        $region78: #{tpu_custom_call.1} parent=71 // pred_check_branch
          %518 = sbr.rel (%p516) target = $region80
        $region79: #{tpu_custom_call.1} parent=71 // pred_region
          %519 = dma.done %s512, 512
        $region80: #{tpu_custom_call.1} parent=71 // pred_fallthru
          _
        // Predicated region
        $region81: #{tpu_custom_call.1} parent=71 // pred_check
          %p520 = pneg %p136
        $region82: #{tpu_custom_call.1} parent=71 // pred_check_branch
          %522 = sbr.rel (%p520) target = $region84
        $region83: #{tpu_custom_call.1} parent=71 // pred_region
          %523 = dma.done [#allocation6], 32
        $region84: #{tpu_custom_call.1} parent=71 // pred_fallthru
          _
        // Predicated region
        $region85: #{tpu_custom_call.1} parent=71 // pred_check
          %p524 = pneg %p157
        $region86: #{tpu_custom_call.1} parent=71 // pred_check_branch
          %526 = sbr.rel (%p524) target = $region88
        $region87: #{tpu_custom_call.1} parent=71 // pred_region
          %527 = dma.done [#allocation9], 12288
        $region88: #{tpu_custom_call.1} parent=71 // pred_fallthru
          _
        // Predicated region
        $region89: #{tpu_custom_call.1} parent=71 // pred_check
          %p528 = pneg %p178
        $region90: #{tpu_custom_call.1} parent=71 // pred_check_branch
          %530 = sbr.rel (%p528) target = $region92
        $region91: #{tpu_custom_call.1} parent=71 // pred_region
          %531 = dma.done [#allocation9], 4096
        $region92: #{tpu_custom_call.1} parent=71 // pred_fallthru
          _
        // Predicated region
        $region93: #{tpu_custom_call.1} parent=71 // pred_check
          %p532 = pneg %p262
        $region94: #{tpu_custom_call.1} parent=71 // pred_check_branch
          %534 = sbr.rel (%p532) target = $region96
        $region95: #{tpu_custom_call.1} parent=71 // pred_region
          %535 = dma.done [#allocation12], 8192
        $region96: #{tpu_custom_call.1} parent=71 // pred_fallthru
          _
        // Predicated region
        $region97: #{tpu_custom_call.1} parent=71 // pred_check
          %p536 = pneg %p304
        $region98: #{tpu_custom_call.1} parent=71 // pred_check_branch
          %538 = sbr.rel (%p536) target = $region100
        $region99: #{tpu_custom_call.1} parent=71 // pred_region
          %539 = dma.done [#allocation12], 8192
        $region100: #{tpu_custom_call.1} parent=71 // pred_fallthru
          _
        %s540 = sand.u32 %s55, 1
        %s541 = scalar_lea.sflag [#allocation3], %s540
        %s542 = sand.u32 %s55, 1
        %s543 = smul.addr %s542, 256
        %s544 = scalar_lea.vmem [#allocation2], %s543
        %p545 = pneg %p68
        %p546 = pneg %p65
        %s547 = sand.u32 %s35, 1
        %s548 = scalar_lea.sflag [#allocation6], %s547
        %s549 = sand.u32 %s81, 1
        %s550 = smul.addr %s549, 32
        %s551 = scalar_lea.vmem [#allocation5], %s550
        %p552 = pneg %p94
        %p553 = pneg %p91
        %p554 = pneg %p115
        %p555 = pneg %p112
        %p556 = pneg %p136
        %p557 = pneg %p133
        %p558 = pneg %p157
        %p559 = pneg %p154
        %p560 = pneg %p178
        %p561 = pneg %p175
        %p562 = pneg %p199
        %p563 = pneg %p196
        %p564 = pneg %p220
        %p565 = pneg %p217
        %p566 = pneg %p241
        %p567 = pneg %p238
        %p568 = pneg %p262
        %p569 = pneg %p259
        %p570 = pneg %p283
        %p571 = pneg %p280
        %p572 = pneg %p304
        %p573 = pneg %p301
        %p574 = pneg %p325
        %p575 = pneg %p322
        %p576 = pneg %p353
        %p577 = pneg %p350
        %s578 = sand.u32 %s340, 1
        %s579 = scalar_lea.sflag [#allocation4], %s578
        %s580 = sand.u32 %s340, 1
        %s581 = smul.addr %s580, 128
        %s582 = scalar_lea.vmem [#allocation14], %s581
        %s583 = smul.u32 8, %s40
        %s584 = smul.u32 8, %s40
        %s586 = smul.u32 %s40, 64
        %v587 = vld [vmem:[%s506] sm:$0xff]
        %v588 = vld [vmem:[%s506 + $0x8] sm:$0xff]
        %v589 = vld [vmem:[%s506 + $0x10] sm:$0xff]
        %v590 = vld [vmem:[%s506 + $0x18] sm:$0xff]
        %v591 = vld [vmem:[%s506 + $0x20] sm:$0xff]
        %v592 = vld [vmem:[%s506 + $0x28] sm:$0xff]
        %v593 = vld [vmem:[%s506 + $0x30] sm:$0xff]
        %v594 = vld [vmem:[%s506 + $0x38] sm:$0xff]
        %v595 = vld [vmem:[%s506 + $0x40] sm:$0xff]
        %v596 = vld [vmem:[%s506 + $0x48] sm:$0xff]
        %v597 = vld [vmem:[%s506 + $0x50] sm:$0xff]
        %v598 = vld [vmem:[%s506 + $0x58] sm:$0xff]
        %v599 = vld [vmem:[%s506 + $0x60] sm:$0xff]
        %v600 = vld [vmem:[%s506 + $0x68] sm:$0xff]
        %v601 = vld [vmem:[%s506 + $0x70] sm:$0xff]
        %v602 = vld [vmem:[%s506 + $0x78] sm:$0xff]
        %v603 = vld [vmem:[%s506 + $0x80] sm:$0xff]
        %v604 = vld [vmem:[%s506 + $0x88] sm:$0xff]
        %v605 = vld [vmem:[%s506 + $0x90] sm:$0xff]
        %v606 = vld [vmem:[%s506 + $0x98] sm:$0xff]
        %v607 = vld [vmem:[%s506 + $0xa0] sm:$0xff]
        %v608 = vld [vmem:[%s506 + $0xa8] sm:$0xff]
        %v609 = vld [vmem:[%s506 + $0xb0] sm:$0xff]
        %v610 = vld [vmem:[%s506 + $0xb8] sm:$0xff]
        %v611 = vld [vmem:[%s506 + $0xc0] sm:$0xff]
        %v612 = vld [vmem:[%s506 + $0xc8] sm:$0xff]
        %v613 = vld [vmem:[%s506 + $0xd0] sm:$0xff]
        %v614 = vld [vmem:[%s506 + $0xd8] sm:$0xff]
        %v615 = vld [vmem:[%s506 + $0xe0] sm:$0xff]
        %v616 = vld [vmem:[%s506 + $0xe8] sm:$0xff]
        %v617 = vld [vmem:[%s506 + $0xf0] sm:$0xff]
        %v618 = vld [vmem:[%s506 + $0xf8] sm:$0xff]
        %s619 = sshra.s32 %s586, 3
        %s620 = sand.u32 %s586, 7
        %s621 = smul.u32 %s619, 2
        %s622 = smul.addr %s621, 8
        %s623 = scalar_lea.vmem %s506, %s622 [#allocation2]
        %v624 = vld [vmem:[%s623] sm:$0xff]
        %v625 = vld [vmem:[%s623 + $0x8] sm:$0xff]
        %v626 = vld [vmem:[%s623 + $0x10] sm:$0xff]
        %v627 = vld [vmem:[%s623 + $0x18] sm:$0xff]
        %v628 = vld [vmem:[%s623 + $0x20] sm:$0xff]
        %v629 = vld [vmem:[%s623 + $0x28] sm:$0xff]
        %v630 = vld [vmem:[%s623 + $0x30] sm:$0xff]
        %v631 = vld [vmem:[%s623 + $0x38] sm:$0xff]
        %v632 = vld [vmem:[%s623 + $0x40] sm:$0xff]
        %v633 = vld [vmem:[%s623 + $0x48] sm:$0xff]
        %v634 = vld [vmem:[%s623 + $0x50] sm:$0xff]
        %v635 = vld [vmem:[%s623 + $0x58] sm:$0xff]
        %v636 = vld [vmem:[%s623 + $0x60] sm:$0xff]
        %v637 = vld [vmem:[%s623 + $0x68] sm:$0xff]
        %v638 = vld [vmem:[%s623 + $0x70] sm:$0xff]
        %v639 = vld [vmem:[%s623 + $0x78] sm:$0xff]
        %v640 = vld [vmem:[%s2] sm:$0x3]
        %v641 = vld [vmem:[#allocation7] sm:$0x3]
        %v642 = vadd.f32 %v587, %v588
        %643 = vadd.xlane.f32.xlu0 %v642
        %v644 = vpop.xlane.xlu0 %643
        %v645 = vadd.f32 %v589, %v590
        %646 = vadd.xlane.f32.xlu0 %v645
        %v647 = vpop.xlane.xlu0 %646
        %v648 = vadd.f32 %v591, %v592
        %649 = vadd.xlane.f32.xlu0 %v648
        %v650 = vpop.xlane.xlu0 %649
        %v651 = vadd.f32 %v593, %v594
        %652 = vadd.xlane.f32.xlu0 %v651
        %v653 = vpop.xlane.xlu0 %652
        %v654 = vadd.f32 %v595, %v596
        %655 = vadd.xlane.f32.xlu0 %v654
        %v656 = vpop.xlane.xlu0 %655
        %v657 = vadd.f32 %v597, %v598
        %658 = vadd.xlane.f32.xlu0 %v657
        %v659 = vpop.xlane.xlu0 %658
        %v660 = vadd.f32 %v599, %v600
        %661 = vadd.xlane.f32.xlu0 %v660
        %v662 = vpop.xlane.xlu0 %661
        %v663 = vadd.f32 %v601, %v602
        %664 = vadd.xlane.f32.xlu0 %v663
        %v665 = vpop.xlane.xlu0 %664
        %v666 = vadd.f32 %v603, %v604
        %667 = vadd.xlane.f32.xlu0 %v666
        %v668 = vpop.xlane.xlu0 %667
        %v669 = vadd.f32 %v605, %v606
        %670 = vadd.xlane.f32.xlu0 %v669
        %v671 = vpop.xlane.xlu0 %670
        %v672 = vadd.f32 %v607, %v608
        %673 = vadd.xlane.f32.xlu0 %v672
        %v674 = vpop.xlane.xlu0 %673
        %v675 = vadd.f32 %v609, %v610
        %676 = vadd.xlane.f32.xlu0 %v675
        %v677 = vpop.xlane.xlu0 %676
        %v678 = vadd.f32 %v611, %v612
        %679 = vadd.xlane.f32.xlu0 %v678
        %v680 = vpop.xlane.xlu0 %679
        %v681 = vadd.f32 %v613, %v614
        %682 = vadd.xlane.f32.xlu0 %v681
        %v683 = vpop.xlane.xlu0 %682
        %v684 = vadd.f32 %v615, %v616
        %685 = vadd.xlane.f32.xlu0 %v684
        %v686 = vpop.xlane.xlu0 %685
        %v687 = vadd.f32 %v617, %v618
        %688 = vadd.xlane.f32.xlu0 %v687
        %v689 = vpop.xlane.xlu0 %688
        %v690 = vrcp.pop 256.0
        %v691 = vmul.f32 %v644, %v690
        %v692 = vmul.f32 %v647, %v690
        %v693 = vmul.f32 %v650, %v690
        %v694 = vmul.f32 %v653, %v690
        %v695 = vmul.f32 %v656, %v690
        %v696 = vmul.f32 %v659, %v690
        %v697 = vmul.f32 %v662, %v690
        %v698 = vmul.f32 %v665, %v690
        %v699 = vmul.f32 %v668, %v690
        %v700 = vmul.f32 %v671, %v690
        %v701 = vmul.f32 %v674, %v690
        %v702 = vmul.f32 %v677, %v690
        %v703 = vmul.f32 %v680, %v690
        %v704 = vmul.f32 %v683, %v690
        %v705 = vmul.f32 %v686, %v690
        %v706 = vmul.f32 %v689, %v690
        %v707 = vsub.f32 %v587, %v691
        %v708 = vsub.f32 %v588, %v691
        %v709 = vsub.f32 %v589, %v692
        %v710 = vsub.f32 %v590, %v692
        %v711 = vsub.f32 %v591, %v693
        %v712 = vsub.f32 %v592, %v693
        %v713 = vsub.f32 %v593, %v694
        %v714 = vsub.f32 %v594, %v694
        %v715 = vsub.f32 %v595, %v695
        %v716 = vsub.f32 %v596, %v695
        %v717 = vsub.f32 %v597, %v696
        %v718 = vsub.f32 %v598, %v696
        %v719 = vsub.f32 %v599, %v697
        %v720 = vsub.f32 %v600, %v697
        %v721 = vsub.f32 %v601, %v698
        %v722 = vsub.f32 %v602, %v698
        %v723 = vsub.f32 %v603, %v699
        %v724 = vsub.f32 %v604, %v699
        %v725 = vsub.f32 %v605, %v700
        %v726 = vsub.f32 %v606, %v700
        %v727 = vsub.f32 %v607, %v701
        %v728 = vsub.f32 %v608, %v701
        %v729 = vsub.f32 %v609, %v702
        %v730 = vsub.f32 %v610, %v702
        %v731 = vsub.f32 %v611, %v703
        %v732 = vsub.f32 %v612, %v703
        %v733 = vsub.f32 %v613, %v704
        %v734 = vsub.f32 %v614, %v704
        %v735 = vsub.f32 %v615, %v705
        %v736 = vsub.f32 %v616, %v705
        %v737 = vsub.f32 %v617, %v706
        %v738 = vsub.f32 %v618, %v706
        %v739 = vmul.f32 %v707, %v707
        %v740 = vmul.f32 %v708, %v708
        %v741 = vmul.f32 %v709, %v709
        %v742 = vmul.f32 %v710, %v710
        %v743 = vmul.f32 %v711, %v711
        %v744 = vmul.f32 %v712, %v712
        %v745 = vmul.f32 %v713, %v713
        %v746 = vmul.f32 %v714, %v714
        %v747 = vmul.f32 %v715, %v715
        %v748 = vmul.f32 %v716, %v716
        %v749 = vmul.f32 %v717, %v717
        %v750 = vmul.f32 %v718, %v718
        %v751 = vmul.f32 %v719, %v719
        %v752 = vmul.f32 %v720, %v720
        %v753 = vmul.f32 %v721, %v721
        %v754 = vmul.f32 %v722, %v722
        %v755 = vmul.f32 %v723, %v723
        %v756 = vmul.f32 %v724, %v724
        %v757 = vmul.f32 %v725, %v725
        %v758 = vmul.f32 %v726, %v726
        %v759 = vmul.f32 %v727, %v727
        %v760 = vmul.f32 %v728, %v728
        %v761 = vmul.f32 %v729, %v729
        %v762 = vmul.f32 %v730, %v730
        %v763 = vmul.f32 %v731, %v731
        %v764 = vmul.f32 %v732, %v732
        %v765 = vmul.f32 %v733, %v733
        %v766 = vmul.f32 %v734, %v734
        %v767 = vmul.f32 %v735, %v735
        %v768 = vmul.f32 %v736, %v736
        %v769 = vmul.f32 %v737, %v737
        %v770 = vmul.f32 %v738, %v738
        %v771 = vadd.f32 %v739, %v740
        %772 = vadd.xlane.f32.xlu0 %v771
        %v773 = vpop.xlane.xlu0 %772
        %v774 = vadd.f32 %v741, %v742
        %775 = vadd.xlane.f32.xlu0 %v774
        %v776 = vpop.xlane.xlu0 %775
        %v777 = vadd.f32 %v743, %v744
        %778 = vadd.xlane.f32.xlu0 %v777
        %v779 = vpop.xlane.xlu0 %778
        %v780 = vadd.f32 %v745, %v746
        %781 = vadd.xlane.f32.xlu0 %v780
        %v782 = vpop.xlane.xlu0 %781
        %v783 = vadd.f32 %v747, %v748
        %784 = vadd.xlane.f32.xlu0 %v783
        %v785 = vpop.xlane.xlu0 %784
        %v786 = vadd.f32 %v749, %v750
        %787 = vadd.xlane.f32.xlu0 %v786
        %v788 = vpop.xlane.xlu0 %787
        %v789 = vadd.f32 %v751, %v752
        %790 = vadd.xlane.f32.xlu0 %v789
        %v791 = vpop.xlane.xlu0 %790
        %v792 = vadd.f32 %v753, %v754
        %793 = vadd.xlane.f32.xlu0 %v792
        %v794 = vpop.xlane.xlu0 %793
        %v795 = vadd.f32 %v755, %v756
        %796 = vadd.xlane.f32.xlu0 %v795
        %v797 = vpop.xlane.xlu0 %796
        %v798 = vadd.f32 %v757, %v758
        %799 = vadd.xlane.f32.xlu0 %v798
        %v800 = vpop.xlane.xlu0 %799
        %v801 = vadd.f32 %v759, %v760
        %802 = vadd.xlane.f32.xlu0 %v801
        %v803 = vpop.xlane.xlu0 %802
        %v804 = vadd.f32 %v761, %v762
        %805 = vadd.xlane.f32.xlu0 %v804
        %v806 = vpop.xlane.xlu0 %805
        %v807 = vadd.f32 %v763, %v764
        %808 = vadd.xlane.f32.xlu0 %v807
        %v809 = vpop.xlane.xlu0 %808
        %v810 = vadd.f32 %v765, %v766
        %811 = vadd.xlane.f32.xlu0 %v810
        %v812 = vpop.xlane.xlu0 %811
        %v813 = vadd.f32 %v767, %v768
        %814 = vadd.xlane.f32.xlu0 %v813
        %v815 = vpop.xlane.xlu0 %814
        %v816 = vadd.f32 %v769, %v770
        %817 = vadd.xlane.f32.xlu0 %v816
        %v818 = vpop.xlane.xlu0 %817
        %v819 = vmul.f32 %v773, %v690
        %v820 = vmul.f32 %v776, %v690
        %v821 = vmul.f32 %v779, %v690
        %v822 = vmul.f32 %v782, %v690
        %v823 = vmul.f32 %v785, %v690
        %v824 = vmul.f32 %v788, %v690
        %v825 = vmul.f32 %v791, %v690
        %v826 = vmul.f32 %v794, %v690
        %v827 = vmul.f32 %v797, %v690
        %v828 = vmul.f32 %v800, %v690
        %v829 = vmul.f32 %v803, %v690
        %v830 = vmul.f32 %v806, %v690
        %v831 = vmul.f32 %v809, %v690
        %v832 = vmul.f32 %v812, %v690
        %v833 = vmul.f32 %v815, %v690
        %v834 = vmul.f32 %v818, %v690
        %v835 = vadd.f32 %v819, 1e-05
        %v836 = vadd.f32 %v820, 1e-05
        %v837 = vadd.f32 %v821, 1e-05
        %v838 = vadd.f32 %v822, 1e-05
        %v839 = vadd.f32 %v823, 1e-05
        %v840 = vadd.f32 %v824, 1e-05
        %v841 = vadd.f32 %v825, 1e-05
        %v842 = vadd.f32 %v826, 1e-05
        %v843 = vadd.f32 %v827, 1e-05
        %v844 = vadd.f32 %v828, 1e-05
        %v845 = vadd.f32 %v829, 1e-05
        %v846 = vadd.f32 %v830, 1e-05
        %v847 = vadd.f32 %v831, 1e-05
        %v848 = vadd.f32 %v832, 1e-05
        %v849 = vadd.f32 %v833, 1e-05
        %v850 = vadd.f32 %v834, 1e-05
        %v851 = vrsqrt.pop %v835
        %v852 = vrsqrt.pop %v836
        %v853 = vrsqrt.pop %v837
        %v854 = vrsqrt.pop %v838
        %v855 = vrsqrt.pop %v839
        %v856 = vrsqrt.pop %v840
        %v857 = vrsqrt.pop %v841
        %v858 = vrsqrt.pop %v842
        %v859 = vrsqrt.pop %v843
        %v860 = vrsqrt.pop %v844
        %v861 = vrsqrt.pop %v845
        %v862 = vrsqrt.pop %v846
        %v863 = vrsqrt.pop %v847
        %v864 = vrsqrt.pop %v848
        %v865 = vrsqrt.pop %v849
        %v866 = vrsqrt.pop %v850
        %v867 = vmul.f32 %v707, %v851
        %v868 = vmul.f32 %v708, %v851
        %v869 = vmul.f32 %v709, %v852
        %v870 = vmul.f32 %v710, %v852
        %v871 = vmul.f32 %v711, %v853
        %v872 = vmul.f32 %v712, %v853
        %v873 = vmul.f32 %v713, %v854
        %v874 = vmul.f32 %v714, %v854
        %v875 = vmul.f32 %v715, %v855
        %v876 = vmul.f32 %v716, %v855
        %v877 = vmul.f32 %v717, %v856
        %v878 = vmul.f32 %v718, %v856
        %v879 = vmul.f32 %v719, %v857
        %v880 = vmul.f32 %v720, %v857
        %v881 = vmul.f32 %v721, %v858
        %v882 = vmul.f32 %v722, %v858
        %v883 = vmul.f32 %v723, %v859
        %v884 = vmul.f32 %v724, %v859
        %v885 = vmul.f32 %v725, %v860
        %v886 = vmul.f32 %v726, %v860
        %v887 = vmul.f32 %v727, %v861
        %v888 = vmul.f32 %v728, %v861
        %v889 = vmul.f32 %v729, %v862
        %v890 = vmul.f32 %v730, %v862
        %v891 = vmul.f32 %v731, %v863
        %v892 = vmul.f32 %v732, %v863
        %v893 = vmul.f32 %v733, %v864
        %v894 = vmul.f32 %v734, %v864
        %v895 = vmul.f32 %v735, %v865
        %v896 = vmul.f32 %v736, %v865
        %v897 = vmul.f32 %v737, %v866
        %v898 = vmul.f32 %v738, %v866
        %v900 = vlaneseq
        %v901 = vshrl.u32 %v900, 7
        %v902 = vsub.s32 0, %v901
        %v903 = vrot.slane %v640, %v902
        %v904 = vlaneseq
        %v905 = vshrl.u32 %v904, 7
        %v906 = vsub.s32 1, %v905
        %v907 = vrot.slane %v640, %v906
        %v910 = vmul.f32 %v867, %v903
        %v911 = vmul.f32 %v868, %v907
        %v912 = vmul.f32 %v869, %v903
        %v913 = vmul.f32 %v870, %v907
        %v914 = vmul.f32 %v871, %v903
        %v915 = vmul.f32 %v872, %v907
        %v916 = vmul.f32 %v873, %v903
        %v917 = vmul.f32 %v874, %v907
        %v918 = vmul.f32 %v875, %v903
        %v919 = vmul.f32 %v876, %v907
        %v920 = vmul.f32 %v877, %v903
        %v921 = vmul.f32 %v878, %v907
        %v922 = vmul.f32 %v879, %v903
        %v923 = vmul.f32 %v880, %v907
        %v924 = vmul.f32 %v881, %v903
        %v925 = vmul.f32 %v882, %v907
        %v926 = vmul.f32 %v883, %v903
        %v927 = vmul.f32 %v884, %v907
        %v928 = vmul.f32 %v885, %v903
        %v929 = vmul.f32 %v886, %v907
        %v930 = vmul.f32 %v887, %v903
        %v931 = vmul.f32 %v888, %v907
        %v932 = vmul.f32 %v889, %v903
        %v933 = vmul.f32 %v890, %v907
        %v934 = vmul.f32 %v891, %v903
        %v935 = vmul.f32 %v892, %v907
        %v936 = vmul.f32 %v893, %v903
        %v937 = vmul.f32 %v894, %v907
        %v938 = vmul.f32 %v895, %v903
        %v939 = vmul.f32 %v896, %v907
        %v940 = vmul.f32 %v897, %v903
        %v941 = vmul.f32 %v898, %v907
        %v943 = vlaneseq
        %v944 = vshrl.u32 %v943, 7
        %v945 = vsub.s32 0, %v944
        %v946 = vrot.slane %v641, %v945
        %v947 = vlaneseq
        %v948 = vshrl.u32 %v947, 7
        %v949 = vsub.s32 1, %v948
        %v950 = vrot.slane %v641, %v949
        %v953 = vadd.f32 %v910, %v946
        %v954 = vadd.f32 %v911, %v950
        %v955 = vadd.f32 %v912, %v946
        %v956 = vadd.f32 %v913, %v950
        %v957 = vadd.f32 %v914, %v946
        %v958 = vadd.f32 %v915, %v950
        %v959 = vadd.f32 %v916, %v946
        %v960 = vadd.f32 %v917, %v950
        %v961 = vadd.f32 %v918, %v946
        %v962 = vadd.f32 %v919, %v950
        %v963 = vadd.f32 %v920, %v946
        %v964 = vadd.f32 %v921, %v950
        %v965 = vadd.f32 %v922, %v946
        %v966 = vadd.f32 %v923, %v950
        %v967 = vadd.f32 %v924, %v946
        %v968 = vadd.f32 %v925, %v950
        %v969 = vadd.f32 %v926, %v946
        %v970 = vadd.f32 %v927, %v950
        %v971 = vadd.f32 %v928, %v946
        %v972 = vadd.f32 %v929, %v950
        %v973 = vadd.f32 %v930, %v946
        %v974 = vadd.f32 %v931, %v950
        %v975 = vadd.f32 %v932, %v946
        %v976 = vadd.f32 %v933, %v950
        %v977 = vadd.f32 %v934, %v946
        %v978 = vadd.f32 %v935, %v950
        %v979 = vadd.f32 %v936, %v946
        %v980 = vadd.f32 %v937, %v950
        %v981 = vadd.f32 %v938, %v946
        %v982 = vadd.f32 %v939, %v950
        %v983 = vadd.f32 %v940, %v946
        %v984 = vadd.f32 %v941, %v950
        %v985 = vpack.c.bf16 %v955, %v953
        %v986 = vpack.c.bf16 %v956, %v954
        %v987 = vpack.c.bf16 %v959, %v957
        %v988 = vpack.c.bf16 %v960, %v958
        %v989 = vpack.c.bf16 %v963, %v961
        %v990 = vpack.c.bf16 %v964, %v962
        %v991 = vpack.c.bf16 %v967, %v965
        %v992 = vpack.c.bf16 %v968, %v966
        %v993 = vpack.c.bf16 %v971, %v969
        %v994 = vpack.c.bf16 %v972, %v970
        %v995 = vpack.c.bf16 %v975, %v973
        %v996 = vpack.c.bf16 %v976, %v974
        %v997 = vpack.c.bf16 %v979, %v977
        %v998 = vpack.c.bf16 %v980, %v978
        %v999 = vpack.c.bf16 %v983, %v981
        %v1000 = vpack.c.bf16 %v984, %v982
        %v1001 = vadd.f32 %v624, %v625
        %1002 = vadd.xlane.f32.xlu0 %v1001
        %v1003 = vpop.xlane.xlu0 %1002
        %v1004 = vadd.f32 %v626, %v627
        %1005 = vadd.xlane.f32.xlu0 %v1004
        %v1006 = vpop.xlane.xlu0 %1005
        %v1007 = vadd.f32 %v628, %v629
        %1008 = vadd.xlane.f32.xlu0 %v1007
        %v1009 = vpop.xlane.xlu0 %1008
        %v1010 = vadd.f32 %v630, %v631
        %1011 = vadd.xlane.f32.xlu0 %v1010
        %v1012 = vpop.xlane.xlu0 %1011
        %v1013 = vadd.f32 %v632, %v633
        %1014 = vadd.xlane.f32.xlu0 %v1013
        %v1015 = vpop.xlane.xlu0 %1014
        %v1016 = vadd.f32 %v634, %v635
        %1017 = vadd.xlane.f32.xlu0 %v1016
        %v1018 = vpop.xlane.xlu0 %1017
        %v1019 = vadd.f32 %v636, %v637
        %1020 = vadd.xlane.f32.xlu0 %v1019
        %v1021 = vpop.xlane.xlu0 %1020
        %v1022 = vadd.f32 %v638, %v639
        %1023 = vadd.xlane.f32.xlu0 %v1022
        %v1024 = vpop.xlane.xlu0 %1023
        %v1025 = vmul.f32 %v1003, %v690
        %v1026 = vmul.f32 %v1006, %v690
        %v1027 = vmul.f32 %v1009, %v690
        %v1028 = vmul.f32 %v1012, %v690
        %v1029 = vmul.f32 %v1015, %v690
        %v1030 = vmul.f32 %v1018, %v690
        %v1031 = vmul.f32 %v1021, %v690
        %v1032 = vmul.f32 %v1024, %v690
        %v1033 = vsub.f32 %v624, %v1025
        %v1034 = vsub.f32 %v625, %v1025
        %v1035 = vsub.f32 %v626, %v1026
        %v1036 = vsub.f32 %v627, %v1026
        %v1037 = vsub.f32 %v628, %v1027
        %v1038 = vsub.f32 %v629, %v1027
        %v1039 = vsub.f32 %v630, %v1028
        %v1040 = vsub.f32 %v631, %v1028
        %v1041 = vsub.f32 %v632, %v1029
        %v1042 = vsub.f32 %v633, %v1029
        %v1043 = vsub.f32 %v634, %v1030
        %v1044 = vsub.f32 %v635, %v1030
        %v1045 = vsub.f32 %v636, %v1031
        %v1046 = vsub.f32 %v637, %v1031
        %v1047 = vsub.f32 %v638, %v1032
        %v1048 = vsub.f32 %v639, %v1032
        %v1049 = vmul.f32 %v1033, %v1033
        %v1050 = vmul.f32 %v1034, %v1034
        %v1051 = vmul.f32 %v1035, %v1035
        %v1052 = vmul.f32 %v1036, %v1036
        %v1053 = vmul.f32 %v1037, %v1037
        %v1054 = vmul.f32 %v1038, %v1038
        %v1055 = vmul.f32 %v1039, %v1039
        %v1056 = vmul.f32 %v1040, %v1040
        %v1057 = vmul.f32 %v1041, %v1041
        %v1058 = vmul.f32 %v1042, %v1042
        %v1059 = vmul.f32 %v1043, %v1043
        %v1060 = vmul.f32 %v1044, %v1044
        %v1061 = vmul.f32 %v1045, %v1045
        %v1062 = vmul.f32 %v1046, %v1046
        %v1063 = vmul.f32 %v1047, %v1047
        %v1064 = vmul.f32 %v1048, %v1048
        %v1065 = vadd.f32 %v1049, %v1050
        %1066 = vadd.xlane.f32.xlu0 %v1065
        %v1067 = vpop.xlane.xlu0 %1066
        %v1068 = vadd.f32 %v1051, %v1052
        %1069 = vadd.xlane.f32.xlu0 %v1068
        %v1070 = vpop.xlane.xlu0 %1069
        %v1071 = vadd.f32 %v1053, %v1054
        %1072 = vadd.xlane.f32.xlu0 %v1071
        %v1073 = vpop.xlane.xlu0 %1072
        %v1074 = vadd.f32 %v1055, %v1056
        %1075 = vadd.xlane.f32.xlu0 %v1074
        %v1076 = vpop.xlane.xlu0 %1075
        %v1077 = vadd.f32 %v1057, %v1058
        %1078 = vadd.xlane.f32.xlu0 %v1077
        %v1079 = vpop.xlane.xlu0 %1078
        %v1080 = vadd.f32 %v1059, %v1060
        %1081 = vadd.xlane.f32.xlu0 %v1080
        %v1082 = vpop.xlane.xlu0 %1081
        %v1083 = vadd.f32 %v1061, %v1062
        %1084 = vadd.xlane.f32.xlu0 %v1083
        %v1085 = vpop.xlane.xlu0 %1084
        %v1086 = vadd.f32 %v1063, %v1064
        %1087 = vadd.xlane.f32.xlu0 %v1086
        %v1088 = vpop.xlane.xlu0 %1087
        %v1089 = vmul.f32 %v1067, %v690
        %v1090 = vmul.f32 %v1070, %v690
        %v1091 = vmul.f32 %v1073, %v690
        %v1092 = vmul.f32 %v1076, %v690
        %v1093 = vmul.f32 %v1079, %v690
        %v1094 = vmul.f32 %v1082, %v690
        %v1095 = vmul.f32 %v1085, %v690
        %v1096 = vmul.f32 %v1088, %v690
        %v1097 = vadd.f32 %v1089, 1e-05
        %v1098 = vadd.f32 %v1090, 1e-05
        %v1099 = vadd.f32 %v1091, 1e-05
        %v1100 = vadd.f32 %v1092, 1e-05
        %v1101 = vadd.f32 %v1093, 1e-05
        %v1102 = vadd.f32 %v1094, 1e-05
        %v1103 = vadd.f32 %v1095, 1e-05
        %v1104 = vadd.f32 %v1096, 1e-05
        %v1105 = vrsqrt.pop %v1097
        %v1106 = vrsqrt.pop %v1098
        %v1107 = vrsqrt.pop %v1099
        %v1108 = vrsqrt.pop %v1100
        %v1109 = vrsqrt.pop %v1101
        %v1110 = vrsqrt.pop %v1102
        %v1111 = vrsqrt.pop %v1103
        %v1112 = vrsqrt.pop %v1104
        %v1113 = vmul.f32 %v1033, %v1105
        %v1114 = vmul.f32 %v1034, %v1105
        %v1115 = vmul.f32 %v1035, %v1106
        %v1116 = vmul.f32 %v1036, %v1106
        %v1117 = vmul.f32 %v1037, %v1107
        %v1118 = vmul.f32 %v1038, %v1107
        %v1119 = vmul.f32 %v1039, %v1108
        %v1120 = vmul.f32 %v1040, %v1108
        %v1121 = vmul.f32 %v1041, %v1109
        %v1122 = vmul.f32 %v1042, %v1109
        %v1123 = vmul.f32 %v1043, %v1110
        %v1124 = vmul.f32 %v1044, %v1110
        %v1125 = vmul.f32 %v1045, %v1111
        %v1126 = vmul.f32 %v1046, %v1111
        %v1127 = vmul.f32 %v1047, %v1112
        %v1128 = vmul.f32 %v1048, %v1112
        %v1129 = vmul.f32 %v1113, %v903
        %v1130 = vmul.f32 %v1114, %v907
        %v1131 = vmul.f32 %v1115, %v903
        %v1132 = vmul.f32 %v1116, %v907
        %v1133 = vmul.f32 %v1117, %v903
        %v1134 = vmul.f32 %v1118, %v907
        %v1135 = vmul.f32 %v1119, %v903
        %v1136 = vmul.f32 %v1120, %v907
        %v1137 = vmul.f32 %v1121, %v903
        %v1138 = vmul.f32 %v1122, %v907
        %v1139 = vmul.f32 %v1123, %v903
        %v1140 = vmul.f32 %v1124, %v907
        %v1141 = vmul.f32 %v1125, %v903
        %v1142 = vmul.f32 %v1126, %v907
        %v1143 = vmul.f32 %v1127, %v903
        %v1144 = vmul.f32 %v1128, %v907
        %v1145 = vadd.f32 %v1129, %v946
        %v1146 = vadd.f32 %v1130, %v950
        %v1147 = vadd.f32 %v1131, %v946
        %v1148 = vadd.f32 %v1132, %v950
        %v1149 = vadd.f32 %v1133, %v946
        %v1150 = vadd.f32 %v1134, %v950
        %v1151 = vadd.f32 %v1135, %v946
        %v1152 = vadd.f32 %v1136, %v950
        %v1153 = vadd.f32 %v1137, %v946
        %v1154 = vadd.f32 %v1138, %v950
        %v1155 = vadd.f32 %v1139, %v946
        %v1156 = vadd.f32 %v1140, %v950
        %v1157 = vadd.f32 %v1141, %v946
        %v1158 = vadd.f32 %v1142, %v950
        %v1159 = vadd.f32 %v1143, %v946
        %v1160 = vadd.f32 %v1144, %v950
        %v1161 = vpack.c.bf16 %v1147, %v1145
        %v1162 = vpack.c.bf16 %v1148, %v1146
        %v1163 = vpack.c.bf16 %v1151, %v1149
        %v1164 = vpack.c.bf16 %v1152, %v1150
        %v1165 = vpack.c.bf16 %v1155, %v1153
        %v1166 = vpack.c.bf16 %v1156, %v1154
        %v1167 = vpack.c.bf16 %v1159, %v1157
        %v1168 = vpack.c.bf16 %v1160, %v1158
        %v1169 = vld [vmem:[#allocation8] sm:$0xff]
        %v1170 = vld [vmem:[#allocation8 + $0x18] sm:$0xff]
        %v1171 = vld [vmem:[#allocation8 + $0x30] sm:$0xff]
        %v1172 = vld [vmem:[#allocation8 + $0x48] sm:$0xff]
        %v1173 = vld [vmem:[#allocation8 + $0x60] sm:$0xff]
        %v1174 = vld [vmem:[#allocation8 + $0x78] sm:$0xff]
        %v1175 = vld [vmem:[#allocation8 + $0x90] sm:$0xff]
        %v1176 = vld [vmem:[#allocation8 + $0xa8] sm:$0xff]
        %v1177 = vld [vmem:[#allocation8 + $0xc0] sm:$0xff]
        %v1178 = vld [vmem:[#allocation8 + $0xd8] sm:$0xff]
        %v1179 = vld [vmem:[#allocation8 + $0xf0] sm:$0xff]
        %v1180 = vld [vmem:[#allocation8 + $0x108] sm:$0xff]
        %v1181 = vld [vmem:[#allocation8 + $0x120] sm:$0xff]
        %v1182 = vld [vmem:[#allocation8 + $0x138] sm:$0xff]
        %v1183 = vld [vmem:[#allocation8 + $0x150] sm:$0xff]
        %v1184 = vld [vmem:[#allocation8 + $0x168] sm:$0xff]
        %v1185 = vld [vmem:[#allocation8 + $0x180] sm:$0xff]
        %v1186 = vld [vmem:[#allocation8 + $0x198] sm:$0xff]
        %v1187 = vld [vmem:[#allocation8 + $0x1b0] sm:$0xff]
        %v1188 = vld [vmem:[#allocation8 + $0x1c8] sm:$0xff]
        %v1189 = vld [vmem:[#allocation8 + $0x1e0] sm:$0xff]
        %v1190 = vld [vmem:[#allocation8 + $0x1f8] sm:$0xff]
        %v1191 = vld [vmem:[#allocation8 + $0x210] sm:$0xff]
        %v1192 = vld [vmem:[#allocation8 + $0x228] sm:$0xff]
        %v1193 = vld [vmem:[#allocation8 + $0x240] sm:$0xff]
        %v1194 = vld [vmem:[#allocation8 + $0x258] sm:$0xff]
        %v1195 = vld [vmem:[#allocation8 + $0x270] sm:$0xff]
        %v1196 = vld [vmem:[#allocation8 + $0x288] sm:$0xff]
        %v1197 = vld [vmem:[#allocation8 + $0x2a0] sm:$0xff]
        %v1198 = vld [vmem:[#allocation8 + $0x2b8] sm:$0xff]
        %v1199 = vld [vmem:[#allocation8 + $0x2d0] sm:$0xff]
        %v1200 = vld [vmem:[#allocation8 + $0x2e8] sm:$0xff]
        %v1233 = vunpack.c.l.b16 %v1169
        %v1234 = vunpack.c.h.b16 %v1169
        %v1235 = vunpack.c.l.b16 %v1170
        %v1236 = vunpack.c.h.b16 %v1170
        %v1237 = vunpack.c.l.b16 %v1171
        %v1238 = vunpack.c.h.b16 %v1171
        %v1239 = vunpack.c.l.b16 %v1172
        %v1240 = vunpack.c.h.b16 %v1172
        %v1241 = vunpack.c.l.b16 %v1173
        %v1242 = vunpack.c.h.b16 %v1173
        %v1243 = vunpack.c.l.b16 %v1174
        %v1244 = vunpack.c.h.b16 %v1174
        %v1245 = vunpack.c.l.b16 %v1175
        %v1246 = vunpack.c.h.b16 %v1175
        %v1247 = vunpack.c.l.b16 %v1176
        %v1248 = vunpack.c.h.b16 %v1176
        %v1249 = vunpack.c.l.b16 %v1177
        %v1250 = vunpack.c.h.b16 %v1177
        %v1251 = vunpack.c.l.b16 %v1178
        %v1252 = vunpack.c.h.b16 %v1178
        %v1253 = vunpack.c.l.b16 %v1179
        %v1254 = vunpack.c.h.b16 %v1179
        %v1255 = vunpack.c.l.b16 %v1180
        %v1256 = vunpack.c.h.b16 %v1180
        %v1257 = vunpack.c.l.b16 %v1181
        %v1258 = vunpack.c.h.b16 %v1181
        %v1259 = vunpack.c.l.b16 %v1182
        %v1260 = vunpack.c.h.b16 %v1182
        %v1261 = vunpack.c.l.b16 %v1183
        %v1262 = vunpack.c.h.b16 %v1183
        %v1263 = vunpack.c.l.b16 %v1184
        %v1264 = vunpack.c.h.b16 %v1184
        %v1265 = vunpack.c.l.b16 %v1185
        %v1266 = vunpack.c.h.b16 %v1185
        %v1267 = vunpack.c.l.b16 %v1186
        %v1268 = vunpack.c.h.b16 %v1186
        %v1269 = vunpack.c.l.b16 %v1187
        %v1270 = vunpack.c.h.b16 %v1187
        %v1271 = vunpack.c.l.b16 %v1188
        %v1272 = vunpack.c.h.b16 %v1188
        %v1273 = vunpack.c.l.b16 %v1189
        %v1274 = vunpack.c.h.b16 %v1189
        %v1275 = vunpack.c.l.b16 %v1190
        %v1276 = vunpack.c.h.b16 %v1190
        %v1277 = vunpack.c.l.b16 %v1191
        %v1278 = vunpack.c.h.b16 %v1191
        %v1279 = vunpack.c.l.b16 %v1192
        %v1280 = vunpack.c.h.b16 %v1192
        %v1281 = vunpack.c.l.b16 %v1193
        %v1282 = vunpack.c.h.b16 %v1193
        %v1283 = vunpack.c.l.b16 %v1194
        %v1284 = vunpack.c.h.b16 %v1194
        %v1285 = vunpack.c.l.b16 %v1195
        %v1286 = vunpack.c.h.b16 %v1195
        %v1287 = vunpack.c.l.b16 %v1196
        %v1288 = vunpack.c.h.b16 %v1196
        %v1289 = vunpack.c.l.b16 %v1197
        %v1290 = vunpack.c.h.b16 %v1197
        %v1291 = vunpack.c.l.b16 %v1198
        %v1292 = vunpack.c.h.b16 %v1198
        %v1293 = vunpack.c.l.b16 %v1199
        %v1294 = vunpack.c.h.b16 %v1199
        %v1295 = vunpack.c.l.b16 %v1200
        %v1296 = vunpack.c.h.b16 %v1200
        %v1297 = vpack.c.b16 %v1235, %v1233
        %v1298 = vpack.c.b16 %v1236, %v1234
        %v1299 = vpack.c.b16 %v1239, %v1237
        %v1300 = vpack.c.b16 %v1240, %v1238
        %v1301 = vpack.c.b16 %v1243, %v1241
        %v1302 = vpack.c.b16 %v1244, %v1242
        %v1303 = vpack.c.b16 %v1247, %v1245
        %v1304 = vpack.c.b16 %v1248, %v1246
        %v1305 = vpack.c.b16 %v1251, %v1249
        %v1306 = vpack.c.b16 %v1252, %v1250
        %v1307 = vpack.c.b16 %v1255, %v1253
        %v1308 = vpack.c.b16 %v1256, %v1254
        %v1309 = vpack.c.b16 %v1259, %v1257
        %v1310 = vpack.c.b16 %v1260, %v1258
        %v1311 = vpack.c.b16 %v1263, %v1261
        %v1312 = vpack.c.b16 %v1264, %v1262
        %v1313 = vpack.c.b16 %v1267, %v1265
        %v1314 = vpack.c.b16 %v1268, %v1266
        %v1315 = vpack.c.b16 %v1271, %v1269
        %v1316 = vpack.c.b16 %v1272, %v1270
        %v1317 = vpack.c.b16 %v1275, %v1273
        %v1318 = vpack.c.b16 %v1276, %v1274
        %v1319 = vpack.c.b16 %v1279, %v1277
        %v1320 = vpack.c.b16 %v1280, %v1278
        %v1321 = vpack.c.b16 %v1283, %v1281
        %v1322 = vpack.c.b16 %v1284, %v1282
        %v1323 = vpack.c.b16 %v1287, %v1285
        %v1324 = vpack.c.b16 %v1288, %v1286
        %v1325 = vpack.c.b16 %v1291, %v1289
        %v1326 = vpack.c.b16 %v1292, %v1290
        %v1327 = vpack.c.b16 %v1295, %v1293
        %v1328 = vpack.c.b16 %v1296, %v1294
        %1361 = vmatprep.subr.bf16.mxu0 %v1312
        %1362 = vmatpush1.bf16.msra.mxu0 %v1311
        %1363 = vmatprep.subr.bf16.mxu0 %v1310
        %1364 = vmatpush1.bf16.msra.mxu0 %v1309
        %1365 = vmatprep.subr.bf16.mxu0 %v1308
        %1366 = vmatpush1.bf16.msra.mxu0 %v1307
        %1367 = vmatprep.subr.bf16.mxu0 %v1306
        %1368 = vmatpush1.bf16.msra.mxu0 %v1305
        %1369 = vmatprep.subr.bf16.mxu0 %v1304
        %1370 = vmatpush1.bf16.msra.mxu0 %v1303
        %1371 = vmatprep.subr.bf16.mxu0 %v1302
        %1372 = vmatpush1.bf16.msra.mxu0 %v1301
        %1373 = vmatprep.subr.bf16.mxu0 %v1300
        %1374 = vmatpush1.bf16.msra.mxu0 %v1299
        %1375 = vmatprep.subr.bf16.mxu0 %v1298
        %1376 = vmatpush1.bf16.msra.mxu0 %v1297
        %1377 = vmatprep.subr.bf16.mxu0 %v1328
        %1378 = vmatpush2.bf16.msra.mxu0 %v1327
        %1379 = vmatprep.subr.bf16.mxu0 %v1326
        %1380 = vmatpush2.bf16.msra.mxu0 %v1325
        %1381 = vmatprep.subr.bf16.mxu0 %v1324
        %1382 = vmatpush2.bf16.msra.mxu0 %v1323
        %1383 = vmatprep.subr.bf16.mxu0 %v1322
        %1384 = vmatpush2.bf16.msra.mxu0 %v1321
        %1385 = vmatprep.subr.bf16.mxu0 %v1320
        %1386 = vmatpush2.bf16.msra.mxu0 %v1319
        %1387 = vmatprep.subr.bf16.mxu0 %v1318
        %1388 = vmatpush2.bf16.msra.mxu0 %v1317
        %1389 = vmatprep.subr.bf16.mxu0 %v1316
        %1390 = vmatpush2.bf16.msra.mxu0 %v1315
        %1391 = vmatprep.subr.bf16.mxu0 %v1314
        %1392 = vmatpush2.bf16.msra.mxu0 %v1313
        %1393 = vmatprep.mubr.bf16.mxu0 %v1162
        %1394 = vmatmul.mubr.bf16.gmra.mxu0 %v1161
        %v1395 = vpop.f32.mrf.mxu0
        %v1396 = vadd.f32 0.0, %v1395
        %v1397 = vpop.f32.mrf.mxu0
        %v1398 = vadd.f32 0.0, %v1397
        %v1399 = vpop.f32.mrf.mxu0
        %v1400 = vadd.f32 0.0, %v1399
        %v1401 = vpop.f32.mrf.mxu0
        %v1402 = vadd.f32 0.0, %v1401
        %1403 = vmatprep.mubr.bf16.mxu0 %v1164
        %1404 = vmatmul.mubr.bf16.gmra.mxu0 %v1163
        %v1405 = vpop.f32.mrf.mxu0
        %v1406 = vadd.f32 0.0, %v1405
        %v1407 = vpop.f32.mrf.mxu0
        %v1408 = vadd.f32 0.0, %v1407
        %v1409 = vpop.f32.mrf.mxu0
        %v1410 = vadd.f32 0.0, %v1409
        %v1411 = vpop.f32.mrf.mxu0
        %v1412 = vadd.f32 0.0, %v1411
        %1413 = vmatprep.mubr.bf16.mxu0 %v1166
        %1414 = vmatmul.mubr.bf16.gmra.mxu0 %v1165
        %v1415 = vpop.f32.mrf.mxu0
        %v1416 = vadd.f32 0.0, %v1415
        %v1417 = vpop.f32.mrf.mxu0
        %v1418 = vadd.f32 0.0, %v1417
        %v1419 = vpop.f32.mrf.mxu0
        %v1420 = vadd.f32 0.0, %v1419
        %v1421 = vpop.f32.mrf.mxu0
        %v1422 = vadd.f32 0.0, %v1421
        %1423 = vmatprep.mubr.bf16.mxu0 %v1168
        %1424 = vmatmul.mubr.bf16.gmra.mxu0 %v1167
        %v1425 = vpop.f32.mrf.mxu0
        %v1426 = vadd.f32 0.0, %v1425
        %v1427 = vpop.f32.mrf.mxu0
        %v1428 = vadd.f32 0.0, %v1427
        %v1429 = vpop.f32.mrf.mxu0
        %v1430 = vadd.f32 0.0, %v1429
        %v1431 = vpop.f32.mrf.mxu0
        %v1432 = vadd.f32 0.0, %v1431
        %1433 = vdwg.mxu0
        %v1434 = vpack.c.bf16 %v1400, %v1396
        %v1435 = vpack.c.bf16 %v1402, %v1398
        %v1436 = vpack.c.bf16 %v1410, %v1406
        %v1437 = vpack.c.bf16 %v1412, %v1408
        %v1438 = vpack.c.bf16 %v1420, %v1416
        %v1439 = vpack.c.bf16 %v1422, %v1418
        %v1440 = vpack.c.bf16 %v1430, %v1426
        %v1441 = vpack.c.bf16 %v1432, %v1428
        %v1442 = vld [vmem:[#allocation8 + $0x8] sm:$0xff]
        %v1443 = vld [vmem:[#allocation8 + $0x10] sm:$0xff]
        %v1444 = vld [vmem:[#allocation8 + $0x20] sm:$0xff]
        %v1445 = vld [vmem:[#allocation8 + $0x28] sm:$0xff]
        %v1446 = vld [vmem:[#allocation8 + $0x38] sm:$0xff]
        %v1447 = vld [vmem:[#allocation8 + $0x40] sm:$0xff]
        %v1448 = vld [vmem:[#allocation8 + $0x50] sm:$0xff]
        %v1449 = vld [vmem:[#allocation8 + $0x58] sm:$0xff]
        %v1450 = vld [vmem:[#allocation8 + $0x68] sm:$0xff]
        %v1451 = vld [vmem:[#allocation8 + $0x70] sm:$0xff]
        %v1452 = vld [vmem:[#allocation8 + $0x80] sm:$0xff]
        %v1453 = vld [vmem:[#allocation8 + $0x88] sm:$0xff]
        %v1454 = vld [vmem:[#allocation8 + $0x98] sm:$0xff]
        %v1455 = vld [vmem:[#allocation8 + $0xa0] sm:$0xff]
        %v1456 = vld [vmem:[#allocation8 + $0xb0] sm:$0xff]
        %v1457 = vld [vmem:[#allocation8 + $0xb8] sm:$0xff]
        %v1458 = vld [vmem:[#allocation8 + $0xc8] sm:$0xff]
        %v1459 = vld [vmem:[#allocation8 + $0xd0] sm:$0xff]
        %v1460 = vld [vmem:[#allocation8 + $0xe0] sm:$0xff]
        %v1461 = vld [vmem:[#allocation8 + $0xe8] sm:$0xff]
        %v1462 = vld [vmem:[#allocation8 + $0xf8] sm:$0xff]
        %v1463 = vld [vmem:[#allocation8 + $0x100] sm:$0xff]
        %v1464 = vld [vmem:[#allocation8 + $0x110] sm:$0xff]
        %v1465 = vld [vmem:[#allocation8 + $0x118] sm:$0xff]
        %v1466 = vld [vmem:[#allocation8 + $0x128] sm:$0xff]
        %v1467 = vld [vmem:[#allocation8 + $0x130] sm:$0xff]
        %v1468 = vld [vmem:[#allocation8 + $0x140] sm:$0xff]
        %v1469 = vld [vmem:[#allocation8 + $0x148] sm:$0xff]
        %v1470 = vld [vmem:[#allocation8 + $0x158] sm:$0xff]
        %v1471 = vld [vmem:[#allocation8 + $0x160] sm:$0xff]
        %v1472 = vld [vmem:[#allocation8 + $0x170] sm:$0xff]
        %v1473 = vld [vmem:[#allocation8 + $0x178] sm:$0xff]
        %v1474 = vld [vmem:[#allocation8 + $0x188] sm:$0xff]
        %v1475 = vld [vmem:[#allocation8 + $0x190] sm:$0xff]
        %v1476 = vld [vmem:[#allocation8 + $0x1a0] sm:$0xff]
        %v1477 = vld [vmem:[#allocation8 + $0x1a8] sm:$0xff]
        %v1478 = vld [vmem:[#allocation8 + $0x1b8] sm:$0xff]
        %v1479 = vld [vmem:[#allocation8 + $0x1c0] sm:$0xff]
        %v1480 = vld [vmem:[#allocation8 + $0x1d0] sm:$0xff]
        %v1481 = vld [vmem:[#allocation8 + $0x1d8] sm:$0xff]
        %v1482 = vld [vmem:[#allocation8 + $0x1e8] sm:$0xff]
        %v1483 = vld [vmem:[#allocation8 + $0x1f0] sm:$0xff]
        %v1484 = vld [vmem:[#allocation8 + $0x200] sm:$0xff]
        %v1485 = vld [vmem:[#allocation8 + $0x208] sm:$0xff]
        %v1486 = vld [vmem:[#allocation8 + $0x218] sm:$0xff]
        %v1487 = vld [vmem:[#allocation8 + $0x220] sm:$0xff]
        %v1488 = vld [vmem:[#allocation8 + $0x230] sm:$0xff]
        %v1489 = vld [vmem:[#allocation8 + $0x238] sm:$0xff]
        %v1490 = vld [vmem:[#allocation8 + $0x248] sm:$0xff]
        %v1491 = vld [vmem:[#allocation8 + $0x250] sm:$0xff]
        %v1492 = vld [vmem:[#allocation8 + $0x260] sm:$0xff]
        %v1493 = vld [vmem:[#allocation8 + $0x268] sm:$0xff]
        %v1494 = vld [vmem:[#allocation8 + $0x278] sm:$0xff]
        %v1495 = vld [vmem:[#allocation8 + $0x280] sm:$0xff]
        %v1496 = vld [vmem:[#allocation8 + $0x290] sm:$0xff]
        %v1497 = vld [vmem:[#allocation8 + $0x298] sm:$0xff]
        %v1498 = vld [vmem:[#allocation8 + $0x2a8] sm:$0xff]
        %v1499 = vld [vmem:[#allocation8 + $0x2b0] sm:$0xff]
        %v1500 = vld [vmem:[#allocation8 + $0x2c0] sm:$0xff]
        %v1501 = vld [vmem:[#allocation8 + $0x2c8] sm:$0xff]
        %v1502 = vld [vmem:[#allocation8 + $0x2d8] sm:$0xff]
        %v1503 = vld [vmem:[#allocation8 + $0x2e0] sm:$0xff]
        %v1504 = vld [vmem:[#allocation8 + $0x2f0] sm:$0xff]
        %v1505 = vld [vmem:[#allocation8 + $0x2f8] sm:$0xff]
        %v1570 = vunpack.c.l.b16 %v1442
        %v1571 = vunpack.c.h.b16 %v1442
        %v1572 = vunpack.c.l.b16 %v1443
        %v1573 = vunpack.c.h.b16 %v1443
        %v1574 = vunpack.c.l.b16 %v1444
        %v1575 = vunpack.c.h.b16 %v1444
        %v1576 = vunpack.c.l.b16 %v1445
        %v1577 = vunpack.c.h.b16 %v1445
        %v1578 = vunpack.c.l.b16 %v1446
        %v1579 = vunpack.c.h.b16 %v1446
        %v1580 = vunpack.c.l.b16 %v1447
        %v1581 = vunpack.c.h.b16 %v1447
        %v1582 = vunpack.c.l.b16 %v1448
        %v1583 = vunpack.c.h.b16 %v1448
        %v1584 = vunpack.c.l.b16 %v1449
        %v1585 = vunpack.c.h.b16 %v1449
        %v1586 = vunpack.c.l.b16 %v1450
        %v1587 = vunpack.c.h.b16 %v1450
        %v1588 = vunpack.c.l.b16 %v1451
        %v1589 = vunpack.c.h.b16 %v1451
        %v1590 = vunpack.c.l.b16 %v1452
        %v1591 = vunpack.c.h.b16 %v1452
        %v1592 = vunpack.c.l.b16 %v1453
        %v1593 = vunpack.c.h.b16 %v1453
        %v1594 = vunpack.c.l.b16 %v1454
        %v1595 = vunpack.c.h.b16 %v1454
        %v1596 = vunpack.c.l.b16 %v1455
        %v1597 = vunpack.c.h.b16 %v1455
        %v1598 = vunpack.c.l.b16 %v1456
        %v1599 = vunpack.c.h.b16 %v1456
        %v1600 = vunpack.c.l.b16 %v1457
        %v1601 = vunpack.c.h.b16 %v1457
        %v1602 = vunpack.c.l.b16 %v1458
        %v1603 = vunpack.c.h.b16 %v1458
        %v1604 = vunpack.c.l.b16 %v1459
        %v1605 = vunpack.c.h.b16 %v1459
        %v1606 = vunpack.c.l.b16 %v1460
        %v1607 = vunpack.c.h.b16 %v1460
        %v1608 = vunpack.c.l.b16 %v1461
        %v1609 = vunpack.c.h.b16 %v1461
        %v1610 = vunpack.c.l.b16 %v1462
        %v1611 = vunpack.c.h.b16 %v1462
        %v1612 = vunpack.c.l.b16 %v1463
        %v1613 = vunpack.c.h.b16 %v1463
        %v1614 = vunpack.c.l.b16 %v1464
        %v1615 = vunpack.c.h.b16 %v1464
        %v1616 = vunpack.c.l.b16 %v1465
        %v1617 = vunpack.c.h.b16 %v1465
        %v1618 = vunpack.c.l.b16 %v1466
        %v1619 = vunpack.c.h.b16 %v1466
        %v1620 = vunpack.c.l.b16 %v1467
        %v1621 = vunpack.c.h.b16 %v1467
        %v1622 = vunpack.c.l.b16 %v1468
        %v1623 = vunpack.c.h.b16 %v1468
        %v1624 = vunpack.c.l.b16 %v1469
        %v1625 = vunpack.c.h.b16 %v1469
        %v1626 = vunpack.c.l.b16 %v1470
        %v1627 = vunpack.c.h.b16 %v1470
        %v1628 = vunpack.c.l.b16 %v1471
        %v1629 = vunpack.c.h.b16 %v1471
        %v1630 = vunpack.c.l.b16 %v1472
        %v1631 = vunpack.c.h.b16 %v1472
        %v1632 = vunpack.c.l.b16 %v1473
        %v1633 = vunpack.c.h.b16 %v1473
        %v1634 = vunpack.c.l.b16 %v1474
        %v1635 = vunpack.c.h.b16 %v1474
        %v1636 = vunpack.c.l.b16 %v1475
        %v1637 = vunpack.c.h.b16 %v1475
        %v1638 = vunpack.c.l.b16 %v1476
        %v1639 = vunpack.c.h.b16 %v1476
        %v1640 = vunpack.c.l.b16 %v1477
        %v1641 = vunpack.c.h.b16 %v1477
        %v1642 = vunpack.c.l.b16 %v1478
        %v1643 = vunpack.c.h.b16 %v1478
        %v1644 = vunpack.c.l.b16 %v1479
        %v1645 = vunpack.c.h.b16 %v1479
        %v1646 = vunpack.c.l.b16 %v1480
        %v1647 = vunpack.c.h.b16 %v1480
        %v1648 = vunpack.c.l.b16 %v1481
        %v1649 = vunpack.c.h.b16 %v1481
        %v1650 = vunpack.c.l.b16 %v1482
        %v1651 = vunpack.c.h.b16 %v1482
        %v1652 = vunpack.c.l.b16 %v1483
        %v1653 = vunpack.c.h.b16 %v1483
        %v1654 = vunpack.c.l.b16 %v1484
        %v1655 = vunpack.c.h.b16 %v1484
        %v1656 = vunpack.c.l.b16 %v1485
        %v1657 = vunpack.c.h.b16 %v1485
        %v1658 = vunpack.c.l.b16 %v1486
        %v1659 = vunpack.c.h.b16 %v1486
        %v1660 = vunpack.c.l.b16 %v1487
        %v1661 = vunpack.c.h.b16 %v1487
        %v1662 = vunpack.c.l.b16 %v1488
        %v1663 = vunpack.c.h.b16 %v1488
        %v1664 = vunpack.c.l.b16 %v1489
        %v1665 = vunpack.c.h.b16 %v1489
        %v1666 = vunpack.c.l.b16 %v1490
        %v1667 = vunpack.c.h.b16 %v1490
        %v1668 = vunpack.c.l.b16 %v1491
        %v1669 = vunpack.c.h.b16 %v1491
        %v1670 = vunpack.c.l.b16 %v1492
        %v1671 = vunpack.c.h.b16 %v1492
        %v1672 = vunpack.c.l.b16 %v1493
        %v1673 = vunpack.c.h.b16 %v1493
        %v1674 = vunpack.c.l.b16 %v1494
        %v1675 = vunpack.c.h.b16 %v1494
        %v1676 = vunpack.c.l.b16 %v1495
        %v1677 = vunpack.c.h.b16 %v1495
        %v1678 = vunpack.c.l.b16 %v1496
        %v1679 = vunpack.c.h.b16 %v1496
        %v1680 = vunpack.c.l.b16 %v1497
        %v1681 = vunpack.c.h.b16 %v1497
        %v1682 = vunpack.c.l.b16 %v1498
        %v1683 = vunpack.c.h.b16 %v1498
        %v1684 = vunpack.c.l.b16 %v1499
        %v1685 = vunpack.c.h.b16 %v1499
        %v1686 = vunpack.c.l.b16 %v1500
        %v1687 = vunpack.c.h.b16 %v1500
        %v1688 = vunpack.c.l.b16 %v1501
        %v1689 = vunpack.c.h.b16 %v1501
        %v1690 = vunpack.c.l.b16 %v1502
        %v1691 = vunpack.c.h.b16 %v1502
        %v1692 = vunpack.c.l.b16 %v1503
        %v1693 = vunpack.c.h.b16 %v1503
        %v1694 = vunpack.c.l.b16 %v1504
        %v1695 = vunpack.c.h.b16 %v1504
        %v1696 = vunpack.c.l.b16 %v1505
        %v1697 = vunpack.c.h.b16 %v1505
        %v1698 = vpack.c.b16 %v1574, %v1570
        %v1699 = vpack.c.b16 %v1575, %v1571
        %v1700 = vpack.c.b16 %v1576, %v1572
        %v1701 = vpack.c.b16 %v1577, %v1573
        %v1702 = vpack.c.b16 %v1582, %v1578
        %v1703 = vpack.c.b16 %v1583, %v1579
        %v1704 = vpack.c.b16 %v1584, %v1580
        %v1705 = vpack.c.b16 %v1585, %v1581
        %v1706 = vpack.c.b16 %v1590, %v1586
        %v1707 = vpack.c.b16 %v1591, %v1587
        %v1708 = vpack.c.b16 %v1592, %v1588
        %v1709 = vpack.c.b16 %v1593, %v1589
        %v1710 = vpack.c.b16 %v1598, %v1594
        %v1711 = vpack.c.b16 %v1599, %v1595
        %v1712 = vpack.c.b16 %v1600, %v1596
        %v1713 = vpack.c.b16 %v1601, %v1597
        %v1714 = vpack.c.b16 %v1606, %v1602
        %v1715 = vpack.c.b16 %v1607, %v1603
        %v1716 = vpack.c.b16 %v1608, %v1604
        %v1717 = vpack.c.b16 %v1609, %v1605
        %v1718 = vpack.c.b16 %v1614, %v1610
        %v1719 = vpack.c.b16 %v1615, %v1611
        %v1720 = vpack.c.b16 %v1616, %v1612
        %v1721 = vpack.c.b16 %v1617, %v1613
        %v1722 = vpack.c.b16 %v1622, %v1618
        %v1723 = vpack.c.b16 %v1623, %v1619
        %v1724 = vpack.c.b16 %v1624, %v1620
        %v1725 = vpack.c.b16 %v1625, %v1621
        %v1726 = vpack.c.b16 %v1630, %v1626
        %v1727 = vpack.c.b16 %v1631, %v1627
        %v1728 = vpack.c.b16 %v1632, %v1628
        %v1729 = vpack.c.b16 %v1633, %v1629
        %v1730 = vpack.c.b16 %v1638, %v1634
        %v1731 = vpack.c.b16 %v1639, %v1635
        %v1732 = vpack.c.b16 %v1640, %v1636
        %v1733 = vpack.c.b16 %v1641, %v1637
        %v1734 = vpack.c.b16 %v1646, %v1642
        %v1735 = vpack.c.b16 %v1647, %v1643
        %v1736 = vpack.c.b16 %v1648, %v1644
        %v1737 = vpack.c.b16 %v1649, %v1645
        %v1738 = vpack.c.b16 %v1654, %v1650
        %v1739 = vpack.c.b16 %v1655, %v1651
        %v1740 = vpack.c.b16 %v1656, %v1652
        %v1741 = vpack.c.b16 %v1657, %v1653
        %v1742 = vpack.c.b16 %v1662, %v1658
        %v1743 = vpack.c.b16 %v1663, %v1659
        %v1744 = vpack.c.b16 %v1664, %v1660
        %v1745 = vpack.c.b16 %v1665, %v1661
        %v1746 = vpack.c.b16 %v1670, %v1666
        %v1747 = vpack.c.b16 %v1671, %v1667
        %v1748 = vpack.c.b16 %v1672, %v1668
        %v1749 = vpack.c.b16 %v1673, %v1669
        %v1750 = vpack.c.b16 %v1678, %v1674
        %v1751 = vpack.c.b16 %v1679, %v1675
        %v1752 = vpack.c.b16 %v1680, %v1676
        %v1753 = vpack.c.b16 %v1681, %v1677
        %v1754 = vpack.c.b16 %v1686, %v1682
        %v1755 = vpack.c.b16 %v1687, %v1683
        %v1756 = vpack.c.b16 %v1688, %v1684
        %v1757 = vpack.c.b16 %v1689, %v1685
        %v1758 = vpack.c.b16 %v1694, %v1690
        %v1759 = vpack.c.b16 %v1695, %v1691
        %v1760 = vpack.c.b16 %v1696, %v1692
        %v1761 = vpack.c.b16 %v1697, %v1693
        %1826 = vmatprep.subr.bf16.mxu0 %v1727
        %1827 = vmatpush1.bf16.msra.mxu0 %v1726
        %1828 = vmatprep.subr.bf16.mxu0 %v1723
        %1829 = vmatpush1.bf16.msra.mxu0 %v1722
        %1830 = vmatprep.subr.bf16.mxu0 %v1719
        %1831 = vmatpush1.bf16.msra.mxu0 %v1718
        %1832 = vmatprep.subr.bf16.mxu0 %v1715
        %1833 = vmatpush1.bf16.msra.mxu0 %v1714
        %1834 = vmatprep.subr.bf16.mxu0 %v1711
        %1835 = vmatpush1.bf16.msra.mxu0 %v1710
        %1836 = vmatprep.subr.bf16.mxu0 %v1707
        %1837 = vmatpush1.bf16.msra.mxu0 %v1706
        %1838 = vmatprep.subr.bf16.mxu0 %v1703
        %1839 = vmatpush1.bf16.msra.mxu0 %v1702
        %1840 = vmatprep.subr.bf16.mxu0 %v1699
        %1841 = vmatpush1.bf16.msra.mxu0 %v1698
        %1842 = vmatprep.subr.bf16.mxu0 %v1759
        %1843 = vmatpush2.bf16.msra.mxu0 %v1758
        %1844 = vmatprep.subr.bf16.mxu0 %v1755
        %1845 = vmatpush2.bf16.msra.mxu0 %v1754
        %1846 = vmatprep.subr.bf16.mxu0 %v1751
        %1847 = vmatpush2.bf16.msra.mxu0 %v1750
        %1848 = vmatprep.subr.bf16.mxu0 %v1747
        %1849 = vmatpush2.bf16.msra.mxu0 %v1746
        %1850 = vmatprep.subr.bf16.mxu0 %v1743
        %1851 = vmatpush2.bf16.msra.mxu0 %v1742
        %1852 = vmatprep.subr.bf16.mxu0 %v1739
        %1853 = vmatpush2.bf16.msra.mxu0 %v1738
        %1854 = vmatprep.subr.bf16.mxu0 %v1735
        %1855 = vmatpush2.bf16.msra.mxu0 %v1734
        %1856 = vmatprep.subr.bf16.mxu0 %v1731
        %1857 = vmatpush2.bf16.msra.mxu0 %v1730
        %1858 = vmatprep.mubr.bf16.mxu0 %v986
        %1859 = vmatmul.mubr.bf16.gmra.mxu0 %v985
        %v1860 = vpop.f32.mrf.mxu0
        %v1861 = vadd.f32 0.0, %v1860
        %v1862 = vpop.f32.mrf.mxu0
        %v1863 = vadd.f32 0.0, %v1862
        %v1864 = vpop.f32.mrf.mxu0
        %v1865 = vadd.f32 0.0, %v1864
        %v1866 = vpop.f32.mrf.mxu0
        %v1867 = vadd.f32 0.0, %v1866
        %1868 = vmatprep.mubr.bf16.mxu0 %v988
        %1869 = vmatmul.mubr.bf16.gmra.mxu0 %v987
        %v1870 = vpop.f32.mrf.mxu0
        %v1871 = vadd.f32 0.0, %v1870
        %v1872 = vpop.f32.mrf.mxu0
        %v1873 = vadd.f32 0.0, %v1872
        %v1874 = vpop.f32.mrf.mxu0
        %v1875 = vadd.f32 0.0, %v1874
        %v1876 = vpop.f32.mrf.mxu0
        %v1877 = vadd.f32 0.0, %v1876
        %1878 = vmatprep.mubr.bf16.mxu0 %v990
        %1879 = vmatmul.mubr.bf16.gmra.mxu0 %v989
        %v1880 = vpop.f32.mrf.mxu0
        %v1881 = vadd.f32 0.0, %v1880
        %v1882 = vpop.f32.mrf.mxu0
        %v1883 = vadd.f32 0.0, %v1882
        %v1884 = vpop.f32.mrf.mxu0
        %v1885 = vadd.f32 0.0, %v1884
        %v1886 = vpop.f32.mrf.mxu0
        %v1887 = vadd.f32 0.0, %v1886
        %1888 = vmatprep.mubr.bf16.mxu0 %v992
        %1889 = vmatmul.mubr.bf16.gmra.mxu0 %v991
        %v1890 = vpop.f32.mrf.mxu0
        %v1891 = vadd.f32 0.0, %v1890
        %v1892 = vpop.f32.mrf.mxu0
        %v1893 = vadd.f32 0.0, %v1892
        %v1894 = vpop.f32.mrf.mxu0
        %v1895 = vadd.f32 0.0, %v1894
        %v1896 = vpop.f32.mrf.mxu0
        %v1897 = vadd.f32 0.0, %v1896
        %1898 = vmatprep.mubr.bf16.mxu0 %v994
        %1899 = vmatmul.mubr.bf16.gmra.mxu0 %v993
        %v1900 = vpop.f32.mrf.mxu0
        %v1901 = vadd.f32 0.0, %v1900
        %v1902 = vpop.f32.mrf.mxu0
        %v1903 = vadd.f32 0.0, %v1902
        %v1904 = vpop.f32.mrf.mxu0
        %v1905 = vadd.f32 0.0, %v1904
        %v1906 = vpop.f32.mrf.mxu0
        %v1907 = vadd.f32 0.0, %v1906
        %1908 = vmatprep.mubr.bf16.mxu0 %v996
        %1909 = vmatmul.mubr.bf16.gmra.mxu0 %v995
        %v1910 = vpop.f32.mrf.mxu0
        %v1911 = vadd.f32 0.0, %v1910
        %v1912 = vpop.f32.mrf.mxu0
        %v1913 = vadd.f32 0.0, %v1912
        %v1914 = vpop.f32.mrf.mxu0
        %v1915 = vadd.f32 0.0, %v1914
        %v1916 = vpop.f32.mrf.mxu0
        %v1917 = vadd.f32 0.0, %v1916
        %1918 = vmatprep.mubr.bf16.mxu0 %v998
        %1919 = vmatmul.mubr.bf16.gmra.mxu0 %v997
        %v1920 = vpop.f32.mrf.mxu0
        %v1921 = vadd.f32 0.0, %v1920
        %v1922 = vpop.f32.mrf.mxu0
        %v1923 = vadd.f32 0.0, %v1922
        %v1924 = vpop.f32.mrf.mxu0
        %v1925 = vadd.f32 0.0, %v1924
        %v1926 = vpop.f32.mrf.mxu0
        %v1927 = vadd.f32 0.0, %v1926
        %1928 = vmatprep.mubr.bf16.mxu0 %v1000
        %1929 = vmatmul.mubr.bf16.gmra.mxu0 %v999
        %v1930 = vpop.f32.mrf.mxu0
        %v1931 = vadd.f32 0.0, %v1930
        %v1932 = vpop.f32.mrf.mxu0
        %v1933 = vadd.f32 0.0, %v1932
        %v1934 = vpop.f32.mrf.mxu0
        %v1935 = vadd.f32 0.0, %v1934
        %v1936 = vpop.f32.mrf.mxu0
        %v1937 = vadd.f32 0.0, %v1936
        %1938 = vdwg.mxu0
        %1939 = vmatprep.subr.bf16.mxu0 %v1729
        %1940 = vmatpush1.bf16.msra.mxu0 %v1728
        %1941 = vmatprep.subr.bf16.mxu0 %v1725
        %1942 = vmatpush1.bf16.msra.mxu0 %v1724
        %1943 = vmatprep.subr.bf16.mxu0 %v1721
        %1944 = vmatpush1.bf16.msra.mxu0 %v1720
        %1945 = vmatprep.subr.bf16.mxu0 %v1717
        %1946 = vmatpush1.bf16.msra.mxu0 %v1716
        %1947 = vmatprep.subr.bf16.mxu0 %v1713
        %1948 = vmatpush1.bf16.msra.mxu0 %v1712
        %1949 = vmatprep.subr.bf16.mxu0 %v1709
        %1950 = vmatpush1.bf16.msra.mxu0 %v1708
        %1951 = vmatprep.subr.bf16.mxu0 %v1705
        %1952 = vmatpush1.bf16.msra.mxu0 %v1704
        %1953 = vmatprep.subr.bf16.mxu0 %v1701
        %1954 = vmatpush1.bf16.msra.mxu0 %v1700
        %1955 = vmatprep.subr.bf16.mxu0 %v1761
        %1956 = vmatpush2.bf16.msra.mxu0 %v1760
        %1957 = vmatprep.subr.bf16.mxu0 %v1757
        %1958 = vmatpush2.bf16.msra.mxu0 %v1756
        %1959 = vmatprep.subr.bf16.mxu0 %v1753
        %1960 = vmatpush2.bf16.msra.mxu0 %v1752
        %1961 = vmatprep.subr.bf16.mxu0 %v1749
        %1962 = vmatpush2.bf16.msra.mxu0 %v1748
        %1963 = vmatprep.subr.bf16.mxu0 %v1745
        %1964 = vmatpush2.bf16.msra.mxu0 %v1744
        %1965 = vmatprep.subr.bf16.mxu0 %v1741
        %1966 = vmatpush2.bf16.msra.mxu0 %v1740
        %1967 = vmatprep.subr.bf16.mxu0 %v1737
        %1968 = vmatpush2.bf16.msra.mxu0 %v1736
        %1969 = vmatprep.subr.bf16.mxu0 %v1733
        %1970 = vmatpush2.bf16.msra.mxu0 %v1732
        %1971 = vmatprep.mubr.bf16.mxu0 %v986
        %1972 = vmatmul.mubr.bf16.gmra.mxu0 %v985
        %v1973 = vpop.f32.mrf.mxu0
        %v1974 = vadd.f32 0.0, %v1973
        %v1975 = vpop.f32.mrf.mxu0
        %v1976 = vadd.f32 0.0, %v1975
        %v1977 = vpop.f32.mrf.mxu0
        %v1978 = vadd.f32 0.0, %v1977
        %v1979 = vpop.f32.mrf.mxu0
        %v1980 = vadd.f32 0.0, %v1979
        %1981 = vmatprep.mubr.bf16.mxu0 %v988
        %1982 = vmatmul.mubr.bf16.gmra.mxu0 %v987
        %v1983 = vpop.f32.mrf.mxu0
        %v1984 = vadd.f32 0.0, %v1983
        %v1985 = vpop.f32.mrf.mxu0
        %v1986 = vadd.f32 0.0, %v1985
        %v1987 = vpop.f32.mrf.mxu0
        %v1988 = vadd.f32 0.0, %v1987
        %v1989 = vpop.f32.mrf.mxu0
        %v1990 = vadd.f32 0.0, %v1989
        %1991 = vmatprep.mubr.bf16.mxu0 %v990
        %1992 = vmatmul.mubr.bf16.gmra.mxu0 %v989
        %v1993 = vpop.f32.mrf.mxu0
        %v1994 = vadd.f32 0.0, %v1993
        %v1995 = vpop.f32.mrf.mxu0
        %v1996 = vadd.f32 0.0, %v1995
        %v1997 = vpop.f32.mrf.mxu0
        %v1998 = vadd.f32 0.0, %v1997
        %v1999 = vpop.f32.mrf.mxu0
        %v2000 = vadd.f32 0.0, %v1999
        %2001 = vmatprep.mubr.bf16.mxu0 %v992
        %2002 = vmatmul.mubr.bf16.gmra.mxu0 %v991
        %v2003 = vpop.f32.mrf.mxu0
        %v2004 = vadd.f32 0.0, %v2003
        %v2005 = vpop.f32.mrf.mxu0
        %v2006 = vadd.f32 0.0, %v2005
        %v2007 = vpop.f32.mrf.mxu0
        %v2008 = vadd.f32 0.0, %v2007
        %v2009 = vpop.f32.mrf.mxu0
        %v2010 = vadd.f32 0.0, %v2009
        %2011 = vmatprep.mubr.bf16.mxu0 %v994
        %2012 = vmatmul.mubr.bf16.gmra.mxu0 %v993
        %v2013 = vpop.f32.mrf.mxu0
        %v2014 = vadd.f32 0.0, %v2013
        %v2015 = vpop.f32.mrf.mxu0
        %v2016 = vadd.f32 0.0, %v2015
        %v2017 = vpop.f32.mrf.mxu0
        %v2018 = vadd.f32 0.0, %v2017
        %v2019 = vpop.f32.mrf.mxu0
        %v2020 = vadd.f32 0.0, %v2019
        %2021 = vmatprep.mubr.bf16.mxu0 %v996
        %2022 = vmatmul.mubr.bf16.gmra.mxu0 %v995
        %v2023 = vpop.f32.mrf.mxu0
        %v2024 = vadd.f32 0.0, %v2023
        %v2025 = vpop.f32.mrf.mxu0
        %v2026 = vadd.f32 0.0, %v2025
        %v2027 = vpop.f32.mrf.mxu0
        %v2028 = vadd.f32 0.0, %v2027
        %v2029 = vpop.f32.mrf.mxu0
        %v2030 = vadd.f32 0.0, %v2029
        %2031 = vmatprep.mubr.bf16.mxu0 %v998
        %2032 = vmatmul.mubr.bf16.gmra.mxu0 %v997
        %v2033 = vpop.f32.mrf.mxu0
        %v2034 = vadd.f32 0.0, %v2033
        %v2035 = vpop.f32.mrf.mxu0
        %v2036 = vadd.f32 0.0, %v2035
        %v2037 = vpop.f32.mrf.mxu0
        %v2038 = vadd.f32 0.0, %v2037
        %v2039 = vpop.f32.mrf.mxu0
        %v2040 = vadd.f32 0.0, %v2039
        %2041 = vmatprep.mubr.bf16.mxu0 %v1000
        %2042 = vmatmul.mubr.bf16.gmra.mxu0 %v999
        %v2043 = vpop.f32.mrf.mxu0
        %v2044 = vadd.f32 0.0, %v2043
        %v2045 = vpop.f32.mrf.mxu0
        %v2046 = vadd.f32 0.0, %v2045
        %v2047 = vpop.f32.mrf.mxu0
        %v2048 = vadd.f32 0.0, %v2047
        %v2049 = vpop.f32.mrf.mxu0
        %v2050 = vadd.f32 0.0, %v2049
        %2051 = vdwg.mxu0
        %v2052 = vpack.c.bf16 %v1865, %v1861
        %v2053 = vpack.c.bf16 %v1867, %v1863
        %v2054 = vpack.c.bf16 %v1978, %v1974
        %v2055 = vpack.c.bf16 %v1980, %v1976
        %v2056 = vpack.c.bf16 %v1875, %v1871
        %v2057 = vpack.c.bf16 %v1877, %v1873
        %v2058 = vpack.c.bf16 %v1988, %v1984
        %v2059 = vpack.c.bf16 %v1990, %v1986
        %v2060 = vpack.c.bf16 %v1885, %v1881
        %v2061 = vpack.c.bf16 %v1887, %v1883
        %v2062 = vpack.c.bf16 %v1998, %v1994
        %v2063 = vpack.c.bf16 %v2000, %v1996
        %v2064 = vpack.c.bf16 %v1895, %v1891
        %v2065 = vpack.c.bf16 %v1897, %v1893
        %v2066 = vpack.c.bf16 %v2008, %v2004
        %v2067 = vpack.c.bf16 %v2010, %v2006
        %v2068 = vpack.c.bf16 %v1905, %v1901
        %v2069 = vpack.c.bf16 %v1907, %v1903
        %v2070 = vpack.c.bf16 %v2018, %v2014
        %v2071 = vpack.c.bf16 %v2020, %v2016
        %v2072 = vpack.c.bf16 %v1915, %v1911
        %v2073 = vpack.c.bf16 %v1917, %v1913
        %v2074 = vpack.c.bf16 %v2028, %v2024
        %v2075 = vpack.c.bf16 %v2030, %v2026
        %v2076 = vpack.c.bf16 %v1925, %v1921
        %v2077 = vpack.c.bf16 %v1927, %v1923
        %v2078 = vpack.c.bf16 %v2038, %v2034
        %v2079 = vpack.c.bf16 %v2040, %v2036
        %v2080 = vpack.c.bf16 %v1935, %v1931
        %v2081 = vpack.c.bf16 %v1937, %v1933
        %v2082 = vpack.c.bf16 %v2048, %v2044
        %v2083 = vpack.c.bf16 %v2050, %v2046
        %v2084 = vld [vmem:[%s515] sm:$0xf]
        %v2085 = vld [vmem:[%s515 + $0x4] sm:$0xf]
        %v2086 = vld [vmem:[%s515 + $0x8] sm:$0xf]
        %v2087 = vld [vmem:[%s515 + $0xc] sm:$0xf]
        %v2088 = vld [vmem:[%s515 + $0x10] sm:$0xf]
        %v2089 = vld [vmem:[%s515 + $0x14] sm:$0xf]
        %v2090 = vld [vmem:[%s515 + $0x18] sm:$0xf]
        %v2091 = vld [vmem:[%s515 + $0x1c] sm:$0xf]
        %v2092 = vunpack.c.l.bf16 %v2084
        %v2093 = vunpack.c.l.bf16 %v2085
        %v2094 = vunpack.c.l.bf16 %v2086
        %v2095 = vunpack.c.l.bf16 %v2087
        %v2096 = vunpack.c.l.bf16 %v2088
        %v2097 = vunpack.c.l.bf16 %v2089
        %v2098 = vunpack.c.l.bf16 %v2090
        %v2099 = vunpack.c.l.bf16 %v2091
        %vm2100 = vcmp.eq.f32.partialorder %v2092, 0.0
        %vm2101 = vcmp.eq.f32.partialorder %v2093, 0.0
        %vm2102 = vcmp.eq.f32.partialorder %v2094, 0.0
        %vm2103 = vcmp.eq.f32.partialorder %v2095, 0.0
        %vm2104 = vcmp.eq.f32.partialorder %v2096, 0.0
        %vm2105 = vcmp.eq.f32.partialorder %v2097, 0.0
        %vm2106 = vcmp.eq.f32.partialorder %v2098, 0.0
        %vm2107 = vcmp.eq.f32.partialorder %v2099, 0.0
        %v2108 = vsel %vm2100, -1e+09, 0.0
        %v2109 = vsel %vm2101, -1e+09, 0.0
        %v2110 = vsel %vm2102, -1e+09, 0.0
        %v2111 = vsel %vm2103, -1e+09, 0.0
        %v2112 = vsel %vm2104, -1e+09, 0.0
        %v2113 = vsel %vm2105, -1e+09, 0.0
        %v2114 = vsel %vm2106, -1e+09, 0.0
        %v2115 = vsel %vm2107, -1e+09, 0.0
        %2116 = vmatprep.subr.bf16.mxu0 0
        %2117 = vmatpush1.bf16.xpose.msra.mxu0 %v2080
        %2118 = vmatprep.subr.bf16.mxu0 0
        %2119 = vmatpush1.bf16.xpose.msra.mxu0 %v2076
        %2120 = vmatprep.subr.bf16.mxu0 0
        %2121 = vmatpush1.bf16.xpose.msra.mxu0 %v2072
        %2122 = vmatprep.subr.bf16.mxu0 0
        %2123 = vmatpush1.bf16.xpose.msra.mxu0 %v2068
        %2124 = vmatprep.subr.bf16.mxu0 0
        %2125 = vmatpush1.bf16.xpose.msra.mxu0 %v2064
        %2126 = vmatprep.subr.bf16.mxu0 0
        %2127 = vmatpush1.bf16.xpose.msra.mxu0 %v2060
        %2128 = vmatprep.subr.bf16.mxu0 0
        %2129 = vmatpush1.bf16.xpose.msra.mxu0 %v2056
        %2130 = vmatprep.subr.bf16.mxu0 0
        %2131 = vmatpush1.bf16.xpose.msra.mxu0 %v2052
        %2132 = vmatprep.subr.bf16.mxu0 0
        %2133 = vmatpush2.bf16.xpose.msra.mxu0 0
        %2134 = vmatprep.subr.bf16.mxu0 0
        %2135 = vmatpush2.bf16.xpose.msra.mxu0 0
        %2136 = vmatprep.subr.bf16.mxu0 0
        %2137 = vmatpush2.bf16.xpose.msra.mxu0 0
        %2138 = vmatprep.subr.bf16.mxu0 0
        %2139 = vmatpush2.bf16.xpose.msra.mxu0 0
        %2140 = vmatprep.subr.bf16.mxu0 0
        %2141 = vmatpush2.bf16.xpose.msra.mxu0 0
        %2142 = vmatprep.subr.bf16.mxu0 0
        %2143 = vmatpush2.bf16.xpose.msra.mxu0 0
        %2144 = vmatprep.subr.bf16.mxu0 0
        %2145 = vmatpush2.bf16.xpose.msra.mxu0 0
        %2146 = vmatprep.subr.bf16.mxu0 0
        %2147 = vmatpush2.bf16.xpose.msra.mxu0 0
        %2148 = vmatprep.mubr.bf16.mxu0 0
        %2149 = vmatmul.mubr.bf16.gmra.mxu0 %v1434
        %v2150 = vpop.f32.mrf.mxu0
        %v2151 = vadd.f32 %v2108, %v2150
        %v2152 = vpop.f32.mrf.mxu0
        %v2153 = vpop.f32.mrf.mxu0
        %v2154 = vadd.f32 %v2109, %v2153
        %v2155 = vpop.f32.mrf.mxu0
        %2156 = vmatprep.mubr.bf16.mxu0 0
        %2157 = vmatmul.mubr.bf16.gmra.mxu0 %v1436
        %v2158 = vpop.f32.mrf.mxu0
        %v2159 = vadd.f32 %v2110, %v2158
        %v2160 = vpop.f32.mrf.mxu0
        %v2161 = vpop.f32.mrf.mxu0
        %v2162 = vadd.f32 %v2111, %v2161
        %v2163 = vpop.f32.mrf.mxu0
        %2164 = vmatprep.mubr.bf16.mxu0 0
        %2165 = vmatmul.mubr.bf16.gmra.mxu0 %v1438
        %v2166 = vpop.f32.mrf.mxu0
        %v2167 = vadd.f32 %v2112, %v2166
        %v2168 = vpop.f32.mrf.mxu0
        %v2169 = vpop.f32.mrf.mxu0
        %v2170 = vadd.f32 %v2113, %v2169
        %v2171 = vpop.f32.mrf.mxu0
        %2172 = vmatprep.mubr.bf16.mxu0 0
        %2173 = vmatmul.mubr.bf16.gmra.mxu0 %v1440
        %v2174 = vpop.f32.mrf.mxu0
        %v2175 = vadd.f32 %v2114, %v2174
        %v2176 = vpop.f32.mrf.mxu0
        %v2177 = vpop.f32.mrf.mxu0
        %v2178 = vadd.f32 %v2115, %v2177
        %v2179 = vpop.f32.mrf.mxu0
        %2180 = vdwg.mxu0
        %2181 = vmax.xlane.f32.xlu0 %v2151
        %v2182 = vpop.xlane.xlu0 %2181
        %2183 = vmax.xlane.f32.xlu0 %v2154
        %v2184 = vpop.xlane.xlu0 %2183
        %2185 = vmax.xlane.f32.xlu0 %v2159
        %v2186 = vpop.xlane.xlu0 %2185
        %2187 = vmax.xlane.f32.xlu0 %v2162
        %v2188 = vpop.xlane.xlu0 %2187
        %2189 = vmax.xlane.f32.xlu0 %v2167
        %v2190 = vpop.xlane.xlu0 %2189
        %2191 = vmax.xlane.f32.xlu0 %v2170
        %v2192 = vpop.xlane.xlu0 %2191
        %2193 = vmax.xlane.f32.xlu0 %v2175
        %v2194 = vpop.xlane.xlu0 %2193
        %2195 = vmax.xlane.f32.xlu0 %v2178
        %v2196 = vpop.xlane.xlu0 %2195
        %v2197 = vsub.f32 %v2151, %v2182
        %v2198 = vsub.f32 %v2154, %v2184
        %v2199 = vsub.f32 %v2159, %v2186
        %v2200 = vsub.f32 %v2162, %v2188
        %v2201 = vsub.f32 %v2167, %v2190
        %v2202 = vsub.f32 %v2170, %v2192
        %v2203 = vsub.f32 %v2175, %v2194
        %v2204 = vsub.f32 %v2178, %v2196
        %v2205 = vmul.f32 %v2197, 1.442695
        %v2206 = vpow.pop %v2205
        %v2207 = vmul.f32 %v2198, 1.442695
        %v2208 = vpow.pop %v2207
        %v2209 = vmul.f32 %v2199, 1.442695
        %v2210 = vpow.pop %v2209
        %v2211 = vmul.f32 %v2200, 1.442695
        %v2212 = vpow.pop %v2211
        %v2213 = vmul.f32 %v2201, 1.442695
        %v2214 = vpow.pop %v2213
        %v2215 = vmul.f32 %v2202, 1.442695
        %v2216 = vpow.pop %v2215
        %v2217 = vmul.f32 %v2203, 1.442695
        %v2218 = vpow.pop %v2217
        %v2219 = vmul.f32 %v2204, 1.442695
        %v2220 = vpow.pop %v2219
        %2221 = vadd.xlane.f32.xlu0 %v2206
        %v2222 = vpop.xlane.xlu0 %2221
        %2223 = vadd.xlane.f32.xlu0 %v2208
        %v2224 = vpop.xlane.xlu0 %2223
        %2225 = vadd.xlane.f32.xlu0 %v2210
        %v2226 = vpop.xlane.xlu0 %2225
        %2227 = vadd.xlane.f32.xlu0 %v2212
        %v2228 = vpop.xlane.xlu0 %2227
        %2229 = vadd.xlane.f32.xlu0 %v2214
        %v2230 = vpop.xlane.xlu0 %2229
        %2231 = vadd.xlane.f32.xlu0 %v2216
        %v2232 = vpop.xlane.xlu0 %2231
        %2233 = vadd.xlane.f32.xlu0 %v2218
        %v2234 = vpop.xlane.xlu0 %2233
        %2235 = vadd.xlane.f32.xlu0 %v2220
        %v2236 = vpop.xlane.xlu0 %2235
        %v2237 = vrcp.pop %v2222
        %v2238 = vmul.f32 1.0, %v2237
        %v2239 = vrcp.pop %v2224
        %v2240 = vmul.f32 1.0, %v2239
        %v2241 = vrcp.pop %v2226
        %v2242 = vmul.f32 1.0, %v2241
        %v2243 = vrcp.pop %v2228
        %v2244 = vmul.f32 1.0, %v2243
        %v2245 = vrcp.pop %v2230
        %v2246 = vmul.f32 1.0, %v2245
        %v2247 = vrcp.pop %v2232
        %v2248 = vmul.f32 1.0, %v2247
        %v2249 = vrcp.pop %v2234
        %v2250 = vmul.f32 1.0, %v2249
        %v2251 = vrcp.pop %v2236
        %v2252 = vmul.f32 1.0, %v2251
        %v2253 = vmul.f32 %v2206, %v2238
        %v2254 = vmul.f32 %v2208, %v2240
        %v2255 = vmul.f32 %v2210, %v2242
        %v2256 = vmul.f32 %v2212, %v2244
        %v2257 = vmul.f32 %v2214, %v2246
        %v2258 = vmul.f32 %v2216, %v2248
        %v2259 = vmul.f32 %v2218, %v2250
        %v2260 = vmul.f32 %v2220, %v2252
        %v2261 = vpack.c.bf16 %v2254, %v2253
        %v2262 = vpack.c.bf16 %v2256, %v2255
        %v2263 = vpack.c.bf16 %v2258, %v2257
        %v2264 = vpack.c.bf16 %v2260, %v2259
        %2265 = vmatprep.subr.bf16.mxu0 0
        %2266 = vmatpush1.bf16.msra.mxu0 %v2082
        %2267 = vmatprep.subr.bf16.mxu0 0
        %2268 = vmatpush1.bf16.msra.mxu0 %v2078
        %2269 = vmatprep.subr.bf16.mxu0 0
        %2270 = vmatpush1.bf16.msra.mxu0 %v2074
        %2271 = vmatprep.subr.bf16.mxu0 0
        %2272 = vmatpush1.bf16.msra.mxu0 %v2070
        %2273 = vmatprep.subr.bf16.mxu0 0
        %2274 = vmatpush1.bf16.msra.mxu0 %v2066
        %2275 = vmatprep.subr.bf16.mxu0 0
        %2276 = vmatpush1.bf16.msra.mxu0 %v2062
        %2277 = vmatprep.subr.bf16.mxu0 0
        %2278 = vmatpush1.bf16.msra.mxu0 %v2058
        %2279 = vmatprep.subr.bf16.mxu0 0
        %2280 = vmatpush1.bf16.msra.mxu0 %v2054
        %2281 = vmatprep.subr.bf16.mxu0 0
        %2282 = vmatpush2.bf16.msra.mxu0 0
        %2283 = vmatprep.subr.bf16.mxu0 0
        %2284 = vmatpush2.bf16.msra.mxu0 0
        %2285 = vmatprep.subr.bf16.mxu0 0
        %2286 = vmatpush2.bf16.msra.mxu0 0
        %2287 = vmatprep.subr.bf16.mxu0 0
        %2288 = vmatpush2.bf16.msra.mxu0 0
        %2289 = vmatprep.subr.bf16.mxu0 0
        %2290 = vmatpush2.bf16.msra.mxu0 0
        %2291 = vmatprep.subr.bf16.mxu0 0
        %2292 = vmatpush2.bf16.msra.mxu0 0
        %2293 = vmatprep.subr.bf16.mxu0 0
        %2294 = vmatpush2.bf16.msra.mxu0 0
        %2295 = vmatprep.subr.bf16.mxu0 0
        %2296 = vmatpush2.bf16.msra.mxu0 0
        %2297 = vmatprep.mubr.bf16.mxu0 0
        %2298 = vmatmul.mubr.bf16.gmra.mxu0 %v2261
        %v2299 = vpop.f32.mrf.mxu0
        %v2300 = vadd.f32 0.0, %v2299
        %v2301 = vpop.f32.mrf.mxu0
        %v2302 = vpop.f32.mrf.mxu0
        %v2303 = vadd.f32 0.0, %v2302
        %v2304 = vpop.f32.mrf.mxu0
        %2305 = vmatprep.mubr.bf16.mxu0 0
        %2306 = vmatmul.mubr.bf16.gmra.mxu0 %v2262
        %v2307 = vpop.f32.mrf.mxu0
        %v2308 = vadd.f32 0.0, %v2307
        %v2309 = vpop.f32.mrf.mxu0
        %v2310 = vpop.f32.mrf.mxu0
        %v2311 = vadd.f32 0.0, %v2310
        %v2312 = vpop.f32.mrf.mxu0
        %2313 = vmatprep.mubr.bf16.mxu0 0
        %2314 = vmatmul.mubr.bf16.gmra.mxu0 %v2263
        %v2315 = vpop.f32.mrf.mxu0
        %v2316 = vadd.f32 0.0, %v2315
        %v2317 = vpop.f32.mrf.mxu0
        %v2318 = vpop.f32.mrf.mxu0
        %v2319 = vadd.f32 0.0, %v2318
        %v2320 = vpop.f32.mrf.mxu0
        %2321 = vmatprep.mubr.bf16.mxu0 0
        %2322 = vmatmul.mubr.bf16.gmra.mxu0 %v2264
        %v2323 = vpop.f32.mrf.mxu0
        %v2324 = vadd.f32 0.0, %v2323
        %v2325 = vpop.f32.mrf.mxu0
        %v2326 = vpop.f32.mrf.mxu0
        %v2327 = vadd.f32 0.0, %v2326
        %v2328 = vpop.f32.mrf.mxu0
        %2329 = vdwg.mxu0
        %v2330 = vpack.c.bf16 %v2303, %v2300
        %v2331 = vpack.c.bf16 %v2311, %v2308
        %v2332 = vpack.c.bf16 %v2319, %v2316
        %v2333 = vpack.c.bf16 %v2327, %v2324
        %v2334 = vld [vmem:[#allocation10] sm:$0xff]
        %v2335 = vld [vmem:[#allocation10 + $0x8] sm:$0xff]
        %v2336 = vld [vmem:[#allocation10 + $0x10] sm:$0xff]
        %v2337 = vld [vmem:[#allocation10 + $0x18] sm:$0xff]
        %v2338 = vld [vmem:[#allocation10 + $0x20] sm:$0xff]
        %v2339 = vld [vmem:[#allocation10 + $0x28] sm:$0xff]
        %v2340 = vld [vmem:[#allocation10 + $0x30] sm:$0xff]
        %v2341 = vld [vmem:[#allocation10 + $0x38] sm:$0xff]
        %v2342 = vld [vmem:[#allocation10 + $0x40] sm:$0xff]
        %v2343 = vld [vmem:[#allocation10 + $0x48] sm:$0xff]
        %v2344 = vld [vmem:[#allocation10 + $0x50] sm:$0xff]
        %v2345 = vld [vmem:[#allocation10 + $0x58] sm:$0xff]
        %v2346 = vld [vmem:[#allocation10 + $0x60] sm:$0xff]
        %v2347 = vld [vmem:[#allocation10 + $0x68] sm:$0xff]
        %v2348 = vld [vmem:[#allocation10 + $0x70] sm:$0xff]
        %v2349 = vld [vmem:[#allocation10 + $0x78] sm:$0xff]
        %2350 = vmatprep.subr.bf16.mxu0 0
        %2351 = vmatpush1.bf16.xpose.msra.mxu0 %v2081
        %2352 = vmatprep.subr.bf16.mxu0 0
        %2353 = vmatpush1.bf16.xpose.msra.mxu0 %v2077
        %2354 = vmatprep.subr.bf16.mxu0 0
        %2355 = vmatpush1.bf16.xpose.msra.mxu0 %v2073
        %2356 = vmatprep.subr.bf16.mxu0 0
        %2357 = vmatpush1.bf16.xpose.msra.mxu0 %v2069
        %2358 = vmatprep.subr.bf16.mxu0 0
        %2359 = vmatpush1.bf16.xpose.msra.mxu0 %v2065
        %2360 = vmatprep.subr.bf16.mxu0 0
        %2361 = vmatpush1.bf16.xpose.msra.mxu0 %v2061
        %2362 = vmatprep.subr.bf16.mxu0 0
        %2363 = vmatpush1.bf16.xpose.msra.mxu0 %v2057
        %2364 = vmatprep.subr.bf16.mxu0 0
        %2365 = vmatpush1.bf16.xpose.msra.mxu0 %v2053
        %2366 = vmatprep.subr.bf16.mxu0 0
        %2367 = vmatpush2.bf16.xpose.msra.mxu0 0
        %2368 = vmatprep.subr.bf16.mxu0 0
        %2369 = vmatpush2.bf16.xpose.msra.mxu0 0
        %2370 = vmatprep.subr.bf16.mxu0 0
        %2371 = vmatpush2.bf16.xpose.msra.mxu0 0
        %2372 = vmatprep.subr.bf16.mxu0 0
        %2373 = vmatpush2.bf16.xpose.msra.mxu0 0
        %2374 = vmatprep.subr.bf16.mxu0 0
        %2375 = vmatpush2.bf16.xpose.msra.mxu0 0
        %2376 = vmatprep.subr.bf16.mxu0 0
        %2377 = vmatpush2.bf16.xpose.msra.mxu0 0
        %2378 = vmatprep.subr.bf16.mxu0 0
        %2379 = vmatpush2.bf16.xpose.msra.mxu0 0
        %2380 = vmatprep.subr.bf16.mxu0 0
        %2381 = vmatpush2.bf16.xpose.msra.mxu0 0
        %2382 = vmatprep.mubr.bf16.mxu0 0
        %2383 = vmatmul.mubr.bf16.gmra.mxu0 %v1435
        %v2384 = vpop.f32.mrf.mxu0
        %v2385 = vadd.f32 %v2108, %v2384
        %v2386 = vpop.f32.mrf.mxu0
        %v2387 = vpop.f32.mrf.mxu0
        %v2388 = vadd.f32 %v2109, %v2387
        %v2389 = vpop.f32.mrf.mxu0
        %2390 = vmatprep.mubr.bf16.mxu0 0
        %2391 = vmatmul.mubr.bf16.gmra.mxu0 %v1437
        %v2392 = vpop.f32.mrf.mxu0
        %v2393 = vadd.f32 %v2110, %v2392
        %v2394 = vpop.f32.mrf.mxu0
        %v2395 = vpop.f32.mrf.mxu0
        %v2396 = vadd.f32 %v2111, %v2395
        %v2397 = vpop.f32.mrf.mxu0
        %2398 = vmatprep.mubr.bf16.mxu0 0
        %2399 = vmatmul.mubr.bf16.gmra.mxu0 %v1439
        %v2400 = vpop.f32.mrf.mxu0
        %v2401 = vadd.f32 %v2112, %v2400
        %v2402 = vpop.f32.mrf.mxu0
        %v2403 = vpop.f32.mrf.mxu0
        %v2404 = vadd.f32 %v2113, %v2403
        %v2405 = vpop.f32.mrf.mxu0
        %2406 = vmatprep.mubr.bf16.mxu0 0
        %2407 = vmatmul.mubr.bf16.gmra.mxu0 %v1441
        %v2408 = vpop.f32.mrf.mxu0
        %v2409 = vadd.f32 %v2114, %v2408
        %v2410 = vpop.f32.mrf.mxu0
        %v2411 = vpop.f32.mrf.mxu0
        %v2412 = vadd.f32 %v2115, %v2411
        %v2413 = vpop.f32.mrf.mxu0
        %2414 = vdwg.mxu0
        %2415 = vmax.xlane.f32.xlu0 %v2385
        %v2416 = vpop.xlane.xlu0 %2415
        %2417 = vmax.xlane.f32.xlu0 %v2388
        %v2418 = vpop.xlane.xlu0 %2417
        %2419 = vmax.xlane.f32.xlu0 %v2393
        %v2420 = vpop.xlane.xlu0 %2419
        %2421 = vmax.xlane.f32.xlu0 %v2396
        %v2422 = vpop.xlane.xlu0 %2421
        %2423 = vmax.xlane.f32.xlu0 %v2401
        %v2424 = vpop.xlane.xlu0 %2423
        %2425 = vmax.xlane.f32.xlu0 %v2404
        %v2426 = vpop.xlane.xlu0 %2425
        %2427 = vmax.xlane.f32.xlu0 %v2409
        %v2428 = vpop.xlane.xlu0 %2427
        %2429 = vmax.xlane.f32.xlu0 %v2412
        %v2430 = vpop.xlane.xlu0 %2429
        %v2431 = vsub.f32 %v2385, %v2416
        %v2432 = vsub.f32 %v2388, %v2418
        %v2433 = vsub.f32 %v2393, %v2420
        %v2434 = vsub.f32 %v2396, %v2422
        %v2435 = vsub.f32 %v2401, %v2424
        %v2436 = vsub.f32 %v2404, %v2426
        %v2437 = vsub.f32 %v2409, %v2428
        %v2438 = vsub.f32 %v2412, %v2430
        %v2439 = vmul.f32 %v2431, 1.442695
        %v2440 = vpow.pop %v2439
        %v2441 = vmul.f32 %v2432, 1.442695
        %v2442 = vpow.pop %v2441
        %v2443 = vmul.f32 %v2433, 1.442695
        %v2444 = vpow.pop %v2443
        %v2445 = vmul.f32 %v2434, 1.442695
        %v2446 = vpow.pop %v2445
        %v2447 = vmul.f32 %v2435, 1.442695
        %v2448 = vpow.pop %v2447
        %v2449 = vmul.f32 %v2436, 1.442695
        %v2450 = vpow.pop %v2449
        %v2451 = vmul.f32 %v2437, 1.442695
        %v2452 = vpow.pop %v2451
        %v2453 = vmul.f32 %v2438, 1.442695
        %v2454 = vpow.pop %v2453
        %2455 = vadd.xlane.f32.xlu0 %v2440
        %v2456 = vpop.xlane.xlu0 %2455
        %2457 = vadd.xlane.f32.xlu0 %v2442
        %v2458 = vpop.xlane.xlu0 %2457
        %2459 = vadd.xlane.f32.xlu0 %v2444
        %v2460 = vpop.xlane.xlu0 %2459
        %2461 = vadd.xlane.f32.xlu0 %v2446
        %v2462 = vpop.xlane.xlu0 %2461
        %2463 = vadd.xlane.f32.xlu0 %v2448
        %v2464 = vpop.xlane.xlu0 %2463
        %2465 = vadd.xlane.f32.xlu0 %v2450
        %v2466 = vpop.xlane.xlu0 %2465
        %2467 = vadd.xlane.f32.xlu0 %v2452
        %v2468 = vpop.xlane.xlu0 %2467
        %2469 = vadd.xlane.f32.xlu0 %v2454
        %v2470 = vpop.xlane.xlu0 %2469
        %v2471 = vrcp.pop %v2456
        %v2472 = vmul.f32 1.0, %v2471
        %v2473 = vrcp.pop %v2458
        %v2474 = vmul.f32 1.0, %v2473
        %v2475 = vrcp.pop %v2460
        %v2476 = vmul.f32 1.0, %v2475
        %v2477 = vrcp.pop %v2462
        %v2478 = vmul.f32 1.0, %v2477
        %v2479 = vrcp.pop %v2464
        %v2480 = vmul.f32 1.0, %v2479
        %v2481 = vrcp.pop %v2466
        %v2482 = vmul.f32 1.0, %v2481
        %v2483 = vrcp.pop %v2468
        %v2484 = vmul.f32 1.0, %v2483
        %v2485 = vrcp.pop %v2470
        %v2486 = vmul.f32 1.0, %v2485
        %v2487 = vmul.f32 %v2440, %v2472
        %v2488 = vmul.f32 %v2442, %v2474
        %v2489 = vmul.f32 %v2444, %v2476
        %v2490 = vmul.f32 %v2446, %v2478
        %v2491 = vmul.f32 %v2448, %v2480
        %v2492 = vmul.f32 %v2450, %v2482
        %v2493 = vmul.f32 %v2452, %v2484
        %v2494 = vmul.f32 %v2454, %v2486
        %v2495 = vpack.c.bf16 %v2488, %v2487
        %v2496 = vpack.c.bf16 %v2490, %v2489
        %v2497 = vpack.c.bf16 %v2492, %v2491
        %v2498 = vpack.c.bf16 %v2494, %v2493
        %2499 = vmatprep.subr.bf16.mxu0 0
        %2500 = vmatpush1.bf16.msra.mxu0 %v2083
        %2501 = vmatprep.subr.bf16.mxu0 0
        %2502 = vmatpush1.bf16.msra.mxu0 %v2079
        %2503 = vmatprep.subr.bf16.mxu0 0
        %2504 = vmatpush1.bf16.msra.mxu0 %v2075
        %2505 = vmatprep.subr.bf16.mxu0 0
        %2506 = vmatpush1.bf16.msra.mxu0 %v2071
        %2507 = vmatprep.subr.bf16.mxu0 0
        %2508 = vmatpush1.bf16.msra.mxu0 %v2067
        %2509 = vmatprep.subr.bf16.mxu0 0
        %2510 = vmatpush1.bf16.msra.mxu0 %v2063
        %2511 = vmatprep.subr.bf16.mxu0 0
        %2512 = vmatpush1.bf16.msra.mxu0 %v2059
        %2513 = vmatprep.subr.bf16.mxu0 0
        %2514 = vmatpush1.bf16.msra.mxu0 %v2055
        %2515 = vmatprep.subr.bf16.mxu0 0
        %2516 = vmatpush2.bf16.msra.mxu0 0
        %2517 = vmatprep.subr.bf16.mxu0 0
        %2518 = vmatpush2.bf16.msra.mxu0 0
        %2519 = vmatprep.subr.bf16.mxu0 0
        %2520 = vmatpush2.bf16.msra.mxu0 0
        %2521 = vmatprep.subr.bf16.mxu0 0
        %2522 = vmatpush2.bf16.msra.mxu0 0
        %2523 = vmatprep.subr.bf16.mxu0 0
        %2524 = vmatpush2.bf16.msra.mxu0 0
        %2525 = vmatprep.subr.bf16.mxu0 0
        %2526 = vmatpush2.bf16.msra.mxu0 0
        %2527 = vmatprep.subr.bf16.mxu0 0
        %2528 = vmatpush2.bf16.msra.mxu0 0
        %2529 = vmatprep.subr.bf16.mxu0 0
        %2530 = vmatpush2.bf16.msra.mxu0 0
        %2531 = vmatprep.mubr.bf16.mxu0 0
        %2532 = vmatmul.mubr.bf16.gmra.mxu0 %v2495
        %v2533 = vpop.f32.mrf.mxu0
        %v2534 = vadd.f32 0.0, %v2533
        %v2535 = vpop.f32.mrf.mxu0
        %v2536 = vpop.f32.mrf.mxu0
        %v2537 = vadd.f32 0.0, %v2536
        %v2538 = vpop.f32.mrf.mxu0
        %2539 = vmatprep.mubr.bf16.mxu0 0
        %2540 = vmatmul.mubr.bf16.gmra.mxu0 %v2496
        %v2541 = vpop.f32.mrf.mxu0
        %v2542 = vadd.f32 0.0, %v2541
        %v2543 = vpop.f32.mrf.mxu0
        %v2544 = vpop.f32.mrf.mxu0
        %v2545 = vadd.f32 0.0, %v2544
        %v2546 = vpop.f32.mrf.mxu0
        %2547 = vmatprep.mubr.bf16.mxu0 0
        %2548 = vmatmul.mubr.bf16.gmra.mxu0 %v2497
        %v2549 = vpop.f32.mrf.mxu0
        %v2550 = vadd.f32 0.0, %v2549
        %v2551 = vpop.f32.mrf.mxu0
        %v2552 = vpop.f32.mrf.mxu0
        %v2553 = vadd.f32 0.0, %v2552
        %v2554 = vpop.f32.mrf.mxu0
        %2555 = vmatprep.mubr.bf16.mxu0 0
        %2556 = vmatmul.mubr.bf16.gmra.mxu0 %v2498
        %v2557 = vpop.f32.mrf.mxu0
        %v2558 = vadd.f32 0.0, %v2557
        %v2559 = vpop.f32.mrf.mxu0
        %v2560 = vpop.f32.mrf.mxu0
        %v2561 = vadd.f32 0.0, %v2560
        %v2562 = vpop.f32.mrf.mxu0
        %2563 = vdwg.mxu0
        %v2564 = vpack.c.bf16 %v2537, %v2534
        %v2565 = vpack.c.bf16 %v2545, %v2542
        %v2566 = vpack.c.bf16 %v2553, %v2550
        %v2567 = vpack.c.bf16 %v2561, %v2558
        %v2568 = vld [vmem:[#allocation10 + $0x80] sm:$0xff]
        %v2569 = vld [vmem:[#allocation10 + $0x88] sm:$0xff]
        %v2570 = vld [vmem:[#allocation10 + $0x90] sm:$0xff]
        %v2571 = vld [vmem:[#allocation10 + $0x98] sm:$0xff]
        %v2572 = vld [vmem:[#allocation10 + $0xa0] sm:$0xff]
        %v2573 = vld [vmem:[#allocation10 + $0xa8] sm:$0xff]
        %v2574 = vld [vmem:[#allocation10 + $0xb0] sm:$0xff]
        %v2575 = vld [vmem:[#allocation10 + $0xb8] sm:$0xff]
        %v2576 = vld [vmem:[#allocation10 + $0xc0] sm:$0xff]
        %v2577 = vld [vmem:[#allocation10 + $0xc8] sm:$0xff]
        %v2578 = vld [vmem:[#allocation10 + $0xd0] sm:$0xff]
        %v2579 = vld [vmem:[#allocation10 + $0xd8] sm:$0xff]
        %v2580 = vld [vmem:[#allocation10 + $0xe0] sm:$0xff]
        %v2581 = vld [vmem:[#allocation10 + $0xe8] sm:$0xff]
        %v2582 = vld [vmem:[#allocation10 + $0xf0] sm:$0xff]
        %v2583 = vld [vmem:[#allocation10 + $0xf8] sm:$0xff]
        %v2600 = vunpack.c.l.b16 %v2568
        %v2601 = vunpack.c.h.b16 %v2568
        %v2602 = vunpack.c.l.b16 %v2569
        %v2603 = vunpack.c.h.b16 %v2569
        %v2604 = vunpack.c.l.b16 %v2570
        %v2605 = vunpack.c.h.b16 %v2570
        %v2606 = vunpack.c.l.b16 %v2571
        %v2607 = vunpack.c.h.b16 %v2571
        %v2608 = vunpack.c.l.b16 %v2572
        %v2609 = vunpack.c.h.b16 %v2572
        %v2610 = vunpack.c.l.b16 %v2573
        %v2611 = vunpack.c.h.b16 %v2573
        %v2612 = vunpack.c.l.b16 %v2574
        %v2613 = vunpack.c.h.b16 %v2574
        %v2614 = vunpack.c.l.b16 %v2575
        %v2615 = vunpack.c.h.b16 %v2575
        %v2616 = vunpack.c.l.b16 %v2576
        %v2617 = vunpack.c.h.b16 %v2576
        %v2618 = vunpack.c.l.b16 %v2577
        %v2619 = vunpack.c.h.b16 %v2577
        %v2620 = vunpack.c.l.b16 %v2578
        %v2621 = vunpack.c.h.b16 %v2578
        %v2622 = vunpack.c.l.b16 %v2579
        %v2623 = vunpack.c.h.b16 %v2579
        %v2624 = vunpack.c.l.b16 %v2580
        %v2625 = vunpack.c.h.b16 %v2580
        %v2626 = vunpack.c.l.b16 %v2581
        %v2627 = vunpack.c.h.b16 %v2581
        %v2628 = vunpack.c.l.b16 %v2582
        %v2629 = vunpack.c.h.b16 %v2582
        %v2630 = vunpack.c.l.b16 %v2583
        %v2631 = vunpack.c.h.b16 %v2583
        %v2632 = vpack.c.b16 %v2602, %v2600
        %v2633 = vpack.c.b16 %v2603, %v2601
        %v2634 = vpack.c.b16 %v2606, %v2604
        %v2635 = vpack.c.b16 %v2607, %v2605
        %v2636 = vpack.c.b16 %v2610, %v2608
        %v2637 = vpack.c.b16 %v2611, %v2609
        %v2638 = vpack.c.b16 %v2614, %v2612
        %v2639 = vpack.c.b16 %v2615, %v2613
        %v2640 = vpack.c.b16 %v2618, %v2616
        %v2641 = vpack.c.b16 %v2619, %v2617
        %v2642 = vpack.c.b16 %v2622, %v2620
        %v2643 = vpack.c.b16 %v2623, %v2621
        %v2644 = vpack.c.b16 %v2626, %v2624
        %v2645 = vpack.c.b16 %v2627, %v2625
        %v2646 = vpack.c.b16 %v2630, %v2628
        %v2647 = vpack.c.b16 %v2631, %v2629
        %2664 = vmatprep.subr.bf16.mxu0 %v2647
        %2665 = vmatpush1.bf16.msra.mxu0 %v2646
        %2666 = vmatprep.subr.bf16.mxu0 %v2645
        %2667 = vmatpush1.bf16.msra.mxu0 %v2644
        %2668 = vmatprep.subr.bf16.mxu0 %v2643
        %2669 = vmatpush1.bf16.msra.mxu0 %v2642
        %2670 = vmatprep.subr.bf16.mxu0 %v2641
        %2671 = vmatpush1.bf16.msra.mxu0 %v2640
        %2672 = vmatprep.subr.bf16.mxu0 %v2639
        %2673 = vmatpush1.bf16.msra.mxu0 %v2638
        %2674 = vmatprep.subr.bf16.mxu0 %v2637
        %2675 = vmatpush1.bf16.msra.mxu0 %v2636
        %2676 = vmatprep.subr.bf16.mxu0 %v2635
        %2677 = vmatpush1.bf16.msra.mxu0 %v2634
        %2678 = vmatprep.subr.bf16.mxu0 %v2633
        %2679 = vmatpush1.bf16.msra.mxu0 %v2632
        %2680 = vmatprep.subr.bf16.mxu0 0
        %2681 = vmatpush2.bf16.msra.mxu0 0
        %2682 = vmatprep.subr.bf16.mxu0 0
        %2683 = vmatpush2.bf16.msra.mxu0 0
        %2684 = vmatprep.subr.bf16.mxu0 0
        %2685 = vmatpush2.bf16.msra.mxu0 0
        %2686 = vmatprep.subr.bf16.mxu0 0
        %2687 = vmatpush2.bf16.msra.mxu0 0
        %2688 = vmatprep.subr.bf16.mxu0 0
        %2689 = vmatpush2.bf16.msra.mxu0 0
        %2690 = vmatprep.subr.bf16.mxu0 0
        %2691 = vmatpush2.bf16.msra.mxu0 0
        %2692 = vmatprep.subr.bf16.mxu0 0
        %2693 = vmatpush2.bf16.msra.mxu0 0
        %2694 = vmatprep.subr.bf16.mxu0 0
        %2695 = vmatpush2.bf16.msra.mxu0 0
        %2696 = vmatprep.mubr.bf16.mxu0 0
        %2697 = vmatmul.mubr.bf16.gmra.mxu0 %v2564
        %v2698 = vpop.f32.mrf.mxu0
        %v2699 = vadd.f32 0.0, %v2698
        %v2700 = vpop.f32.mrf.mxu0
        %v2701 = vadd.f32 0.0, %v2700
        %v2702 = vpop.f32.mrf.mxu0
        %v2703 = vadd.f32 0.0, %v2702
        %v2704 = vpop.f32.mrf.mxu0
        %v2705 = vadd.f32 0.0, %v2704
        %2706 = vmatprep.mubr.bf16.mxu0 0
        %2707 = vmatmul.mubr.bf16.gmra.mxu0 %v2565
        %v2708 = vpop.f32.mrf.mxu0
        %v2709 = vadd.f32 0.0, %v2708
        %v2710 = vpop.f32.mrf.mxu0
        %v2711 = vadd.f32 0.0, %v2710
        %v2712 = vpop.f32.mrf.mxu0
        %v2713 = vadd.f32 0.0, %v2712
        %v2714 = vpop.f32.mrf.mxu0
        %v2715 = vadd.f32 0.0, %v2714
        %2716 = vmatprep.mubr.bf16.mxu0 0
        %2717 = vmatmul.mubr.bf16.gmra.mxu0 %v2566
        %v2718 = vpop.f32.mrf.mxu0
        %v2719 = vadd.f32 0.0, %v2718
        %v2720 = vpop.f32.mrf.mxu0
        %v2721 = vadd.f32 0.0, %v2720
        %v2722 = vpop.f32.mrf.mxu0
        %v2723 = vadd.f32 0.0, %v2722
        %v2724 = vpop.f32.mrf.mxu0
        %v2725 = vadd.f32 0.0, %v2724
        %2726 = vmatprep.mubr.bf16.mxu0 0
        %2727 = vmatmul.mubr.bf16.gmra.mxu0 %v2567
        %v2728 = vpop.f32.mrf.mxu0
        %v2729 = vadd.f32 0.0, %v2728
        %v2730 = vpop.f32.mrf.mxu0
        %v2731 = vadd.f32 0.0, %v2730
        %v2732 = vpop.f32.mrf.mxu0
        %v2733 = vadd.f32 0.0, %v2732
        %v2734 = vpop.f32.mrf.mxu0
        %v2735 = vadd.f32 0.0, %v2734
        %2736 = vdwg.mxu0
        %v2753 = vunpack.c.l.b16 %v2334
        %v2754 = vunpack.c.h.b16 %v2334
        %v2755 = vunpack.c.l.b16 %v2335
        %v2756 = vunpack.c.h.b16 %v2335
        %v2757 = vunpack.c.l.b16 %v2336
        %v2758 = vunpack.c.h.b16 %v2336
        %v2759 = vunpack.c.l.b16 %v2337
        %v2760 = vunpack.c.h.b16 %v2337
        %v2761 = vunpack.c.l.b16 %v2338
        %v2762 = vunpack.c.h.b16 %v2338
        %v2763 = vunpack.c.l.b16 %v2339
        %v2764 = vunpack.c.h.b16 %v2339
        %v2765 = vunpack.c.l.b16 %v2340
        %v2766 = vunpack.c.h.b16 %v2340
        %v2767 = vunpack.c.l.b16 %v2341
        %v2768 = vunpack.c.h.b16 %v2341
        %v2769 = vunpack.c.l.b16 %v2342
        %v2770 = vunpack.c.h.b16 %v2342
        %v2771 = vunpack.c.l.b16 %v2343
        %v2772 = vunpack.c.h.b16 %v2343
        %v2773 = vunpack.c.l.b16 %v2344
        %v2774 = vunpack.c.h.b16 %v2344
        %v2775 = vunpack.c.l.b16 %v2345
        %v2776 = vunpack.c.h.b16 %v2345
        %v2777 = vunpack.c.l.b16 %v2346
        %v2778 = vunpack.c.h.b16 %v2346
        %v2779 = vunpack.c.l.b16 %v2347
        %v2780 = vunpack.c.h.b16 %v2347
        %v2781 = vunpack.c.l.b16 %v2348
        %v2782 = vunpack.c.h.b16 %v2348
        %v2783 = vunpack.c.l.b16 %v2349
        %v2784 = vunpack.c.h.b16 %v2349
        %v2785 = vpack.c.b16 %v2755, %v2753
        %v2786 = vpack.c.b16 %v2756, %v2754
        %v2787 = vpack.c.b16 %v2759, %v2757
        %v2788 = vpack.c.b16 %v2760, %v2758
        %v2789 = vpack.c.b16 %v2763, %v2761
        %v2790 = vpack.c.b16 %v2764, %v2762
        %v2791 = vpack.c.b16 %v2767, %v2765
        %v2792 = vpack.c.b16 %v2768, %v2766
        %v2793 = vpack.c.b16 %v2771, %v2769
        %v2794 = vpack.c.b16 %v2772, %v2770
        %v2795 = vpack.c.b16 %v2775, %v2773
        %v2796 = vpack.c.b16 %v2776, %v2774
        %v2797 = vpack.c.b16 %v2779, %v2777
        %v2798 = vpack.c.b16 %v2780, %v2778
        %v2799 = vpack.c.b16 %v2783, %v2781
        %v2800 = vpack.c.b16 %v2784, %v2782
        %2817 = vmatprep.subr.bf16.mxu0 %v2800
        %2818 = vmatpush1.bf16.msra.mxu0 %v2799
        %2819 = vmatprep.subr.bf16.mxu0 %v2798
        %2820 = vmatpush1.bf16.msra.mxu0 %v2797
        %2821 = vmatprep.subr.bf16.mxu0 %v2796
        %2822 = vmatpush1.bf16.msra.mxu0 %v2795
        %2823 = vmatprep.subr.bf16.mxu0 %v2794
        %2824 = vmatpush1.bf16.msra.mxu0 %v2793
        %2825 = vmatprep.subr.bf16.mxu0 %v2792
        %2826 = vmatpush1.bf16.msra.mxu0 %v2791
        %2827 = vmatprep.subr.bf16.mxu0 %v2790
        %2828 = vmatpush1.bf16.msra.mxu0 %v2789
        %2829 = vmatprep.subr.bf16.mxu0 %v2788
        %2830 = vmatpush1.bf16.msra.mxu0 %v2787
        %2831 = vmatprep.subr.bf16.mxu0 %v2786
        %2832 = vmatpush1.bf16.msra.mxu0 %v2785
        %2833 = vmatprep.subr.bf16.mxu0 0
        %2834 = vmatpush2.bf16.msra.mxu0 0
        %2835 = vmatprep.subr.bf16.mxu0 0
        %2836 = vmatpush2.bf16.msra.mxu0 0
        %2837 = vmatprep.subr.bf16.mxu0 0
        %2838 = vmatpush2.bf16.msra.mxu0 0
        %2839 = vmatprep.subr.bf16.mxu0 0
        %2840 = vmatpush2.bf16.msra.mxu0 0
        %2841 = vmatprep.subr.bf16.mxu0 0
        %2842 = vmatpush2.bf16.msra.mxu0 0
        %2843 = vmatprep.subr.bf16.mxu0 0
        %2844 = vmatpush2.bf16.msra.mxu0 0
        %2845 = vmatprep.subr.bf16.mxu0 0
        %2846 = vmatpush2.bf16.msra.mxu0 0
        %2847 = vmatprep.subr.bf16.mxu0 0
        %2848 = vmatpush2.bf16.msra.mxu0 0
        %2849 = vmatprep.mubr.bf16.mxu0 0
        %2850 = vmatmul.mubr.bf16.gmra.mxu0 %v2330
        %v2851 = vpop.f32.mrf.mxu0
        %v2852 = vadd.f32 %v2699, %v2851
        %v2853 = vpop.f32.mrf.mxu0
        %v2854 = vadd.f32 %v2701, %v2853
        %v2855 = vpop.f32.mrf.mxu0
        %v2856 = vadd.f32 %v2703, %v2855
        %v2857 = vpop.f32.mrf.mxu0
        %v2858 = vadd.f32 %v2705, %v2857
        %2859 = vmatprep.mubr.bf16.mxu0 0
        %2860 = vmatmul.mubr.bf16.gmra.mxu0 %v2331
        %v2861 = vpop.f32.mrf.mxu0
        %v2862 = vadd.f32 %v2709, %v2861
        %v2863 = vpop.f32.mrf.mxu0
        %v2864 = vadd.f32 %v2711, %v2863
        %v2865 = vpop.f32.mrf.mxu0
        %v2866 = vadd.f32 %v2713, %v2865
        %v2867 = vpop.f32.mrf.mxu0
        %v2868 = vadd.f32 %v2715, %v2867
        %2869 = vmatprep.mubr.bf16.mxu0 0
        %2870 = vmatmul.mubr.bf16.gmra.mxu0 %v2332
        %v2871 = vpop.f32.mrf.mxu0
        %v2872 = vadd.f32 %v2719, %v2871
        %v2873 = vpop.f32.mrf.mxu0
        %v2874 = vadd.f32 %v2721, %v2873
        %v2875 = vpop.f32.mrf.mxu0
        %v2876 = vadd.f32 %v2723, %v2875
        %v2877 = vpop.f32.mrf.mxu0
        %v2878 = vadd.f32 %v2725, %v2877
        %2879 = vmatprep.mubr.bf16.mxu0 0
        %2880 = vmatmul.mubr.bf16.gmra.mxu0 %v2333
        %v2881 = vpop.f32.mrf.mxu0
        %v2882 = vadd.f32 %v2729, %v2881
        %v2883 = vpop.f32.mrf.mxu0
        %v2884 = vadd.f32 %v2731, %v2883
        %v2885 = vpop.f32.mrf.mxu0
        %v2886 = vadd.f32 %v2733, %v2885
        %v2887 = vpop.f32.mrf.mxu0
        %v2888 = vadd.f32 %v2735, %v2887
        %2889 = vdwg.mxu0
        %v2890 = vadd.f32 %v624, %v2852
        %v2891 = vadd.f32 %v625, %v2854
        %v2892 = vadd.f32 %v626, %v2856
        %v2893 = vadd.f32 %v627, %v2858
        %v2894 = vadd.f32 %v628, %v2862
        %v2895 = vadd.f32 %v629, %v2864
        %v2896 = vadd.f32 %v630, %v2866
        %v2897 = vadd.f32 %v631, %v2868
        %v2898 = vadd.f32 %v632, %v2872
        %v2899 = vadd.f32 %v633, %v2874
        %v2900 = vadd.f32 %v634, %v2876
        %v2901 = vadd.f32 %v635, %v2878
        %v2902 = vadd.f32 %v636, %v2882
        %v2903 = vadd.f32 %v637, %v2884
        %v2904 = vadd.f32 %v638, %v2886
        %v2905 = vadd.f32 %v639, %v2888
        %v2906 = vld [vmem:[%s6] sm:$0x3]
        %v2908 = vlaneseq
        %v2909 = vshrl.u32 %v2908, 7
        %v2910 = vsub.s32 0, %v2909
        %v2911 = vrot.slane %v2906, %v2910
        %v2912 = vlaneseq
        %v2913 = vshrl.u32 %v2912, 7
        %v2914 = vsub.s32 1, %v2913
        %v2915 = vrot.slane %v2906, %v2914
        %v2918 = vadd.f32 %v2890, %v2911
        %v2919 = vadd.f32 %v2891, %v2915
        %v2920 = vadd.f32 %v2892, %v2911
        %v2921 = vadd.f32 %v2893, %v2915
        %v2922 = vadd.f32 %v2894, %v2911
        %v2923 = vadd.f32 %v2895, %v2915
        %v2924 = vadd.f32 %v2896, %v2911
        %v2925 = vadd.f32 %v2897, %v2915
        %v2926 = vadd.f32 %v2898, %v2911
        %v2927 = vadd.f32 %v2899, %v2915
        %v2928 = vadd.f32 %v2900, %v2911
        %v2929 = vadd.f32 %v2901, %v2915
        %v2930 = vadd.f32 %v2902, %v2911
        %v2931 = vadd.f32 %v2903, %v2915
        %v2932 = vadd.f32 %v2904, %v2911
        %v2933 = vadd.f32 %v2905, %v2915
        %v2934 = vld [vmem:[%s7] sm:$0x3]
        %v2935 = vld [vmem:[%s8] sm:$0x3]
        %v2936 = vadd.f32 %v2918, %v2919
        %2937 = vadd.xlane.f32.xlu0 %v2936
        %v2938 = vpop.xlane.xlu0 %2937
        %v2939 = vadd.f32 %v2920, %v2921
        %2940 = vadd.xlane.f32.xlu0 %v2939
        %v2941 = vpop.xlane.xlu0 %2940
        %v2942 = vadd.f32 %v2922, %v2923
        %2943 = vadd.xlane.f32.xlu0 %v2942
        %v2944 = vpop.xlane.xlu0 %2943
        %v2945 = vadd.f32 %v2924, %v2925
        %2946 = vadd.xlane.f32.xlu0 %v2945
        %v2947 = vpop.xlane.xlu0 %2946
        %v2948 = vadd.f32 %v2926, %v2927
        %2949 = vadd.xlane.f32.xlu0 %v2948
        %v2950 = vpop.xlane.xlu0 %2949
        %v2951 = vadd.f32 %v2928, %v2929
        %2952 = vadd.xlane.f32.xlu0 %v2951
        %v2953 = vpop.xlane.xlu0 %2952
        %v2954 = vadd.f32 %v2930, %v2931
        %2955 = vadd.xlane.f32.xlu0 %v2954
        %v2956 = vpop.xlane.xlu0 %2955
        %v2957 = vadd.f32 %v2932, %v2933
        %2958 = vadd.xlane.f32.xlu0 %v2957
        %v2959 = vpop.xlane.xlu0 %2958
        %v2960 = vmul.f32 %v2938, %v690
        %v2961 = vmul.f32 %v2941, %v690
        %v2962 = vmul.f32 %v2944, %v690
        %v2963 = vmul.f32 %v2947, %v690
        %v2964 = vmul.f32 %v2950, %v690
        %v2965 = vmul.f32 %v2953, %v690
        %v2966 = vmul.f32 %v2956, %v690
        %v2967 = vmul.f32 %v2959, %v690
        %v2968 = vsub.f32 %v2918, %v2960
        %v2969 = vsub.f32 %v2919, %v2960
        %v2970 = vsub.f32 %v2920, %v2961
        %v2971 = vsub.f32 %v2921, %v2961
        %v2972 = vsub.f32 %v2922, %v2962
        %v2973 = vsub.f32 %v2923, %v2962
        %v2974 = vsub.f32 %v2924, %v2963
        %v2975 = vsub.f32 %v2925, %v2963
        %v2976 = vsub.f32 %v2926, %v2964
        %v2977 = vsub.f32 %v2927, %v2964
        %v2978 = vsub.f32 %v2928, %v2965
        %v2979 = vsub.f32 %v2929, %v2965
        %v2980 = vsub.f32 %v2930, %v2966
        %v2981 = vsub.f32 %v2931, %v2966
        %v2982 = vsub.f32 %v2932, %v2967
        %v2983 = vsub.f32 %v2933, %v2967
        %v2984 = vmul.f32 %v2968, %v2968
        %v2985 = vmul.f32 %v2969, %v2969
        %v2986 = vmul.f32 %v2970, %v2970
        %v2987 = vmul.f32 %v2971, %v2971
        %v2988 = vmul.f32 %v2972, %v2972
        %v2989 = vmul.f32 %v2973, %v2973
        %v2990 = vmul.f32 %v2974, %v2974
        %v2991 = vmul.f32 %v2975, %v2975
        %v2992 = vmul.f32 %v2976, %v2976
        %v2993 = vmul.f32 %v2977, %v2977
        %v2994 = vmul.f32 %v2978, %v2978
        %v2995 = vmul.f32 %v2979, %v2979
        %v2996 = vmul.f32 %v2980, %v2980
        %v2997 = vmul.f32 %v2981, %v2981
        %v2998 = vmul.f32 %v2982, %v2982
        %v2999 = vmul.f32 %v2983, %v2983
        %v3000 = vadd.f32 %v2984, %v2985
        %3001 = vadd.xlane.f32.xlu0 %v3000
        %v3002 = vpop.xlane.xlu0 %3001
        %v3003 = vadd.f32 %v2986, %v2987
        %3004 = vadd.xlane.f32.xlu0 %v3003
        %v3005 = vpop.xlane.xlu0 %3004
        %v3006 = vadd.f32 %v2988, %v2989
        %3007 = vadd.xlane.f32.xlu0 %v3006
        %v3008 = vpop.xlane.xlu0 %3007
        %v3009 = vadd.f32 %v2990, %v2991
        %3010 = vadd.xlane.f32.xlu0 %v3009
        %v3011 = vpop.xlane.xlu0 %3010
        %v3012 = vadd.f32 %v2992, %v2993
        %3013 = vadd.xlane.f32.xlu0 %v3012
        %v3014 = vpop.xlane.xlu0 %3013
        %v3015 = vadd.f32 %v2994, %v2995
        %3016 = vadd.xlane.f32.xlu0 %v3015
        %v3017 = vpop.xlane.xlu0 %3016
        %v3018 = vadd.f32 %v2996, %v2997
        %3019 = vadd.xlane.f32.xlu0 %v3018
        %v3020 = vpop.xlane.xlu0 %3019
        %v3021 = vadd.f32 %v2998, %v2999
        %3022 = vadd.xlane.f32.xlu0 %v3021
        %v3023 = vpop.xlane.xlu0 %3022
        %v3024 = vmul.f32 %v3002, %v690
        %v3025 = vmul.f32 %v3005, %v690
        %v3026 = vmul.f32 %v3008, %v690
        %v3027 = vmul.f32 %v3011, %v690
        %v3028 = vmul.f32 %v3014, %v690
        %v3029 = vmul.f32 %v3017, %v690
        %v3030 = vmul.f32 %v3020, %v690
        %v3031 = vmul.f32 %v3023, %v690
        %v3032 = vadd.f32 %v3024, 1e-05
        %v3033 = vadd.f32 %v3025, 1e-05
        %v3034 = vadd.f32 %v3026, 1e-05
        %v3035 = vadd.f32 %v3027, 1e-05
        %v3036 = vadd.f32 %v3028, 1e-05
        %v3037 = vadd.f32 %v3029, 1e-05
        %v3038 = vadd.f32 %v3030, 1e-05
        %v3039 = vadd.f32 %v3031, 1e-05
        %v3040 = vrsqrt.pop %v3032
        %v3041 = vrsqrt.pop %v3033
        %v3042 = vrsqrt.pop %v3034
        %v3043 = vrsqrt.pop %v3035
        %v3044 = vrsqrt.pop %v3036
        %v3045 = vrsqrt.pop %v3037
        %v3046 = vrsqrt.pop %v3038
        %v3047 = vrsqrt.pop %v3039
        %v3048 = vmul.f32 %v2968, %v3040
        %v3049 = vmul.f32 %v2969, %v3040
        %v3050 = vmul.f32 %v2970, %v3041
        %v3051 = vmul.f32 %v2971, %v3041
        %v3052 = vmul.f32 %v2972, %v3042
        %v3053 = vmul.f32 %v2973, %v3042
        %v3054 = vmul.f32 %v2974, %v3043
        %v3055 = vmul.f32 %v2975, %v3043
        %v3056 = vmul.f32 %v2976, %v3044
        %v3057 = vmul.f32 %v2977, %v3044
        %v3058 = vmul.f32 %v2978, %v3045
        %v3059 = vmul.f32 %v2979, %v3045
        %v3060 = vmul.f32 %v2980, %v3046
        %v3061 = vmul.f32 %v2981, %v3046
        %v3062 = vmul.f32 %v2982, %v3047
        %v3063 = vmul.f32 %v2983, %v3047
        %v3065 = vlaneseq
        %v3066 = vshrl.u32 %v3065, 7
        %v3067 = vsub.s32 0, %v3066
        %v3068 = vrot.slane %v2934, %v3067
        %v3069 = vlaneseq
        %v3070 = vshrl.u32 %v3069, 7
        %v3071 = vsub.s32 1, %v3070
        %v3072 = vrot.slane %v2934, %v3071
        %v3075 = vmul.f32 %v3048, %v3068
        %v3076 = vmul.f32 %v3049, %v3072
        %v3077 = vmul.f32 %v3050, %v3068
        %v3078 = vmul.f32 %v3051, %v3072
        %v3079 = vmul.f32 %v3052, %v3068
        %v3080 = vmul.f32 %v3053, %v3072
        %v3081 = vmul.f32 %v3054, %v3068
        %v3082 = vmul.f32 %v3055, %v3072
        %v3083 = vmul.f32 %v3056, %v3068
        %v3084 = vmul.f32 %v3057, %v3072
        %v3085 = vmul.f32 %v3058, %v3068
        %v3086 = vmul.f32 %v3059, %v3072
        %v3087 = vmul.f32 %v3060, %v3068
        %v3088 = vmul.f32 %v3061, %v3072
        %v3089 = vmul.f32 %v3062, %v3068
        %v3090 = vmul.f32 %v3063, %v3072
        %v3092 = vlaneseq
        %v3093 = vshrl.u32 %v3092, 7
        %v3094 = vsub.s32 0, %v3093
        %v3095 = vrot.slane %v2935, %v3094
        %v3096 = vlaneseq
        %v3097 = vshrl.u32 %v3096, 7
        %v3098 = vsub.s32 1, %v3097
        %v3099 = vrot.slane %v2935, %v3098
        %v3102 = vadd.f32 %v3075, %v3095
        %v3103 = vadd.f32 %v3076, %v3099
        %v3104 = vadd.f32 %v3077, %v3095
        %v3105 = vadd.f32 %v3078, %v3099
        %v3106 = vadd.f32 %v3079, %v3095
        %v3107 = vadd.f32 %v3080, %v3099
        %v3108 = vadd.f32 %v3081, %v3095
        %v3109 = vadd.f32 %v3082, %v3099
        %v3110 = vadd.f32 %v3083, %v3095
        %v3111 = vadd.f32 %v3084, %v3099
        %v3112 = vadd.f32 %v3085, %v3095
        %v3113 = vadd.f32 %v3086, %v3099
        %v3114 = vadd.f32 %v3087, %v3095
        %v3115 = vadd.f32 %v3088, %v3099
        %v3116 = vadd.f32 %v3089, %v3095
        %v3117 = vadd.f32 %v3090, %v3099
        %v3118 = vpack.c.bf16 %v3104, %v3102
        %v3119 = vpack.c.bf16 %v3105, %v3103
        %v3120 = vpack.c.bf16 %v3108, %v3106
        %v3121 = vpack.c.bf16 %v3109, %v3107
        %v3122 = vpack.c.bf16 %v3112, %v3110
        %v3123 = vpack.c.bf16 %v3113, %v3111
        %v3124 = vpack.c.bf16 %v3116, %v3114
        %v3125 = vpack.c.bf16 %v3117, %v3115
        %v3126 = vld [vmem:[#allocation11] sm:$0xff]
        %v3127 = vld [vmem:[#allocation11 + $0x8] sm:$0xff]
        %v3128 = vld [vmem:[#allocation11 + $0x10] sm:$0xff]
        %v3129 = vld [vmem:[#allocation11 + $0x18] sm:$0xff]
        %v3130 = vld [vmem:[#allocation11 + $0x20] sm:$0xff]
        %v3131 = vld [vmem:[#allocation11 + $0x28] sm:$0xff]
        %v3132 = vld [vmem:[#allocation11 + $0x30] sm:$0xff]
        %v3133 = vld [vmem:[#allocation11 + $0x38] sm:$0xff]
        %v3134 = vld [vmem:[#allocation11 + $0x40] sm:$0xff]
        %v3135 = vld [vmem:[#allocation11 + $0x48] sm:$0xff]
        %v3136 = vld [vmem:[#allocation11 + $0x50] sm:$0xff]
        %v3137 = vld [vmem:[#allocation11 + $0x58] sm:$0xff]
        %v3138 = vld [vmem:[#allocation11 + $0x60] sm:$0xff]
        %v3139 = vld [vmem:[#allocation11 + $0x68] sm:$0xff]
        %v3140 = vld [vmem:[#allocation11 + $0x70] sm:$0xff]
        %v3141 = vld [vmem:[#allocation11 + $0x78] sm:$0xff]
        %v3142 = vld [vmem:[#allocation11 + $0x80] sm:$0xff]
        %v3143 = vld [vmem:[#allocation11 + $0x88] sm:$0xff]
        %v3144 = vld [vmem:[#allocation11 + $0x90] sm:$0xff]
        %v3145 = vld [vmem:[#allocation11 + $0x98] sm:$0xff]
        %v3146 = vld [vmem:[#allocation11 + $0xa0] sm:$0xff]
        %v3147 = vld [vmem:[#allocation11 + $0xa8] sm:$0xff]
        %v3148 = vld [vmem:[#allocation11 + $0xb0] sm:$0xff]
        %v3149 = vld [vmem:[#allocation11 + $0xb8] sm:$0xff]
        %v3150 = vld [vmem:[#allocation11 + $0xc0] sm:$0xff]
        %v3151 = vld [vmem:[#allocation11 + $0xc8] sm:$0xff]
        %v3152 = vld [vmem:[#allocation11 + $0xd0] sm:$0xff]
        %v3153 = vld [vmem:[#allocation11 + $0xd8] sm:$0xff]
        %v3154 = vld [vmem:[#allocation11 + $0xe0] sm:$0xff]
        %v3155 = vld [vmem:[#allocation11 + $0xe8] sm:$0xff]
        %v3156 = vld [vmem:[#allocation11 + $0xf0] sm:$0xff]
        %v3157 = vld [vmem:[#allocation11 + $0xf8] sm:$0xff]
        %v3158 = vld [vmem:[#allocation11 + $0x100] sm:$0xff]
        %v3159 = vld [vmem:[#allocation11 + $0x108] sm:$0xff]
        %v3160 = vld [vmem:[#allocation11 + $0x110] sm:$0xff]
        %v3161 = vld [vmem:[#allocation11 + $0x118] sm:$0xff]
        %v3162 = vld [vmem:[#allocation11 + $0x120] sm:$0xff]
        %v3163 = vld [vmem:[#allocation11 + $0x128] sm:$0xff]
        %v3164 = vld [vmem:[#allocation11 + $0x130] sm:$0xff]
        %v3165 = vld [vmem:[#allocation11 + $0x138] sm:$0xff]
        %v3166 = vld [vmem:[#allocation11 + $0x140] sm:$0xff]
        %v3167 = vld [vmem:[#allocation11 + $0x148] sm:$0xff]
        %v3168 = vld [vmem:[#allocation11 + $0x150] sm:$0xff]
        %v3169 = vld [vmem:[#allocation11 + $0x158] sm:$0xff]
        %v3170 = vld [vmem:[#allocation11 + $0x160] sm:$0xff]
        %v3171 = vld [vmem:[#allocation11 + $0x168] sm:$0xff]
        %v3172 = vld [vmem:[#allocation11 + $0x170] sm:$0xff]
        %v3173 = vld [vmem:[#allocation11 + $0x178] sm:$0xff]
        %v3174 = vld [vmem:[#allocation11 + $0x180] sm:$0xff]
        %v3175 = vld [vmem:[#allocation11 + $0x188] sm:$0xff]
        %v3176 = vld [vmem:[#allocation11 + $0x190] sm:$0xff]
        %v3177 = vld [vmem:[#allocation11 + $0x198] sm:$0xff]
        %v3178 = vld [vmem:[#allocation11 + $0x1a0] sm:$0xff]
        %v3179 = vld [vmem:[#allocation11 + $0x1a8] sm:$0xff]
        %v3180 = vld [vmem:[#allocation11 + $0x1b0] sm:$0xff]
        %v3181 = vld [vmem:[#allocation11 + $0x1b8] sm:$0xff]
        %v3182 = vld [vmem:[#allocation11 + $0x1c0] sm:$0xff]
        %v3183 = vld [vmem:[#allocation11 + $0x1c8] sm:$0xff]
        %v3184 = vld [vmem:[#allocation11 + $0x1d0] sm:$0xff]
        %v3185 = vld [vmem:[#allocation11 + $0x1d8] sm:$0xff]
        %v3186 = vld [vmem:[#allocation11 + $0x1e0] sm:$0xff]
        %v3187 = vld [vmem:[#allocation11 + $0x1e8] sm:$0xff]
        %v3188 = vld [vmem:[#allocation11 + $0x1f0] sm:$0xff]
        %v3189 = vld [vmem:[#allocation11 + $0x1f8] sm:$0xff]
        %v3190 = vld [vmem:[%s10] sm:$0xf]
        %v3192 = vlaneseq
        %v3193 = vshrl.u32 %v3192, 7
        %v3194 = vsub.s32 0, %v3193
        %v3195 = vrot.slane %v3190, %v3194
        %v3196 = vlaneseq
        %v3197 = vshrl.u32 %v3196, 7
        %v3198 = vsub.s32 1, %v3197
        %v3199 = vrot.slane %v3190, %v3198
        %v3200 = vlaneseq
        %v3201 = vshrl.u32 %v3200, 7
        %v3202 = vsub.s32 2, %v3201
        %v3203 = vrot.slane %v3190, %v3202
        %v3204 = vlaneseq
        %v3205 = vshrl.u32 %v3204, 7
        %v3206 = vsub.s32 3, %v3205
        %v3207 = vrot.slane %v3190, %v3206
        %v3276 = vunpack.c.l.b16 %v3126
        %v3277 = vunpack.c.h.b16 %v3126
        %v3278 = vunpack.c.l.b16 %v3127
        %v3279 = vunpack.c.h.b16 %v3127
        %v3280 = vunpack.c.l.b16 %v3128
        %v3281 = vunpack.c.h.b16 %v3128
        %v3282 = vunpack.c.l.b16 %v3129
        %v3283 = vunpack.c.h.b16 %v3129
        %v3284 = vunpack.c.l.b16 %v3130
        %v3285 = vunpack.c.h.b16 %v3130
        %v3286 = vunpack.c.l.b16 %v3131
        %v3287 = vunpack.c.h.b16 %v3131
        %v3288 = vunpack.c.l.b16 %v3132
        %v3289 = vunpack.c.h.b16 %v3132
        %v3290 = vunpack.c.l.b16 %v3133
        %v3291 = vunpack.c.h.b16 %v3133
        %v3292 = vunpack.c.l.b16 %v3134
        %v3293 = vunpack.c.h.b16 %v3134
        %v3294 = vunpack.c.l.b16 %v3135
        %v3295 = vunpack.c.h.b16 %v3135
        %v3296 = vunpack.c.l.b16 %v3136
        %v3297 = vunpack.c.h.b16 %v3136
        %v3298 = vunpack.c.l.b16 %v3137
        %v3299 = vunpack.c.h.b16 %v3137
        %v3300 = vunpack.c.l.b16 %v3138
        %v3301 = vunpack.c.h.b16 %v3138
        %v3302 = vunpack.c.l.b16 %v3139
        %v3303 = vunpack.c.h.b16 %v3139
        %v3304 = vunpack.c.l.b16 %v3140
        %v3305 = vunpack.c.h.b16 %v3140
        %v3306 = vunpack.c.l.b16 %v3141
        %v3307 = vunpack.c.h.b16 %v3141
        %v3308 = vunpack.c.l.b16 %v3142
        %v3309 = vunpack.c.h.b16 %v3142
        %v3310 = vunpack.c.l.b16 %v3143
        %v3311 = vunpack.c.h.b16 %v3143
        %v3312 = vunpack.c.l.b16 %v3144
        %v3313 = vunpack.c.h.b16 %v3144
        %v3314 = vunpack.c.l.b16 %v3145
        %v3315 = vunpack.c.h.b16 %v3145
        %v3316 = vunpack.c.l.b16 %v3146
        %v3317 = vunpack.c.h.b16 %v3146
        %v3318 = vunpack.c.l.b16 %v3147
        %v3319 = vunpack.c.h.b16 %v3147
        %v3320 = vunpack.c.l.b16 %v3148
        %v3321 = vunpack.c.h.b16 %v3148
        %v3322 = vunpack.c.l.b16 %v3149
        %v3323 = vunpack.c.h.b16 %v3149
        %v3324 = vunpack.c.l.b16 %v3150
        %v3325 = vunpack.c.h.b16 %v3150
        %v3326 = vunpack.c.l.b16 %v3151
        %v3327 = vunpack.c.h.b16 %v3151
        %v3328 = vunpack.c.l.b16 %v3152
        %v3329 = vunpack.c.h.b16 %v3152
        %v3330 = vunpack.c.l.b16 %v3153
        %v3331 = vunpack.c.h.b16 %v3153
        %v3332 = vunpack.c.l.b16 %v3154
        %v3333 = vunpack.c.h.b16 %v3154
        %v3334 = vunpack.c.l.b16 %v3155
        %v3335 = vunpack.c.h.b16 %v3155
        %v3336 = vunpack.c.l.b16 %v3156
        %v3337 = vunpack.c.h.b16 %v3156
        %v3338 = vunpack.c.l.b16 %v3157
        %v3339 = vunpack.c.h.b16 %v3157
        %v3340 = vunpack.c.l.b16 %v3158
        %v3341 = vunpack.c.h.b16 %v3158
        %v3342 = vunpack.c.l.b16 %v3159
        %v3343 = vunpack.c.h.b16 %v3159
        %v3344 = vunpack.c.l.b16 %v3160
        %v3345 = vunpack.c.h.b16 %v3160
        %v3346 = vunpack.c.l.b16 %v3161
        %v3347 = vunpack.c.h.b16 %v3161
        %v3348 = vunpack.c.l.b16 %v3162
        %v3349 = vunpack.c.h.b16 %v3162
        %v3350 = vunpack.c.l.b16 %v3163
        %v3351 = vunpack.c.h.b16 %v3163
        %v3352 = vunpack.c.l.b16 %v3164
        %v3353 = vunpack.c.h.b16 %v3164
        %v3354 = vunpack.c.l.b16 %v3165
        %v3355 = vunpack.c.h.b16 %v3165
        %v3356 = vunpack.c.l.b16 %v3166
        %v3357 = vunpack.c.h.b16 %v3166
        %v3358 = vunpack.c.l.b16 %v3167
        %v3359 = vunpack.c.h.b16 %v3167
        %v3360 = vunpack.c.l.b16 %v3168
        %v3361 = vunpack.c.h.b16 %v3168
        %v3362 = vunpack.c.l.b16 %v3169
        %v3363 = vunpack.c.h.b16 %v3169
        %v3364 = vunpack.c.l.b16 %v3170
        %v3365 = vunpack.c.h.b16 %v3170
        %v3366 = vunpack.c.l.b16 %v3171
        %v3367 = vunpack.c.h.b16 %v3171
        %v3368 = vunpack.c.l.b16 %v3172
        %v3369 = vunpack.c.h.b16 %v3172
        %v3370 = vunpack.c.l.b16 %v3173
        %v3371 = vunpack.c.h.b16 %v3173
        %v3372 = vunpack.c.l.b16 %v3174
        %v3373 = vunpack.c.h.b16 %v3174
        %v3374 = vunpack.c.l.b16 %v3175
        %v3375 = vunpack.c.h.b16 %v3175
        %v3376 = vunpack.c.l.b16 %v3176
        %v3377 = vunpack.c.h.b16 %v3176
        %v3378 = vunpack.c.l.b16 %v3177
        %v3379 = vunpack.c.h.b16 %v3177
        %v3380 = vunpack.c.l.b16 %v3178
        %v3381 = vunpack.c.h.b16 %v3178
        %v3382 = vunpack.c.l.b16 %v3179
        %v3383 = vunpack.c.h.b16 %v3179
        %v3384 = vunpack.c.l.b16 %v3180
        %v3385 = vunpack.c.h.b16 %v3180
        %v3386 = vunpack.c.l.b16 %v3181
        %v3387 = vunpack.c.h.b16 %v3181
        %v3388 = vunpack.c.l.b16 %v3182
        %v3389 = vunpack.c.h.b16 %v3182
        %v3390 = vunpack.c.l.b16 %v3183
        %v3391 = vunpack.c.h.b16 %v3183
        %v3392 = vunpack.c.l.b16 %v3184
        %v3393 = vunpack.c.h.b16 %v3184
        %v3394 = vunpack.c.l.b16 %v3185
        %v3395 = vunpack.c.h.b16 %v3185
        %v3396 = vunpack.c.l.b16 %v3186
        %v3397 = vunpack.c.h.b16 %v3186
        %v3398 = vunpack.c.l.b16 %v3187
        %v3399 = vunpack.c.h.b16 %v3187
        %v3400 = vunpack.c.l.b16 %v3188
        %v3401 = vunpack.c.h.b16 %v3188
        %v3402 = vunpack.c.l.b16 %v3189
        %v3403 = vunpack.c.h.b16 %v3189
        %v3404 = vpack.c.b16 %v3280, %v3276
        %v3405 = vpack.c.b16 %v3281, %v3277
        %v3406 = vpack.c.b16 %v3282, %v3278
        %v3407 = vpack.c.b16 %v3283, %v3279
        %v3408 = vpack.c.b16 %v3288, %v3284
        %v3409 = vpack.c.b16 %v3289, %v3285
        %v3410 = vpack.c.b16 %v3290, %v3286
        %v3411 = vpack.c.b16 %v3291, %v3287
        %v3412 = vpack.c.b16 %v3296, %v3292
        %v3413 = vpack.c.b16 %v3297, %v3293
        %v3414 = vpack.c.b16 %v3298, %v3294
        %v3415 = vpack.c.b16 %v3299, %v3295
        %v3416 = vpack.c.b16 %v3304, %v3300
        %v3417 = vpack.c.b16 %v3305, %v3301
        %v3418 = vpack.c.b16 %v3306, %v3302
        %v3419 = vpack.c.b16 %v3307, %v3303
        %v3420 = vpack.c.b16 %v3312, %v3308
        %v3421 = vpack.c.b16 %v3313, %v3309
        %v3422 = vpack.c.b16 %v3314, %v3310
        %v3423 = vpack.c.b16 %v3315, %v3311
        %v3424 = vpack.c.b16 %v3320, %v3316
        %v3425 = vpack.c.b16 %v3321, %v3317
        %v3426 = vpack.c.b16 %v3322, %v3318
        %v3427 = vpack.c.b16 %v3323, %v3319
        %v3428 = vpack.c.b16 %v3328, %v3324
        %v3429 = vpack.c.b16 %v3329, %v3325
        %v3430 = vpack.c.b16 %v3330, %v3326
        %v3431 = vpack.c.b16 %v3331, %v3327
        %v3432 = vpack.c.b16 %v3336, %v3332
        %v3433 = vpack.c.b16 %v3337, %v3333
        %v3434 = vpack.c.b16 %v3338, %v3334
        %v3435 = vpack.c.b16 %v3339, %v3335
        %v3436 = vpack.c.b16 %v3344, %v3340
        %v3437 = vpack.c.b16 %v3345, %v3341
        %v3438 = vpack.c.b16 %v3346, %v3342
        %v3439 = vpack.c.b16 %v3347, %v3343
        %v3440 = vpack.c.b16 %v3352, %v3348
        %v3441 = vpack.c.b16 %v3353, %v3349
        %v3442 = vpack.c.b16 %v3354, %v3350
        %v3443 = vpack.c.b16 %v3355, %v3351
        %v3444 = vpack.c.b16 %v3360, %v3356
        %v3445 = vpack.c.b16 %v3361, %v3357
        %v3446 = vpack.c.b16 %v3362, %v3358
        %v3447 = vpack.c.b16 %v3363, %v3359
        %v3448 = vpack.c.b16 %v3368, %v3364
        %v3449 = vpack.c.b16 %v3369, %v3365
        %v3450 = vpack.c.b16 %v3370, %v3366
        %v3451 = vpack.c.b16 %v3371, %v3367
        %v3452 = vpack.c.b16 %v3376, %v3372
        %v3453 = vpack.c.b16 %v3377, %v3373
        %v3454 = vpack.c.b16 %v3378, %v3374
        %v3455 = vpack.c.b16 %v3379, %v3375
        %v3456 = vpack.c.b16 %v3384, %v3380
        %v3457 = vpack.c.b16 %v3385, %v3381
        %v3458 = vpack.c.b16 %v3386, %v3382
        %v3459 = vpack.c.b16 %v3387, %v3383
        %v3460 = vpack.c.b16 %v3392, %v3388
        %v3461 = vpack.c.b16 %v3393, %v3389
        %v3462 = vpack.c.b16 %v3394, %v3390
        %v3463 = vpack.c.b16 %v3395, %v3391
        %v3464 = vpack.c.b16 %v3400, %v3396
        %v3465 = vpack.c.b16 %v3401, %v3397
        %v3466 = vpack.c.b16 %v3402, %v3398
        %v3467 = vpack.c.b16 %v3403, %v3399
        %3532 = vmatprep.subr.bf16.mxu0 %v3433
        %3533 = vmatpush1.bf16.msra.mxu0 %v3432
        %3534 = vmatprep.subr.bf16.mxu0 %v3429
        %3535 = vmatpush1.bf16.msra.mxu0 %v3428
        %3536 = vmatprep.subr.bf16.mxu0 %v3425
        %3537 = vmatpush1.bf16.msra.mxu0 %v3424
        %3538 = vmatprep.subr.bf16.mxu0 %v3421
        %3539 = vmatpush1.bf16.msra.mxu0 %v3420
        %3540 = vmatprep.subr.bf16.mxu0 %v3417
        %3541 = vmatpush1.bf16.msra.mxu0 %v3416
        %3542 = vmatprep.subr.bf16.mxu0 %v3413
        %3543 = vmatpush1.bf16.msra.mxu0 %v3412
        %3544 = vmatprep.subr.bf16.mxu0 %v3409
        %3545 = vmatpush1.bf16.msra.mxu0 %v3408
        %3546 = vmatprep.subr.bf16.mxu0 %v3405
        %3547 = vmatpush1.bf16.msra.mxu0 %v3404
        %3548 = vmatprep.subr.bf16.mxu0 %v3465
        %3549 = vmatpush2.bf16.msra.mxu0 %v3464
        %3550 = vmatprep.subr.bf16.mxu0 %v3461
        %3551 = vmatpush2.bf16.msra.mxu0 %v3460
        %3552 = vmatprep.subr.bf16.mxu0 %v3457
        %3553 = vmatpush2.bf16.msra.mxu0 %v3456
        %3554 = vmatprep.subr.bf16.mxu0 %v3453
        %3555 = vmatpush2.bf16.msra.mxu0 %v3452
        %3556 = vmatprep.subr.bf16.mxu0 %v3449
        %3557 = vmatpush2.bf16.msra.mxu0 %v3448
        %3558 = vmatprep.subr.bf16.mxu0 %v3445
        %3559 = vmatpush2.bf16.msra.mxu0 %v3444
        %3560 = vmatprep.subr.bf16.mxu0 %v3441
        %3561 = vmatpush2.bf16.msra.mxu0 %v3440
        %3562 = vmatprep.subr.bf16.mxu0 %v3437
        %3563 = vmatpush2.bf16.msra.mxu0 %v3436
        %3564 = vmatprep.mubr.bf16.mxu0 %v3119
        %3565 = vmatmul.mubr.bf16.gmra.mxu0 %v3118
        %v3566 = vpop.f32.mrf.mxu0
        %v3567 = vadd.f32 %v3195, %v3566
        %v3568 = vpop.f32.mrf.mxu0
        %v3569 = vadd.f32 %v3199, %v3568
        %v3570 = vpop.f32.mrf.mxu0
        %v3571 = vadd.f32 %v3195, %v3570
        %v3572 = vpop.f32.mrf.mxu0
        %v3573 = vadd.f32 %v3199, %v3572
        %3574 = vmatprep.mubr.bf16.mxu0 %v3121
        %3575 = vmatmul.mubr.bf16.gmra.mxu0 %v3120
        %v3576 = vpop.f32.mrf.mxu0
        %v3577 = vadd.f32 %v3195, %v3576
        %v3578 = vpop.f32.mrf.mxu0
        %v3579 = vadd.f32 %v3199, %v3578
        %v3580 = vpop.f32.mrf.mxu0
        %v3581 = vadd.f32 %v3195, %v3580
        %v3582 = vpop.f32.mrf.mxu0
        %v3583 = vadd.f32 %v3199, %v3582
        %3584 = vmatprep.mubr.bf16.mxu0 %v3123
        %3585 = vmatmul.mubr.bf16.gmra.mxu0 %v3122
        %v3586 = vpop.f32.mrf.mxu0
        %v3587 = vadd.f32 %v3195, %v3586
        %v3588 = vpop.f32.mrf.mxu0
        %v3589 = vadd.f32 %v3199, %v3588
        %v3590 = vpop.f32.mrf.mxu0
        %v3591 = vadd.f32 %v3195, %v3590
        %v3592 = vpop.f32.mrf.mxu0
        %v3593 = vadd.f32 %v3199, %v3592
        %3594 = vmatprep.mubr.bf16.mxu0 %v3125
        %3595 = vmatmul.mubr.bf16.gmra.mxu0 %v3124
        %v3596 = vpop.f32.mrf.mxu0
        %v3597 = vadd.f32 %v3195, %v3596
        %v3598 = vpop.f32.mrf.mxu0
        %v3599 = vadd.f32 %v3199, %v3598
        %v3600 = vpop.f32.mrf.mxu0
        %v3601 = vadd.f32 %v3195, %v3600
        %v3602 = vpop.f32.mrf.mxu0
        %v3603 = vadd.f32 %v3199, %v3602
        %3604 = vdwg.mxu0
        %3605 = vmatprep.subr.bf16.mxu0 %v3435
        %3606 = vmatpush1.bf16.msra.mxu0 %v3434
        %3607 = vmatprep.subr.bf16.mxu0 %v3431
        %3608 = vmatpush1.bf16.msra.mxu0 %v3430
        %3609 = vmatprep.subr.bf16.mxu0 %v3427
        %3610 = vmatpush1.bf16.msra.mxu0 %v3426
        %3611 = vmatprep.subr.bf16.mxu0 %v3423
        %3612 = vmatpush1.bf16.msra.mxu0 %v3422
        %3613 = vmatprep.subr.bf16.mxu0 %v3419
        %3614 = vmatpush1.bf16.msra.mxu0 %v3418
        %3615 = vmatprep.subr.bf16.mxu0 %v3415
        %3616 = vmatpush1.bf16.msra.mxu0 %v3414
        %3617 = vmatprep.subr.bf16.mxu0 %v3411
        %3618 = vmatpush1.bf16.msra.mxu0 %v3410
        %3619 = vmatprep.subr.bf16.mxu0 %v3407
        %3620 = vmatpush1.bf16.msra.mxu0 %v3406
        %3621 = vmatprep.subr.bf16.mxu0 %v3467
        %3622 = vmatpush2.bf16.msra.mxu0 %v3466
        %3623 = vmatprep.subr.bf16.mxu0 %v3463
        %3624 = vmatpush2.bf16.msra.mxu0 %v3462
        %3625 = vmatprep.subr.bf16.mxu0 %v3459
        %3626 = vmatpush2.bf16.msra.mxu0 %v3458
        %3627 = vmatprep.subr.bf16.mxu0 %v3455
        %3628 = vmatpush2.bf16.msra.mxu0 %v3454
        %3629 = vmatprep.subr.bf16.mxu0 %v3451
        %3630 = vmatpush2.bf16.msra.mxu0 %v3450
        %3631 = vmatprep.subr.bf16.mxu0 %v3447
        %3632 = vmatpush2.bf16.msra.mxu0 %v3446
        %3633 = vmatprep.subr.bf16.mxu0 %v3443
        %3634 = vmatpush2.bf16.msra.mxu0 %v3442
        %3635 = vmatprep.subr.bf16.mxu0 %v3439
        %3636 = vmatpush2.bf16.msra.mxu0 %v3438
        %3637 = vmatprep.mubr.bf16.mxu0 %v3119
        %3638 = vmatmul.mubr.bf16.gmra.mxu0 %v3118
        %v3639 = vpop.f32.mrf.mxu0
        %v3640 = vadd.f32 %v3203, %v3639
        %v3641 = vpop.f32.mrf.mxu0
        %v3642 = vadd.f32 %v3207, %v3641
        %v3643 = vpop.f32.mrf.mxu0
        %v3644 = vadd.f32 %v3203, %v3643
        %v3645 = vpop.f32.mrf.mxu0
        %v3646 = vadd.f32 %v3207, %v3645
        %3647 = vmatprep.mubr.bf16.mxu0 %v3121
        %3648 = vmatmul.mubr.bf16.gmra.mxu0 %v3120
        %v3649 = vpop.f32.mrf.mxu0
        %v3650 = vadd.f32 %v3203, %v3649
        %v3651 = vpop.f32.mrf.mxu0
        %v3652 = vadd.f32 %v3207, %v3651
        %v3653 = vpop.f32.mrf.mxu0
        %v3654 = vadd.f32 %v3203, %v3653
        %v3655 = vpop.f32.mrf.mxu0
        %v3656 = vadd.f32 %v3207, %v3655
        %3657 = vmatprep.mubr.bf16.mxu0 %v3123
        %3658 = vmatmul.mubr.bf16.gmra.mxu0 %v3122
        %v3659 = vpop.f32.mrf.mxu0
        %v3660 = vadd.f32 %v3203, %v3659
        %v3661 = vpop.f32.mrf.mxu0
        %v3662 = vadd.f32 %v3207, %v3661
        %v3663 = vpop.f32.mrf.mxu0
        %v3664 = vadd.f32 %v3203, %v3663
        %v3665 = vpop.f32.mrf.mxu0
        %v3666 = vadd.f32 %v3207, %v3665
        %3667 = vmatprep.mubr.bf16.mxu0 %v3125
        %3668 = vmatmul.mubr.bf16.gmra.mxu0 %v3124
        %v3669 = vpop.f32.mrf.mxu0
        %v3670 = vadd.f32 %v3203, %v3669
        %v3671 = vpop.f32.mrf.mxu0
        %v3672 = vadd.f32 %v3207, %v3671
        %v3673 = vpop.f32.mrf.mxu0
        %v3674 = vadd.f32 %v3203, %v3673
        %v3675 = vpop.f32.mrf.mxu0
        %v3676 = vadd.f32 %v3207, %v3675
        %3677 = vdwg.mxu0
        %v3678 = vmax.f32 %v3567, 0.0
        %v3679 = vmax.f32 %v3569, 0.0
        %v3680 = vmax.f32 %v3640, 0.0
        %v3681 = vmax.f32 %v3642, 0.0
        %v3682 = vmax.f32 %v3571, 0.0
        %v3683 = vmax.f32 %v3573, 0.0
        %v3684 = vmax.f32 %v3644, 0.0
        %v3685 = vmax.f32 %v3646, 0.0
        %v3686 = vmax.f32 %v3577, 0.0
        %v3687 = vmax.f32 %v3579, 0.0
        %v3688 = vmax.f32 %v3650, 0.0
        %v3689 = vmax.f32 %v3652, 0.0
        %v3690 = vmax.f32 %v3581, 0.0
        %v3691 = vmax.f32 %v3583, 0.0
        %v3692 = vmax.f32 %v3654, 0.0
        %v3693 = vmax.f32 %v3656, 0.0
        %v3694 = vmax.f32 %v3587, 0.0
        %v3695 = vmax.f32 %v3589, 0.0
        %v3696 = vmax.f32 %v3660, 0.0
        %v3697 = vmax.f32 %v3662, 0.0
        %v3698 = vmax.f32 %v3591, 0.0
        %v3699 = vmax.f32 %v3593, 0.0
        %v3700 = vmax.f32 %v3664, 0.0
        %v3701 = vmax.f32 %v3666, 0.0
        %v3702 = vmax.f32 %v3597, 0.0
        %v3703 = vmax.f32 %v3599, 0.0
        %v3704 = vmax.f32 %v3670, 0.0
        %v3705 = vmax.f32 %v3672, 0.0
        %v3706 = vmax.f32 %v3601, 0.0
        %v3707 = vmax.f32 %v3603, 0.0
        %v3708 = vmax.f32 %v3674, 0.0
        %v3709 = vmax.f32 %v3676, 0.0
        %v3710 = vpack.c.bf16 %v3682, %v3678
        %v3711 = vpack.c.bf16 %v3683, %v3679
        %v3712 = vpack.c.bf16 %v3684, %v3680
        %v3713 = vpack.c.bf16 %v3685, %v3681
        %v3714 = vpack.c.bf16 %v3690, %v3686
        %v3715 = vpack.c.bf16 %v3691, %v3687
        %v3716 = vpack.c.bf16 %v3692, %v3688
        %v3717 = vpack.c.bf16 %v3693, %v3689
        %v3718 = vpack.c.bf16 %v3698, %v3694
        %v3719 = vpack.c.bf16 %v3699, %v3695
        %v3720 = vpack.c.bf16 %v3700, %v3696
        %v3721 = vpack.c.bf16 %v3701, %v3697
        %v3722 = vpack.c.bf16 %v3706, %v3702
        %v3723 = vpack.c.bf16 %v3707, %v3703
        %v3724 = vpack.c.bf16 %v3708, %v3704
        %v3725 = vpack.c.bf16 %v3709, %v3705
        %v3726 = vld [vmem:[#allocation13] sm:$0xff]
        %v3727 = vld [vmem:[#allocation13 + $0x8] sm:$0xff]
        %v3728 = vld [vmem:[#allocation13 + $0x10] sm:$0xff]
        %v3729 = vld [vmem:[#allocation13 + $0x18] sm:$0xff]
        %v3730 = vld [vmem:[#allocation13 + $0x20] sm:$0xff]
        %v3731 = vld [vmem:[#allocation13 + $0x28] sm:$0xff]
        %v3732 = vld [vmem:[#allocation13 + $0x30] sm:$0xff]
        %v3733 = vld [vmem:[#allocation13 + $0x38] sm:$0xff]
        %v3734 = vld [vmem:[#allocation13 + $0x40] sm:$0xff]
        %v3735 = vld [vmem:[#allocation13 + $0x48] sm:$0xff]
        %v3736 = vld [vmem:[#allocation13 + $0x50] sm:$0xff]
        %v3737 = vld [vmem:[#allocation13 + $0x58] sm:$0xff]
        %v3738 = vld [vmem:[#allocation13 + $0x60] sm:$0xff]
        %v3739 = vld [vmem:[#allocation13 + $0x68] sm:$0xff]
        %v3740 = vld [vmem:[#allocation13 + $0x70] sm:$0xff]
        %v3741 = vld [vmem:[#allocation13 + $0x78] sm:$0xff]
        %v3742 = vld [vmem:[#allocation13 + $0x80] sm:$0xff]
        %v3743 = vld [vmem:[#allocation13 + $0x88] sm:$0xff]
        %v3744 = vld [vmem:[#allocation13 + $0x90] sm:$0xff]
        %v3745 = vld [vmem:[#allocation13 + $0x98] sm:$0xff]
        %v3746 = vld [vmem:[#allocation13 + $0xa0] sm:$0xff]
        %v3747 = vld [vmem:[#allocation13 + $0xa8] sm:$0xff]
        %v3748 = vld [vmem:[#allocation13 + $0xb0] sm:$0xff]
        %v3749 = vld [vmem:[#allocation13 + $0xb8] sm:$0xff]
        %v3750 = vld [vmem:[#allocation13 + $0xc0] sm:$0xff]
        %v3751 = vld [vmem:[#allocation13 + $0xc8] sm:$0xff]
        %v3752 = vld [vmem:[#allocation13 + $0xd0] sm:$0xff]
        %v3753 = vld [vmem:[#allocation13 + $0xd8] sm:$0xff]
        %v3754 = vld [vmem:[#allocation13 + $0xe0] sm:$0xff]
        %v3755 = vld [vmem:[#allocation13 + $0xe8] sm:$0xff]
        %v3756 = vld [vmem:[#allocation13 + $0xf0] sm:$0xff]
        %v3757 = vld [vmem:[#allocation13 + $0xf8] sm:$0xff]
        %v3758 = vld [vmem:[#allocation13 + $0x100] sm:$0xff]
        %v3759 = vld [vmem:[#allocation13 + $0x108] sm:$0xff]
        %v3760 = vld [vmem:[#allocation13 + $0x110] sm:$0xff]
        %v3761 = vld [vmem:[#allocation13 + $0x118] sm:$0xff]
        %v3762 = vld [vmem:[#allocation13 + $0x120] sm:$0xff]
        %v3763 = vld [vmem:[#allocation13 + $0x128] sm:$0xff]
        %v3764 = vld [vmem:[#allocation13 + $0x130] sm:$0xff]
        %v3765 = vld [vmem:[#allocation13 + $0x138] sm:$0xff]
        %v3766 = vld [vmem:[#allocation13 + $0x140] sm:$0xff]
        %v3767 = vld [vmem:[#allocation13 + $0x148] sm:$0xff]
        %v3768 = vld [vmem:[#allocation13 + $0x150] sm:$0xff]
        %v3769 = vld [vmem:[#allocation13 + $0x158] sm:$0xff]
        %v3770 = vld [vmem:[#allocation13 + $0x160] sm:$0xff]
        %v3771 = vld [vmem:[#allocation13 + $0x168] sm:$0xff]
        %v3772 = vld [vmem:[#allocation13 + $0x170] sm:$0xff]
        %v3773 = vld [vmem:[#allocation13 + $0x178] sm:$0xff]
        %v3774 = vld [vmem:[#allocation13 + $0x180] sm:$0xff]
        %v3775 = vld [vmem:[#allocation13 + $0x188] sm:$0xff]
        %v3776 = vld [vmem:[#allocation13 + $0x190] sm:$0xff]
        %v3777 = vld [vmem:[#allocation13 + $0x198] sm:$0xff]
        %v3778 = vld [vmem:[#allocation13 + $0x1a0] sm:$0xff]
        %v3779 = vld [vmem:[#allocation13 + $0x1a8] sm:$0xff]
        %v3780 = vld [vmem:[#allocation13 + $0x1b0] sm:$0xff]
        %v3781 = vld [vmem:[#allocation13 + $0x1b8] sm:$0xff]
        %v3782 = vld [vmem:[#allocation13 + $0x1c0] sm:$0xff]
        %v3783 = vld [vmem:[#allocation13 + $0x1c8] sm:$0xff]
        %v3784 = vld [vmem:[#allocation13 + $0x1d0] sm:$0xff]
        %v3785 = vld [vmem:[#allocation13 + $0x1d8] sm:$0xff]
        %v3786 = vld [vmem:[#allocation13 + $0x1e0] sm:$0xff]
        %v3787 = vld [vmem:[#allocation13 + $0x1e8] sm:$0xff]
        %v3788 = vld [vmem:[#allocation13 + $0x1f0] sm:$0xff]
        %v3789 = vld [vmem:[#allocation13 + $0x1f8] sm:$0xff]
        %v3854 = vunpack.c.l.b16 %v3726
        %v3855 = vunpack.c.h.b16 %v3726
        %v3856 = vunpack.c.l.b16 %v3727
        %v3857 = vunpack.c.h.b16 %v3727
        %v3858 = vunpack.c.l.b16 %v3728
        %v3859 = vunpack.c.h.b16 %v3728
        %v3860 = vunpack.c.l.b16 %v3729
        %v3861 = vunpack.c.h.b16 %v3729
        %v3862 = vunpack.c.l.b16 %v3730
        %v3863 = vunpack.c.h.b16 %v3730
        %v3864 = vunpack.c.l.b16 %v3731
        %v3865 = vunpack.c.h.b16 %v3731
        %v3866 = vunpack.c.l.b16 %v3732
        %v3867 = vunpack.c.h.b16 %v3732
        %v3868 = vunpack.c.l.b16 %v3733
        %v3869 = vunpack.c.h.b16 %v3733
        %v3870 = vunpack.c.l.b16 %v3734
        %v3871 = vunpack.c.h.b16 %v3734
        %v3872 = vunpack.c.l.b16 %v3735
        %v3873 = vunpack.c.h.b16 %v3735
        %v3874 = vunpack.c.l.b16 %v3736
        %v3875 = vunpack.c.h.b16 %v3736
        %v3876 = vunpack.c.l.b16 %v3737
        %v3877 = vunpack.c.h.b16 %v3737
        %v3878 = vunpack.c.l.b16 %v3738
        %v3879 = vunpack.c.h.b16 %v3738
        %v3880 = vunpack.c.l.b16 %v3739
        %v3881 = vunpack.c.h.b16 %v3739
        %v3882 = vunpack.c.l.b16 %v3740
        %v3883 = vunpack.c.h.b16 %v3740
        %v3884 = vunpack.c.l.b16 %v3741
        %v3885 = vunpack.c.h.b16 %v3741
        %v3886 = vunpack.c.l.b16 %v3742
        %v3887 = vunpack.c.h.b16 %v3742
        %v3888 = vunpack.c.l.b16 %v3743
        %v3889 = vunpack.c.h.b16 %v3743
        %v3890 = vunpack.c.l.b16 %v3744
        %v3891 = vunpack.c.h.b16 %v3744
        %v3892 = vunpack.c.l.b16 %v3745
        %v3893 = vunpack.c.h.b16 %v3745
        %v3894 = vunpack.c.l.b16 %v3746
        %v3895 = vunpack.c.h.b16 %v3746
        %v3896 = vunpack.c.l.b16 %v3747
        %v3897 = vunpack.c.h.b16 %v3747
        %v3898 = vunpack.c.l.b16 %v3748
        %v3899 = vunpack.c.h.b16 %v3748
        %v3900 = vunpack.c.l.b16 %v3749
        %v3901 = vunpack.c.h.b16 %v3749
        %v3902 = vunpack.c.l.b16 %v3750
        %v3903 = vunpack.c.h.b16 %v3750
        %v3904 = vunpack.c.l.b16 %v3751
        %v3905 = vunpack.c.h.b16 %v3751
        %v3906 = vunpack.c.l.b16 %v3752
        %v3907 = vunpack.c.h.b16 %v3752
        %v3908 = vunpack.c.l.b16 %v3753
        %v3909 = vunpack.c.h.b16 %v3753
        %v3910 = vunpack.c.l.b16 %v3754
        %v3911 = vunpack.c.h.b16 %v3754
        %v3912 = vunpack.c.l.b16 %v3755
        %v3913 = vunpack.c.h.b16 %v3755
        %v3914 = vunpack.c.l.b16 %v3756
        %v3915 = vunpack.c.h.b16 %v3756
        %v3916 = vunpack.c.l.b16 %v3757
        %v3917 = vunpack.c.h.b16 %v3757
        %v3918 = vunpack.c.l.b16 %v3758
        %v3919 = vunpack.c.h.b16 %v3758
        %v3920 = vunpack.c.l.b16 %v3759
        %v3921 = vunpack.c.h.b16 %v3759
        %v3922 = vunpack.c.l.b16 %v3760
        %v3923 = vunpack.c.h.b16 %v3760
        %v3924 = vunpack.c.l.b16 %v3761
        %v3925 = vunpack.c.h.b16 %v3761
        %v3926 = vunpack.c.l.b16 %v3762
        %v3927 = vunpack.c.h.b16 %v3762
        %v3928 = vunpack.c.l.b16 %v3763
        %v3929 = vunpack.c.h.b16 %v3763
        %v3930 = vunpack.c.l.b16 %v3764
        %v3931 = vunpack.c.h.b16 %v3764
        %v3932 = vunpack.c.l.b16 %v3765
        %v3933 = vunpack.c.h.b16 %v3765
        %v3934 = vunpack.c.l.b16 %v3766
        %v3935 = vunpack.c.h.b16 %v3766
        %v3936 = vunpack.c.l.b16 %v3767
        %v3937 = vunpack.c.h.b16 %v3767
        %v3938 = vunpack.c.l.b16 %v3768
        %v3939 = vunpack.c.h.b16 %v3768
        %v3940 = vunpack.c.l.b16 %v3769
        %v3941 = vunpack.c.h.b16 %v3769
        %v3942 = vunpack.c.l.b16 %v3770
        %v3943 = vunpack.c.h.b16 %v3770
        %v3944 = vunpack.c.l.b16 %v3771
        %v3945 = vunpack.c.h.b16 %v3771
        %v3946 = vunpack.c.l.b16 %v3772
        %v3947 = vunpack.c.h.b16 %v3772
        %v3948 = vunpack.c.l.b16 %v3773
        %v3949 = vunpack.c.h.b16 %v3773
        %v3950 = vunpack.c.l.b16 %v3774
        %v3951 = vunpack.c.h.b16 %v3774
        %v3952 = vunpack.c.l.b16 %v3775
        %v3953 = vunpack.c.h.b16 %v3775
        %v3954 = vunpack.c.l.b16 %v3776
        %v3955 = vunpack.c.h.b16 %v3776
        %v3956 = vunpack.c.l.b16 %v3777
        %v3957 = vunpack.c.h.b16 %v3777
        %v3958 = vunpack.c.l.b16 %v3778
        %v3959 = vunpack.c.h.b16 %v3778
        %v3960 = vunpack.c.l.b16 %v3779
        %v3961 = vunpack.c.h.b16 %v3779
        %v3962 = vunpack.c.l.b16 %v3780
        %v3963 = vunpack.c.h.b16 %v3780
        %v3964 = vunpack.c.l.b16 %v3781
        %v3965 = vunpack.c.h.b16 %v3781
        %v3966 = vunpack.c.l.b16 %v3782
        %v3967 = vunpack.c.h.b16 %v3782
        %v3968 = vunpack.c.l.b16 %v3783
        %v3969 = vunpack.c.h.b16 %v3783
        %v3970 = vunpack.c.l.b16 %v3784
        %v3971 = vunpack.c.h.b16 %v3784
        %v3972 = vunpack.c.l.b16 %v3785
        %v3973 = vunpack.c.h.b16 %v3785
        %v3974 = vunpack.c.l.b16 %v3786
        %v3975 = vunpack.c.h.b16 %v3786
        %v3976 = vunpack.c.l.b16 %v3787
        %v3977 = vunpack.c.h.b16 %v3787
        %v3978 = vunpack.c.l.b16 %v3788
        %v3979 = vunpack.c.h.b16 %v3788
        %v3980 = vunpack.c.l.b16 %v3789
        %v3981 = vunpack.c.h.b16 %v3789
        %v3982 = vpack.c.b16 %v3856, %v3854
        %v3983 = vpack.c.b16 %v3857, %v3855
        %v3984 = vpack.c.b16 %v3860, %v3858
        %v3985 = vpack.c.b16 %v3861, %v3859
        %v3986 = vpack.c.b16 %v3864, %v3862
        %v3987 = vpack.c.b16 %v3865, %v3863
        %v3988 = vpack.c.b16 %v3868, %v3866
        %v3989 = vpack.c.b16 %v3869, %v3867
        %v3990 = vpack.c.b16 %v3872, %v3870
        %v3991 = vpack.c.b16 %v3873, %v3871
        %v3992 = vpack.c.b16 %v3876, %v3874
        %v3993 = vpack.c.b16 %v3877, %v3875
        %v3994 = vpack.c.b16 %v3880, %v3878
        %v3995 = vpack.c.b16 %v3881, %v3879
        %v3996 = vpack.c.b16 %v3884, %v3882
        %v3997 = vpack.c.b16 %v3885, %v3883
        %v3998 = vpack.c.b16 %v3888, %v3886
        %v3999 = vpack.c.b16 %v3889, %v3887
        %v4000 = vpack.c.b16 %v3892, %v3890
        %v4001 = vpack.c.b16 %v3893, %v3891
        %v4002 = vpack.c.b16 %v3896, %v3894
        %v4003 = vpack.c.b16 %v3897, %v3895
        %v4004 = vpack.c.b16 %v3900, %v3898
        %v4005 = vpack.c.b16 %v3901, %v3899
        %v4006 = vpack.c.b16 %v3904, %v3902
        %v4007 = vpack.c.b16 %v3905, %v3903
        %v4008 = vpack.c.b16 %v3908, %v3906
        %v4009 = vpack.c.b16 %v3909, %v3907
        %v4010 = vpack.c.b16 %v3912, %v3910
        %v4011 = vpack.c.b16 %v3913, %v3911
        %v4012 = vpack.c.b16 %v3916, %v3914
        %v4013 = vpack.c.b16 %v3917, %v3915
        %v4014 = vpack.c.b16 %v3920, %v3918
        %v4015 = vpack.c.b16 %v3921, %v3919
        %v4016 = vpack.c.b16 %v3924, %v3922
        %v4017 = vpack.c.b16 %v3925, %v3923
        %v4018 = vpack.c.b16 %v3928, %v3926
        %v4019 = vpack.c.b16 %v3929, %v3927
        %v4020 = vpack.c.b16 %v3932, %v3930
        %v4021 = vpack.c.b16 %v3933, %v3931
        %v4022 = vpack.c.b16 %v3936, %v3934
        %v4023 = vpack.c.b16 %v3937, %v3935
        %v4024 = vpack.c.b16 %v3940, %v3938
        %v4025 = vpack.c.b16 %v3941, %v3939
        %v4026 = vpack.c.b16 %v3944, %v3942
        %v4027 = vpack.c.b16 %v3945, %v3943
        %v4028 = vpack.c.b16 %v3948, %v3946
        %v4029 = vpack.c.b16 %v3949, %v3947
        %v4030 = vpack.c.b16 %v3952, %v3950
        %v4031 = vpack.c.b16 %v3953, %v3951
        %v4032 = vpack.c.b16 %v3956, %v3954
        %v4033 = vpack.c.b16 %v3957, %v3955
        %v4034 = vpack.c.b16 %v3960, %v3958
        %v4035 = vpack.c.b16 %v3961, %v3959
        %v4036 = vpack.c.b16 %v3964, %v3962
        %v4037 = vpack.c.b16 %v3965, %v3963
        %v4038 = vpack.c.b16 %v3968, %v3966
        %v4039 = vpack.c.b16 %v3969, %v3967
        %v4040 = vpack.c.b16 %v3972, %v3970
        %v4041 = vpack.c.b16 %v3973, %v3971
        %v4042 = vpack.c.b16 %v3976, %v3974
        %v4043 = vpack.c.b16 %v3977, %v3975
        %v4044 = vpack.c.b16 %v3980, %v3978
        %v4045 = vpack.c.b16 %v3981, %v3979
        %4110 = vmatprep.subr.bf16.mxu0 %v3997
        %4111 = vmatpush1.bf16.msra.mxu0 %v3996
        %4112 = vmatprep.subr.bf16.mxu0 %v3995
        %4113 = vmatpush1.bf16.msra.mxu0 %v3994
        %4114 = vmatprep.subr.bf16.mxu0 %v3993
        %4115 = vmatpush1.bf16.msra.mxu0 %v3992
        %4116 = vmatprep.subr.bf16.mxu0 %v3991
        %4117 = vmatpush1.bf16.msra.mxu0 %v3990
        %4118 = vmatprep.subr.bf16.mxu0 %v3989
        %4119 = vmatpush1.bf16.msra.mxu0 %v3988
        %4120 = vmatprep.subr.bf16.mxu0 %v3987
        %4121 = vmatpush1.bf16.msra.mxu0 %v3986
        %4122 = vmatprep.subr.bf16.mxu0 %v3985
        %4123 = vmatpush1.bf16.msra.mxu0 %v3984
        %4124 = vmatprep.subr.bf16.mxu0 %v3983
        %4125 = vmatpush1.bf16.msra.mxu0 %v3982
        %4126 = vmatprep.subr.bf16.mxu0 %v4013
        %4127 = vmatpush2.bf16.msra.mxu0 %v4012
        %4128 = vmatprep.subr.bf16.mxu0 %v4011
        %4129 = vmatpush2.bf16.msra.mxu0 %v4010
        %4130 = vmatprep.subr.bf16.mxu0 %v4009
        %4131 = vmatpush2.bf16.msra.mxu0 %v4008
        %4132 = vmatprep.subr.bf16.mxu0 %v4007
        %4133 = vmatpush2.bf16.msra.mxu0 %v4006
        %4134 = vmatprep.subr.bf16.mxu0 %v4005
        %4135 = vmatpush2.bf16.msra.mxu0 %v4004
        %4136 = vmatprep.subr.bf16.mxu0 %v4003
        %4137 = vmatpush2.bf16.msra.mxu0 %v4002
        %4138 = vmatprep.subr.bf16.mxu0 %v4001
        %4139 = vmatpush2.bf16.msra.mxu0 %v4000
        %4140 = vmatprep.subr.bf16.mxu0 %v3999
        %4141 = vmatpush2.bf16.msra.mxu0 %v3998
        %4142 = vmatprep.mubr.bf16.mxu0 %v3711
        %4143 = vmatmul.mubr.bf16.gmra.mxu0 %v3710
        %v4144 = vpop.f32.mrf.mxu0
        %v4145 = vadd.f32 0.0, %v4144
        %v4146 = vpop.f32.mrf.mxu0
        %v4147 = vadd.f32 0.0, %v4146
        %v4148 = vpop.f32.mrf.mxu0
        %v4149 = vadd.f32 0.0, %v4148
        %v4150 = vpop.f32.mrf.mxu0
        %v4151 = vadd.f32 0.0, %v4150
        %4152 = vmatprep.mubr.bf16.mxu0 %v3715
        %4153 = vmatmul.mubr.bf16.gmra.mxu0 %v3714
        %v4154 = vpop.f32.mrf.mxu0
        %v4155 = vadd.f32 0.0, %v4154
        %v4156 = vpop.f32.mrf.mxu0
        %v4157 = vadd.f32 0.0, %v4156
        %v4158 = vpop.f32.mrf.mxu0
        %v4159 = vadd.f32 0.0, %v4158
        %v4160 = vpop.f32.mrf.mxu0
        %v4161 = vadd.f32 0.0, %v4160
        %4162 = vmatprep.mubr.bf16.mxu0 %v3719
        %4163 = vmatmul.mubr.bf16.gmra.mxu0 %v3718
        %v4164 = vpop.f32.mrf.mxu0
        %v4165 = vadd.f32 0.0, %v4164
        %v4166 = vpop.f32.mrf.mxu0
        %v4167 = vadd.f32 0.0, %v4166
        %v4168 = vpop.f32.mrf.mxu0
        %v4169 = vadd.f32 0.0, %v4168
        %v4170 = vpop.f32.mrf.mxu0
        %v4171 = vadd.f32 0.0, %v4170
        %4172 = vmatprep.mubr.bf16.mxu0 %v3723
        %4173 = vmatmul.mubr.bf16.gmra.mxu0 %v3722
        %v4174 = vpop.f32.mrf.mxu0
        %v4175 = vadd.f32 0.0, %v4174
        %v4176 = vpop.f32.mrf.mxu0
        %v4177 = vadd.f32 0.0, %v4176
        %v4178 = vpop.f32.mrf.mxu0
        %v4179 = vadd.f32 0.0, %v4178
        %v4180 = vpop.f32.mrf.mxu0
        %v4181 = vadd.f32 0.0, %v4180
        %4182 = vdwg.mxu0
        %4183 = vmatprep.subr.bf16.mxu0 %v4029
        %4184 = vmatpush1.bf16.msra.mxu0 %v4028
        %4185 = vmatprep.subr.bf16.mxu0 %v4027
        %4186 = vmatpush1.bf16.msra.mxu0 %v4026
        %4187 = vmatprep.subr.bf16.mxu0 %v4025
        %4188 = vmatpush1.bf16.msra.mxu0 %v4024
        %4189 = vmatprep.subr.bf16.mxu0 %v4023
        %4190 = vmatpush1.bf16.msra.mxu0 %v4022
        %4191 = vmatprep.subr.bf16.mxu0 %v4021
        %4192 = vmatpush1.bf16.msra.mxu0 %v4020
        %4193 = vmatprep.subr.bf16.mxu0 %v4019
        %4194 = vmatpush1.bf16.msra.mxu0 %v4018
        %4195 = vmatprep.subr.bf16.mxu0 %v4017
        %4196 = vmatpush1.bf16.msra.mxu0 %v4016
        %4197 = vmatprep.subr.bf16.mxu0 %v4015
        %4198 = vmatpush1.bf16.msra.mxu0 %v4014
        %4199 = vmatprep.subr.bf16.mxu0 %v4045
        %4200 = vmatpush2.bf16.msra.mxu0 %v4044
        %4201 = vmatprep.subr.bf16.mxu0 %v4043
        %4202 = vmatpush2.bf16.msra.mxu0 %v4042
        %4203 = vmatprep.subr.bf16.mxu0 %v4041
        %4204 = vmatpush2.bf16.msra.mxu0 %v4040
        %4205 = vmatprep.subr.bf16.mxu0 %v4039
        %4206 = vmatpush2.bf16.msra.mxu0 %v4038
        %4207 = vmatprep.subr.bf16.mxu0 %v4037
        %4208 = vmatpush2.bf16.msra.mxu0 %v4036
        %4209 = vmatprep.subr.bf16.mxu0 %v4035
        %4210 = vmatpush2.bf16.msra.mxu0 %v4034
        %4211 = vmatprep.subr.bf16.mxu0 %v4033
        %4212 = vmatpush2.bf16.msra.mxu0 %v4032
        %4213 = vmatprep.subr.bf16.mxu0 %v4031
        %4214 = vmatpush2.bf16.msra.mxu0 %v4030
        %4215 = vmatprep.mubr.bf16.mxu0 %v3713
        %4216 = vmatmul.mubr.bf16.gmra.mxu0 %v3712
        %v4217 = vpop.f32.mrf.mxu0
        %v4218 = vadd.f32 %v4145, %v4217
        %v4219 = vpop.f32.mrf.mxu0
        %v4220 = vadd.f32 %v4147, %v4219
        %v4221 = vpop.f32.mrf.mxu0
        %v4222 = vadd.f32 %v4149, %v4221
        %v4223 = vpop.f32.mrf.mxu0
        %v4224 = vadd.f32 %v4151, %v4223
        %4225 = vmatprep.mubr.bf16.mxu0 %v3717
        %4226 = vmatmul.mubr.bf16.gmra.mxu0 %v3716
        %v4227 = vpop.f32.mrf.mxu0
        %v4228 = vadd.f32 %v4155, %v4227
        %v4229 = vpop.f32.mrf.mxu0
        %v4230 = vadd.f32 %v4157, %v4229
        %v4231 = vpop.f32.mrf.mxu0
        %v4232 = vadd.f32 %v4159, %v4231
        %v4233 = vpop.f32.mrf.mxu0
        %v4234 = vadd.f32 %v4161, %v4233
        %4235 = vmatprep.mubr.bf16.mxu0 %v3721
        %4236 = vmatmul.mubr.bf16.gmra.mxu0 %v3720
        %v4237 = vpop.f32.mrf.mxu0
        %v4238 = vadd.f32 %v4165, %v4237
        %v4239 = vpop.f32.mrf.mxu0
        %v4240 = vadd.f32 %v4167, %v4239
        %v4241 = vpop.f32.mrf.mxu0
        %v4242 = vadd.f32 %v4169, %v4241
        %v4243 = vpop.f32.mrf.mxu0
        %v4244 = vadd.f32 %v4171, %v4243
        %4245 = vmatprep.mubr.bf16.mxu0 %v3725
        %4246 = vmatmul.mubr.bf16.gmra.mxu0 %v3724
        %v4247 = vpop.f32.mrf.mxu0
        %v4248 = vadd.f32 %v4175, %v4247
        %v4249 = vpop.f32.mrf.mxu0
        %v4250 = vadd.f32 %v4177, %v4249
        %v4251 = vpop.f32.mrf.mxu0
        %v4252 = vadd.f32 %v4179, %v4251
        %v4253 = vpop.f32.mrf.mxu0
        %v4254 = vadd.f32 %v4181, %v4253
        %4255 = vdwg.mxu0
        %v4256 = vadd.f32 %v2918, %v4218
        %v4257 = vadd.f32 %v2919, %v4220
        %v4258 = vadd.f32 %v2920, %v4222
        %v4259 = vadd.f32 %v2921, %v4224
        %v4260 = vadd.f32 %v2922, %v4228
        %v4261 = vadd.f32 %v2923, %v4230
        %v4262 = vadd.f32 %v2924, %v4232
        %v4263 = vadd.f32 %v2925, %v4234
        %v4264 = vadd.f32 %v2926, %v4238
        %v4265 = vadd.f32 %v2927, %v4240
        %v4266 = vadd.f32 %v2928, %v4242
        %v4267 = vadd.f32 %v2929, %v4244
        %v4268 = vadd.f32 %v2930, %v4248
        %v4269 = vadd.f32 %v2931, %v4250
        %v4270 = vadd.f32 %v2932, %v4252
        %v4271 = vadd.f32 %v2933, %v4254
        %v4272 = vld [vmem:[%s12] sm:$0x3]
        %v4274 = vlaneseq
        %v4275 = vshrl.u32 %v4274, 7
        %v4276 = vsub.s32 0, %v4275
        %v4277 = vrot.slane %v4272, %v4276
        %v4278 = vlaneseq
        %v4279 = vshrl.u32 %v4278, 7
        %v4280 = vsub.s32 1, %v4279
        %v4281 = vrot.slane %v4272, %v4280
        %v4284 = vadd.f32 %v4256, %v4277
        %v4285 = vadd.f32 %v4257, %v4281
        %v4286 = vadd.f32 %v4258, %v4277
        %v4287 = vadd.f32 %v4259, %v4281
        %v4288 = vadd.f32 %v4260, %v4277
        %v4289 = vadd.f32 %v4261, %v4281
        %v4290 = vadd.f32 %v4262, %v4277
        %v4291 = vadd.f32 %v4263, %v4281
        %v4292 = vadd.f32 %v4264, %v4277
        %v4293 = vadd.f32 %v4265, %v4281
        %v4294 = vadd.f32 %v4266, %v4277
        %v4295 = vadd.f32 %v4267, %v4281
        %v4296 = vadd.f32 %v4268, %v4277
        %v4297 = vadd.f32 %v4269, %v4281
        %v4298 = vadd.f32 %v4270, %v4277
        %v4299 = vadd.f32 %v4271, %v4281
        %4300 = vst [vmem:[%s582] sm:$0xff] %v4284
        %4301 = vst [vmem:[%s582 + $0x8] sm:$0xff] %v4285
        %4302 = vst [vmem:[%s582 + $0x10] sm:$0xff] %v4286
        %4303 = vst [vmem:[%s582 + $0x18] sm:$0xff] %v4287
        %4304 = vst [vmem:[%s582 + $0x20] sm:$0xff] %v4288
        %4305 = vst [vmem:[%s582 + $0x28] sm:$0xff] %v4289
        %4306 = vst [vmem:[%s582 + $0x30] sm:$0xff] %v4290
        %4307 = vst [vmem:[%s582 + $0x38] sm:$0xff] %v4291
        %4308 = vst [vmem:[%s582 + $0x40] sm:$0xff] %v4292
        %4309 = vst [vmem:[%s582 + $0x48] sm:$0xff] %v4293
        %4310 = vst [vmem:[%s582 + $0x50] sm:$0xff] %v4294
        %4311 = vst [vmem:[%s582 + $0x58] sm:$0xff] %v4295
        %4312 = vst [vmem:[%s582 + $0x60] sm:$0xff] %v4296
        %4313 = vst [vmem:[%s582 + $0x68] sm:$0xff] %v4297
        %4314 = vst [vmem:[%s582 + $0x70] sm:$0xff] %v4298
        %4315 = vst [vmem:[%s582 + $0x78] sm:$0xff] %v4299
        %s4316 = sand.u32 %s340, 1
        %s4317 = scalar_lea.sflag [#allocation4], %s4316
        %s4318 = sand.u32 %s340, 1
        %s4319 = smul.addr %s4318, 128
        %s4320 = scalar_lea.vmem [#allocation14], %s4319
        // Predicated region
        $region101: #{tpu_custom_call.1} parent=71 // pred_check
          %p4321 = pneg %p350
        $region102: #{tpu_custom_call.1} parent=71 // pred_check_branch
          %4323 = sbr.rel (%p4321) target = $region104
        $region103: #{tpu_custom_call.1} parent=71 // pred_region
          %s4324 = smul.u32 8, %s40
          %s4326 = ssub.s32 2048, 2048
          %4327 = vsyncadd %s4317, %s4326
          %s4328 = smul.addr %s4324, 2
          %s4329 = smul.addr %s39, 32
          %s4330 = sadd.s32 %s4328, %s4329
          %s4331 = smul.addr %s4330, 128
          %s4332 = scalar_lea.hbm %s13, %s4331
          %s4333 = sshll.u32 %s4320, 4
          %s4334 = int_to_ptr.vmem [resolvable:$true] %s4333
          %4339 = dma.vmem_to_hbm [thread:$0]  %s4334, 2048, %s4332, %s4317, 256, 256, 16
        $region104: #{tpu_custom_call.1} parent=71 // pred_fallthru
          _
      $region72: #{tpu_custom_call.1} parent=5 // pred_fallthru
        _
      %p4340 = scmp.le.s32.totalorder 2, %s30
      // Predicated region
      $region105: #{tpu_custom_call.1} parent=5 // pred_check
        %p4341 = pneg %p4340
      $region106: #{tpu_custom_call.1} parent=5 // pred_check_branch
        %4343 = sbr.rel (%p4341) target = $region108
      $region107: #{tpu_custom_call.1} parent=5 // pred_region
        %s4344 = ssub.s32 %s30, 2
        // Predicated region
        $region109: #{tpu_custom_call.1} parent=107 // pred_check
          %p4345 = pneg %p356
        $region110: #{tpu_custom_call.1} parent=107 // pred_check_branch
          %4347 = sbr.rel (%p4345) target = $region112
        $region111: #{tpu_custom_call.1} parent=107 // pred_region
          %s4348 = sand.u32 %s341, 1
          %s4349 = scalar_lea.sflag [#allocation4], %s4348
          %s4350 = sand.u32 %s341, 1
          %s4351 = smul.addr %s4350, 128
          %s4352 = scalar_lea.vmem [#allocation14], %s4351
          %4353 = dma.done %s4349, 2048
        $region112: #{tpu_custom_call.1} parent=107 // pred_fallthru
          _
      $region108: #{tpu_custom_call.1} parent=5 // pred_fallthru
        _
    $region6: #{tpu_custom_call.1} parent=1 // loop_footer
      %s34 = sadd.s32 1, %s30
    $region7: #{tpu_custom_call.1} parent=1 // loop_footer_branch
      %29 = sbr.rel target = $region3
    $region8: #{tpu_custom_call.1} parent=1 // loop_exit
      _
    %4354 = vsyncpa [#allocation3], 1
    %s4355 = scalar_lea.sflag [#allocation3], 1
    %4356 = vsyncpa %s4355, 1
    %4357 = vsyncpa [#allocation6], 1
    %s4358 = scalar_lea.sflag [#allocation6], 1
    %4359 = vsyncpa %s4358, 1
    %4360 = vsyncpa [#allocation9], 1
    %4361 = vsyncpa [#allocation12], 1
    %4362 = vsyncpa [#allocation4], 1
    %s4363 = scalar_lea.sflag [#allocation4], 1
    %4364 = vsyncpa %s4363, 1

</llo_original>
